<compile_context>
chip_gen: v7x
topology: tpu7x:2x2x1
jax: 0.10.0
libtpu: 0.0.40
codegen_flags: <defaults>
</compile_context>

<pallas_src>
import functools

import numpy as np

import jax
import jax.numpy as jnp
from jax.experimental import pallas as pl
from jax.experimental.pallas import tpu as pltpu

LATENT = 128          # latent_dims in the PyTorch module
CP = 16               # padded channel-row count in the decoder (2 aligned sublane tiles)

_VMEM = pl.BlockSpec(memory_space=pltpu.MemorySpace.VMEM)


# ----------------------------------------------------------------------------
# Kernel 1: fused encoder + bottleneck
# ----------------------------------------------------------------------------
def _encoder_bottleneck_kernel(p_ref, ew_ref, eb_ref, g_ref, bt_ref,
                               w12_ref, b12_ref, noise_ref, w3_ref, b3_ref,
                               mu_ref, lv_ref, d_ref,
                               *, B, Lc, Lp, pool, alpha, bn_eps, latent):
    """Conv1d(as matmul) + BN(batch stats) + PReLU + MaxPool + Flatten + fc1|fc2
    + reparameterize + fc3, all VMEM-resident.

    p: (B*Lc, Cin*K) bf16 im2col patches, ew: (Cin*K, 64) bf16,
    eb/g/bt: (1, 64) f32, w12: (Lp*64, 2*latent) bf16 (Flatten permutation folded in),
    b12: (1, 2*latent) f32, noise: (B, latent) f32, w3: (latent, 640) bf16, b3: (1, 640) f32.
    """
    # Conv1d as a single MXU matmul over the im2col patches.
    acc = jnp.dot(p_ref[...], ew_ref[...], preferred_element_type=jnp.float32)
    acc = acc + eb_ref[...]                                # conv bias (cancelled by BN; kept for fidelity)

    # BatchNorm1d training-mode statistics over ALL B*Lc positions (two-pass, centered).
    inv_n = 1.0 / float(B * Lc)
    mean = jnp.sum(acc, axis=0, keepdims=True) * inv_n
    cen = acc - mean
    var = jnp.sum(cen * cen, axis=0, keepdims=True) * inv_n
    xn = cen * (g_ref[...] * jax.lax.rsqrt(var + bn_eps)) + bt_ref[...]

    # PReLU (alpha = default 0.25).
    xn = jnp.where(xn > 0, xn, alpha * xn)

    # MaxPool1d(pool) + Flatten, produced directly as (B, Lp*64) with lane index
    # lp*64 + co.  The PyTorch channel-major (co*Lp + lp) permutation is folded into
    # w12's rows at pack time, so no relayout / transpose is needed here.
    rows = []
    for b in range(B):
        base = b * Lc
        groups = [jnp.max(xn[base + g * pool: base + (g + 1) * pool, :],
                          axis=0, keepdims=True)
                  for g in range(Lp)]
        rows.append(jnp.concatenate(groups, axis=1))       # (1, Lp*64)
    h = jnp.concatenate(rows, axis=0).astype(jnp.bfloat16)  # (B, Lp*64)

    # fc1 | fc2 as one matmul, reparameterize, fc3.
    acc12 = jnp.dot(h, w12_ref[...], preferred_element_type=jnp.float32) + b12_ref[...]
    mu = acc12[:, :latent]
    logvar = acc12[:, latent:]
    z = mu + jnp.exp(0.5 * logvar) * noise_ref[...]
    mu_ref[...] = mu
    lv_ref[...] = logvar
    d = jnp.dot(z.astype(jnp.bfloat16), w3_ref[...],
                preferred_element_type=jnp.float32) + b3_ref[...]
    d_ref[...] = d.astype(d_ref.dtype)                      # bf16: only bf16 consumed downstream


# ----------------------------------------------------------------------------
# Kernel 2: fused decoder (4 ConvTranspose1d + PReLU) + Linear + Sigmoid + AvgPool
# ----------------------------------------------------------------------------
def _decoder_kernel(x0_ref, w1_ref, b1_ref, w2_ref, b2_ref, up2_ref,
                    w3_ref, b3_ref, up3_ref, w4_ref, b4_ref,
                    flw_ref, flb_ref, o_ref, *, B, Cp, alpha, taps):
    """Whole decoder in one body, per-batch (B is tiny) with lane-dense (Cp, L) tiles.

    x0: (B*Cp, 64) bf16 (rows >= 10 are zero), wN: (Cp, K*Cp) bf16 flipped/transposed
    conv-transpose weights, bN: (Cp, 1) f32, upN: (Lin, Lpad) bf16 0/1 upsample+pad
    matrices (stride-2 layers), flw: (425, 519) bf16, flb: (1, 519) f32.
    out: (B*Cp, 500) f32 (rows >= 10 per batch block are discarded by the wrapper).
    """
    layer_specs = (
        (w1_ref, b1_ref, None,    20, 1, True),
        (w2_ref, b2_ref, up2_ref, 20, 2, True),
        (w3_ref, b3_ref, up3_ref, 20, 2, True),
        (w4_ref, b4_ref, None,    40, 1, False),
    )
    L0 = x0_ref.shape[1]
    n_fl = flw_ref.shape[1]
    out_len = n_fl - taps + 1

    for b in range(B):
        x = x0_ref[b * Cp:(b + 1) * Cp, :]                  # (Cp, L) bf16
        lin = L0
        for (w_ref, b_ref, up_ref, K, s, act) in layer_specs:
            lout = (lin - 1) * s + K
            if s == 1:
                zpad = jnp.zeros((Cp, K - 1), jnp.bfloat16)
                xp = jnp.concatenate([zpad, x, zpad], axis=1)           # pad only
            else:
                # zero-upsample + pad via a 0/1 selection matmul (exact in bf16).
                xp = jnp.dot(x, up_ref[...],
                             preferred_element_type=jnp.float32).astype(jnp.bfloat16)
            # im2col patches from K static shifted lane slices; every (Cp, lout) piece
            # is 2 aligned sublane tiles, so the axis-0 concat is pure tile placement.
            patches = jnp.concatenate([xp[:, k:k + lout] for k in range(K)], axis=0)
            y = jnp.dot(w_ref[...], patches, preferred_element_type=jnp.float32)
            y = y + b_ref[...]
            if act:
                y = jnp.where(y > 0, y, alpha * y)          # PReLU
            x = y.astype(jnp.bfloat16)
            lin = lout

        # final_linear: Linear(425, 519) + exact sigmoid + AvgPool1d(20, 1)
        acc = jnp.dot(x, flw_ref[...], preferred_element_type=jnp.float32) + flb_ref[...]
        sig = 1.0 / (1.0 + jnp.exp(-acc))                   # exact reciprocal (no approx vrcp)
        out = sig[:, 0:out_len]
        for r in range(1, taps):
            out = out + sig[:, r:r + out_len]
        out = out * (1.0 / float(taps))
        o_ref[b * Cp:(b + 1) * Cp, :] = out


# ----------------------------------------------------------------------------
# pallas_call wrappers (no grid: whole-array VMEM residency, shapes are tiny)
# ----------------------------------------------------------------------------
def pallas_encoder_bottleneck(patches, params, noise, B, Lc, Lp, pool,
                              alpha=0.25, bn_eps=1e-5):
    kern = functools.partial(_encoder_bottleneck_kernel, B=B, Lc=Lc, Lp=Lp, pool=pool,
                             alpha=float(alpha), bn_eps=float(bn_eps), latent=LATENT)
    return pl.pallas_call(
        kern,
        out_shape=(
            jax.ShapeDtypeStruct((B, LATENT), jnp.float32),                    # mu
            jax.ShapeDtypeStruct((B, LATENT), jnp.float32),                    # logvar
            jax.ShapeDtypeStruct((B, params["fc3_w"].shape[1]), jnp.bfloat16),  # fc3 output
        ),
        in_specs=[_VMEM] * 10,
        out_specs=(_VMEM, _VMEM, _VMEM),
    )(patches, params["enc_w"], params["enc_b"], params["bn_gamma"], params["bn_beta"],
      params["w12"], params["b12"], noise.astype(jnp.float32),
      params["fc3_w"], params["fc3_b"])


def pallas_decoder(x0, params, B, alpha=0.25):
    taps = 20
    out_len = params["fl_w"].shape[1] - taps + 1
    kern = functools.partial(_decoder_kernel, B=B, Cp=CP, alpha=float(alpha), taps=taps)
    return pl.pallas_call(
        kern,
        out_shape=jax.ShapeDtypeStruct((B * CP, out_len), jnp.float32),
        in_specs=[_VMEM] * 13,
        out_specs=_VMEM,
    )(x0,
      params["dct1_w"], params["dct1_b"],
      params["dct2_w"], params["dct2_b"], params["up2"],
      params["dct3_w"], params["dct3_b"], params["up3"],
      params["dct4_w"], params["dct4_b"],
      params["fl_w"], params["fl_b"])


# ----------------------------------------------------------------------------
# Parameters (deterministic, synthetic) + one-time packing / bf16 pre-cast
# ----------------------------------------------------------------------------
def init_params(key, ch_num, wind_size):
    Lc = (wind_size - 50) // 2 + 1
    Lp = Lc // 10
    temp_dim = 64 * Lp

    ks = jax.random.split(key, 20)

    def rn(k, shape, scale=0.05):
        return scale * jax.random.normal(k, shape, dtype=jnp.float32)

    return {
        "conv_w": rn(ks[0], (64, ch_num, 50)),          # Conv1d (Cout, Cin, K)
        "conv_b": rn(ks[1], (64,)),
        "bn_gamma": jnp.ones((64,), jnp.float32),       # BatchNorm1d defaults
        "bn_beta": jnp.zeros((64,), jnp.float32),
        "fc1_w": rn(ks[2], (temp_dim, LATENT)),         # stored (in, out)
        "fc1_b": rn(ks[3], (LATENT,)),
        "fc2_w": rn(ks[4], (temp_dim, LATENT)),
        "fc2_b": rn(ks[5], (LATENT,)),
        "fc3_w": rn(ks[6], (LATENT, 640)),
        "fc3_b": rn(ks[7], (640,)),
        "dct1_w": rn(ks[8], (ch_num, ch_num, 20)),      # ConvTranspose1d (Cin, Cout, K)
        "dct1_b": rn(ks[9], (ch_num,)),
        "dct2_w": rn(ks[10], (ch_num, ch_num, 20)),
        "dct2_b": rn(ks[11], (ch_num,)),
        "dct3_w": rn(ks[12], (ch_num, ch_num, 20)),
        "dct3_b": rn(ks[13], (ch_num,)),
        "dct4_w": rn(ks[14], (ch_num, ch_num, 40)),
        "dct4_b": rn(ks[15], (ch_num,)),
        "fl_w": rn(ks[16], (425, 519)),
        "fl_b": rn(ks[17], (519,)),
    }


def pack_params(p, ch_num, wind_size):
    """One-time layout packing + bf16 pre-cast of every matmul weight."""
    assert ch_num == 10, "module architecture (fc3->640, Linear(425,...)) forces ch_num == 10"
    C, K = ch_num, 50
    Lc = (wind_size - K) // 2 + 1
    Lp = Lc // 10

    packed = {
        # encoder conv: Wm[c*K + k, co] = conv_w[co, c, k]
        "enc_w": jnp.transpose(p["conv_w"], (1, 2, 0)).reshape(C * K, 64).astype(jnp.bfloat16),
        "enc_b": p["conv_b"].reshape(1, 64).astype(jnp.float32),
        "bn_gamma": p["bn_gamma"].reshape(1, 64).astype(jnp.float32),
        "bn_beta": p["bn_beta"].reshape(1, 64).astype(jnp.float32),
        "fc3_w": p["fc3_w"].astype(jnp.bfloat16),
        "fc3_b": p["fc3_b"].reshape(1, -1).astype(jnp.float32),
        "fl_w": p["fl_w"].astype(jnp.bfloat16),
        "fl_b": p["fl_b"].reshape(1, -1).astype(jnp.float32),
    }

    # fc1 | fc2 concatenated along outputs, with the PyTorch channel-major Flatten
    # permutation folded into the rows: new row lp*64 + co <- old row co*Lp + lp.
    w12 = jnp.concatenate([p["fc1_w"], p["fc2_w"]], axis=1)             # (64*Lp, 256)
    w12 = jnp.transpose(w12.reshape(64, Lp, 2 * LATENT), (1, 0, 2)).reshape(64 * Lp, 2 * LATENT)
    packed["w12"] = w12.astype(jnp.bfloat16)
    packed["b12"] = jnp.concatenate([p["fc1_b"], p["fc2_b"]]).reshape(1, -1).astype(jnp.float32)

    # Decoder conv-transpose weights, channel-padded to CP rows, patch order (k, ci):
    #   Wt[co, k*CP + ci] = w[ci, co, K-1-k]   (zero rows/cols for padded channels)
    for name in ("dct1", "dct2", "dct3", "dct4"):
        w = np.asarray(p[name + "_w"], np.float32)                      # (Cin, Cout, Kd)
        Cin, Cout, Kd = w.shape
        wt = np.transpose(np.flip(w, axis=2), (1, 2, 0))                # (Cout, Kd, Cin)
        wt16 = np.zeros((CP, Kd, CP), np.float32)
        wt16[:Cout, :, :Cin] = wt
        packed[name + "_w"] = jnp.asarray(wt16.reshape(CP, Kd * CP), jnp.bfloat16)
        b16 = np.zeros((CP, 1), np.float32)
        b16[:Cout, 0] = np.asarray(p[name + "_b"], np.float32)
        packed[name + "_b"] = jnp.asarray(b16)

    # 0/1 zero-upsample + pad selection matrices for the stride-2 layers (exact in bf16),
    # built once with numpy (hoisted out of the traced forward).
    def up_pad(lin, kd, s):
        lpad = (lin - 1) * s + 1 + 2 * (kd - 1)
        m = np.zeros((lin, lpad), np.float32)
        m[np.arange(lin), (kd - 1) + s * np.arange(lin)] = 1.0
        return jnp.asarray(m, jnp.bfloat16)

    ldec = 640 // ch_num                                                 # 64
    lens = [ldec]
    for (kd, s) in ((20, 1), (20, 2), (20, 2), (40, 1)):
        lens.append((lens[-1] - 1) * s + kd)                             # 83, 184, 386, 425
    packed["up2"] = up_pad(lens[1], 20, 2)                               # (83, 203)
    packed["up3"] = up_pad(lens[2], 20, 2)                               # (184, 405)
    return packed


# ----------------------------------------------------------------------------
# Forward pass
# ----------------------------------------------------------------------------
def seeg_cnn_vae_forward(params, x, eps_noise):
    B, C, L = x.shape
    K, stride, pool = 50, 2, 10
    Lc = (L - K) // stride + 1
    Lp = Lc // pool
    prelu_a = 0.25  # nn.PReLU() default init

    # ---- encoder im2col: cast to bf16 BEFORE the K-fold expansion, then Lc static
    # contiguous slices (no 2-D index gather) -> (B*Lc, C*K) with column order (c, k).
    xb = x.astype(jnp.bfloat16)
    windows = [xb[:, :, i * stride: i * stride + K] for i in range(Lc)]  # each (B, C, K)
    patches = jnp.stack(windows, axis=1).reshape(B * Lc, C * K)

    # ---- fused encoder + bottleneck (1 pallas_call)
    mu, logvar, d = pallas_encoder_bottleneck(patches, params, eps_noise,
                                              B, Lc, Lp, pool, alpha=prelu_a)

    # ---- decoder input: UnFlatten (B,640)->(B,C,64), pad channel rows to CP=16 so all
    # in-kernel sublane concats / stores are tile aligned (padded rows stay zero).
    ldec0 = d.shape[1] // C
    x0 = jnp.pad(d.reshape(B, C, ldec0),
                 ((0, 0), (0, CP - C), (0, 0))).reshape(B * CP, ldec0)   # bf16

    # ---- fused decoder + final_linear (1 pallas_call)
    out16 = pallas_decoder(x0, params, B, alpha=prelu_a)                 # (B*CP, 500) f32
    out_len = out16.shape[1]
    recon = out16.reshape(B, CP, out_len)[:, :C, :]                      # drop padded rows

    return recon, mu, logvar


# ----------------------------------------------------------------------------
if __name__ == "__main__":
    # ch_num must be 10 (640 / ch_num must equal 64 to reach the hard-coded 425 dim).
    B, ch_num, wind_size = 2, 10, 128
    key = jax.random.PRNGKey(0)
    kx, keps, kp = jax.random.split(key, 3)

    x = jax.random.normal(kx, (B, ch_num, wind_size), dtype=jnp.float32)
    # TODO(synk): torch.randn inside reparameterize is device-side RNG; it is replaced by
    # an explicit deterministic eps_noise input (an in-kernel pltpu.prng_* path is possible).
    eps_noise = jax.random.normal(keps, (B, LATENT), dtype=jnp.float32)

    raw_params = init_params(kp, ch_num, wind_size)
    params = pack_params(raw_params, ch_num, wind_size)   # weights packed / bf16-cast once

    fwd = jax.jit(seeg_cnn_vae_forward)
    recon, mu, logvar = fwd(params, x, eps_noise)
    jax.block_until_ready((recon, mu, logvar))

    assert recon.shape == (B, ch_num, 500), recon.shape
    assert mu.shape == (B, LATENT) and logvar.shape == (B, LATENT)
    assert recon.dtype == jnp.float32
    assert bool(jnp.all(jnp.isfinite(recon)))
    print("KERNEL_OK")
</pallas_src>

<mosaic_0001>
module attributes {stable_mosaic.version = 11 : i64} {
  func.func @_encoder_bottleneck_kernel(%arg0: memref<80x500xbf16, #tpu.memory_space<vmem>>, %arg1: memref<500x64xbf16, #tpu.memory_space<vmem>>, %arg2: memref<1x64xf32, #tpu.memory_space<vmem>>, %arg3: memref<1x64xf32, #tpu.memory_space<vmem>>, %arg4: memref<1x64xf32, #tpu.memory_space<vmem>>, %arg5: memref<256x256xbf16, #tpu.memory_space<vmem>>, %arg6: memref<1x256xf32, #tpu.memory_space<vmem>>, %arg7: memref<2x128xf32, #tpu.memory_space<vmem>>, %arg8: memref<128x640xbf16, #tpu.memory_space<vmem>>, %arg9: memref<1x640xf32, #tpu.memory_space<vmem>>, %arg10: memref<2x128xf32, #tpu.memory_space<vmem>>, %arg11: memref<2x128xf32, #tpu.memory_space<vmem>>, %arg12: memref<2x640xbf16, #tpu.memory_space<vmem>>) attributes {dimension_semantics = [], scalar_prefetch = 0 : i64, scratch_operands = 0 : i64, tpu.core_type = #tpu.core_type<tc>} {
    %c0 = arith.constant 0 : index
    %c0_0 = arith.constant 0 : index
    %0 = vector.load %arg0[%c0, %c0_0] : memref<80x500xbf16, #tpu.memory_space<vmem>>, vector<80x500xbf16>
    %c0_1 = arith.constant 0 : index
    %c0_2 = arith.constant 0 : index
    %1 = vector.load %arg1[%c0_1, %c0_2] : memref<500x64xbf16, #tpu.memory_space<vmem>>, vector<500x64xbf16>
    %cst = arith.constant dense<0.000000e+00> : vector<80x64xf32>
    %2 = tpu.matmul %0, %1, %cst {dimension_numbers = #tpu.dot_dimension_numbers<[1], [0], [0], [1], [0, 0, 1, 1], [], []>} : vector<80x500xbf16>, vector<500x64xbf16>, vector<80x64xf32> -> vector<80x64xf32>
    %c0_3 = arith.constant 0 : index
    %c0_4 = arith.constant 0 : index
    %3 = vector.load %arg2[%c0_3, %c0_4] : memref<1x64xf32, #tpu.memory_space<vmem>>, vector<1x64xf32>
    %4 = vector.broadcast %3 : vector<1x64xf32> to vector<80x64xf32>
    %5 = arith.addf %2, %4 : vector<80x64xf32>
    %cst_5 = arith.constant dense<0.000000e+00> : vector<64xf32>
    %6 = vector.multi_reduction <add>, %5, %cst_5 [0] : vector<80x64xf32> to vector<64xf32>
    %7 = vector.shape_cast %6 : vector<64xf32> to vector<1x64xf32>
    %cst_6 = arith.constant 1.250000e-02 : f32
    %8 = vector.broadcast %cst_6 : f32 to vector<1x64xf32>
    %9 = arith.mulf %7, %8 : vector<1x64xf32>
    %10 = vector.broadcast %9 : vector<1x64xf32> to vector<80x64xf32>
    %11 = arith.subf %5, %10 : vector<80x64xf32>
    %12 = arith.mulf %11, %11 : vector<80x64xf32>
    %cst_7 = arith.constant dense<0.000000e+00> : vector<64xf32>
    %13 = vector.multi_reduction <add>, %12, %cst_7 [0] : vector<80x64xf32> to vector<64xf32>
    %14 = vector.shape_cast %13 : vector<64xf32> to vector<1x64xf32>
    %cst_8 = arith.constant 1.250000e-02 : f32
    %15 = vector.broadcast %cst_8 : f32 to vector<1x64xf32>
    %16 = arith.mulf %14, %15 : vector<1x64xf32>
    %c0_9 = arith.constant 0 : index
    %c0_10 = arith.constant 0 : index
    %17 = vector.load %arg3[%c0_9, %c0_10] : memref<1x64xf32, #tpu.memory_space<vmem>>, vector<1x64xf32>
    %cst_11 = arith.constant 9.99999974E-6 : f32
    %18 = vector.broadcast %cst_11 : f32 to vector<1x64xf32>
    %19 = arith.addf %16, %18 : vector<1x64xf32>
    %20 = math.rsqrt %19 : vector<1x64xf32>
    %21 = arith.mulf %17, %20 : vector<1x64xf32>
    %22 = vector.broadcast %21 : vector<1x64xf32> to vector<80x64xf32>
    %23 = arith.mulf %11, %22 : vector<80x64xf32>
    %c0_12 = arith.constant 0 : index
    %c0_13 = arith.constant 0 : index
    %24 = vector.load %arg4[%c0_12, %c0_13] : memref<1x64xf32, #tpu.memory_space<vmem>>, vector<1x64xf32>
    %25 = vector.broadcast %24 : vector<1x64xf32> to vector<80x64xf32>
    %26 = arith.addf %23, %25 : vector<80x64xf32>
    %cst_14 = arith.constant 0.000000e+00 : f32
    %27 = vector.broadcast %cst_14 : f32 to vector<80x64xf32>
    %28 = arith.cmpf ogt, %26, %27 : vector<80x64xf32>
    %cst_15 = arith.constant 2.500000e-01 : f32
    %29 = vector.broadcast %cst_15 : f32 to vector<80x64xf32>
    %30 = arith.mulf %29, %26 : vector<80x64xf32>
    %31 = arith.select %28, %26, %30 : vector<80x64xi1>, vector<80x64xf32>
    %32 = vector.extract_strided_slice %31 {offsets = [0, 0], sizes = [10, 64], strides = [1, 1]} : vector<80x64xf32> to vector<10x64xf32>
    %cst_16 = arith.constant dense<0xFF800000> : vector<64xf32>
    %33 = vector.multi_reduction <maximumf>, %32, %cst_16 [0] : vector<10x64xf32> to vector<64xf32>
    %34 = vector.shape_cast %33 : vector<64xf32> to vector<1x64xf32>
    %35 = vector.extract_strided_slice %31 {offsets = [10, 0], sizes = [10, 64], strides = [1, 1]} : vector<80x64xf32> to vector<10x64xf32>
    %cst_17 = arith.constant dense<0xFF800000> : vector<64xf32>
    %36 = vector.multi_reduction <maximumf>, %35, %cst_17 [0] : vector<10x64xf32> to vector<64xf32>
    %37 = vector.shape_cast %36 : vector<64xf32> to vector<1x64xf32>
    %38 = vector.extract_strided_slice %31 {offsets = [20, 0], sizes = [10, 64], strides = [1, 1]} : vector<80x64xf32> to vector<10x64xf32>
    %cst_18 = arith.constant dense<0xFF800000> : vector<64xf32>
    %39 = vector.multi_reduction <maximumf>, %38, %cst_18 [0] : vector<10x64xf32> to vector<64xf32>
    %40 = vector.shape_cast %39 : vector<64xf32> to vector<1x64xf32>
    %41 = vector.extract_strided_slice %31 {offsets = [30, 0], sizes = [10, 64], strides = [1, 1]} : vector<80x64xf32> to vector<10x64xf32>
    %cst_19 = arith.constant dense<0xFF800000> : vector<64xf32>
    %42 = vector.multi_reduction <maximumf>, %41, %cst_19 [0] : vector<10x64xf32> to vector<64xf32>
    %43 = vector.shape_cast %42 : vector<64xf32> to vector<1x64xf32>
    %44 = tpu.concatenate %34, %37, %40, %43 in 1 : vector<1x64xf32>, vector<1x64xf32>, vector<1x64xf32>, vector<1x64xf32> -> vector<1x256xf32>
    %45 = vector.extract_strided_slice %31 {offsets = [40, 0], sizes = [10, 64], strides = [1, 1]} : vector<80x64xf32> to vector<10x64xf32>
    %cst_20 = arith.constant dense<0xFF800000> : vector<64xf32>
    %46 = vector.multi_reduction <maximumf>, %45, %cst_20 [0] : vector<10x64xf32> to vector<64xf32>
    %47 = vector.shape_cast %46 : vector<64xf32> to vector<1x64xf32>
    %48 = vector.extract_strided_slice %31 {offsets = [50, 0], sizes = [10, 64], strides = [1, 1]} : vector<80x64xf32> to vector<10x64xf32>
    %cst_21 = arith.constant dense<0xFF800000> : vector<64xf32>
    %49 = vector.multi_reduction <maximumf>, %48, %cst_21 [0] : vector<10x64xf32> to vector<64xf32>
    %50 = vector.shape_cast %49 : vector<64xf32> to vector<1x64xf32>
    %51 = vector.extract_strided_slice %31 {offsets = [60, 0], sizes = [10, 64], strides = [1, 1]} : vector<80x64xf32> to vector<10x64xf32>
    %cst_22 = arith.constant dense<0xFF800000> : vector<64xf32>
    %52 = vector.multi_reduction <maximumf>, %51, %cst_22 [0] : vector<10x64xf32> to vector<64xf32>
    %53 = vector.shape_cast %52 : vector<64xf32> to vector<1x64xf32>
    %54 = vector.extract_strided_slice %31 {offsets = [70, 0], sizes = [10, 64], strides = [1, 1]} : vector<80x64xf32> to vector<10x64xf32>
    %cst_23 = arith.constant dense<0xFF800000> : vector<64xf32>
    %55 = vector.multi_reduction <maximumf>, %54, %cst_23 [0] : vector<10x64xf32> to vector<64xf32>
    %56 = vector.shape_cast %55 : vector<64xf32> to vector<1x64xf32>
    %57 = tpu.concatenate %47, %50, %53, %56 in 1 : vector<1x64xf32>, vector<1x64xf32>, vector<1x64xf32>, vector<1x64xf32> -> vector<1x256xf32>
    %58 = tpu.concatenate %44, %57 in 0 : vector<1x256xf32>, vector<1x256xf32> -> vector<2x256xf32>
    %59 = arith.truncf %58 : vector<2x256xf32> to vector<2x256xbf16>
    %c0_24 = arith.constant 0 : index
    %c0_25 = arith.constant 0 : index
    %60 = vector.load %arg5[%c0_24, %c0_25] : memref<256x256xbf16, #tpu.memory_space<vmem>>, vector<256x256xbf16>
    %cst_26 = arith.constant dense<0.000000e+00> : vector<2x256xf32>
    %61 = tpu.matmul %59, %60, %cst_26 {dimension_numbers = #tpu.dot_dimension_numbers<[1], [0], [0], [1], [0, 0, 1, 1], [], []>} : vector<2x256xbf16>, vector<256x256xbf16>, vector<2x256xf32> -> vector<2x256xf32>
    %c0_27 = arith.constant 0 : index
    %c0_28 = arith.constant 0 : index
    %62 = vector.load %arg6[%c0_27, %c0_28] : memref<1x256xf32, #tpu.memory_space<vmem>>, vector<1x256xf32>
    %63 = vector.broadcast %62 : vector<1x256xf32> to vector<2x256xf32>
    %64 = arith.addf %61, %63 : vector<2x256xf32>
    %65 = vector.extract_strided_slice %64 {offsets = [0, 0], sizes = [2, 128], strides = [1, 1]} : vector<2x256xf32> to vector<2x128xf32>
    %66 = vector.extract_strided_slice %64 {offsets = [0, 128], sizes = [2, 128], strides = [1, 1]} : vector<2x256xf32> to vector<2x128xf32>
    %cst_29 = arith.constant 5.000000e-01 : f32
    %67 = vector.broadcast %cst_29 : f32 to vector<2x128xf32>
    %68 = arith.mulf %67, %66 : vector<2x128xf32>
    %69 = math.exp %68 : vector<2x128xf32>
    %c0_30 = arith.constant 0 : index
    %c0_31 = arith.constant 0 : index
    %70 = vector.load %arg7[%c0_30, %c0_31] : memref<2x128xf32, #tpu.memory_space<vmem>>, vector<2x128xf32>
    %71 = arith.mulf %69, %70 : vector<2x128xf32>
    %72 = arith.addf %65, %71 : vector<2x128xf32>
    %c0_32 = arith.constant 0 : index
    %c0_33 = arith.constant 0 : index
    %73 = vector.load %arg10[%c0_32, %c0_33] : memref<2x128xf32, #tpu.memory_space<vmem>>, vector<2x128xf32>
    tpu.vector_store %arg10[%c0_32, %c0_33], %65 {strides = array<i32>} : memref<2x128xf32, #tpu.memory_space<vmem>>, vector<2x128xf32>,
    %c0_34 = arith.constant 0 : index
    %c0_35 = arith.constant 0 : index
    %74 = vector.load %arg11[%c0_34, %c0_35] : memref<2x128xf32, #tpu.memory_space<vmem>>, vector<2x128xf32>
    tpu.vector_store %arg11[%c0_34, %c0_35], %66 {strides = array<i32>} : memref<2x128xf32, #tpu.memory_space<vmem>>, vector<2x128xf32>,
    %75 = arith.truncf %72 : vector<2x128xf32> to vector<2x128xbf16>
    %c0_36 = arith.constant 0 : index
    %c0_37 = arith.constant 0 : index
    %76 = vector.load %arg8[%c0_36, %c0_37] : memref<128x640xbf16, #tpu.memory_space<vmem>>, vector<128x640xbf16>
    %cst_38 = arith.constant dense<0.000000e+00> : vector<2x640xf32>
    %77 = tpu.matmul %75, %76, %cst_38 {dimension_numbers = #tpu.dot_dimension_numbers<[1], [0], [0], [1], [0, 0, 1, 1], [], []>} : vector<2x128xbf16>, vector<128x640xbf16>, vector<2x640xf32> -> vector<2x640xf32>
    %c0_39 = arith.constant 0 : index
    %c0_40 = arith.constant 0 : index
    %78 = vector.load %arg9[%c0_39, %c0_40] : memref<1x640xf32, #tpu.memory_space<vmem>>, vector<1x640xf32>
    %79 = vector.broadcast %78 : vector<1x640xf32> to vector<2x640xf32>
    %80 = arith.addf %77, %79 : vector<2x640xf32>
    %81 = arith.truncf %80 : vector<2x640xf32> to vector<2x640xbf16>
    %c0_41 = arith.constant 0 : index
    %c0_42 = arith.constant 0 : index
    %82 = vector.load %arg12[%c0_41, %c0_42] : memref<2x640xbf16, #tpu.memory_space<vmem>>, vector<2x640xbf16>
    tpu.vector_store %arg12[%c0_41, %c0_42], %81 {strides = array<i32>} : memref<2x640xbf16, #tpu.memory_space<vmem>>, vector<2x640xbf16>,
    return
  }
}

module attributes {stable_mosaic.version = 11 : i64} {
  func.func @_decoder_kernel(%arg0: memref<32x64xbf16, #tpu.memory_space<vmem>>, %arg1: memref<16x320xbf16, #tpu.memory_space<vmem>>, %arg2: memref<16x1xf32, #tpu.memory_space<vmem>>, %arg3: memref<16x320xbf16, #tpu.memory_space<vmem>>, %arg4: memref<16x1xf32, #tpu.memory_space<vmem>>, %arg5: memref<83x203xbf16, #tpu.memory_space<vmem>>, %arg6: memref<16x320xbf16, #tpu.memory_space<vmem>>, %arg7: memref<16x1xf32, #tpu.memory_space<vmem>>, %arg8: memref<184x405xbf16, #tpu.memory_space<vmem>>, %arg9: memref<16x640xbf16, #tpu.memory_space<vmem>>, %arg10: memref<16x1xf32, #tpu.memory_space<vmem>>, %arg11: memref<425x519xbf16, #tpu.memory_space<vmem>>, %arg12: memref<1x519xf32, #tpu.memory_space<vmem>>, %arg13: memref<32x500xf32, #tpu.memory_space<vmem>>) attributes {dimension_semantics = [], scalar_prefetch = 0 : i64, scratch_operands = 0 : i64, tpu.core_type = #tpu.core_type<tc>} {
    %c0 = arith.constant 0 : index
    %c0_0 = arith.constant 0 : index
    %0 = vector.load %arg0[%c0, %c0_0] : memref<32x64xbf16, #tpu.memory_space<vmem>>, vector<16x64xbf16>
    %cst = arith.constant 0.000000e+00 : bf16
    %1 = vector.broadcast %cst : bf16 to vector<16x19xbf16>
    %2 = tpu.concatenate %1, %0, %1 in 1 : vector<16x19xbf16>, vector<16x64xbf16>, vector<16x19xbf16> -> vector<16x102xbf16>
    %3 = vector.extract_strided_slice %2 {offsets = [0, 0], sizes = [16, 83], strides = [1, 1]} : vector<16x102xbf16> to vector<16x83xbf16>
    %4 = vector.extract_strided_slice %2 {offsets = [0, 1], sizes = [16, 83], strides = [1, 1]} : vector<16x102xbf16> to vector<16x83xbf16>
    %5 = vector.extract_strided_slice %2 {offsets = [0, 2], sizes = [16, 83], strides = [1, 1]} : vector<16x102xbf16> to vector<16x83xbf16>
    %6 = vector.extract_strided_slice %2 {offsets = [0, 3], sizes = [16, 83], strides = [1, 1]} : vector<16x102xbf16> to vector<16x83xbf16>
    %7 = vector.extract_strided_slice %2 {offsets = [0, 4], sizes = [16, 83], strides = [1, 1]} : vector<16x102xbf16> to vector<16x83xbf16>
    %8 = vector.extract_strided_slice %2 {offsets = [0, 5], sizes = [16, 83], strides = [1, 1]} : vector<16x102xbf16> to vector<16x83xbf16>
    %9 = vector.extract_strided_slice %2 {offsets = [0, 6], sizes = [16, 83], strides = [1, 1]} : vector<16x102xbf16> to vector<16x83xbf16>
    %10 = vector.extract_strided_slice %2 {offsets = [0, 7], sizes = [16, 83], strides = [1, 1]} : vector<16x102xbf16> to vector<16x83xbf16>
    %11 = vector.extract_strided_slice %2 {offsets = [0, 8], sizes = [16, 83], strides = [1, 1]} : vector<16x102xbf16> to vector<16x83xbf16>
    %12 = vector.extract_strided_slice %2 {offsets = [0, 9], sizes = [16, 83], strides = [1, 1]} : vector<16x102xbf16> to vector<16x83xbf16>
    %13 = vector.extract_strided_slice %2 {offsets = [0, 10], sizes = [16, 83], strides = [1, 1]} : vector<16x102xbf16> to vector<16x83xbf16>
    %14 = vector.extract_strided_slice %2 {offsets = [0, 11], sizes = [16, 83], strides = [1, 1]} : vector<16x102xbf16> to vector<16x83xbf16>
    %15 = vector.extract_strided_slice %2 {offsets = [0, 12], sizes = [16, 83], strides = [1, 1]} : vector<16x102xbf16> to vector<16x83xbf16>
    %16 = vector.extract_strided_slice %2 {offsets = [0, 13], sizes = [16, 83], strides = [1, 1]} : vector<16x102xbf16> to vector<16x83xbf16>
    %17 = vector.extract_strided_slice %2 {offsets = [0, 14], sizes = [16, 83], strides = [1, 1]} : vector<16x102xbf16> to vector<16x83xbf16>
    %18 = vector.extract_strided_slice %2 {offsets = [0, 15], sizes = [16, 83], strides = [1, 1]} : vector<16x102xbf16> to vector<16x83xbf16>
    %19 = vector.extract_strided_slice %2 {offsets = [0, 16], sizes = [16, 83], strides = [1, 1]} : vector<16x102xbf16> to vector<16x83xbf16>
    %20 = vector.extract_strided_slice %2 {offsets = [0, 17], sizes = [16, 83], strides = [1, 1]} : vector<16x102xbf16> to vector<16x83xbf16>
    %21 = vector.extract_strided_slice %2 {offsets = [0, 18], sizes = [16, 83], strides = [1, 1]} : vector<16x102xbf16> to vector<16x83xbf16>
    %22 = vector.extract_strided_slice %2 {offsets = [0, 19], sizes = [16, 83], strides = [1, 1]} : vector<16x102xbf16> to vector<16x83xbf16>
    %23 = tpu.concatenate %3, %4, %5, %6, %7, %8, %9, %10, %11, %12, %13, %14, %15, %16, %17, %18 in 0 : vector<16x83xbf16>, vector<16x83xbf16>, vector<16x83xbf16>, vector<16x83xbf16>, vector<16x83xbf16>, vector<16x83xbf16>, vector<16x83xbf16>, vector<16x83xbf16>, vector<16x83xbf16>, vector<16x83xbf16>, vector<16x83xbf16>, vector<16x83xbf16>, vector<16x83xbf16>, vector<16x83xbf16>, vector<16x83xbf16>, vector<16x83xbf16> -> vector<256x83xbf16>
    %24 = tpu.concatenate %19, %20, %21, %22 in 0 : vector<16x83xbf16>, vector<16x83xbf16>, vector<16x83xbf16>, vector<16x83xbf16> -> vector<64x83xbf16>
    %25 = tpu.concatenate %23, %24 in 0 : vector<256x83xbf16>, vector<64x83xbf16> -> vector<320x83xbf16>
    %c0_1 = arith.constant 0 : index
    %c0_2 = arith.constant 0 : index
    %26 = vector.load %arg1[%c0_1, %c0_2] : memref<16x320xbf16, #tpu.memory_space<vmem>>, vector<16x320xbf16>
    %cst_3 = arith.constant dense<0.000000e+00> : vector<16x83xf32>
    %27 = tpu.matmul %26, %25, %cst_3 {dimension_numbers = #tpu.dot_dimension_numbers<[1], [0], [0], [1], [0, 0, 1, 1], [], []>} : vector<16x320xbf16>, vector<320x83xbf16>, vector<16x83xf32> -> vector<16x83xf32>
    %c0_4 = arith.constant 0 : index
    %c0_5 = arith.constant 0 : index
    %28 = vector.load %arg2[%c0_4, %c0_5] : memref<16x1xf32, #tpu.memory_space<vmem>>, vector<16x1xf32>
    %29 = vector.broadcast %28 : vector<16x1xf32> to vector<16x83xf32>
    %30 = arith.addf %27, %29 : vector<16x83xf32>
    %cst_6 = arith.constant 0.000000e+00 : f32
    %31 = vector.broadcast %cst_6 : f32 to vector<16x83xf32>
    %32 = arith.cmpf ogt, %30, %31 : vector<16x83xf32>
    %cst_7 = arith.constant 2.500000e-01 : f32
    %33 = vector.broadcast %cst_7 : f32 to vector<16x83xf32>
    %34 = arith.mulf %33, %30 : vector<16x83xf32>
    %35 = arith.select %32, %30, %34 : vector<16x83xi1>, vector<16x83xf32>
    %36 = arith.truncf %35 : vector<16x83xf32> to vector<16x83xbf16>
    %c0_8 = arith.constant 0 : index
    %c0_9 = arith.constant 0 : index
    %37 = vector.load %arg5[%c0_8, %c0_9] : memref<83x203xbf16, #tpu.memory_space<vmem>>, vector<83x203xbf16>
    %cst_10 = arith.constant dense<0.000000e+00> : vector<16x203xf32>
    %38 = tpu.matmul %36, %37, %cst_10 {dimension_numbers = #tpu.dot_dimension_numbers<[1], [0], [0], [1], [0, 0, 1, 1], [], []>} : vector<16x83xbf16>, vector<83x203xbf16>, vector<16x203xf32> -> vector<16x203xf32>
    %39 = arith.truncf %38 : vector<16x203xf32> to vector<16x203xbf16>
    %40 = vector.extract_strided_slice %39 {offsets = [0, 0], sizes = [16, 184], strides = [1, 1]} : vector<16x203xbf16> to vector<16x184xbf16>
    %41 = vector.extract_strided_slice %39 {offsets = [0, 1], sizes = [16, 184], strides = [1, 1]} : vector<16x203xbf16> to vector<16x184xbf16>
    %42 = vector.extract_strided_slice %39 {offsets = [0, 2], sizes = [16, 184], strides = [1, 1]} : vector<16x203xbf16> to vector<16x184xbf16>
    %43 = vector.extract_strided_slice %39 {offsets = [0, 3], sizes = [16, 184], strides = [1, 1]} : vector<16x203xbf16> to vector<16x184xbf16>
    %44 = vector.extract_strided_slice %39 {offsets = [0, 4], sizes = [16, 184], strides = [1, 1]} : vector<16x203xbf16> to vector<16x184xbf16>
    %45 = vector.extract_strided_slice %39 {offsets = [0, 5], sizes = [16, 184], strides = [1, 1]} : vector<16x203xbf16> to vector<16x184xbf16>
    %46 = vector.extract_strided_slice %39 {offsets = [0, 6], sizes = [16, 184], strides = [1, 1]} : vector<16x203xbf16> to vector<16x184xbf16>
    %47 = vector.extract_strided_slice %39 {offsets = [0, 7], sizes = [16, 184], strides = [1, 1]} : vector<16x203xbf16> to vector<16x184xbf16>
    %48 = vector.extract_strided_slice %39 {offsets = [0, 8], sizes = [16, 184], strides = [1, 1]} : vector<16x203xbf16> to vector<16x184xbf16>
    %49 = vector.extract_strided_slice %39 {offsets = [0, 9], sizes = [16, 184], strides = [1, 1]} : vector<16x203xbf16> to vector<16x184xbf16>
    %50 = vector.extract_strided_slice %39 {offsets = [0, 10], sizes = [16, 184], strides = [1, 1]} : vector<16x203xbf16> to vector<16x184xbf16>
    %51 = vector.extract_strided_slice %39 {offsets = [0, 11], sizes = [16, 184], strides = [1, 1]} : vector<16x203xbf16> to vector<16x184xbf16>
    %52 = vector.extract_strided_slice %39 {offsets = [0, 12], sizes = [16, 184], strides = [1, 1]} : vector<16x203xbf16> to vector<16x184xbf16>
    %53 = vector.extract_strided_slice %39 {offsets = [0, 13], sizes = [16, 184], strides = [1, 1]} : vector<16x203xbf16> to vector<16x184xbf16>
    %54 = vector.extract_strided_slice %39 {offsets = [0, 14], sizes = [16, 184], strides = [1, 1]} : vector<16x203xbf16> to vector<16x184xbf16>
    %55 = vector.extract_strided_slice %39 {offsets = [0, 15], sizes = [16, 184], strides = [1, 1]} : vector<16x203xbf16> to vector<16x184xbf16>
    %56 = vector.extract_strided_slice %39 {offsets = [0, 16], sizes = [16, 184], strides = [1, 1]} : vector<16x203xbf16> to vector<16x184xbf16>
    %57 = vector.extract_strided_slice %39 {offsets = [0, 17], sizes = [16, 184], strides = [1, 1]} : vector<16x203xbf16> to vector<16x184xbf16>
    %58 = vector.extract_strided_slice %39 {offsets = [0, 18], sizes = [16, 184], strides = [1, 1]} : vector<16x203xbf16> to vector<16x184xbf16>
    %59 = vector.extract_strided_slice %39 {offsets = [0, 19], sizes = [16, 184], strides = [1, 1]} : vector<16x203xbf16> to vector<16x184xbf16>
    %60 = tpu.concatenate %40, %41, %42, %43, %44, %45, %46, %47, %48, %49, %50, %51, %52, %53, %54, %55 in 0 : vector<16x184xbf16>, vector<16x184xbf16>, vector<16x184xbf16>, vector<16x184xbf16>, vector<16x184xbf16>, vector<16x184xbf16>, vector<16x184xbf16>, vector<16x184xbf16>, vector<16x184xbf16>, vector<16x184xbf16>, vector<16x184xbf16>, vector<16x184xbf16>, vector<16x184xbf16>, vector<16x184xbf16>, vector<16x184xbf16>, vector<16x184xbf16> -> vector<256x184xbf16>
    %61 = tpu.concatenate %56, %57, %58, %59 in 0 : vector<16x184xbf16>, vector<16x184xbf16>, vector<16x184xbf16>, vector<16x184xbf16> -> vector<64x184xbf16>
    %62 = tpu.concatenate %60, %61 in 0 : vector<256x184xbf16>, vector<64x184xbf16> -> vector<320x184xbf16>
    %c0_11 = arith.constant 0 : index
    %c0_12 = arith.constant 0 : index
    %63 = vector.load %arg3[%c0_11, %c0_12] : memref<16x320xbf16, #tpu.memory_space<vmem>>, vector<16x320xbf16>
    %cst_13 = arith.constant dense<0.000000e+00> : vector<16x184xf32>
    %64 = tpu.matmul %63, %62, %cst_13 {dimension_numbers = #tpu.dot_dimension_numbers<[1], [0], [0], [1], [0, 0, 1, 1], [], []>} : vector<16x320xbf16>, vector<320x184xbf16>, vector<16x184xf32> -> vector<16x184xf32>
    %c0_14 = arith.constant 0 : index
    %c0_15 = arith.constant 0 : index
    %65 = vector.load %arg4[%c0_14, %c0_15] : memref<16x1xf32, #tpu.memory_space<vmem>>, vector<16x1xf32>
    %66 = vector.broadcast %65 : vector<16x1xf32> to vector<16x184xf32>
    %67 = arith.addf %64, %66 : vector<16x184xf32>
    %cst_16 = arith.constant 0.000000e+00 : f32
    %68 = vector.broadcast %cst_16 : f32 to vector<16x184xf32>
    %69 = arith.cmpf ogt, %67, %68 : vector<16x184xf32>
    %cst_17 = arith.constant 2.500000e-01 : f32
    %70 = vector.broadcast %cst_17 : f32 to vector<16x184xf32>
    %71 = arith.mulf %70, %67 : vector<16x184xf32>
    %72 = arith.select %69, %67, %71 : vector<16x184xi1>, vector<16x184xf32>
    %73 = arith.truncf %72 : vector<16x184xf32> to vector<16x184xbf16>
    %c0_18 = arith.constant 0 : index
    %c0_19 = arith.constant 0 : index
    %74 = vector.load %arg8[%c0_18, %c0_19] : memref<184x405xbf16, #tpu.memory_space<vmem>>, vector<184x405xbf16>
    %cst_20 = arith.constant dense<0.000000e+00> : vector<16x405xf32>
    %75 = tpu.matmul %73, %74, %cst_20 {dimension_numbers = #tpu.dot_dimension_numbers<[1], [0], [0], [1], [0, 0, 1, 1], [], []>} : vector<16x184xbf16>, vector<184x405xbf16>, vector<16x405xf32> -> vector<16x405xf32>
    %76 = arith.truncf %75 : vector<16x405xf32> to vector<16x405xbf16>
    %77 = vector.extract_strided_slice %76 {offsets = [0, 0], sizes = [16, 386], strides = [1, 1]} : vector<16x405xbf16> to vector<16x386xbf16>
    %78 = vector.extract_strided_slice %76 {offsets = [0, 1], sizes = [16, 386], strides = [1, 1]} : vector<16x405xbf16> to vector<16x386xbf16>
    %79 = vector.extract_strided_slice %76 {offsets = [0, 2], sizes = [16, 386], strides = [1, 1]} : vector<16x405xbf16> to vector<16x386xbf16>
    %80 = vector.extract_strided_slice %76 {offsets = [0, 3], sizes = [16, 386], strides = [1, 1]} : vector<16x405xbf16> to vector<16x386xbf16>
    %81 = vector.extract_strided_slice %76 {offsets = [0, 4], sizes = [16, 386], strides = [1, 1]} : vector<16x405xbf16> to vector<16x386xbf16>
    %82 = vector.extract_strided_slice %76 {offsets = [0, 5], sizes = [16, 386], strides = [1, 1]} : vector<16x405xbf16> to vector<16x386xbf16>
    %83 = vector.extract_strided_slice %76 {offsets = [0, 6], sizes = [16, 386], strides = [1, 1]} : vector<16x405xbf16> to vector<16x386xbf16>
    %84 = vector.extract_strided_slice %76 {offsets = [0, 7], sizes = [16, 386], strides = [1, 1]} : vector<16x405xbf16> to vector<16x386xbf16>
    %85 = vector.extract_strided_slice %76 {offsets = [0, 8], sizes = [16, 386], strides = [1, 1]} : vector<16x405xbf16> to vector<16x386xbf16>
    %86 = vector.extract_strided_slice %76 {offsets = [0, 9], sizes = [16, 386], strides = [1, 1]} : vector<16x405xbf16> to vector<16x386xbf16>
    %87 = vector.extract_strided_slice %76 {offsets = [0, 10], sizes = [16, 386], strides = [1, 1]} : vector<16x405xbf16> to vector<16x386xbf16>
    %88 = vector.extract_strided_slice %76 {offsets = [0, 11], sizes = [16, 386], strides = [1, 1]} : vector<16x405xbf16> to vector<16x386xbf16>
    %89 = vector.extract_strided_slice %76 {offsets = [0, 12], sizes = [16, 386], strides = [1, 1]} : vector<16x405xbf16> to vector<16x386xbf16>
    %90 = vector.extract_strided_slice %76 {offsets = [0, 13], sizes = [16, 386], strides = [1, 1]} : vector<16x405xbf16> to vector<16x386xbf16>
    %91 = vector.extract_strided_slice %76 {offsets = [0, 14], sizes = [16, 386], strides = [1, 1]} : vector<16x405xbf16> to vector<16x386xbf16>
    %92 = vector.extract_strided_slice %76 {offsets = [0, 15], sizes = [16, 386], strides = [1, 1]} : vector<16x405xbf16> to vector<16x386xbf16>
    %93 = vector.extract_strided_slice %76 {offsets = [0, 16], sizes = [16, 386], strides = [1, 1]} : vector<16x405xbf16> to vector<16x386xbf16>
    %94 = vector.extract_strided_slice %76 {offsets = [0, 17], sizes = [16, 386], strides = [1, 1]} : vector<16x405xbf16> to vector<16x386xbf16>
    %95 = vector.extract_strided_slice %76 {offsets = [0, 18], sizes = [16, 386], strides = [1, 1]} : vector<16x405xbf16> to vector<16x386xbf16>
    %96 = vector.extract_strided_slice %76 {offsets = [0, 19], sizes = [16, 386], strides = [1, 1]} : vector<16x405xbf16> to vector<16x386xbf16>
    %97 = tpu.concatenate %77, %78, %79, %80, %81, %82, %83, %84, %85, %86, %87, %88, %89, %90, %91, %92 in 0 : vector<16x386xbf16>, vector<16x386xbf16>, vector<16x386xbf16>, vector<16x386xbf16>, vector<16x386xbf16>, vector<16x386xbf16>, vector<16x386xbf16>, vector<16x386xbf16>, vector<16x386xbf16>, vector<16x386xbf16>, vector<16x386xbf16>, vector<16x386xbf16>, vector<16x386xbf16>, vector<16x386xbf16>, vector<16x386xbf16>, vector<16x386xbf16> -> vector<256x386xbf16>
    %98 = tpu.concatenate %93, %94, %95, %96 in 0 : vector<16x386xbf16>, vector<16x386xbf16>, vector<16x386xbf16>, vector<16x386xbf16> -> vector<64x386xbf16>
    %99 = tpu.concatenate %97, %98 in 0 : vector<256x386xbf16>, vector<64x386xbf16> -> vector<320x386xbf16>
    %c0_21 = arith.constant 0 : index
    %c0_22 = arith.constant 0 : index
    %100 = vector.load %arg6[%c0_21, %c0_22] : memref<16x320xbf16, #tpu.memory_space<vmem>>, vector<16x320xbf16>
    %cst_23 = arith.constant dense<0.000000e+00> : vector<16x386xf32>
    %101 = tpu.matmul %100, %99, %cst_23 {dimension_numbers = #tpu.dot_dimension_numbers<[1], [0], [0], [1], [0, 0, 1, 1], [], []>} : vector<16x320xbf16>, vector<320x386xbf16>, vector<16x386xf32> -> vector<16x386xf32>
    %c0_24 = arith.constant 0 : index
    %c0_25 = arith.constant 0 : index
    %102 = vector.load %arg7[%c0_24, %c0_25] : memref<16x1xf32, #tpu.memory_space<vmem>>, vector<16x1xf32>
    %103 = vector.broadcast %102 : vector<16x1xf32> to vector<16x386xf32>
    %104 = arith.addf %101, %103 : vector<16x386xf32>
    %cst_26 = arith.constant 0.000000e+00 : f32
    %105 = vector.broadcast %cst_26 : f32 to vector<16x386xf32>
    %106 = arith.cmpf ogt, %104, %105 : vector<16x386xf32>
    %cst_27 = arith.constant 2.500000e-01 : f32
    %107 = vector.broadcast %cst_27 : f32 to vector<16x386xf32>
    %108 = arith.mulf %107, %104 : vector<16x386xf32>
    %109 = arith.select %106, %104, %108 : vector<16x386xi1>, vector<16x386xf32>
    %110 = arith.truncf %109 : vector<16x386xf32> to vector<16x386xbf16>
    %cst_28 = arith.constant 0.000000e+00 : bf16
    %111 = vector.broadcast %cst_28 : bf16 to vector<16x39xbf16>
    %112 = tpu.concatenate %111, %110, %111 in 1 : vector<16x39xbf16>, vector<16x386xbf16>, vector<16x39xbf16> -> vector<16x464xbf16>
    %113 = vector.extract_strided_slice %112 {offsets = [0, 0], sizes = [16, 425], strides = [1, 1]} : vector<16x464xbf16> to vector<16x425xbf16>
    %114 = vector.extract_strided_slice %112 {offsets = [0, 1], sizes = [16, 425], strides = [1, 1]} : vector<16x464xbf16> to vector<16x425xbf16>
    %115 = vector.extract_strided_slice %112 {offsets = [0, 2], sizes = [16, 425], strides = [1, 1]} : vector<16x464xbf16> to vector<16x425xbf16>
    %116 = vector.extract_strided_slice %112 {offsets = [0, 3], sizes = [16, 425], strides = [1, 1]} : vector<16x464xbf16> to vector<16x425xbf16>
    %117 = vector.extract_strided_slice %112 {offsets = [0, 4], sizes = [16, 425], strides = [1, 1]} : vector<16x464xbf16> to vector<16x425xbf16>
    %118 = vector.extract_strided_slice %112 {offsets = [0, 5], sizes = [16, 425], strides = [1, 1]} : vector<16x464xbf16> to vector<16x425xbf16>
    %119 = vector.extract_strided_slice %112 {offsets = [0, 6], sizes = [16, 425], strides = [1, 1]} : vector<16x464xbf16> to vector<16x425xbf16>
    %120 = vector.extract_strided_slice %112 {offsets = [0, 7], sizes = [16, 425], strides = [1, 1]} : vector<16x464xbf16> to vector<16x425xbf16>
    %121 = vector.extract_strided_slice %112 {offsets = [0, 8], sizes = [16, 425], strides = [1, 1]} : vector<16x464xbf16> to vector<16x425xbf16>
    %122 = vector.extract_strided_slice %112 {offsets = [0, 9], sizes = [16, 425], strides = [1, 1]} : vector<16x464xbf16> to vector<16x425xbf16>
    %123 = vector.extract_strided_slice %112 {offsets = [0, 10], sizes = [16, 425], strides = [1, 1]} : vector<16x464xbf16> to vector<16x425xbf16>
    %124 = vector.extract_strided_slice %112 {offsets = [0, 11], sizes = [16, 425], strides = [1, 1]} : vector<16x464xbf16> to vector<16x425xbf16>
    %125 = vector.extract_strided_slice %112 {offsets = [0, 12], sizes = [16, 425], strides = [1, 1]} : vector<16x464xbf16> to vector<16x425xbf16>
    %126 = vector.extract_strided_slice %112 {offsets = [0, 13], sizes = [16, 425], strides = [1, 1]} : vector<16x464xbf16> to vector<16x425xbf16>
    %127 = vector.extract_strided_slice %112 {offsets = [0, 14], sizes = [16, 425], strides = [1, 1]} : vector<16x464xbf16> to vector<16x425xbf16>
    %128 = vector.extract_strided_slice %112 {offsets = [0, 15], sizes = [16, 425], strides = [1, 1]} : vector<16x464xbf16> to vector<16x425xbf16>
    %129 = vector.extract_strided_slice %112 {offsets = [0, 16], sizes = [16, 425], strides = [1, 1]} : vector<16x464xbf16> to vector<16x425xbf16>
    %130 = vector.extract_strided_slice %112 {offsets = [0, 17], sizes = [16, 425], strides = [1, 1]} : vector<16x464xbf16> to vector<16x425xbf16>
    %131 = vector.extract_strided_slice %112 {offsets = [0, 18], sizes = [16, 425], strides = [1, 1]} : vector<16x464xbf16> to vector<16x425xbf16>
    %132 = vector.extract_strided_slice %112 {offsets = [0, 19], sizes = [16, 425], strides = [1, 1]} : vector<16x464xbf16> to vector<16x425xbf16>
    %133 = vector.extract_strided_slice %112 {offsets = [0, 20], sizes = [16, 425], strides = [1, 1]} : vector<16x464xbf16> to vector<16x425xbf16>
    %134 = vector.extract_strided_slice %112 {offsets = [0, 21], sizes = [16, 425], strides = [1, 1]} : vector<16x464xbf16> to vector<16x425xbf16>
    %135 = vector.extract_strided_slice %112 {offsets = [0, 22], sizes = [16, 425], strides = [1, 1]} : vector<16x464xbf16> to vector<16x425xbf16>
    %136 = vector.extract_strided_slice %112 {offsets = [0, 23], sizes = [16, 425], strides = [1, 1]} : vector<16x464xbf16> to vector<16x425xbf16>
    %137 = vector.extract_strided_slice %112 {offsets = [0, 24], sizes = [16, 425], strides = [1, 1]} : vector<16x464xbf16> to vector<16x425xbf16>
    %138 = vector.extract_strided_slice %112 {offsets = [0, 25], sizes = [16, 425], strides = [1, 1]} : vector<16x464xbf16> to vector<16x425xbf16>
    %139 = vector.extract_strided_slice %112 {offsets = [0, 26], sizes = [16, 425], strides = [1, 1]} : vector<16x464xbf16> to vector<16x425xbf16>
    %140 = vector.extract_strided_slice %112 {offsets = [0, 27], sizes = [16, 425], strides = [1, 1]} : vector<16x464xbf16> to vector<16x425xbf16>
    %141 = vector.extract_strided_slice %112 {offsets = [0, 28], sizes = [16, 425], strides = [1, 1]} : vector<16x464xbf16> to vector<16x425xbf16>
    %142 = vector.extract_strided_slice %112 {offsets = [0, 29], sizes = [16, 425], strides = [1, 1]} : vector<16x464xbf16> to vector<16x425xbf16>
    %143 = vector.extract_strided_slice %112 {offsets = [0, 30], sizes = [16, 425], strides = [1, 1]} : vector<16x464xbf16> to vector<16x425xbf16>
    %144 = vector.extract_strided_slice %112 {offsets = [0, 31], sizes = [16, 425], strides = [1, 1]} : vector<16x464xbf16> to vector<16x425xbf16>
    %145 = vector.extract_strided_slice %112 {offsets = [0, 32], sizes = [16, 425], strides = [1, 1]} : vector<16x464xbf16> to vector<16x425xbf16>
    %146 = vector.extract_strided_slice %112 {offsets = [0, 33], sizes = [16, 425], strides = [1, 1]} : vector<16x464xbf16> to vector<16x425xbf16>
    %147 = vector.extract_strided_slice %112 {offsets = [0, 34], sizes = [16, 425], strides = [1, 1]} : vector<16x464xbf16> to vector<16x425xbf16>
    %148 = vector.extract_strided_slice %112 {offsets = [0, 35], sizes = [16, 425], strides = [1, 1]} : vector<16x464xbf16> to vector<16x425xbf16>
    %149 = vector.extract_strided_slice %112 {offsets = [0, 36], sizes = [16, 425], strides = [1, 1]} : vector<16x464xbf16> to vector<16x425xbf16>
    %150 = vector.extract_strided_slice %112 {offsets = [0, 37], sizes = [16, 425], strides = [1, 1]} : vector<16x464xbf16> to vector<16x425xbf16>
    %151 = vector.extract_strided_slice %112 {offsets = [0, 38], sizes = [16, 425], strides = [1, 1]} : vector<16x464xbf16> to vector<16x425xbf16>
    %152 = vector.extract_strided_slice %112 {offsets = [0, 39], sizes = [16, 425], strides = [1, 1]} : vector<16x464xbf16> to vector<16x425xbf16>
    %153 = tpu.concatenate %113, %114, %115, %116, %117, %118, %119, %120, %121, %122, %123, %124, %125, %126, %127, %128 in 0 : vector<16x425xbf16>, vector<16x425xbf16>, vector<16x425xbf16>, vector<16x425xbf16>, vector<16x425xbf16>, vector<16x425xbf16>, vector<16x425xbf16>, vector<16x425xbf16>, vector<16x425xbf16>, vector<16x425xbf16>, vector<16x425xbf16>, vector<16x425xbf16>, vector<16x425xbf16>, vector<16x425xbf16>, vector<16x425xbf16>, vector<16x425xbf16> -> vector<256x425xbf16>
    %154 = tpu.concatenate %129, %130, %131, %132, %133, %134, %135, %136, %137, %138, %139, %140, %141, %142, %143, %144 in 0 : vector<16x425xbf16>, vector<16x425xbf16>, vector<16x425xbf16>, vector<16x425xbf16>, vector<16x425xbf16>, vector<16x425xbf16>, vector<16x425xbf16>, vector<16x425xbf16>, vector<16x425xbf16>, vector<16x425xbf16>, vector<16x425xbf16>, vector<16x425xbf16>, vector<16x425xbf16>, vector<16x425xbf16>, vector<16x425xbf16>, vector<16x425xbf16> -> vector<256x425xbf16>
    %155 = tpu.concatenate %145, %146, %147, %148, %149, %150, %151, %152 in 0 : vector<16x425xbf16>, vector<16x425xbf16>, vector<16x425xbf16>, vector<16x425xbf16>, vector<16x425xbf16>, vector<16x425xbf16>, vector<16x425xbf16>, vector<16x425xbf16> -> vector<128x425xbf16>
    %156 = tpu.concatenate %153, %154, %155 in 0 : vector<256x425xbf16>, vector<256x425xbf16>, vector<128x425xbf16> -> vector<640x425xbf16>
    %c0_29 = arith.constant 0 : index
    %c0_30 = arith.constant 0 : index
    %157 = vector.load %arg9[%c0_29, %c0_30] : memref<16x640xbf16, #tpu.memory_space<vmem>>, vector<16x640xbf16>
    %cst_31 = arith.constant dense<0.000000e+00> : vector<16x425xf32>
    %158 = tpu.matmul %157, %156, %cst_31 {dimension_numbers = #tpu.dot_dimension_numbers<[1], [0], [0], [1], [0, 0, 1, 1], [], []>} : vector<16x640xbf16>, vector<640x425xbf16>, vector<16x425xf32> -> vector<16x425xf32>
    %c0_32 = arith.constant 0 : index
    %c0_33 = arith.constant 0 : index
    %159 = vector.load %arg10[%c0_32, %c0_33] : memref<16x1xf32, #tpu.memory_space<vmem>>, vector<16x1xf32>
    %160 = vector.broadcast %159 : vector<16x1xf32> to vector<16x425xf32>
    %161 = arith.addf %158, %160 : vector<16x425xf32>
    %162 = arith.truncf %161 : vector<16x425xf32> to vector<16x425xbf16>
    %c0_34 = arith.constant 0 : index
    %c0_35 = arith.constant 0 : index
    %163 = vector.load %arg11[%c0_34, %c0_35] : memref<425x519xbf16, #tpu.memory_space<vmem>>, vector<425x519xbf16>
    %cst_36 = arith.constant dense<0.000000e+00> : vector<16x519xf32>
    %164 = tpu.matmul %162, %163, %cst_36 {dimension_numbers = #tpu.dot_dimension_numbers<[1], [0], [0], [1], [0, 0, 1, 1], [], []>} : vector<16x425xbf16>, vector<425x519xbf16>, vector<16x519xf32> -> vector<16x519xf32>
    %c0_37 = arith.constant 0 : index
    %c0_38 = arith.constant 0 : index
    %165 = vector.load %arg12[%c0_37, %c0_38] : memref<1x519xf32, #tpu.memory_space<vmem>>, vector<1x519xf32>
    %166 = vector.broadcast %165 : vector<1x519xf32> to vector<16x519xf32>
    %167 = arith.addf %164, %166 : vector<16x519xf32>
    %cst_39 = arith.constant 0.000000e+00 : f32
    %168 = vector.broadcast %cst_39 : f32 to vector<16x519xf32>
    %169 = arith.subf %168, %167 : vector<16x519xf32>
    %170 = math.exp %169 : vector<16x519xf32>
    %cst_40 = arith.constant 1.000000e+00 : f32
    %171 = vector.broadcast %cst_40 : f32 to vector<16x519xf32>
    %172 = arith.addf %171, %170 : vector<16x519xf32>
    %cst_41 = arith.constant 1.000000e+00 : f32
    %173 = vector.broadcast %cst_41 : f32 to vector<16x519xf32>
    %174 = arith.divf %173, %172 : vector<16x519xf32>
    %175 = vector.extract_strided_slice %174 {offsets = [0, 0], sizes = [16, 500], strides = [1, 1]} : vector<16x519xf32> to vector<16x500xf32>
    %176 = vector.extract_strided_slice %174 {offsets = [0, 1], sizes = [16, 500], strides = [1, 1]} : vector<16x519xf32> to vector<16x500xf32>
    %177 = arith.addf %175, %176 : vector<16x500xf32>
    %178 = vector.extract_strided_slice %174 {offsets = [0, 2], sizes = [16, 500], strides = [1, 1]} : vector<16x519xf32> to vector<16x500xf32>
    %179 = arith.addf %177, %178 : vector<16x500xf32>
    %180 = vector.extract_strided_slice %174 {offsets = [0, 3], sizes = [16, 500], strides = [1, 1]} : vector<16x519xf32> to vector<16x500xf32>
    %181 = arith.addf %179, %180 : vector<16x500xf32>
    %182 = vector.extract_strided_slice %174 {offsets = [0, 4], sizes = [16, 500], strides = [1, 1]} : vector<16x519xf32> to vector<16x500xf32>
    %183 = arith.addf %181, %182 : vector<16x500xf32>
    %184 = vector.extract_strided_slice %174 {offsets = [0, 5], sizes = [16, 500], strides = [1, 1]} : vector<16x519xf32> to vector<16x500xf32>
    %185 = arith.addf %183, %184 : vector<16x500xf32>
    %186 = vector.extract_strided_slice %174 {offsets = [0, 6], sizes = [16, 500], strides = [1, 1]} : vector<16x519xf32> to vector<16x500xf32>
    %187 = arith.addf %185, %186 : vector<16x500xf32>
    %188 = vector.extract_strided_slice %174 {offsets = [0, 7], sizes = [16, 500], strides = [1, 1]} : vector<16x519xf32> to vector<16x500xf32>
    %189 = arith.addf %187, %188 : vector<16x500xf32>
    %190 = vector.extract_strided_slice %174 {offsets = [0, 8], sizes = [16, 500], strides = [1, 1]} : vector<16x519xf32> to vector<16x500xf32>
    %191 = arith.addf %189, %190 : vector<16x500xf32>
    %192 = vector.extract_strided_slice %174 {offsets = [0, 9], sizes = [16, 500], strides = [1, 1]} : vector<16x519xf32> to vector<16x500xf32>
    %193 = arith.addf %191, %192 : vector<16x500xf32>
    %194 = vector.extract_strided_slice %174 {offsets = [0, 10], sizes = [16, 500], strides = [1, 1]} : vector<16x519xf32> to vector<16x500xf32>
    %195 = arith.addf %193, %194 : vector<16x500xf32>
    %196 = vector.extract_strided_slice %174 {offsets = [0, 11], sizes = [16, 500], strides = [1, 1]} : vector<16x519xf32> to vector<16x500xf32>
    %197 = arith.addf %195, %196 : vector<16x500xf32>
    %198 = vector.extract_strided_slice %174 {offsets = [0, 12], sizes = [16, 500], strides = [1, 1]} : vector<16x519xf32> to vector<16x500xf32>
    %199 = arith.addf %197, %198 : vector<16x500xf32>
    %200 = vector.extract_strided_slice %174 {offsets = [0, 13], sizes = [16, 500], strides = [1, 1]} : vector<16x519xf32> to vector<16x500xf32>
    %201 = arith.addf %199, %200 : vector<16x500xf32>
    %202 = vector.extract_strided_slice %174 {offsets = [0, 14], sizes = [16, 500], strides = [1, 1]} : vector<16x519xf32> to vector<16x500xf32>
    %203 = arith.addf %201, %202 : vector<16x500xf32>
    %204 = vector.extract_strided_slice %174 {offsets = [0, 15], sizes = [16, 500], strides = [1, 1]} : vector<16x519xf32> to vector<16x500xf32>
    %205 = arith.addf %203, %204 : vector<16x500xf32>
    %206 = vector.extract_strided_slice %174 {offsets = [0, 16], sizes = [16, 500], strides = [1, 1]} : vector<16x519xf32> to vector<16x500xf32>
    %207 = arith.addf %205, %206 : vector<16x500xf32>
    %208 = vector.extract_strided_slice %174 {offsets = [0, 17], sizes = [16, 500], strides = [1, 1]} : vector<16x519xf32> to vector<16x500xf32>
    %209 = arith.addf %207, %208 : vector<16x500xf32>
    %210 = vector.extract_strided_slice %174 {offsets = [0, 18], sizes = [16, 500], strides = [1, 1]} : vector<16x519xf32> to vector<16x500xf32>
    %211 = arith.addf %209, %210 : vector<16x500xf32>
    %212 = vector.extract_strided_slice %174 {offsets = [0, 19], sizes = [16, 500], strides = [1, 1]} : vector<16x519xf32> to vector<16x500xf32>
    %213 = arith.addf %211, %212 : vector<16x500xf32>
    %cst_42 = arith.constant 5.000000e-02 : f32
    %214 = vector.broadcast %cst_42 : f32 to vector<16x500xf32>
    %215 = arith.mulf %213, %214 : vector<16x500xf32>
    %c0_43 = arith.constant 0 : index
    %c0_44 = arith.constant 0 : index
    %216 = vector.load %arg13[%c0_43, %c0_44] : memref<32x500xf32, #tpu.memory_space<vmem>>, vector<16x500xf32>
    tpu.vector_store %arg13[%c0_43, %c0_44], %215 {strides = array<i32>} : memref<32x500xf32, #tpu.memory_space<vmem>>, vector<16x500xf32>,
    %c16 = arith.constant 16 : index
    %c0_45 = arith.constant 0 : index
    %217 = vector.load %arg0[%c16, %c0_45] : memref<32x64xbf16, #tpu.memory_space<vmem>>, vector<16x64xbf16>
    %cst_46 = arith.constant 0.000000e+00 : bf16
    %218 = vector.broadcast %cst_46 : bf16 to vector<16x19xbf16>
    %219 = tpu.concatenate %218, %217, %218 in 1 : vector<16x19xbf16>, vector<16x64xbf16>, vector<16x19xbf16> -> vector<16x102xbf16>
    %220 = vector.extract_strided_slice %219 {offsets = [0, 0], sizes = [16, 83], strides = [1, 1]} : vector<16x102xbf16> to vector<16x83xbf16>
    %221 = vector.extract_strided_slice %219 {offsets = [0, 1], sizes = [16, 83], strides = [1, 1]} : vector<16x102xbf16> to vector<16x83xbf16>
    %222 = vector.extract_strided_slice %219 {offsets = [0, 2], sizes = [16, 83], strides = [1, 1]} : vector<16x102xbf16> to vector<16x83xbf16>
    %223 = vector.extract_strided_slice %219 {offsets = [0, 3], sizes = [16, 83], strides = [1, 1]} : vector<16x102xbf16> to vector<16x83xbf16>
    %224 = vector.extract_strided_slice %219 {offsets = [0, 4], sizes = [16, 83], strides = [1, 1]} : vector<16x102xbf16> to vector<16x83xbf16>
    %225 = vector.extract_strided_slice %219 {offsets = [0, 5], sizes = [16, 83], strides = [1, 1]} : vector<16x102xbf16> to vector<16x83xbf16>
    %226 = vector.extract_strided_slice %219 {offsets = [0, 6], sizes = [16, 83], strides = [1, 1]} : vector<16x102xbf16> to vector<16x83xbf16>
    %227 = vector.extract_strided_slice %219 {offsets = [0, 7], sizes = [16, 83], strides = [1, 1]} : vector<16x102xbf16> to vector<16x83xbf16>
    %228 = vector.extract_strided_slice %219 {offsets = [0, 8], sizes = [16, 83], strides = [1, 1]} : vector<16x102xbf16> to vector<16x83xbf16>
    %229 = vector.extract_strided_slice %219 {offsets = [0, 9], sizes = [16, 83], strides = [1, 1]} : vector<16x102xbf16> to vector<16x83xbf16>
    %230 = vector.extract_strided_slice %219 {offsets = [0, 10], sizes = [16, 83], strides = [1, 1]} : vector<16x102xbf16> to vector<16x83xbf16>
    %231 = vector.extract_strided_slice %219 {offsets = [0, 11], sizes = [16, 83], strides = [1, 1]} : vector<16x102xbf16> to vector<16x83xbf16>
    %232 = vector.extract_strided_slice %219 {offsets = [0, 12], sizes = [16, 83], strides = [1, 1]} : vector<16x102xbf16> to vector<16x83xbf16>
    %233 = vector.extract_strided_slice %219 {offsets = [0, 13], sizes = [16, 83], strides = [1, 1]} : vector<16x102xbf16> to vector<16x83xbf16>
    %234 = vector.extract_strided_slice %219 {offsets = [0, 14], sizes = [16, 83], strides = [1, 1]} : vector<16x102xbf16> to vector<16x83xbf16>
    %235 = vector.extract_strided_slice %219 {offsets = [0, 15], sizes = [16, 83], strides = [1, 1]} : vector<16x102xbf16> to vector<16x83xbf16>
    %236 = vector.extract_strided_slice %219 {offsets = [0, 16], sizes = [16, 83], strides = [1, 1]} : vector<16x102xbf16> to vector<16x83xbf16>
    %237 = vector.extract_strided_slice %219 {offsets = [0, 17], sizes = [16, 83], strides = [1, 1]} : vector<16x102xbf16> to vector<16x83xbf16>
    %238 = vector.extract_strided_slice %219 {offsets = [0, 18], sizes = [16, 83], strides = [1, 1]} : vector<16x102xbf16> to vector<16x83xbf16>
    %239 = vector.extract_strided_slice %219 {offsets = [0, 19], sizes = [16, 83], strides = [1, 1]} : vector<16x102xbf16> to vector<16x83xbf16>
    %240 = tpu.concatenate %220, %221, %222, %223, %224, %225, %226, %227, %228, %229, %230, %231, %232, %233, %234, %235 in 0 : vector<16x83xbf16>, vector<16x83xbf16>, vector<16x83xbf16>, vector<16x83xbf16>, vector<16x83xbf16>, vector<16x83xbf16>, vector<16x83xbf16>, vector<16x83xbf16>, vector<16x83xbf16>, vector<16x83xbf16>, vector<16x83xbf16>, vector<16x83xbf16>, vector<16x83xbf16>, vector<16x83xbf16>, vector<16x83xbf16>, vector<16x83xbf16> -> vector<256x83xbf16>
    %241 = tpu.concatenate %236, %237, %238, %239 in 0 : vector<16x83xbf16>, vector<16x83xbf16>, vector<16x83xbf16>, vector<16x83xbf16> -> vector<64x83xbf16>
    %242 = tpu.concatenate %240, %241 in 0 : vector<256x83xbf16>, vector<64x83xbf16> -> vector<320x83xbf16>
    %c0_47 = arith.constant 0 : index
    %c0_48 = arith.constant 0 : index
    %243 = vector.load %arg1[%c0_47, %c0_48] : memref<16x320xbf16, #tpu.memory_space<vmem>>, vector<16x320xbf16>
    %cst_49 = arith.constant dense<0.000000e+00> : vector<16x83xf32>
    %244 = tpu.matmul %243, %242, %cst_49 {dimension_numbers = #tpu.dot_dimension_numbers<[1], [0], [0], [1], [0, 0, 1, 1], [], []>} : vector<16x320xbf16>, vector<320x83xbf16>, vector<16x83xf32> -> vector<16x83xf32>
    %c0_50 = arith.constant 0 : index
    %c0_51 = arith.constant 0 : index
    %245 = vector.load %arg2[%c0_50, %c0_51] : memref<16x1xf32, #tpu.memory_space<vmem>>, vector<16x1xf32>
    %246 = vector.broadcast %245 : vector<16x1xf32> to vector<16x83xf32>
    %247 = arith.addf %244, %246 : vector<16x83xf32>
    %cst_52 = arith.constant 0.000000e+00 : f32
    %248 = vector.broadcast %cst_52 : f32 to vector<16x83xf32>
    %249 = arith.cmpf ogt, %247, %248 : vector<16x83xf32>
    %cst_53 = arith.constant 2.500000e-01 : f32
    %250 = vector.broadcast %cst_53 : f32 to vector<16x83xf32>
    %251 = arith.mulf %250, %247 : vector<16x83xf32>
    %252 = arith.select %249, %247, %251 : vector<16x83xi1>, vector<16x83xf32>
    %253 = arith.truncf %252 : vector<16x83xf32> to vector<16x83xbf16>
    %c0_54 = arith.constant 0 : index
    %c0_55 = arith.constant 0 : index
    %254 = vector.load %arg5[%c0_54, %c0_55] : memref<83x203xbf16, #tpu.memory_space<vmem>>, vector<83x203xbf16>
    %cst_56 = arith.constant dense<0.000000e+00> : vector<16x203xf32>
    %255 = tpu.matmul %253, %254, %cst_56 {dimension_numbers = #tpu.dot_dimension_numbers<[1], [0], [0], [1], [0, 0, 1, 1], [], []>} : vector<16x83xbf16>, vector<83x203xbf16>, vector<16x203xf32> -> vector<16x203xf32>
    %256 = arith.truncf %255 : vector<16x203xf32> to vector<16x203xbf16>
    %257 = vector.extract_strided_slice %256 {offsets = [0, 0], sizes = [16, 184], strides = [1, 1]} : vector<16x203xbf16> to vector<16x184xbf16>
    %258 = vector.extract_strided_slice %256 {offsets = [0, 1], sizes = [16, 184], strides = [1, 1]} : vector<16x203xbf16> to vector<16x184xbf16>
    %259 = vector.extract_strided_slice %256 {offsets = [0, 2], sizes = [16, 184], strides = [1, 1]} : vector<16x203xbf16> to vector<16x184xbf16>
    %260 = vector.extract_strided_slice %256 {offsets = [0, 3], sizes = [16, 184], strides = [1, 1]} : vector<16x203xbf16> to vector<16x184xbf16>
    %261 = vector.extract_strided_slice %256 {offsets = [0, 4], sizes = [16, 184], strides = [1, 1]} : vector<16x203xbf16> to vector<16x184xbf16>
    %262 = vector.extract_strided_slice %256 {offsets = [0, 5], sizes = [16, 184], strides = [1, 1]} : vector<16x203xbf16> to vector<16x184xbf16>
    %263 = vector.extract_strided_slice %256 {offsets = [0, 6], sizes = [16, 184], strides = [1, 1]} : vector<16x203xbf16> to vector<16x184xbf16>
    %264 = vector.extract_strided_slice %256 {offsets = [0, 7], sizes = [16, 184], strides = [1, 1]} : vector<16x203xbf16> to vector<16x184xbf16>
    %265 = vector.extract_strided_slice %256 {offsets = [0, 8], sizes = [16, 184], strides = [1, 1]} : vector<16x203xbf16> to vector<16x184xbf16>
    %266 = vector.extract_strided_slice %256 {offsets = [0, 9], sizes = [16, 184], strides = [1, 1]} : vector<16x203xbf16> to vector<16x184xbf16>
    %267 = vector.extract_strided_slice %256 {offsets = [0, 10], sizes = [16, 184], strides = [1, 1]} : vector<16x203xbf16> to vector<16x184xbf16>
    %268 = vector.extract_strided_slice %256 {offsets = [0, 11], sizes = [16, 184], strides = [1, 1]} : vector<16x203xbf16> to vector<16x184xbf16>
    %269 = vector.extract_strided_slice %256 {offsets = [0, 12], sizes = [16, 184], strides = [1, 1]} : vector<16x203xbf16> to vector<16x184xbf16>
    %270 = vector.extract_strided_slice %256 {offsets = [0, 13], sizes = [16, 184], strides = [1, 1]} : vector<16x203xbf16> to vector<16x184xbf16>
    %271 = vector.extract_strided_slice %256 {offsets = [0, 14], sizes = [16, 184], strides = [1, 1]} : vector<16x203xbf16> to vector<16x184xbf16>
    %272 = vector.extract_strided_slice %256 {offsets = [0, 15], sizes = [16, 184], strides = [1, 1]} : vector<16x203xbf16> to vector<16x184xbf16>
    %273 = vector.extract_strided_slice %256 {offsets = [0, 16], sizes = [16, 184], strides = [1, 1]} : vector<16x203xbf16> to vector<16x184xbf16>
    %274 = vector.extract_strided_slice %256 {offsets = [0, 17], sizes = [16, 184], strides = [1, 1]} : vector<16x203xbf16> to vector<16x184xbf16>
    %275 = vector.extract_strided_slice %256 {offsets = [0, 18], sizes = [16, 184], strides = [1, 1]} : vector<16x203xbf16> to vector<16x184xbf16>
    %276 = vector.extract_strided_slice %256 {offsets = [0, 19], sizes = [16, 184], strides = [1, 1]} : vector<16x203xbf16> to vector<16x184xbf16>
    %277 = tpu.concatenate %257, %258, %259, %260, %261, %262, %263, %264, %265, %266, %267, %268, %269, %270, %271, %272 in 0 : vector<16x184xbf16>, vector<16x184xbf16>, vector<16x184xbf16>, vector<16x184xbf16>, vector<16x184xbf16>, vector<16x184xbf16>, vector<16x184xbf16>, vector<16x184xbf16>, vector<16x184xbf16>, vector<16x184xbf16>, vector<16x184xbf16>, vector<16x184xbf16>, vector<16x184xbf16>, vector<16x184xbf16>, vector<16x184xbf16>, vector<16x184xbf16> -> vector<256x184xbf16>
    %278 = tpu.concatenate %273, %274, %275, %276 in 0 : vector<16x184xbf16>, vector<16x184xbf16>, vector<16x184xbf16>, vector<16x184xbf16> -> vector<64x184xbf16>
    %279 = tpu.concatenate %277, %278 in 0 : vector<256x184xbf16>, vector<64x184xbf16> -> vector<320x184xbf16>
    %c0_57 = arith.constant 0 : index
    %c0_58 = arith.constant 0 : index
    %280 = vector.load %arg3[%c0_57, %c0_58] : memref<16x320xbf16, #tpu.memory_space<vmem>>, vector<16x320xbf16>
    %cst_59 = arith.constant dense<0.000000e+00> : vector<16x184xf32>
    %281 = tpu.matmul %280, %279, %cst_59 {dimension_numbers = #tpu.dot_dimension_numbers<[1], [0], [0], [1], [0, 0, 1, 1], [], []>} : vector<16x320xbf16>, vector<320x184xbf16>, vector<16x184xf32> -> vector<16x184xf32>
    %c0_60 = arith.constant 0 : index
    %c0_61 = arith.constant 0 : index
    %282 = vector.load %arg4[%c0_60, %c0_61] : memref<16x1xf32, #tpu.memory_space<vmem>>, vector<16x1xf32>
    %283 = vector.broadcast %282 : vector<16x1xf32> to vector<16x184xf32>
    %284 = arith.addf %281, %283 : vector<16x184xf32>
    %cst_62 = arith.constant 0.000000e+00 : f32
    %285 = vector.broadcast %cst_62 : f32 to vector<16x184xf32>
    %286 = arith.cmpf ogt, %284, %285 : vector<16x184xf32>
    %cst_63 = arith.constant 2.500000e-01 : f32
    %287 = vector.broadcast %cst_63 : f32 to vector<16x184xf32>
    %288 = arith.mulf %287, %284 : vector<16x184xf32>
    %289 = arith.select %286, %284, %288 : vector<16x184xi1>, vector<16x184xf32>
    %290 = arith.truncf %289 : vector<16x184xf32> to vector<16x184xbf16>
    %c0_64 = arith.constant 0 : index
    %c0_65 = arith.constant 0 : index
    %291 = vector.load %arg8[%c0_64, %c0_65] : memref<184x405xbf16, #tpu.memory_space<vmem>>, vector<184x405xbf16>
    %cst_66 = arith.constant dense<0.000000e+00> : vector<16x405xf32>
    %292 = tpu.matmul %290, %291, %cst_66 {dimension_numbers = #tpu.dot_dimension_numbers<[1], [0], [0], [1], [0, 0, 1, 1], [], []>} : vector<16x184xbf16>, vector<184x405xbf16>, vector<16x405xf32> -> vector<16x405xf32>
    %293 = arith.truncf %292 : vector<16x405xf32> to vector<16x405xbf16>
    %294 = vector.extract_strided_slice %293 {offsets = [0, 0], sizes = [16, 386], strides = [1, 1]} : vector<16x405xbf16> to vector<16x386xbf16>
    %295 = vector.extract_strided_slice %293 {offsets = [0, 1], sizes = [16, 386], strides = [1, 1]} : vector<16x405xbf16> to vector<16x386xbf16>
    %296 = vector.extract_strided_slice %293 {offsets = [0, 2], sizes = [16, 386], strides = [1, 1]} : vector<16x405xbf16> to vector<16x386xbf16>
    %297 = vector.extract_strided_slice %293 {offsets = [0, 3], sizes = [16, 386], strides = [1, 1]} : vector<16x405xbf16> to vector<16x386xbf16>
    %298 = vector.extract_strided_slice %293 {offsets = [0, 4], sizes = [16, 386], strides = [1, 1]} : vector<16x405xbf16> to vector<16x386xbf16>
    %299 = vector.extract_strided_slice %293 {offsets = [0, 5], sizes = [16, 386], strides = [1, 1]} : vector<16x405xbf16> to vector<16x386xbf16>
    %300 = vector.extract_strided_slice %293 {offsets = [0, 6], sizes = [16, 386], strides = [1, 1]} : vector<16x405xbf16> to vector<16x386xbf16>
    %301 = vector.extract_strided_slice %293 {offsets = [0, 7], sizes = [16, 386], strides = [1, 1]} : vector<16x405xbf16> to vector<16x386xbf16>
    %302 = vector.extract_strided_slice %293 {offsets = [0, 8], sizes = [16, 386], strides = [1, 1]} : vector<16x405xbf16> to vector<16x386xbf16>
    %303 = vector.extract_strided_slice %293 {offsets = [0, 9], sizes = [16, 386], strides = [1, 1]} : vector<16x405xbf16> to vector<16x386xbf16>
    %304 = vector.extract_strided_slice %293 {offsets = [0, 10], sizes = [16, 386], strides = [1, 1]} : vector<16x405xbf16> to vector<16x386xbf16>
    %305 = vector.extract_strided_slice %293 {offsets = [0, 11], sizes = [16, 386], strides = [1, 1]} : vector<16x405xbf16> to vector<16x386xbf16>
    %306 = vector.extract_strided_slice %293 {offsets = [0, 12], sizes = [16, 386], strides = [1, 1]} : vector<16x405xbf16> to vector<16x386xbf16>
    %307 = vector.extract_strided_slice %293 {offsets = [0, 13], sizes = [16, 386], strides = [1, 1]} : vector<16x405xbf16> to vector<16x386xbf16>
    %308 = vector.extract_strided_slice %293 {offsets = [0, 14], sizes = [16, 386], strides = [1, 1]} : vector<16x405xbf16> to vector<16x386xbf16>
    %309 = vector.extract_strided_slice %293 {offsets = [0, 15], sizes = [16, 386], strides = [1, 1]} : vector<16x405xbf16> to vector<16x386xbf16>
    %310 = vector.extract_strided_slice %293 {offsets = [0, 16], sizes = [16, 386], strides = [1, 1]} : vector<16x405xbf16> to vector<16x386xbf16>
    %311 = vector.extract_strided_slice %293 {offsets = [0, 17], sizes = [16, 386], strides = [1, 1]} : vector<16x405xbf16> to vector<16x386xbf16>
    %312 = vector.extract_strided_slice %293 {offsets = [0, 18], sizes = [16, 386], strides = [1, 1]} : vector<16x405xbf16> to vector<16x386xbf16>
    %313 = vector.extract_strided_slice %293 {offsets = [0, 19], sizes = [16, 386], strides = [1, 1]} : vector<16x405xbf16> to vector<16x386xbf16>
    %314 = tpu.concatenate %294, %295, %296, %297, %298, %299, %300, %301, %302, %303, %304, %305, %306, %307, %308, %309 in 0 : vector<16x386xbf16>, vector<16x386xbf16>, vector<16x386xbf16>, vector<16x386xbf16>, vector<16x386xbf16>, vector<16x386xbf16>, vector<16x386xbf16>, vector<16x386xbf16>, vector<16x386xbf16>, vector<16x386xbf16>, vector<16x386xbf16>, vector<16x386xbf16>, vector<16x386xbf16>, vector<16x386xbf16>, vector<16x386xbf16>, vector<16x386xbf16> -> vector<256x386xbf16>
    %315 = tpu.concatenate %310, %311, %312, %313 in 0 : vector<16x386xbf16>, vector<16x386xbf16>, vector<16x386xbf16>, vector<16x386xbf16> -> vector<64x386xbf16>
    %316 = tpu.concatenate %314, %315 in 0 : vector<256x386xbf16>, vector<64x386xbf16> -> vector<320x386xbf16>
    %c0_67 = arith.constant 0 : index
    %c0_68 = arith.constant 0 : index
    %317 = vector.load %arg6[%c0_67, %c0_68] : memref<16x320xbf16, #tpu.memory_space<vmem>>, vector<16x320xbf16>
    %cst_69 = arith.constant dense<0.000000e+00> : vector<16x386xf32>
    %318 = tpu.matmul %317, %316, %cst_69 {dimension_numbers = #tpu.dot_dimension_numbers<[1], [0], [0], [1], [0, 0, 1, 1], [], []>} : vector<16x320xbf16>, vector<320x386xbf16>, vector<16x386xf32> -> vector<16x386xf32>
    %c0_70 = arith.constant 0 : index
    %c0_71 = arith.constant 0 : index
    %319 = vector.load %arg7[%c0_70, %c0_71] : memref<16x1xf32, #tpu.memory_space<vmem>>, vector<16x1xf32>
    %320 = vector.broadcast %319 : vector<16x1xf32> to vector<16x386xf32>
    %321 = arith.addf %318, %320 : vector<16x386xf32>
    %cst_72 = arith.constant 0.000000e+00 : f32
    %322 = vector.broadcast %cst_72 : f32 to vector<16x386xf32>
    %323 = arith.cmpf ogt, %321, %322 : vector<16x386xf32>
    %cst_73 = arith.constant 2.500000e-01 : f32
    %324 = vector.broadcast %cst_73 : f32 to vector<16x386xf32>
    %325 = arith.mulf %324, %321 : vector<16x386xf32>
    %326 = arith.select %323, %321, %325 : vector<16x386xi1>, vector<16x386xf32>
    %327 = arith.truncf %326 : vector<16x386xf32> to vector<16x386xbf16>
    %cst_74 = arith.constant 0.000000e+00 : bf16
    %328 = vector.broadcast %cst_74 : bf16 to vector<16x39xbf16>
    %329 = tpu.concatenate %328, %327, %328 in 1 : vector<16x39xbf16>, vector<16x386xbf16>, vector<16x39xbf16> -> vector<16x464xbf16>
    %330 = vector.extract_strided_slice %329 {offsets = [0, 0], sizes = [16, 425], strides = [1, 1]} : vector<16x464xbf16> to vector<16x425xbf16>
    %331 = vector.extract_strided_slice %329 {offsets = [0, 1], sizes = [16, 425], strides = [1, 1]} : vector<16x464xbf16> to vector<16x425xbf16>
    %332 = vector.extract_strided_slice %329 {offsets = [0, 2], sizes = [16, 425], strides = [1, 1]} : vector<16x464xbf16> to vector<16x425xbf16>
    %333 = vector.extract_strided_slice %329 {offsets = [0, 3], sizes = [16, 425], strides = [1, 1]} : vector<16x464xbf16> to vector<16x425xbf16>
    %334 = vector.extract_strided_slice %329 {offsets = [0, 4], sizes = [16, 425], strides = [1, 1]} : vector<16x464xbf16> to vector<16x425xbf16>
    %335 = vector.extract_strided_slice %329 {offsets = [0, 5], sizes = [16, 425], strides = [1, 1]} : vector<16x464xbf16> to vector<16x425xbf16>
    %336 = vector.extract_strided_slice %329 {offsets = [0, 6], sizes = [16, 425], strides = [1, 1]} : vector<16x464xbf16> to vector<16x425xbf16>
    %337 = vector.extract_strided_slice %329 {offsets = [0, 7], sizes = [16, 425], strides = [1, 1]} : vector<16x464xbf16> to vector<16x425xbf16>
    %338 = vector.extract_strided_slice %329 {offsets = [0, 8], sizes = [16, 425], strides = [1, 1]} : vector<16x464xbf16> to vector<16x425xbf16>
    %339 = vector.extract_strided_slice %329 {offsets = [0, 9], sizes = [16, 425], strides = [1, 1]} : vector<16x464xbf16> to vector<16x425xbf16>
    %340 = vector.extract_strided_slice %329 {offsets = [0, 10], sizes = [16, 425], strides = [1, 1]} : vector<16x464xbf16> to vector<16x425xbf16>
    %341 = vector.extract_strided_slice %329 {offsets = [0, 11], sizes = [16, 425], strides = [1, 1]} : vector<16x464xbf16> to vector<16x425xbf16>
    %342 = vector.extract_strided_slice %329 {offsets = [0, 12], sizes = [16, 425], strides = [1, 1]} : vector<16x464xbf16> to vector<16x425xbf16>
    %343 = vector.extract_strided_slice %329 {offsets = [0, 13], sizes = [16, 425], strides = [1, 1]} : vector<16x464xbf16> to vector<16x425xbf16>
    %344 = vector.extract_strided_slice %329 {offsets = [0, 14], sizes = [16, 425], strides = [1, 1]} : vector<16x464xbf16> to vector<16x425xbf16>
    %345 = vector.extract_strided_slice %329 {offsets = [0, 15], sizes = [16, 425], strides = [1, 1]} : vector<16x464xbf16> to vector<16x425xbf16>
    %346 = vector.extract_strided_slice %329 {offsets = [0, 16], sizes = [16, 425], strides = [1, 1]} : vector<16x464xbf16> to vector<16x425xbf16>
    %347 = vector.extract_strided_slice %329 {offsets = [0, 17], sizes = [16, 425], strides = [1, 1]} : vector<16x464xbf16> to vector<16x425xbf16>
    %348 = vector.extract_strided_slice %329 {offsets = [0, 18], sizes = [16, 425], strides = [1, 1]} : vector<16x464xbf16> to vector<16x425xbf16>
    %349 = vector.extract_strided_slice %329 {offsets = [0, 19], sizes = [16, 425], strides = [1, 1]} : vector<16x464xbf16> to vector<16x425xbf16>
    %350 = vector.extract_strided_slice %329 {offsets = [0, 20], sizes = [16, 425], strides = [1, 1]} : vector<16x464xbf16> to vector<16x425xbf16>
    %351 = vector.extract_strided_slice %329 {offsets = [0, 21], sizes = [16, 425], strides = [1, 1]} : vector<16x464xbf16> to vector<16x425xbf16>
    %352 = vector.extract_strided_slice %329 {offsets = [0, 22], sizes = [16, 425], strides = [1, 1]} : vector<16x464xbf16> to vector<16x425xbf16>
    %353 = vector.extract_strided_slice %329 {offsets = [0, 23], sizes = [16, 425], strides = [1, 1]} : vector<16x464xbf16> to vector<16x425xbf16>
    %354 = vector.extract_strided_slice %329 {offsets = [0, 24], sizes = [16, 425], strides = [1, 1]} : vector<16x464xbf16> to vector<16x425xbf16>
    %355 = vector.extract_strided_slice %329 {offsets = [0, 25], sizes = [16, 425], strides = [1, 1]} : vector<16x464xbf16> to vector<16x425xbf16>
    %356 = vector.extract_strided_slice %329 {offsets = [0, 26], sizes = [16, 425], strides = [1, 1]} : vector<16x464xbf16> to vector<16x425xbf16>
    %357 = vector.extract_strided_slice %329 {offsets = [0, 27], sizes = [16, 425], strides = [1, 1]} : vector<16x464xbf16> to vector<16x425xbf16>
    %358 = vector.extract_strided_slice %329 {offsets = [0, 28], sizes = [16, 425], strides = [1, 1]} : vector<16x464xbf16> to vector<16x425xbf16>
    %359 = vector.extract_strided_slice %329 {offsets = [0, 29], sizes = [16, 425], strides = [1, 1]} : vector<16x464xbf16> to vector<16x425xbf16>
    %360 = vector.extract_strided_slice %329 {offsets = [0, 30], sizes = [16, 425], strides = [1, 1]} : vector<16x464xbf16> to vector<16x425xbf16>
    %361 = vector.extract_strided_slice %329 {offsets = [0, 31], sizes = [16, 425], strides = [1, 1]} : vector<16x464xbf16> to vector<16x425xbf16>
    %362 = vector.extract_strided_slice %329 {offsets = [0, 32], sizes = [16, 425], strides = [1, 1]} : vector<16x464xbf16> to vector<16x425xbf16>
    %363 = vector.extract_strided_slice %329 {offsets = [0, 33], sizes = [16, 425], strides = [1, 1]} : vector<16x464xbf16> to vector<16x425xbf16>
    %364 = vector.extract_strided_slice %329 {offsets = [0, 34], sizes = [16, 425], strides = [1, 1]} : vector<16x464xbf16> to vector<16x425xbf16>
    %365 = vector.extract_strided_slice %329 {offsets = [0, 35], sizes = [16, 425], strides = [1, 1]} : vector<16x464xbf16> to vector<16x425xbf16>
    %366 = vector.extract_strided_slice %329 {offsets = [0, 36], sizes = [16, 425], strides = [1, 1]} : vector<16x464xbf16> to vector<16x425xbf16>
    %367 = vector.extract_strided_slice %329 {offsets = [0, 37], sizes = [16, 425], strides = [1, 1]} : vector<16x464xbf16> to vector<16x425xbf16>
    %368 = vector.extract_strided_slice %329 {offsets = [0, 38], sizes = [16, 425], strides = [1, 1]} : vector<16x464xbf16> to vector<16x425xbf16>
    %369 = vector.extract_strided_slice %329 {offsets = [0, 39], sizes = [16, 425], strides = [1, 1]} : vector<16x464xbf16> to vector<16x425xbf16>
    %370 = tpu.concatenate %330, %331, %332, %333, %334, %335, %336, %337, %338, %339, %340, %341, %342, %343, %344, %345 in 0 : vector<16x425xbf16>, vector<16x425xbf16>, vector<16x425xbf16>, vector<16x425xbf16>, vector<16x425xbf16>, vector<16x425xbf16>, vector<16x425xbf16>, vector<16x425xbf16>, vector<16x425xbf16>, vector<16x425xbf16>, vector<16x425xbf16>, vector<16x425xbf16>, vector<16x425xbf16>, vector<16x425xbf16>, vector<16x425xbf16>, vector<16x425xbf16> -> vector<256x425xbf16>
    %371 = tpu.concatenate %346, %347, %348, %349, %350, %351, %352, %353, %354, %355, %356, %357, %358, %359, %360, %361 in 0 : vector<16x425xbf16>, vector<16x425xbf16>, vector<16x425xbf16>, vector<16x425xbf16>, vector<16x425xbf16>, vector<16x425xbf16>, vector<16x425xbf16>, vector<16x425xbf16>, vector<16x425xbf16>, vector<16x425xbf16>, vector<16x425xbf16>, vector<16x425xbf16>, vector<16x425xbf16>, vector<16x425xbf16>, vector<16x425xbf16>, vector<16x425xbf16> -> vector<256x425xbf16>
    %372 = tpu.concatenate %362, %363, %364, %365, %366, %367, %368, %369 in 0 : vector<16x425xbf16>, vector<16x425xbf16>, vector<16x425xbf16>, vector<16x425xbf16>, vector<16x425xbf16>, vector<16x425xbf16>, vector<16x425xbf16>, vector<16x425xbf16> -> vector<128x425xbf16>
    %373 = tpu.concatenate %370, %371, %372 in 0 : vector<256x425xbf16>, vector<256x425xbf16>, vector<128x425xbf16> -> vector<640x425xbf16>
    %c0_75 = arith.constant 0 : index
    %c0_76 = arith.constant 0 : index
    %374 = vector.load %arg9[%c0_75, %c0_76] : memref<16x640xbf16, #tpu.memory_space<vmem>>, vector<16x640xbf16>
    %cst_77 = arith.constant dense<0.000000e+00> : vector<16x425xf32>
    %375 = tpu.matmul %374, %373, %cst_77 {dimension_numbers = #tpu.dot_dimension_numbers<[1], [0], [0], [1], [0, 0, 1, 1], [], []>} : vector<16x640xbf16>, vector<640x425xbf16>, vector<16x425xf32> -> vector<16x425xf32>
    %c0_78 = arith.constant 0 : index
    %c0_79 = arith.constant 0 : index
    %376 = vector.load %arg10[%c0_78, %c0_79] : memref<16x1xf32, #tpu.memory_space<vmem>>, vector<16x1xf32>
    %377 = vector.broadcast %376 : vector<16x1xf32> to vector<16x425xf32>
    %378 = arith.addf %375, %377 : vector<16x425xf32>
    %379 = arith.truncf %378 : vector<16x425xf32> to vector<16x425xbf16>
    %c0_80 = arith.constant 0 : index
    %c0_81 = arith.constant 0 : index
    %380 = vector.load %arg11[%c0_80, %c0_81] : memref<425x519xbf16, #tpu.memory_space<vmem>>, vector<425x519xbf16>
    %cst_82 = arith.constant dense<0.000000e+00> : vector<16x519xf32>
    %381 = tpu.matmul %379, %380, %cst_82 {dimension_numbers = #tpu.dot_dimension_numbers<[1], [0], [0], [1], [0, 0, 1, 1], [], []>} : vector<16x425xbf16>, vector<425x519xbf16>, vector<16x519xf32> -> vector<16x519xf32>
    %c0_83 = arith.constant 0 : index
    %c0_84 = arith.constant 0 : index
    %382 = vector.load %arg12[%c0_83, %c0_84] : memref<1x519xf32, #tpu.memory_space<vmem>>, vector<1x519xf32>
    %383 = vector.broadcast %382 : vector<1x519xf32> to vector<16x519xf32>
    %384 = arith.addf %381, %383 : vector<16x519xf32>
    %cst_85 = arith.constant 0.000000e+00 : f32
    %385 = vector.broadcast %cst_85 : f32 to vector<16x519xf32>
    %386 = arith.subf %385, %384 : vector<16x519xf32>
    %387 = math.exp %386 : vector<16x519xf32>
    %cst_86 = arith.constant 1.000000e+00 : f32
    %388 = vector.broadcast %cst_86 : f32 to vector<16x519xf32>
    %389 = arith.addf %388, %387 : vector<16x519xf32>
    %cst_87 = arith.constant 1.000000e+00 : f32
    %390 = vector.broadcast %cst_87 : f32 to vector<16x519xf32>
    %391 = arith.divf %390, %389 : vector<16x519xf32>
    %392 = vector.extract_strided_slice %391 {offsets = [0, 0], sizes = [16, 500], strides = [1, 1]} : vector<16x519xf32> to vector<16x500xf32>
    %393 = vector.extract_strided_slice %391 {offsets = [0, 1], sizes = [16, 500], strides = [1, 1]} : vector<16x519xf32> to vector<16x500xf32>
    %394 = arith.addf %392, %393 : vector<16x500xf32>
    %395 = vector.extract_strided_slice %391 {offsets = [0, 2], sizes = [16, 500], strides = [1, 1]} : vector<16x519xf32> to vector<16x500xf32>
    %396 = arith.addf %394, %395 : vector<16x500xf32>
    %397 = vector.extract_strided_slice %391 {offsets = [0, 3], sizes = [16, 500], strides = [1, 1]} : vector<16x519xf32> to vector<16x500xf32>
    %398 = arith.addf %396, %397 : vector<16x500xf32>
    %399 = vector.extract_strided_slice %391 {offsets = [0, 4], sizes = [16, 500], strides = [1, 1]} : vector<16x519xf32> to vector<16x500xf32>
    %400 = arith.addf %398, %399 : vector<16x500xf32>
    %401 = vector.extract_strided_slice %391 {offsets = [0, 5], sizes = [16, 500], strides = [1, 1]} : vector<16x519xf32> to vector<16x500xf32>
    %402 = arith.addf %400, %401 : vector<16x500xf32>
    %403 = vector.extract_strided_slice %391 {offsets = [0, 6], sizes = [16, 500], strides = [1, 1]} : vector<16x519xf32> to vector<16x500xf32>
    %404 = arith.addf %402, %403 : vector<16x500xf32>
    %405 = vector.extract_strided_slice %391 {offsets = [0, 7], sizes = [16, 500], strides = [1, 1]} : vector<16x519xf32> to vector<16x500xf32>
    %406 = arith.addf %404, %405 : vector<16x500xf32>
    %407 = vector.extract_strided_slice %391 {offsets = [0, 8], sizes = [16, 500], strides = [1, 1]} : vector<16x519xf32> to vector<16x500xf32>
    %408 = arith.addf %406, %407 : vector<16x500xf32>
    %409 = vector.extract_strided_slice %391 {offsets = [0, 9], sizes = [16, 500], strides = [1, 1]} : vector<16x519xf32> to vector<16x500xf32>
    %410 = arith.addf %408, %409 : vector<16x500xf32>
    %411 = vector.extract_strided_slice %391 {offsets = [0, 10], sizes = [16, 500], strides = [1, 1]} : vector<16x519xf32> to vector<16x500xf32>
    %412 = arith.addf %410, %411 : vector<16x500xf32>
    %413 = vector.extract_strided_slice %391 {offsets = [0, 11], sizes = [16, 500], strides = [1, 1]} : vector<16x519xf32> to vector<16x500xf32>
    %414 = arith.addf %412, %413 : vector<16x500xf32>
    %415 = vector.extract_strided_slice %391 {offsets = [0, 12], sizes = [16, 500], strides = [1, 1]} : vector<16x519xf32> to vector<16x500xf32>
    %416 = arith.addf %414, %415 : vector<16x500xf32>
    %417 = vector.extract_strided_slice %391 {offsets = [0, 13], sizes = [16, 500], strides = [1, 1]} : vector<16x519xf32> to vector<16x500xf32>
    %418 = arith.addf %416, %417 : vector<16x500xf32>
    %419 = vector.extract_strided_slice %391 {offsets = [0, 14], sizes = [16, 500], strides = [1, 1]} : vector<16x519xf32> to vector<16x500xf32>
    %420 = arith.addf %418, %419 : vector<16x500xf32>
    %421 = vector.extract_strided_slice %391 {offsets = [0, 15], sizes = [16, 500], strides = [1, 1]} : vector<16x519xf32> to vector<16x500xf32>
    %422 = arith.addf %420, %421 : vector<16x500xf32>
    %423 = vector.extract_strided_slice %391 {offsets = [0, 16], sizes = [16, 500], strides = [1, 1]} : vector<16x519xf32> to vector<16x500xf32>
    %424 = arith.addf %422, %423 : vector<16x500xf32>
    %425 = vector.extract_strided_slice %391 {offsets = [0, 17], sizes = [16, 500], strides = [1, 1]} : vector<16x519xf32> to vector<16x500xf32>
    %426 = arith.addf %424, %425 : vector<16x500xf32>
    %427 = vector.extract_strided_slice %391 {offsets = [0, 18], sizes = [16, 500], strides = [1, 1]} : vector<16x519xf32> to vector<16x500xf32>
    %428 = arith.addf %426, %427 : vector<16x500xf32>
    %429 = vector.extract_strided_slice %391 {offsets = [0, 19], sizes = [16, 500], strides = [1, 1]} : vector<16x519xf32> to vector<16x500xf32>
    %430 = arith.addf %428, %429 : vector<16x500xf32>
    %cst_88 = arith.constant 5.000000e-02 : f32
    %431 = vector.broadcast %cst_88 : f32 to vector<16x500xf32>
    %432 = arith.mulf %430, %431 : vector<16x500xf32>
    %c16_89 = arith.constant 16 : index
    %c0_90 = arith.constant 0 : index
    %433 = vector.load %arg13[%c16_89, %c0_90] : memref<32x500xf32, #tpu.memory_space<vmem>>, vector<16x500xf32>
    tpu.vector_store %arg13[%c16_89, %c0_90], %432 {strides = array<i32>} : memref<32x500xf32, #tpu.memory_space<vmem>>, vector<16x500xf32>,
    return
  }
}

</mosaic_0001>

<llo_original>
// kernel: seeg_cnn_vae_forward.2
$region0: #{seeg_cnn_vae_forward.2}
  #allocation0 [shape = 'u32[]', space=smem, size = 0x4, offset = 0x4, fixed_abs, tag = 'smem constant byte address 0x4 - core index']
  #allocation1 [shape = 'u32[144,128]{1,0:T(1,128)}', space=vmem, size = 0x12000, scoped, tag = 'internal scratch']
  %s0 = inlined_call_operand.vmem [shape: bf16[80,500], index: 0, kind: input, shape index: {}]
  %s1 = inlined_call_operand.vmem [shape: bf16[500,64], index: 1, kind: input, shape index: {}]
  %s2 = inlined_call_operand.vmem [shape: f32[1,64], index: 2, kind: input, shape index: {}]
  %s3 = inlined_call_operand.vmem [shape: f32[1,64], index: 3, kind: input, shape index: {}]
  %s4 = inlined_call_operand.vmem [shape: f32[1,64], index: 4, kind: input, shape index: {}]
  %s5 = inlined_call_operand.vmem [shape: bf16[256,256], index: 5, kind: input, shape index: {}]
  %s6 = inlined_call_operand.vmem [shape: f32[1,256], index: 6, kind: input, shape index: {}]
  %s7 = inlined_call_operand.vmem [shape: f32[2,128], index: 7, kind: input, shape index: {}]
  %s8 = inlined_call_operand.vmem [shape: bf16[128,640], index: 8, kind: input, shape index: {}]
  %s9 = inlined_call_operand.vmem [shape: f32[1,640], index: 9, kind: input, shape index: {}]
  %s10 = inlined_call_operand.hbm [shape: f32[2,128], index: 10, kind: output, shape index: {0}]
  %s11 = inlined_call_operand.hbm [shape: f32[2,128], index: 11, kind: output, shape index: {1}]
  %s12 = inlined_call_operand.vmem [shape: bf16[2,640], index: 12, kind: output, shape index: {2}]
  %13 = xla_tuple %s10, %s11, %s12
  %s14 = sld [smem:[#allocation0]]
  $region66: #{seeg_cnn_vae_forward.2} parent=0
    _
  %s16 = ssub.s32 1, %s14
  %s17 = scalar_select 0, %s16, %s14
  $region1: #{seeg_cnn_vae_forward.2} parent=0
    #allocation2 [shape = 'u8[1024]{0}', space=vmem, size = 0x400, scoped, tag = 'output window, operand 0, single buffered']
    #allocation3 [shape = 's32[1]{0}', space=sflag, size = 0x4, scoped, tag = 'scoped memory for seeg_cnn_vae_forward.2']
    #allocation4 [shape = 'u8[1024]{0}', space=vmem, size = 0x400, scoped, tag = 'output window, operand 1, single buffered']
    #allocation5 [shape = 's32[1]{0}', space=sflag, size = 0x4, scoped, tag = 'scoped memory for seeg_cnn_vae_forward.2']
    %18 = vsyncpa [#allocation3], 0
    %19 = vsyncpa [#allocation5], 0
    // Predicated region
    $region2: #{seeg_cnn_vae_forward.2} parent=1 // pred_check
      _
    $region3: #{seeg_cnn_vae_forward.2} parent=1 // pred_check_branch
      %21 = sbr.rel (0) target = $region5
    $region4: #{seeg_cnn_vae_forward.2} parent=1 // pred_region
      _
    $region5: #{seeg_cnn_vae_forward.2} parent=1 // pred_fallthru
      _
    // Predicated region
    $region6: #{seeg_cnn_vae_forward.2} parent=1 // pred_check
      _
    $region7: #{seeg_cnn_vae_forward.2} parent=1 // pred_check_branch
      %23 = sbr.rel (0) target = $region9
    $region8: #{seeg_cnn_vae_forward.2} parent=1 // pred_region
      _
    $region9: #{seeg_cnn_vae_forward.2} parent=1 // pred_fallthru
      _
    // Predicated region
    $region10: #{seeg_cnn_vae_forward.2} parent=1 // pred_check
      _
    $region11: #{seeg_cnn_vae_forward.2} parent=1 // pred_check_branch
      %25 = sbr.rel (0) target = $region13
    $region12: #{seeg_cnn_vae_forward.2} parent=1 // pred_region
      _
    $region13: #{seeg_cnn_vae_forward.2} parent=1 // pred_fallthru
      _
    // Predicated region
    $region14: #{seeg_cnn_vae_forward.2} parent=1 // pred_check
      _
    $region15: #{seeg_cnn_vae_forward.2} parent=1 // pred_check_branch
      %27 = sbr.rel (0) target = $region17
    $region16: #{seeg_cnn_vae_forward.2} parent=1 // pred_region
      _
    $region17: #{seeg_cnn_vae_forward.2} parent=1 // pred_fallthru
      _
    // Predicated region
    $region18: #{seeg_cnn_vae_forward.2} parent=1 // pred_check
      _
    $region19: #{seeg_cnn_vae_forward.2} parent=1 // pred_check_branch
      %29 = sbr.rel (0) target = $region21
    $region20: #{seeg_cnn_vae_forward.2} parent=1 // pred_region
      _
    $region21: #{seeg_cnn_vae_forward.2} parent=1 // pred_fallthru
      _
    // Predicated region
    $region22: #{seeg_cnn_vae_forward.2} parent=1 // pred_check
      _
    $region23: #{seeg_cnn_vae_forward.2} parent=1 // pred_check_branch
      %31 = sbr.rel (0) target = $region25
    $region24: #{seeg_cnn_vae_forward.2} parent=1 // pred_region
      _
    $region25: #{seeg_cnn_vae_forward.2} parent=1 // pred_fallthru
      _
    // Predicated region
    $region26: #{seeg_cnn_vae_forward.2} parent=1 // pred_check
      _
    $region27: #{seeg_cnn_vae_forward.2} parent=1 // pred_check_branch
      %33 = sbr.rel (0) target = $region29
    $region28: #{seeg_cnn_vae_forward.2} parent=1 // pred_region
      _
    $region29: #{seeg_cnn_vae_forward.2} parent=1 // pred_fallthru
      _
    // Predicated region
    $region30: #{seeg_cnn_vae_forward.2} parent=1 // pred_check
      _
    $region31: #{seeg_cnn_vae_forward.2} parent=1 // pred_check_branch
      %35 = sbr.rel (0) target = $region33
    $region32: #{seeg_cnn_vae_forward.2} parent=1 // pred_region
      _
    $region33: #{seeg_cnn_vae_forward.2} parent=1 // pred_fallthru
      _
    // Predicated region
    $region34: #{seeg_cnn_vae_forward.2} parent=1 // pred_check
      _
    $region35: #{seeg_cnn_vae_forward.2} parent=1 // pred_check_branch
      %37 = sbr.rel (0) target = $region37
    $region36: #{seeg_cnn_vae_forward.2} parent=1 // pred_region
      _
    $region37: #{seeg_cnn_vae_forward.2} parent=1 // pred_fallthru
      _
    // Predicated region
    $region38: #{seeg_cnn_vae_forward.2} parent=1 // pred_check
      _
    $region39: #{seeg_cnn_vae_forward.2} parent=1 // pred_check_branch
      %39 = sbr.rel (0) target = $region41
    $region40: #{seeg_cnn_vae_forward.2} parent=1 // pred_region
      _
    $region41: #{seeg_cnn_vae_forward.2} parent=1 // pred_fallthru
      _
    %v41 = vld [vmem:[%s0] sm:$0xff]
    %v42 = vld [vmem:[%s0 + $0x8] sm:$0xff]
    %v43 = vld [vmem:[%s0 + $0x10] sm:$0xff]
    %v44 = vld [vmem:[%s0 + $0x18] sm:$0xff]
    %v45 = vld [vmem:[%s0 + $0x20] sm:$0xff]
    %v46 = vld [vmem:[%s0 + $0x28] sm:$0xff]
    %v47 = vld [vmem:[%s0 + $0x30] sm:$0xff]
    %v48 = vld [vmem:[%s0 + $0x38] sm:$0xff]
    %v49 = vld [vmem:[%s0 + $0x40] sm:$0xff]
    %v50 = vld [vmem:[%s0 + $0x48] sm:$0xff]
    %v51 = vld [vmem:[%s0 + $0x50] sm:$0xff]
    %v52 = vld [vmem:[%s0 + $0x58] sm:$0xff]
    %v53 = vld [vmem:[%s0 + $0x60] sm:$0xff]
    %v54 = vld [vmem:[%s0 + $0x68] sm:$0xff]
    %v55 = vld [vmem:[%s0 + $0x70] sm:$0xff]
    %v56 = vld [vmem:[%s0 + $0x78] sm:$0xff]
    %v57 = vld [vmem:[%s0 + $0x80] sm:$0xff]
    %v58 = vld [vmem:[%s0 + $0x88] sm:$0xff]
    %v59 = vld [vmem:[%s0 + $0x90] sm:$0xff]
    %v60 = vld [vmem:[%s0 + $0x98] sm:$0xff]
    %v61 = vld [vmem:[%s1] sm:$0xf]
    %v62 = vld [vmem:[%s1 + $0x4] sm:$0xf]
    %v63 = vld [vmem:[%s1 + $0x8] sm:$0xf]
    %v64 = vld [vmem:[%s1 + $0xc] sm:$0xf]
    %v65 = vld [vmem:[%s1 + $0x10] sm:$0xf]
    %v66 = vld [vmem:[%s1 + $0x14] sm:$0xf]
    %v67 = vld [vmem:[%s1 + $0x18] sm:$0xf]
    %v68 = vld [vmem:[%s1 + $0x1c] sm:$0xf]
    %v69 = vld [vmem:[%s1 + $0x20] sm:$0xf]
    %v70 = vld [vmem:[%s1 + $0x24] sm:$0xf]
    %v71 = vld [vmem:[%s1 + $0x28] sm:$0xf]
    %v72 = vld [vmem:[%s1 + $0x2c] sm:$0xf]
    %v73 = vld [vmem:[%s1 + $0x30] sm:$0xf]
    %v74 = vld [vmem:[%s1 + $0x34] sm:$0xf]
    %v75 = vld [vmem:[%s1 + $0x38] sm:$0xf]
    %v76 = vld [vmem:[%s1 + $0x3c] sm:$0xf]
    %v77 = vld [vmem:[%s1 + $0x40] sm:$0xf]
    %v78 = vld [vmem:[%s1 + $0x44] sm:$0xf]
    %v79 = vld [vmem:[%s1 + $0x48] sm:$0xf]
    %v80 = vld [vmem:[%s1 + $0x4c] sm:$0xf]
    %v81 = vld [vmem:[%s1 + $0x50] sm:$0xf]
    %v82 = vld [vmem:[%s1 + $0x54] sm:$0xf]
    %v83 = vld [vmem:[%s1 + $0x58] sm:$0xf]
    %v84 = vld [vmem:[%s1 + $0x5c] sm:$0xf]
    %v85 = vld [vmem:[%s1 + $0x60] sm:$0xf]
    %v86 = vld [vmem:[%s1 + $0x64] sm:$0xf]
    %v87 = vld [vmem:[%s1 + $0x68] sm:$0xf]
    %v88 = vld [vmem:[%s1 + $0x6c] sm:$0xf]
    %v89 = vld [vmem:[%s1 + $0x70] sm:$0xf]
    %v90 = vld [vmem:[%s1 + $0x74] sm:$0xf]
    %v91 = vld [vmem:[%s1 + $0x78] sm:$0xf]
    %v92 = vld [vmem:[%s1 + $0x7c] sm:$0xf]
    %v93 = vld [vmem:[%s1 + $0x80] sm:$0xf]
    %v94 = vld [vmem:[%s1 + $0x84] sm:$0xf]
    %v95 = vld [vmem:[%s1 + $0x88] sm:$0xf]
    %v96 = vld [vmem:[%s1 + $0x8c] sm:$0xf]
    %v97 = vld [vmem:[%s1 + $0x90] sm:$0xf]
    %v98 = vld [vmem:[%s1 + $0x94] sm:$0xf]
    %v99 = vld [vmem:[%s1 + $0x98] sm:$0xf]
    %v100 = vld [vmem:[%s1 + $0x9c] sm:$0xf]
    %v101 = vld [vmem:[%s1 + $0xa0] sm:$0xf]
    %v102 = vld [vmem:[%s1 + $0xa4] sm:$0xf]
    %v103 = vld [vmem:[%s1 + $0xa8] sm:$0xf]
    %v104 = vld [vmem:[%s1 + $0xac] sm:$0xf]
    %v105 = vld [vmem:[%s1 + $0xb0] sm:$0xf]
    %v106 = vld [vmem:[%s1 + $0xb4] sm:$0xf]
    %v107 = vld [vmem:[%s1 + $0xb8] sm:$0xf]
    %v108 = vld [vmem:[%s1 + $0xbc] sm:$0xf]
    %v109 = vld [vmem:[%s1 + $0xc0] sm:$0xf]
    %v110 = vld [vmem:[%s1 + $0xc4] sm:$0xf]
    %v111 = vld [vmem:[%s1 + $0xc8] sm:$0xf]
    %v112 = vld [vmem:[%s1 + $0xcc] sm:$0xf]
    %v113 = vld [vmem:[%s1 + $0xd0] sm:$0xf]
    %v114 = vld [vmem:[%s1 + $0xd4] sm:$0xf]
    %v115 = vld [vmem:[%s1 + $0xd8] sm:$0xf]
    %v116 = vld [vmem:[%s1 + $0xdc] sm:$0xf]
    %v117 = vld [vmem:[%s1 + $0xe0] sm:$0xf]
    %v118 = vld [vmem:[%s1 + $0xe4] sm:$0xf]
    %v119 = vld [vmem:[%s1 + $0xe8] sm:$0xf]
    %v120 = vld [vmem:[%s1 + $0xec] sm:$0xf]
    %v121 = vld [vmem:[%s1 + $0xf0] sm:$0xf]
    %v122 = vld [vmem:[%s1 + $0xf4] sm:$0xf]
    %v123 = vld [vmem:[%s1 + $0xf8] sm:$0x3]
    %v124 = vld [vmem:[%s2] sm:$0x1]
    %v126 = vlaneseq
    %v127 = vshrl.u32 %v126, 7
    %v128 = vsub.s32 0, %v127
    %v129 = vrot.slane %v124, %v128
    %v151 = vunpack.c.l.b16 %v41
    %v152 = vunpack.c.h.b16 %v41
    %v153 = vunpack.c.l.b16 %v42
    %v154 = vunpack.c.h.b16 %v42
    %v155 = vunpack.c.l.b16 %v43
    %v156 = vunpack.c.h.b16 %v43
    %v157 = vunpack.c.l.b16 %v44
    %v158 = vunpack.c.h.b16 %v44
    %v159 = vunpack.c.l.b16 %v45
    %v160 = vunpack.c.h.b16 %v45
    %v161 = vunpack.c.l.b16 %v46
    %v162 = vunpack.c.h.b16 %v46
    %v163 = vunpack.c.l.b16 %v47
    %v164 = vunpack.c.h.b16 %v47
    %v165 = vunpack.c.l.b16 %v48
    %v166 = vunpack.c.h.b16 %v48
    %v167 = vunpack.c.l.b16 %v49
    %v168 = vunpack.c.h.b16 %v49
    %v169 = vunpack.c.l.b16 %v50
    %v170 = vunpack.c.h.b16 %v50
    %v171 = vunpack.c.l.b16 %v51
    %v172 = vunpack.c.h.b16 %v51
    %v173 = vunpack.c.l.b16 %v52
    %v174 = vunpack.c.h.b16 %v52
    %v175 = vunpack.c.l.b16 %v53
    %v176 = vunpack.c.h.b16 %v53
    %v177 = vunpack.c.l.b16 %v54
    %v178 = vunpack.c.h.b16 %v54
    %v179 = vunpack.c.l.b16 %v55
    %v180 = vunpack.c.h.b16 %v55
    %v181 = vunpack.c.l.b16 %v56
    %v182 = vunpack.c.h.b16 %v56
    %v183 = vunpack.c.l.b16 %v57
    %v184 = vunpack.c.h.b16 %v57
    %v185 = vunpack.c.l.b16 %v58
    %v186 = vunpack.c.h.b16 %v58
    %v187 = vunpack.c.l.b16 %v59
    %v188 = vunpack.c.h.b16 %v59
    %v189 = vunpack.c.l.b16 %v60
    %v190 = vunpack.c.h.b16 %v60
    %v191 = vpack.c.b16 %v155, %v151
    %v192 = vpack.c.b16 %v156, %v152
    %v193 = vpack.c.b16 %v157, %v153
    %v194 = vpack.c.b16 %v158, %v154
    %v195 = vpack.c.b16 %v163, %v159
    %v196 = vpack.c.b16 %v164, %v160
    %v197 = vpack.c.b16 %v165, %v161
    %v198 = vpack.c.b16 %v166, %v162
    %v199 = vpack.c.b16 %v171, %v167
    %v200 = vpack.c.b16 %v172, %v168
    %v201 = vpack.c.b16 %v173, %v169
    %v202 = vpack.c.b16 %v174, %v170
    %v203 = vpack.c.b16 %v179, %v175
    %v204 = vpack.c.b16 %v180, %v176
    %v205 = vpack.c.b16 %v181, %v177
    %v206 = vpack.c.b16 %v182, %v178
    %v207 = vpack.c.b16 %v187, %v183
    %v208 = vpack.c.b16 %v188, %v184
    %v209 = vpack.c.b16 %v189, %v185
    %v210 = vpack.c.b16 %v190, %v186
    %v289 = vunpack.c.l.b16 %v61
    %v290 = vunpack.c.l.b16 %v62
    %v291 = vunpack.c.l.b16 %v63
    %v292 = vunpack.c.l.b16 %v64
    %v293 = vunpack.c.l.b16 %v65
    %v294 = vunpack.c.l.b16 %v66
    %v295 = vunpack.c.l.b16 %v67
    %v296 = vunpack.c.l.b16 %v68
    %v297 = vunpack.c.l.b16 %v69
    %v298 = vunpack.c.l.b16 %v70
    %v299 = vunpack.c.l.b16 %v71
    %v300 = vunpack.c.l.b16 %v72
    %v301 = vunpack.c.l.b16 %v73
    %v302 = vunpack.c.l.b16 %v74
    %v303 = vunpack.c.l.b16 %v75
    %v304 = vunpack.c.l.b16 %v76
    %v305 = vunpack.c.l.b16 %v77
    %v306 = vunpack.c.l.b16 %v78
    %v307 = vunpack.c.l.b16 %v79
    %v308 = vunpack.c.l.b16 %v80
    %v309 = vunpack.c.l.b16 %v81
    %v310 = vunpack.c.l.b16 %v82
    %v311 = vunpack.c.l.b16 %v83
    %v312 = vunpack.c.l.b16 %v84
    %v313 = vunpack.c.l.b16 %v85
    %v314 = vunpack.c.l.b16 %v86
    %v315 = vunpack.c.l.b16 %v87
    %v316 = vunpack.c.l.b16 %v88
    %v317 = vunpack.c.l.b16 %v89
    %v318 = vunpack.c.l.b16 %v90
    %v319 = vunpack.c.l.b16 %v91
    %v320 = vunpack.c.l.b16 %v92
    %v321 = vunpack.c.l.b16 %v93
    %v322 = vunpack.c.l.b16 %v94
    %v323 = vunpack.c.l.b16 %v95
    %v324 = vunpack.c.l.b16 %v96
    %v325 = vunpack.c.l.b16 %v97
    %v326 = vunpack.c.l.b16 %v98
    %v327 = vunpack.c.l.b16 %v99
    %v328 = vunpack.c.l.b16 %v100
    %v329 = vunpack.c.l.b16 %v101
    %v330 = vunpack.c.l.b16 %v102
    %v331 = vunpack.c.l.b16 %v103
    %v332 = vunpack.c.l.b16 %v104
    %v333 = vunpack.c.l.b16 %v105
    %v334 = vunpack.c.l.b16 %v106
    %v335 = vunpack.c.l.b16 %v107
    %v336 = vunpack.c.l.b16 %v108
    %v337 = vunpack.c.l.b16 %v109
    %v338 = vunpack.c.l.b16 %v110
    %v339 = vunpack.c.l.b16 %v111
    %v340 = vunpack.c.l.b16 %v112
    %v341 = vunpack.c.l.b16 %v113
    %v342 = vunpack.c.l.b16 %v114
    %v343 = vunpack.c.l.b16 %v115
    %v344 = vunpack.c.l.b16 %v116
    %v345 = vunpack.c.l.b16 %v117
    %v346 = vunpack.c.l.b16 %v118
    %v347 = vunpack.c.l.b16 %v119
    %v348 = vunpack.c.l.b16 %v120
    %v349 = vunpack.c.l.b16 %v121
    %v350 = vunpack.c.l.b16 %v122
    %v351 = vunpack.c.l.b16 %v123
    %v352 = vpack.c.b16 %v290, %v289
    %v353 = vpack.c.b16 %v292, %v291
    %v354 = vpack.c.b16 %v294, %v293
    %v355 = vpack.c.b16 %v296, %v295
    %v356 = vpack.c.b16 %v298, %v297
    %v357 = vpack.c.b16 %v300, %v299
    %v358 = vpack.c.b16 %v302, %v301
    %v359 = vpack.c.b16 %v304, %v303
    %v360 = vpack.c.b16 %v306, %v305
    %v361 = vpack.c.b16 %v308, %v307
    %v362 = vpack.c.b16 %v310, %v309
    %v363 = vpack.c.b16 %v312, %v311
    %v364 = vpack.c.b16 %v314, %v313
    %v365 = vpack.c.b16 %v316, %v315
    %v366 = vpack.c.b16 %v318, %v317
    %v367 = vpack.c.b16 %v320, %v319
    %v368 = vpack.c.b16 %v322, %v321
    %v369 = vpack.c.b16 %v324, %v323
    %v370 = vpack.c.b16 %v326, %v325
    %v371 = vpack.c.b16 %v328, %v327
    %v372 = vpack.c.b16 %v330, %v329
    %v373 = vpack.c.b16 %v332, %v331
    %v374 = vpack.c.b16 %v334, %v333
    %v375 = vpack.c.b16 %v336, %v335
    %v376 = vpack.c.b16 %v338, %v337
    %v377 = vpack.c.b16 %v340, %v339
    %v378 = vpack.c.b16 %v342, %v341
    %v379 = vpack.c.b16 %v344, %v343
    %v380 = vpack.c.b16 %v346, %v345
    %v381 = vpack.c.b16 %v348, %v347
    %v382 = vpack.c.b16 %v350, %v349
    %v383 = vpack.c.b16 %v351, %v351
    %vm415 = vcmask 949248
    %v417 = vsel %vm415, %v194, 0
    %v420 = vsel %vm415, %v198, 0
    %v423 = vsel %vm415, %v202, 0
    %v426 = vsel %vm415, %v206, 0
    %v429 = vsel %vm415, %v210, 0
    %vm431 = vcmask 1041408
    %v433 = vsel %vm431, %v383, 0
    %435 = vmatprep.subr.bf16.mxu0 0
    %436 = vmatpush1.bf16.msra.mxu0 %v352
    %437 = vmatprep.subr.bf16.mxu0 0
    %438 = vmatpush1.bf16.msra.mxu0 %v353
    %439 = vmatprep.subr.bf16.mxu0 0
    %440 = vmatpush1.bf16.msra.mxu0 %v354
    %441 = vmatprep.subr.bf16.mxu0 0
    %442 = vmatpush1.bf16.msra.mxu0 %v355
    %443 = vmatprep.subr.bf16.mxu0 0
    %444 = vmatpush1.bf16.msra.mxu0 %v356
    %445 = vmatprep.subr.bf16.mxu0 0
    %446 = vmatpush1.bf16.msra.mxu0 %v357
    %447 = vmatprep.subr.bf16.mxu0 0
    %448 = vmatpush1.bf16.msra.mxu0 %v358
    %449 = vmatprep.subr.bf16.mxu0 0
    %450 = vmatpush1.bf16.msra.mxu0 %v359
    %451 = vmatprep.subr.bf16.mxu0 0
    %452 = vmatpush1.bf16.msra.mxu0 %v360
    %453 = vmatprep.subr.bf16.mxu0 0
    %454 = vmatpush1.bf16.msra.mxu0 %v361
    %455 = vmatprep.subr.bf16.mxu0 0
    %456 = vmatpush1.bf16.msra.mxu0 %v362
    %457 = vmatprep.subr.bf16.mxu0 0
    %458 = vmatpush1.bf16.msra.mxu0 %v363
    %459 = vmatprep.subr.bf16.mxu0 0
    %460 = vmatpush1.bf16.msra.mxu0 %v364
    %461 = vmatprep.subr.bf16.mxu0 0
    %462 = vmatpush1.bf16.msra.mxu0 %v365
    %463 = vmatprep.subr.bf16.mxu0 0
    %464 = vmatpush1.bf16.msra.mxu0 %v366
    %465 = vmatprep.subr.bf16.mxu0 0
    %466 = vmatpush1.bf16.msra.mxu0 %v367
    %467 = vmatprep.mubr.bf16.mxu0 %v192
    %468 = vmatmul.mubr.bf16.gmra.mrb[0].mxu0 %v191
    %v469 = vpop.f32.mrb[0].mxu0
    %v470 = vadd.f32 %v129, %v469
    %v471 = vpop.f32.mrb[0].mxu0
    %v472 = vpop.f32.mrb[0].mxu0
    %v473 = vadd.f32 %v129, %v472
    %v474 = vpop.f32.mrb[0].mxu0
    %475 = vmatprep.mubr.bf16.mxu0 %v196
    %476 = vmatmul.mubr.bf16.gmra.mrb[0].mxu0 %v195
    %v477 = vpop.f32.mrb[0].mxu0
    %v478 = vadd.f32 %v129, %v477
    %v479 = vpop.f32.mrb[0].mxu0
    %v480 = vpop.f32.mrb[0].mxu0
    %v481 = vadd.f32 %v129, %v480
    %v482 = vpop.f32.mrb[0].mxu0
    %483 = vmatprep.mubr.bf16.mxu0 %v200
    %484 = vmatmul.mubr.bf16.gmra.mrb[0].mxu0 %v199
    %v485 = vpop.f32.mrb[0].mxu0
    %v486 = vadd.f32 %v129, %v485
    %v487 = vpop.f32.mrb[0].mxu0
    %v488 = vpop.f32.mrb[0].mxu0
    %v489 = vadd.f32 %v129, %v488
    %v490 = vpop.f32.mrb[0].mxu0
    %491 = vmatprep.mubr.bf16.mxu0 %v204
    %492 = vmatmul.mubr.bf16.gmra.mrb[0].mxu0 %v203
    %v493 = vpop.f32.mrb[0].mxu0
    %v494 = vadd.f32 %v129, %v493
    %v495 = vpop.f32.mrb[0].mxu0
    %v496 = vpop.f32.mrb[0].mxu0
    %v497 = vadd.f32 %v129, %v496
    %v498 = vpop.f32.mrb[0].mxu0
    %499 = vmatprep.mubr.bf16.mxu0 %v208
    %500 = vmatmul.mubr.bf16.gmra.mrb[0].mxu0 %v207
    %v501 = vpop.f32.mrb[0].mxu0
    %v502 = vadd.f32 %v129, %v501
    %v503 = vpop.f32.mrb[0].mxu0
    %v504 = vpop.f32.mrb[0].mxu0
    %v505 = vadd.f32 %v129, %v504
    %v506 = vpop.f32.mrb[0].mxu0
    %507 = vdwg.mxu0
    %508 = vmatprep.subr.bf16.mxu0 0
    %509 = vmatpush1.bf16.msra.mxu0 %v368
    %510 = vmatprep.subr.bf16.mxu0 0
    %511 = vmatpush1.bf16.msra.mxu0 %v369
    %512 = vmatprep.subr.bf16.mxu0 0
    %513 = vmatpush1.bf16.msra.mxu0 %v370
    %514 = vmatprep.subr.bf16.mxu0 0
    %515 = vmatpush1.bf16.msra.mxu0 %v371
    %516 = vmatprep.subr.bf16.mxu0 0
    %517 = vmatpush1.bf16.msra.mxu0 %v372
    %518 = vmatprep.subr.bf16.mxu0 0
    %519 = vmatpush1.bf16.msra.mxu0 %v373
    %520 = vmatprep.subr.bf16.mxu0 0
    %521 = vmatpush1.bf16.msra.mxu0 %v374
    %522 = vmatprep.subr.bf16.mxu0 0
    %523 = vmatpush1.bf16.msra.mxu0 %v375
    %524 = vmatprep.subr.bf16.mxu0 0
    %525 = vmatpush1.bf16.msra.mxu0 %v376
    %526 = vmatprep.subr.bf16.mxu0 0
    %527 = vmatpush1.bf16.msra.mxu0 %v377
    %528 = vmatprep.subr.bf16.mxu0 0
    %529 = vmatpush1.bf16.msra.mxu0 %v378
    %530 = vmatprep.subr.bf16.mxu0 0
    %531 = vmatpush1.bf16.msra.mxu0 %v379
    %532 = vmatprep.subr.bf16.mxu0 0
    %533 = vmatpush1.bf16.msra.mxu0 %v380
    %534 = vmatprep.subr.bf16.mxu0 0
    %535 = vmatpush1.bf16.msra.mxu0 %v381
    %536 = vmatprep.subr.bf16.mxu0 0
    %537 = vmatpush1.bf16.msra.mxu0 %v382
    %538 = vmatprep.subr.bf16.mxu0 0
    %539 = vmatpush1.bf16.msra.mxu0 %v433
    %540 = vmatprep.mubr.bf16.mxu0 %v417
    %541 = vmatmul.mubr.bf16.gmra.mrb[0].mxu0 %v193
    %v542 = vpop.f32.mrb[0].mxu0
    %v543 = vadd.f32 %v470, %v542
    %v544 = vpop.f32.mrb[0].mxu0
    %v545 = vpop.f32.mrb[0].mxu0
    %v546 = vadd.f32 %v473, %v545
    %v547 = vpop.f32.mrb[0].mxu0
    %548 = vmatprep.mubr.bf16.mxu0 %v420
    %549 = vmatmul.mubr.bf16.gmra.mrb[0].mxu0 %v197
    %v550 = vpop.f32.mrb[0].mxu0
    %v551 = vadd.f32 %v478, %v550
    %v552 = vpop.f32.mrb[0].mxu0
    %v553 = vpop.f32.mrb[0].mxu0
    %v554 = vadd.f32 %v481, %v553
    %v555 = vpop.f32.mrb[0].mxu0
    %556 = vmatprep.mubr.bf16.mxu0 %v423
    %557 = vmatmul.mubr.bf16.gmra.mrb[0].mxu0 %v201
    %v558 = vpop.f32.mrb[0].mxu0
    %v559 = vadd.f32 %v486, %v558
    %v560 = vpop.f32.mrb[0].mxu0
    %v561 = vpop.f32.mrb[0].mxu0
    %v562 = vadd.f32 %v489, %v561
    %v563 = vpop.f32.mrb[0].mxu0
    %564 = vmatprep.mubr.bf16.mxu0 %v426
    %565 = vmatmul.mubr.bf16.gmra.mrb[0].mxu0 %v205
    %v566 = vpop.f32.mrb[0].mxu0
    %v567 = vadd.f32 %v494, %v566
    %v568 = vpop.f32.mrb[0].mxu0
    %v569 = vpop.f32.mrb[0].mxu0
    %v570 = vadd.f32 %v497, %v569
    %v571 = vpop.f32.mrb[0].mxu0
    %572 = vmatprep.mubr.bf16.mxu0 %v429
    %573 = vmatmul.mubr.bf16.gmra.mrb[0].mxu0 %v209
    %v574 = vpop.f32.mrb[0].mxu0
    %v575 = vadd.f32 %v502, %v574
    %v576 = vpop.f32.mrb[0].mxu0
    %v577 = vpop.f32.mrb[0].mxu0
    %v578 = vadd.f32 %v505, %v577
    %v579 = vpop.f32.mrb[0].mxu0
    %580 = vdwg.mxu0
    %vm581 = vcmask 523264
    %v582 = vsel %vm581, %v543, 0.0
    %v583 = vsel %vm581, %v546, 0.0
    %v584 = vadd.f32 %v582, %v583
    %v585 = vsel %vm581, %v551, 0.0
    %v586 = vadd.f32 %v584, %v585
    %v587 = vsel %vm581, %v554, 0.0
    %v588 = vadd.f32 %v586, %v587
    %v589 = vsel %vm581, %v559, 0.0
    %v590 = vadd.f32 %v588, %v589
    %v591 = vsel %vm581, %v562, 0.0
    %v592 = vadd.f32 %v590, %v591
    %v593 = vsel %vm581, %v567, 0.0
    %v594 = vadd.f32 %v592, %v593
    %v595 = vsel %vm581, %v570, 0.0
    %v596 = vadd.f32 %v594, %v595
    %v597 = vsel %vm581, %v575, 0.0
    %v598 = vadd.f32 %v596, %v597
    %v599 = vsel %vm581, %v578, 0.0
    %v600 = vadd.f32 %v598, %v599
    %v601 = vrot.slane %v600, 4
    %v602 = vadd.f32 %v600, %v601
    %v603 = vrot.slane %v602, 2
    %v604 = vadd.f32 %v602, %v603
    %v605 = vrot.slane %v604, 1
    %v606 = vadd.f32 %v604, %v605
    %v607 = vmul.f32 %v606, 0.0125
    %v608 = vsub.f32 %v543, %v607
    %v609 = vsub.f32 %v546, %v607
    %v610 = vsub.f32 %v551, %v607
    %v611 = vsub.f32 %v554, %v607
    %v612 = vsub.f32 %v559, %v607
    %v613 = vsub.f32 %v562, %v607
    %v614 = vsub.f32 %v567, %v607
    %v615 = vsub.f32 %v570, %v607
    %v616 = vsub.f32 %v575, %v607
    %v617 = vsub.f32 %v578, %v607
    %v618 = vmul.f32 %v608, %v608
    %v619 = vmul.f32 %v609, %v609
    %v620 = vmul.f32 %v610, %v610
    %v621 = vmul.f32 %v611, %v611
    %v622 = vmul.f32 %v612, %v612
    %v623 = vmul.f32 %v613, %v613
    %v624 = vmul.f32 %v614, %v614
    %v625 = vmul.f32 %v615, %v615
    %v626 = vmul.f32 %v616, %v616
    %v627 = vmul.f32 %v617, %v617
    %v628 = vsel %vm581, %v618, 0.0
    %v629 = vsel %vm581, %v619, 0.0
    %v630 = vadd.f32 %v628, %v629
    %v631 = vsel %vm581, %v620, 0.0
    %v632 = vadd.f32 %v630, %v631
    %v633 = vsel %vm581, %v621, 0.0
    %v634 = vadd.f32 %v632, %v633
    %v635 = vsel %vm581, %v622, 0.0
    %v636 = vadd.f32 %v634, %v635
    %v637 = vsel %vm581, %v623, 0.0
    %v638 = vadd.f32 %v636, %v637
    %v639 = vsel %vm581, %v624, 0.0
    %v640 = vadd.f32 %v638, %v639
    %v641 = vsel %vm581, %v625, 0.0
    %v642 = vadd.f32 %v640, %v641
    %v643 = vsel %vm581, %v626, 0.0
    %v644 = vadd.f32 %v642, %v643
    %v645 = vsel %vm581, %v627, 0.0
    %v646 = vadd.f32 %v644, %v645
    %v647 = vrot.slane %v646, 4
    %v648 = vadd.f32 %v646, %v647
    %v649 = vrot.slane %v648, 2
    %v650 = vadd.f32 %v648, %v649
    %v651 = vrot.slane %v650, 1
    %v652 = vadd.f32 %v650, %v651
    %v653 = vmul.f32 %v652, 0.0125
    %v654 = vld [vmem:[%s3] sm:$0x1]
    %v655 = vadd.f32 %v653, 1e-05
    %v656 = vrsqrt.pop %v655
    %v657 = vmul.f32 %v654, %v656
    %v659 = vlaneseq
    %v660 = vshrl.u32 %v659, 7
    %v661 = vsub.s32 0, %v660
    %v662 = vrot.slane %v657, %v661
    %v664 = vmul.f32 %v608, %v662
    %v665 = vmul.f32 %v609, %v662
    %v666 = vmul.f32 %v610, %v662
    %v667 = vmul.f32 %v611, %v662
    %v668 = vmul.f32 %v612, %v662
    %v669 = vmul.f32 %v613, %v662
    %v670 = vmul.f32 %v614, %v662
    %v671 = vmul.f32 %v615, %v662
    %v672 = vmul.f32 %v616, %v662
    %v673 = vmul.f32 %v617, %v662
    %v674 = vld [vmem:[%s4] sm:$0x1]
    %v676 = vlaneseq
    %v677 = vshrl.u32 %v676, 7
    %v678 = vsub.s32 0, %v677
    %v679 = vrot.slane %v674, %v678
    %v681 = vadd.f32 %v664, %v679
    %v682 = vadd.f32 %v665, %v679
    %v683 = vadd.f32 %v666, %v679
    %v684 = vadd.f32 %v667, %v679
    %v685 = vadd.f32 %v668, %v679
    %v686 = vadd.f32 %v669, %v679
    %v687 = vadd.f32 %v670, %v679
    %v688 = vadd.f32 %v671, %v679
    %v689 = vadd.f32 %v672, %v679
    %v690 = vadd.f32 %v673, %v679
    %vm691 = vcmp.gt.f32.partialorder %v681, 0.0
    %vm692 = vcmp.gt.f32.partialorder %v682, 0.0
    %vm693 = vcmp.gt.f32.partialorder %v683, 0.0
    %vm694 = vcmp.gt.f32.partialorder %v684, 0.0
    %vm695 = vcmp.gt.f32.partialorder %v685, 0.0
    %vm696 = vcmp.gt.f32.partialorder %v686, 0.0
    %vm697 = vcmp.gt.f32.partialorder %v687, 0.0
    %vm698 = vcmp.gt.f32.partialorder %v688, 0.0
    %vm699 = vcmp.gt.f32.partialorder %v689, 0.0
    %vm700 = vcmp.gt.f32.partialorder %v690, 0.0
    %v701 = vmul.f32 %v681, 0.25
    %v702 = vmul.f32 %v682, 0.25
    %v703 = vmul.f32 %v683, 0.25
    %v704 = vmul.f32 %v684, 0.25
    %v705 = vmul.f32 %v685, 0.25
    %v706 = vmul.f32 %v686, 0.25
    %v707 = vmul.f32 %v687, 0.25
    %v708 = vmul.f32 %v688, 0.25
    %v709 = vmul.f32 %v689, 0.25
    %v710 = vmul.f32 %v690, 0.25
    %v711 = vsel %vm691, %v681, %v701
    %v712 = vsel %vm692, %v682, %v702
    %v713 = vsel %vm693, %v683, %v703
    %v714 = vsel %vm694, %v684, %v704
    %v715 = vsel %vm695, %v685, %v705
    %v716 = vsel %vm696, %v686, %v706
    %v717 = vsel %vm697, %v687, %v707
    %v718 = vsel %vm698, %v688, %v708
    %v719 = vsel %vm699, %v689, %v709
    %v720 = vsel %vm700, %v690, %v710
    %v721 = vsel %vm581, %v711, -inf
    %vm722 = vcmask 517120
    %v723 = vsel %vm722, %v712, -inf
    %v724 = vmax.f32 %v721, %v723
    %v725 = vrot.slane %v724, 4
    %v726 = vmax.f32 %v724, %v725
    %v727 = vrot.slane %v726, 2
    %v728 = vmax.f32 %v726, %v727
    %v729 = vrot.slane %v728, 1
    %v730 = vmax.f32 %v728, %v729
    %vm731 = vcmask 523266
    %v732 = vsel %vm731, %v712, -inf
    %vm733 = vcmask 519168
    %v734 = vsel %vm733, %v713, -inf
    %v735 = vmax.f32 %v732, %v734
    %v736 = vrot.slane %v735, 4
    %v737 = vmax.f32 %v735, %v736
    %v738 = vrot.slane %v737, 2
    %v739 = vmax.f32 %v737, %v738
    %v740 = vrot.slane %v739, 1
    %v741 = vmax.f32 %v739, %v740
    %vm742 = vcmask 523268
    %v743 = vsel %vm742, %v713, -inf
    %vm744 = vcmask 521216
    %v745 = vsel %vm744, %v714, -inf
    %v746 = vmax.f32 %v743, %v745
    %v747 = vrot.slane %v746, 4
    %v748 = vmax.f32 %v746, %v747
    %v749 = vrot.slane %v748, 2
    %v750 = vmax.f32 %v748, %v749
    %v751 = vrot.slane %v750, 1
    %v752 = vmax.f32 %v750, %v751
    %vm753 = vcmask 523270
    %v754 = vsel %vm753, %v714, -inf
    %v755 = vsel %vm581, %v715, -inf
    %v756 = vmax.f32 %v754, %v755
    %v757 = vrot.slane %v756, 4
    %v758 = vmax.f32 %v756, %v757
    %v759 = vrot.slane %v758, 2
    %v760 = vmax.f32 %v758, %v759
    %v761 = vrot.slane %v760, 1
    %v762 = vmax.f32 %v760, %v761
    %764 = vrot.lane.b32.xlu0 %v741, 64
    %v765 = vpop.permute.xlu0 %764
    %768 = vrot.lane.b32.xlu0 %v762, 64
    %v769 = vpop.permute.xlu0 %768
    %v771 = vsel %vm581, %v730, %v765
    %v772 = vsel %vm581, %v752, %v769
    %v773 = vsel %vm581, %v716, -inf
    %v774 = vsel %vm722, %v717, -inf
    %v775 = vmax.f32 %v773, %v774
    %v776 = vrot.slane %v775, 4
    %v777 = vmax.f32 %v775, %v776
    %v778 = vrot.slane %v777, 2
    %v779 = vmax.f32 %v777, %v778
    %v780 = vrot.slane %v779, 1
    %v781 = vmax.f32 %v779, %v780
    %v782 = vsel %vm731, %v717, -inf
    %v783 = vsel %vm733, %v718, -inf
    %v784 = vmax.f32 %v782, %v783
    %v785 = vrot.slane %v784, 4
    %v786 = vmax.f32 %v784, %v785
    %v787 = vrot.slane %v786, 2
    %v788 = vmax.f32 %v786, %v787
    %v789 = vrot.slane %v788, 1
    %v790 = vmax.f32 %v788, %v789
    %v791 = vsel %vm742, %v718, -inf
    %v792 = vsel %vm744, %v719, -inf
    %v793 = vmax.f32 %v791, %v792
    %v794 = vrot.slane %v793, 4
    %v795 = vmax.f32 %v793, %v794
    %v796 = vrot.slane %v795, 2
    %v797 = vmax.f32 %v795, %v796
    %v798 = vrot.slane %v797, 1
    %v799 = vmax.f32 %v797, %v798
    %v800 = vsel %vm753, %v719, -inf
    %v801 = vsel %vm581, %v720, -inf
    %v802 = vmax.f32 %v800, %v801
    %v803 = vrot.slane %v802, 4
    %v804 = vmax.f32 %v802, %v803
    %v805 = vrot.slane %v804, 2
    %v806 = vmax.f32 %v804, %v805
    %v807 = vrot.slane %v806, 1
    %v808 = vmax.f32 %v806, %v807
    %810 = vrot.lane.b32.xlu0 %v790, 64
    %v811 = vpop.permute.xlu0 %810
    %814 = vrot.lane.b32.xlu0 %v808, 64
    %v815 = vpop.permute.xlu0 %814
    %v817 = vsel %vm581, %v781, %v811
    %v818 = vsel %vm581, %v799, %v815
    %v821 = vrot.slane %v817, 7
    %v822 = vrot.slane %v818, 7
    %vm825 = vcmask 1040384
    %v826 = vsel %vm825, %v771, %v821
    %v827 = vsel %vm825, %v772, %v822
    %v828 = vpack.c.bf16 %v826, %v826
    %v829 = vpack.c.bf16 %v827, %v827
    %v830 = vld [vmem:[%s5] sm:$0xff]
    %v831 = vld [vmem:[%s5 + $0x8] sm:$0xff]
    %v832 = vld [vmem:[%s5 + $0x10] sm:$0xff]
    %v833 = vld [vmem:[%s5 + $0x18] sm:$0xff]
    %v834 = vld [vmem:[%s5 + $0x20] sm:$0xff]
    %v835 = vld [vmem:[%s5 + $0x28] sm:$0xff]
    %v836 = vld [vmem:[%s5 + $0x30] sm:$0xff]
    %v837 = vld [vmem:[%s5 + $0x38] sm:$0xff]
    %v838 = vld [vmem:[%s5 + $0x40] sm:$0xff]
    %v839 = vld [vmem:[%s5 + $0x48] sm:$0xff]
    %v840 = vld [vmem:[%s5 + $0x50] sm:$0xff]
    %v841 = vld [vmem:[%s5 + $0x58] sm:$0xff]
    %v842 = vld [vmem:[%s5 + $0x60] sm:$0xff]
    %v843 = vld [vmem:[%s5 + $0x68] sm:$0xff]
    %v844 = vld [vmem:[%s5 + $0x70] sm:$0xff]
    %v845 = vld [vmem:[%s5 + $0x78] sm:$0xff]
    %v846 = vld [vmem:[%s5 + $0x80] sm:$0xff]
    %v847 = vld [vmem:[%s5 + $0x88] sm:$0xff]
    %v848 = vld [vmem:[%s5 + $0x90] sm:$0xff]
    %v849 = vld [vmem:[%s5 + $0x98] sm:$0xff]
    %v850 = vld [vmem:[%s5 + $0xa0] sm:$0xff]
    %v851 = vld [vmem:[%s5 + $0xa8] sm:$0xff]
    %v852 = vld [vmem:[%s5 + $0xb0] sm:$0xff]
    %v853 = vld [vmem:[%s5 + $0xb8] sm:$0xff]
    %v854 = vld [vmem:[%s5 + $0xc0] sm:$0xff]
    %v855 = vld [vmem:[%s5 + $0xc8] sm:$0xff]
    %v856 = vld [vmem:[%s5 + $0xd0] sm:$0xff]
    %v857 = vld [vmem:[%s5 + $0xd8] sm:$0xff]
    %v858 = vld [vmem:[%s5 + $0xe0] sm:$0xff]
    %v859 = vld [vmem:[%s5 + $0xe8] sm:$0xff]
    %v860 = vld [vmem:[%s5 + $0xf0] sm:$0xff]
    %v861 = vld [vmem:[%s5 + $0xf8] sm:$0xff]
    %v862 = vld [vmem:[%s6] sm:$0x3]
    %v864 = vlaneseq
    %v865 = vshrl.u32 %v864, 7
    %v866 = vsub.s32 0, %v865
    %v867 = vrot.slane %v862, %v866
    %v868 = vlaneseq
    %v869 = vshrl.u32 %v868, 7
    %v870 = vsub.s32 1, %v869
    %v871 = vrot.slane %v862, %v870
    %v906 = vunpack.c.l.b16 %v830
    %v907 = vunpack.c.h.b16 %v830
    %v908 = vunpack.c.l.b16 %v831
    %v909 = vunpack.c.h.b16 %v831
    %v910 = vunpack.c.l.b16 %v832
    %v911 = vunpack.c.h.b16 %v832
    %v912 = vunpack.c.l.b16 %v833
    %v913 = vunpack.c.h.b16 %v833
    %v914 = vunpack.c.l.b16 %v834
    %v915 = vunpack.c.h.b16 %v834
    %v916 = vunpack.c.l.b16 %v835
    %v917 = vunpack.c.h.b16 %v835
    %v918 = vunpack.c.l.b16 %v836
    %v919 = vunpack.c.h.b16 %v836
    %v920 = vunpack.c.l.b16 %v837
    %v921 = vunpack.c.h.b16 %v837
    %v922 = vunpack.c.l.b16 %v838
    %v923 = vunpack.c.h.b16 %v838
    %v924 = vunpack.c.l.b16 %v839
    %v925 = vunpack.c.h.b16 %v839
    %v926 = vunpack.c.l.b16 %v840
    %v927 = vunpack.c.h.b16 %v840
    %v928 = vunpack.c.l.b16 %v841
    %v929 = vunpack.c.h.b16 %v841
    %v930 = vunpack.c.l.b16 %v842
    %v931 = vunpack.c.h.b16 %v842
    %v932 = vunpack.c.l.b16 %v843
    %v933 = vunpack.c.h.b16 %v843
    %v934 = vunpack.c.l.b16 %v844
    %v935 = vunpack.c.h.b16 %v844
    %v936 = vunpack.c.l.b16 %v845
    %v937 = vunpack.c.h.b16 %v845
    %v938 = vunpack.c.l.b16 %v846
    %v939 = vunpack.c.h.b16 %v846
    %v940 = vunpack.c.l.b16 %v847
    %v941 = vunpack.c.h.b16 %v847
    %v942 = vunpack.c.l.b16 %v848
    %v943 = vunpack.c.h.b16 %v848
    %v944 = vunpack.c.l.b16 %v849
    %v945 = vunpack.c.h.b16 %v849
    %v946 = vunpack.c.l.b16 %v850
    %v947 = vunpack.c.h.b16 %v850
    %v948 = vunpack.c.l.b16 %v851
    %v949 = vunpack.c.h.b16 %v851
    %v950 = vunpack.c.l.b16 %v852
    %v951 = vunpack.c.h.b16 %v852
    %v952 = vunpack.c.l.b16 %v853
    %v953 = vunpack.c.h.b16 %v853
    %v954 = vunpack.c.l.b16 %v854
    %v955 = vunpack.c.h.b16 %v854
    %v956 = vunpack.c.l.b16 %v855
    %v957 = vunpack.c.h.b16 %v855
    %v958 = vunpack.c.l.b16 %v856
    %v959 = vunpack.c.h.b16 %v856
    %v960 = vunpack.c.l.b16 %v857
    %v961 = vunpack.c.h.b16 %v857
    %v962 = vunpack.c.l.b16 %v858
    %v963 = vunpack.c.h.b16 %v858
    %v964 = vunpack.c.l.b16 %v859
    %v965 = vunpack.c.h.b16 %v859
    %v966 = vunpack.c.l.b16 %v860
    %v967 = vunpack.c.h.b16 %v860
    %v968 = vunpack.c.l.b16 %v861
    %v969 = vunpack.c.h.b16 %v861
    %v970 = vpack.c.b16 %v908, %v906
    %v971 = vpack.c.b16 %v909, %v907
    %v972 = vpack.c.b16 %v912, %v910
    %v973 = vpack.c.b16 %v913, %v911
    %v974 = vpack.c.b16 %v916, %v914
    %v975 = vpack.c.b16 %v917, %v915
    %v976 = vpack.c.b16 %v920, %v918
    %v977 = vpack.c.b16 %v921, %v919
    %v978 = vpack.c.b16 %v924, %v922
    %v979 = vpack.c.b16 %v925, %v923
    %v980 = vpack.c.b16 %v928, %v926
    %v981 = vpack.c.b16 %v929, %v927
    %v982 = vpack.c.b16 %v932, %v930
    %v983 = vpack.c.b16 %v933, %v931
    %v984 = vpack.c.b16 %v936, %v934
    %v985 = vpack.c.b16 %v937, %v935
    %v986 = vpack.c.b16 %v940, %v938
    %v987 = vpack.c.b16 %v941, %v939
    %v988 = vpack.c.b16 %v944, %v942
    %v989 = vpack.c.b16 %v945, %v943
    %v990 = vpack.c.b16 %v948, %v946
    %v991 = vpack.c.b16 %v949, %v947
    %v992 = vpack.c.b16 %v952, %v950
    %v993 = vpack.c.b16 %v953, %v951
    %v994 = vpack.c.b16 %v956, %v954
    %v995 = vpack.c.b16 %v957, %v955
    %v996 = vpack.c.b16 %v960, %v958
    %v997 = vpack.c.b16 %v961, %v959
    %v998 = vpack.c.b16 %v964, %v962
    %v999 = vpack.c.b16 %v965, %v963
    %v1000 = vpack.c.b16 %v968, %v966
    %v1001 = vpack.c.b16 %v969, %v967
    %1034 = vmatprep.subr.bf16.mxu0 %v971
    %1035 = vmatpush1.bf16.msra.mxu0 %v970
    %1036 = vmatprep.subr.bf16.mxu0 %v973
    %1037 = vmatpush1.bf16.msra.mxu0 %v972
    %1038 = vmatprep.subr.bf16.mxu0 %v975
    %1039 = vmatpush1.bf16.msra.mxu0 %v974
    %1040 = vmatprep.subr.bf16.mxu0 %v977
    %1041 = vmatpush1.bf16.msra.mxu0 %v976
    %1042 = vmatprep.subr.bf16.mxu0 %v979
    %1043 = vmatpush1.bf16.msra.mxu0 %v978
    %1044 = vmatprep.subr.bf16.mxu0 %v981
    %1045 = vmatpush1.bf16.msra.mxu0 %v980
    %1046 = vmatprep.subr.bf16.mxu0 %v983
    %1047 = vmatpush1.bf16.msra.mxu0 %v982
    %1048 = vmatprep.subr.bf16.mxu0 %v985
    %1049 = vmatpush1.bf16.msra.mxu0 %v984
    %1050 = vmatprep.subr.bf16.mxu0 %v987
    %1051 = vmatpush1.bf16.msra.mxu0 %v986
    %1052 = vmatprep.subr.bf16.mxu0 %v989
    %1053 = vmatpush1.bf16.msra.mxu0 %v988
    %1054 = vmatprep.subr.bf16.mxu0 %v991
    %1055 = vmatpush1.bf16.msra.mxu0 %v990
    %1056 = vmatprep.subr.bf16.mxu0 %v993
    %1057 = vmatpush1.bf16.msra.mxu0 %v992
    %1058 = vmatprep.subr.bf16.mxu0 %v995
    %1059 = vmatpush1.bf16.msra.mxu0 %v994
    %1060 = vmatprep.subr.bf16.mxu0 %v997
    %1061 = vmatpush1.bf16.msra.mxu0 %v996
    %1062 = vmatprep.subr.bf16.mxu0 %v999
    %1063 = vmatpush1.bf16.msra.mxu0 %v998
    %1064 = vmatprep.subr.bf16.mxu0 %v1001
    %1065 = vmatpush1.bf16.msra.mxu0 %v1000
    %1066 = vmatprep.mubr.bf16.mxu0 %v829
    %1067 = vmatmul.mubr.bf16.gmra.mrb[0].mxu0 %v828
    %v1068 = vpop.f32.mrb[0].mxu0
    %v1069 = vadd.f32 %v867, %v1068
    %v1070 = vpop.f32.mrb[0].mxu0
    %v1071 = vadd.f32 %v871, %v1070
    %v1072 = vpop.f32.mrb[0].mxu0
    %v1073 = vpop.f32.mrb[0].mxu0
    %1074 = vdwg.mxu0
    %v1075 = vmul.f32 %v1071, 0.5
    %v1076 = vmul.f32 %v1075, 1.442695
    %v1077 = vpow.pop %v1076
    %v1078 = vld [vmem:[%s7] sm:$0x3]
    %v1079 = vmul.f32 %v1077, %v1078
    %v1080 = vadd.f32 %v1069, %v1079
    %1081 = vst [vmem:[#allocation2] sm:$0x3] %v1069
    %1082 = vst [vmem:[#allocation4] sm:$0x3] %v1071
    %v1083 = vpack.c.bf16 %v1080, %v1080
    %v1084 = vld [vmem:[%s8] sm:$0xff]
    %v1085 = vld [vmem:[%s8 + $0x8] sm:$0xff]
    %v1086 = vld [vmem:[%s8 + $0x10] sm:$0xf]
    %v1087 = vld [vmem:[%s8 + $0x14] sm:$0xff]
    %v1088 = vld [vmem:[%s8 + $0x1c] sm:$0xff]
    %v1089 = vld [vmem:[%s8 + $0x24] sm:$0xf]
    %v1090 = vld [vmem:[%s8 + $0x28] sm:$0xff]
    %v1091 = vld [vmem:[%s8 + $0x30] sm:$0xff]
    %v1092 = vld [vmem:[%s8 + $0x38] sm:$0xf]
    %v1093 = vld [vmem:[%s8 + $0x3c] sm:$0xff]
    %v1094 = vld [vmem:[%s8 + $0x44] sm:$0xff]
    %v1095 = vld [vmem:[%s8 + $0x4c] sm:$0xf]
    %v1096 = vld [vmem:[%s8 + $0x50] sm:$0xff]
    %v1097 = vld [vmem:[%s8 + $0x58] sm:$0xff]
    %v1098 = vld [vmem:[%s8 + $0x60] sm:$0xf]
    %v1099 = vld [vmem:[%s8 + $0x64] sm:$0xff]
    %v1100 = vld [vmem:[%s8 + $0x6c] sm:$0xff]
    %v1101 = vld [vmem:[%s8 + $0x74] sm:$0xf]
    %v1102 = vld [vmem:[%s8 + $0x78] sm:$0xff]
    %v1103 = vld [vmem:[%s8 + $0x80] sm:$0xff]
    %v1104 = vld [vmem:[%s8 + $0x88] sm:$0xf]
    %v1105 = vld [vmem:[%s8 + $0x8c] sm:$0xff]
    %v1106 = vld [vmem:[%s8 + $0x94] sm:$0xff]
    %v1107 = vld [vmem:[%s8 + $0x9c] sm:$0xf]
    %v1108 = vld [vmem:[%s8 + $0xa0] sm:$0xff]
    %v1109 = vld [vmem:[%s8 + $0xa8] sm:$0xff]
    %v1110 = vld [vmem:[%s8 + $0xb0] sm:$0xf]
    %v1111 = vld [vmem:[%s8 + $0xb4] sm:$0xff]
    %v1112 = vld [vmem:[%s8 + $0xbc] sm:$0xff]
    %v1113 = vld [vmem:[%s8 + $0xc4] sm:$0xf]
    %v1114 = vld [vmem:[%s8 + $0xc8] sm:$0xff]
    %v1115 = vld [vmem:[%s8 + $0xd0] sm:$0xff]
    %v1116 = vld [vmem:[%s8 + $0xd8] sm:$0xf]
    %v1117 = vld [vmem:[%s8 + $0xdc] sm:$0xff]
    %v1118 = vld [vmem:[%s8 + $0xe4] sm:$0xff]
    %v1119 = vld [vmem:[%s8 + $0xec] sm:$0xf]
    %v1120 = vld [vmem:[%s8 + $0xf0] sm:$0xff]
    %v1121 = vld [vmem:[%s8 + $0xf8] sm:$0xff]
    %v1122 = vld [vmem:[%s8 + $0x100] sm:$0xf]
    %v1123 = vld [vmem:[%s8 + $0x104] sm:$0xff]
    %v1124 = vld [vmem:[%s8 + $0x10c] sm:$0xff]
    %v1125 = vld [vmem:[%s8 + $0x114] sm:$0xf]
    %v1126 = vld [vmem:[%s8 + $0x118] sm:$0xff]
    %v1127 = vld [vmem:[%s8 + $0x120] sm:$0xff]
    %v1128 = vld [vmem:[%s8 + $0x128] sm:$0xf]
    %v1129 = vld [vmem:[%s8 + $0x12c] sm:$0xff]
    %v1130 = vld [vmem:[%s8 + $0x134] sm:$0xff]
    %v1131 = vld [vmem:[%s8 + $0x13c] sm:$0xf]
    %v1132 = vld [vmem:[%s9] sm:$0x1f]
    %v1134 = vlaneseq
    %v1135 = vshrl.u32 %v1134, 7
    %v1136 = vsub.s32 0, %v1135
    %v1137 = vrot.slane %v1132, %v1136
    %v1138 = vlaneseq
    %v1139 = vshrl.u32 %v1138, 7
    %v1140 = vsub.s32 1, %v1139
    %v1141 = vrot.slane %v1132, %v1140
    %v1142 = vlaneseq
    %v1143 = vshrl.u32 %v1142, 7
    %v1144 = vsub.s32 2, %v1143
    %v1145 = vrot.slane %v1132, %v1144
    %v1146 = vlaneseq
    %v1147 = vshrl.u32 %v1146, 7
    %v1148 = vsub.s32 3, %v1147
    %v1149 = vrot.slane %v1132, %v1148
    %v1150 = vlaneseq
    %v1151 = vshrl.u32 %v1150, 7
    %v1152 = vsub.s32 4, %v1151
    %v1153 = vrot.slane %v1132, %v1152
    %v1207 = vunpack.c.l.b16 %v1084
    %v1208 = vunpack.c.h.b16 %v1084
    %v1209 = vunpack.c.l.b16 %v1085
    %v1210 = vunpack.c.h.b16 %v1085
    %v1211 = vunpack.c.l.b16 %v1086
    %v1212 = vunpack.c.l.b16 %v1087
    %v1213 = vunpack.c.h.b16 %v1087
    %v1214 = vunpack.c.l.b16 %v1088
    %v1215 = vunpack.c.h.b16 %v1088
    %v1216 = vunpack.c.l.b16 %v1089
    %v1217 = vunpack.c.l.b16 %v1090
    %v1218 = vunpack.c.h.b16 %v1090
    %v1219 = vunpack.c.l.b16 %v1091
    %v1220 = vunpack.c.h.b16 %v1091
    %v1221 = vunpack.c.l.b16 %v1092
    %v1222 = vunpack.c.l.b16 %v1093
    %v1223 = vunpack.c.h.b16 %v1093
    %v1224 = vunpack.c.l.b16 %v1094
    %v1225 = vunpack.c.h.b16 %v1094
    %v1226 = vunpack.c.l.b16 %v1095
    %v1227 = vunpack.c.l.b16 %v1096
    %v1228 = vunpack.c.h.b16 %v1096
    %v1229 = vunpack.c.l.b16 %v1097
    %v1230 = vunpack.c.h.b16 %v1097
    %v1231 = vunpack.c.l.b16 %v1098
    %v1232 = vunpack.c.l.b16 %v1099
    %v1233 = vunpack.c.h.b16 %v1099
    %v1234 = vunpack.c.l.b16 %v1100
    %v1235 = vunpack.c.h.b16 %v1100
    %v1236 = vunpack.c.l.b16 %v1101
    %v1237 = vunpack.c.l.b16 %v1102
    %v1238 = vunpack.c.h.b16 %v1102
    %v1239 = vunpack.c.l.b16 %v1103
    %v1240 = vunpack.c.h.b16 %v1103
    %v1241 = vunpack.c.l.b16 %v1104
    %v1242 = vunpack.c.l.b16 %v1105
    %v1243 = vunpack.c.h.b16 %v1105
    %v1244 = vunpack.c.l.b16 %v1106
    %v1245 = vunpack.c.h.b16 %v1106
    %v1246 = vunpack.c.l.b16 %v1107
    %v1247 = vunpack.c.l.b16 %v1108
    %v1248 = vunpack.c.h.b16 %v1108
    %v1249 = vunpack.c.l.b16 %v1109
    %v1250 = vunpack.c.h.b16 %v1109
    %v1251 = vunpack.c.l.b16 %v1110
    %v1252 = vunpack.c.l.b16 %v1111
    %v1253 = vunpack.c.h.b16 %v1111
    %v1254 = vunpack.c.l.b16 %v1112
    %v1255 = vunpack.c.h.b16 %v1112
    %v1256 = vunpack.c.l.b16 %v1113
    %v1257 = vunpack.c.l.b16 %v1114
    %v1258 = vunpack.c.h.b16 %v1114
    %v1259 = vunpack.c.l.b16 %v1115
    %v1260 = vunpack.c.h.b16 %v1115
    %v1261 = vunpack.c.l.b16 %v1116
    %v1262 = vunpack.c.l.b16 %v1117
    %v1263 = vunpack.c.h.b16 %v1117
    %v1264 = vunpack.c.l.b16 %v1118
    %v1265 = vunpack.c.h.b16 %v1118
    %v1266 = vunpack.c.l.b16 %v1119
    %v1267 = vunpack.c.l.b16 %v1120
    %v1268 = vunpack.c.h.b16 %v1120
    %v1269 = vunpack.c.l.b16 %v1121
    %v1270 = vunpack.c.h.b16 %v1121
    %v1271 = vunpack.c.l.b16 %v1122
    %v1272 = vunpack.c.l.b16 %v1123
    %v1273 = vunpack.c.h.b16 %v1123
    %v1274 = vunpack.c.l.b16 %v1124
    %v1275 = vunpack.c.h.b16 %v1124
    %v1276 = vunpack.c.l.b16 %v1125
    %v1277 = vunpack.c.l.b16 %v1126
    %v1278 = vunpack.c.h.b16 %v1126
    %v1279 = vunpack.c.l.b16 %v1127
    %v1280 = vunpack.c.h.b16 %v1127
    %v1281 = vunpack.c.l.b16 %v1128
    %v1282 = vunpack.c.l.b16 %v1129
    %v1283 = vunpack.c.h.b16 %v1129
    %v1284 = vunpack.c.l.b16 %v1130
    %v1285 = vunpack.c.h.b16 %v1130
    %v1286 = vunpack.c.l.b16 %v1131
    %v1287 = vpack.c.b16 %v1212, %v1207
    %v1288 = vpack.c.b16 %v1213, %v1208
    %v1289 = vpack.c.b16 %v1214, %v1209
    %v1290 = vpack.c.b16 %v1215, %v1210
    %v1291 = vpack.c.b16 %v1216, %v1211
    %v1292 = vpack.c.b16 %v1222, %v1217
    %v1293 = vpack.c.b16 %v1223, %v1218
    %v1294 = vpack.c.b16 %v1224, %v1219
    %v1295 = vpack.c.b16 %v1225, %v1220
    %v1296 = vpack.c.b16 %v1226, %v1221
    %v1297 = vpack.c.b16 %v1232, %v1227
    %v1298 = vpack.c.b16 %v1233, %v1228
    %v1299 = vpack.c.b16 %v1234, %v1229
    %v1300 = vpack.c.b16 %v1235, %v1230
    %v1301 = vpack.c.b16 %v1236, %v1231
    %v1302 = vpack.c.b16 %v1242, %v1237
    %v1303 = vpack.c.b16 %v1243, %v1238
    %v1304 = vpack.c.b16 %v1244, %v1239
    %v1305 = vpack.c.b16 %v1245, %v1240
    %v1306 = vpack.c.b16 %v1246, %v1241
    %v1307 = vpack.c.b16 %v1252, %v1247
    %v1308 = vpack.c.b16 %v1253, %v1248
    %v1309 = vpack.c.b16 %v1254, %v1249
    %v1310 = vpack.c.b16 %v1255, %v1250
    %v1311 = vpack.c.b16 %v1256, %v1251
    %v1312 = vpack.c.b16 %v1262, %v1257
    %v1313 = vpack.c.b16 %v1263, %v1258
    %v1314 = vpack.c.b16 %v1264, %v1259
    %v1315 = vpack.c.b16 %v1265, %v1260
    %v1316 = vpack.c.b16 %v1266, %v1261
    %v1317 = vpack.c.b16 %v1272, %v1267
    %v1318 = vpack.c.b16 %v1273, %v1268
    %v1319 = vpack.c.b16 %v1274, %v1269
    %v1320 = vpack.c.b16 %v1275, %v1270
    %v1321 = vpack.c.b16 %v1276, %v1271
    %v1322 = vpack.c.b16 %v1282, %v1277
    %v1323 = vpack.c.b16 %v1283, %v1278
    %v1324 = vpack.c.b16 %v1284, %v1279
    %v1325 = vpack.c.b16 %v1285, %v1280
    %v1326 = vpack.c.b16 %v1286, %v1281
    %1367 = vmatprep.subr.bf16.mxu0 %v1288
    %1368 = vmatpush1.bf16.msra.mxu0 %v1287
    %1369 = vmatprep.subr.bf16.mxu0 %v1293
    %1370 = vmatpush1.bf16.msra.mxu0 %v1292
    %1371 = vmatprep.subr.bf16.mxu0 %v1298
    %1372 = vmatpush1.bf16.msra.mxu0 %v1297
    %1373 = vmatprep.subr.bf16.mxu0 %v1303
    %1374 = vmatpush1.bf16.msra.mxu0 %v1302
    %1375 = vmatprep.subr.bf16.mxu0 %v1308
    %1376 = vmatpush1.bf16.msra.mxu0 %v1307
    %1377 = vmatprep.subr.bf16.mxu0 %v1313
    %1378 = vmatpush1.bf16.msra.mxu0 %v1312
    %1379 = vmatprep.subr.bf16.mxu0 %v1318
    %1380 = vmatpush1.bf16.msra.mxu0 %v1317
    %1381 = vmatprep.subr.bf16.mxu0 %v1323
    %1382 = vmatpush1.bf16.msra.mxu0 %v1322
    %1383 = vmatprep.subr.bf16.mxu0 0
    %1384 = vmatpush1.bf16.msra.mxu0 0
    %1385 = vmatprep.subr.bf16.mxu0 0
    %1386 = vmatpush1.bf16.msra.mxu0 0
    %1387 = vmatprep.subr.bf16.mxu0 0
    %1388 = vmatpush1.bf16.msra.mxu0 0
    %1389 = vmatprep.subr.bf16.mxu0 0
    %1390 = vmatpush1.bf16.msra.mxu0 0
    %1391 = vmatprep.subr.bf16.mxu0 0
    %1392 = vmatpush1.bf16.msra.mxu0 0
    %1393 = vmatprep.subr.bf16.mxu0 0
    %1394 = vmatpush1.bf16.msra.mxu0 0
    %1395 = vmatprep.subr.bf16.mxu0 0
    %1396 = vmatpush1.bf16.msra.mxu0 0
    %1397 = vmatprep.subr.bf16.mxu0 0
    %1398 = vmatpush1.bf16.msra.mxu0 0
    %1399 = vmatprep.mubr.bf16.mxu0 0
    %1400 = vmatmul.mubr.bf16.gmra.mrb[0].mxu0 %v1083
    %v1401 = vpop.f32.mrb[0].mxu0
    %v1402 = vadd.f32 %v1137, %v1401
    %v1403 = vpop.f32.mrb[0].mxu0
    %v1404 = vadd.f32 %v1141, %v1403
    %v1405 = vpop.f32.mrb[0].mxu0
    %v1406 = vpop.f32.mrb[0].mxu0
    %1407 = vdwg.mxu0
    %1408 = vmatprep.subr.bf16.mxu0 %v1290
    %1409 = vmatpush1.bf16.msra.mxu0 %v1289
    %1410 = vmatprep.subr.bf16.mxu0 %v1295
    %1411 = vmatpush1.bf16.msra.mxu0 %v1294
    %1412 = vmatprep.subr.bf16.mxu0 %v1300
    %1413 = vmatpush1.bf16.msra.mxu0 %v1299
    %1414 = vmatprep.subr.bf16.mxu0 %v1305
    %1415 = vmatpush1.bf16.msra.mxu0 %v1304
    %1416 = vmatprep.subr.bf16.mxu0 %v1310
    %1417 = vmatpush1.bf16.msra.mxu0 %v1309
    %1418 = vmatprep.subr.bf16.mxu0 %v1315
    %1419 = vmatpush1.bf16.msra.mxu0 %v1314
    %1420 = vmatprep.subr.bf16.mxu0 %v1320
    %1421 = vmatpush1.bf16.msra.mxu0 %v1319
    %1422 = vmatprep.subr.bf16.mxu0 %v1325
    %1423 = vmatpush1.bf16.msra.mxu0 %v1324
    %1424 = vmatprep.subr.bf16.mxu0 0
    %1425 = vmatpush1.bf16.msra.mxu0 0
    %1426 = vmatprep.subr.bf16.mxu0 0
    %1427 = vmatpush1.bf16.msra.mxu0 0
    %1428 = vmatprep.subr.bf16.mxu0 0
    %1429 = vmatpush1.bf16.msra.mxu0 0
    %1430 = vmatprep.subr.bf16.mxu0 0
    %1431 = vmatpush1.bf16.msra.mxu0 0
    %1432 = vmatprep.subr.bf16.mxu0 0
    %1433 = vmatpush1.bf16.msra.mxu0 0
    %1434 = vmatprep.subr.bf16.mxu0 0
    %1435 = vmatpush1.bf16.msra.mxu0 0
    %1436 = vmatprep.subr.bf16.mxu0 0
    %1437 = vmatpush1.bf16.msra.mxu0 0
    %1438 = vmatprep.subr.bf16.mxu0 0
    %1439 = vmatpush1.bf16.msra.mxu0 0
    %1440 = vmatprep.mubr.bf16.mxu0 0
    %1441 = vmatmul.mubr.bf16.gmra.mrb[0].mxu0 %v1083
    %v1442 = vpop.f32.mrb[0].mxu0
    %v1443 = vadd.f32 %v1145, %v1442
    %v1444 = vpop.f32.mrb[0].mxu0
    %v1445 = vadd.f32 %v1149, %v1444
    %v1446 = vpop.f32.mrb[0].mxu0
    %v1447 = vpop.f32.mrb[0].mxu0
    %1448 = vdwg.mxu0
    %1449 = vmatprep.subr.bf16.mxu0 0
    %1450 = vmatpush1.bf16.msra.mxu0 %v1291
    %1451 = vmatprep.subr.bf16.mxu0 0
    %1452 = vmatpush1.bf16.msra.mxu0 %v1296
    %1453 = vmatprep.subr.bf16.mxu0 0
    %1454 = vmatpush1.bf16.msra.mxu0 %v1301
    %1455 = vmatprep.subr.bf16.mxu0 0
    %1456 = vmatpush1.bf16.msra.mxu0 %v1306
    %1457 = vmatprep.subr.bf16.mxu0 0
    %1458 = vmatpush1.bf16.msra.mxu0 %v1311
    %1459 = vmatprep.subr.bf16.mxu0 0
    %1460 = vmatpush1.bf16.msra.mxu0 %v1316
    %1461 = vmatprep.subr.bf16.mxu0 0
    %1462 = vmatpush1.bf16.msra.mxu0 %v1321
    %1463 = vmatprep.subr.bf16.mxu0 0
    %1464 = vmatpush1.bf16.msra.mxu0 %v1326
    %1465 = vmatprep.subr.bf16.mxu0 0
    %1466 = vmatpush1.bf16.msra.mxu0 0
    %1467 = vmatprep.subr.bf16.mxu0 0
    %1468 = vmatpush1.bf16.msra.mxu0 0
    %1469 = vmatprep.subr.bf16.mxu0 0
    %1470 = vmatpush1.bf16.msra.mxu0 0
    %1471 = vmatprep.subr.bf16.mxu0 0
    %1472 = vmatpush1.bf16.msra.mxu0 0
    %1473 = vmatprep.subr.bf16.mxu0 0
    %1474 = vmatpush1.bf16.msra.mxu0 0
    %1475 = vmatprep.subr.bf16.mxu0 0
    %1476 = vmatpush1.bf16.msra.mxu0 0
    %1477 = vmatprep.subr.bf16.mxu0 0
    %1478 = vmatpush1.bf16.msra.mxu0 0
    %1479 = vmatprep.subr.bf16.mxu0 0
    %1480 = vmatpush1.bf16.msra.mxu0 0
    %1481 = vmatprep.mubr.bf16.mxu0 0
    %1482 = vmatmul.mubr.bf16.gmra.mrb[0].mxu0 %v1083
    %v1483 = vpop.f32.mrb[0].mxu0
    %v1484 = vadd.f32 %v1153, %v1483
    %v1485 = vpop.f32.mrb[0].mxu0
    %v1486 = vpop.f32.mrb[0].mxu0
    %v1487 = vpop.f32.mrb[0].mxu0
    %1488 = vdwg.mxu0
    %v1489 = vpack.c.bf16 %v1402, %v1402
    %v1490 = vpack.c.bf16 %v1404, %v1404
    %v1491 = vpack.c.bf16 %v1443, %v1443
    %v1492 = vpack.c.bf16 %v1445, %v1445
    %v1493 = vpack.c.bf16 %v1484, %v1484
    %v1499 = vcombine.low %v1489, %v1490
    %v1500 = vcombine.low %v1491, %v1492
    %v1502 = vunpack.c.l.s4 1966171168
    %v1503 = vunpack.c.0.s8 %v1502
    %v1504 = vlaneseq
    %v1505 = vshrl.u32 %v1504, 7
    %v1506 = vsub.s32 %v1503, %v1505
    %v1507 = vrot.slane %v1499, %v1506
    %v1509 = vunpack.c.l.s4 1966171168
    %v1510 = vunpack.c.0.s8 %v1509
    %v1511 = vlaneseq
    %v1512 = vshrl.u32 %v1511, 7
    %v1513 = vsub.s32 %v1510, %v1512
    %v1514 = vrot.slane %v1500, %v1513
    %v1516 = vunpack.c.l.s4 1966171168
    %v1517 = vunpack.c.0.s8 %v1516
    %v1518 = vlaneseq
    %v1519 = vshrl.u32 %v1518, 7
    %v1520 = vsub.s32 %v1517, %v1519
    %v1521 = vrot.slane %v1493, %v1520
    %v1522 = vcombine.low %v1507, %v1514
    %v1524 = vunpack.c.l.s4 1966171168
    %v1525 = vunpack.c.0.s8 %v1524
    %v1526 = vlaneseq
    %v1527 = vshrl.u32 %v1526, 7
    %v1528 = vsub.s32 %v1525, %v1527
    %v1529 = vrot.slane %v1522, %v1528
    %v1531 = vunpack.c.l.s4 1966171168
    %v1532 = vunpack.c.0.s8 %v1531
    %v1533 = vlaneseq
    %v1534 = vshrl.u32 %v1533, 7
    %v1535 = vsub.s32 %v1532, %v1534
    %v1536 = vrot.slane %v1521, %v1535
    %v1537 = vcombine.low %v1529, %v1536
    %1539 = vst [vmem:[%s12] sm:$0x1f] %v1537
    // Predicated region
    $region42: #{seeg_cnn_vae_forward.2} parent=1 // pred_check
      _
    $region43: #{seeg_cnn_vae_forward.2} parent=1 // pred_check_branch
      %1541 = sbr.rel (0) target = $region45
    $region44: #{seeg_cnn_vae_forward.2} parent=1 // pred_region
      %s1543 = ssub.s32 32, 32
      %1544 = vsyncadd [#allocation3], %s1543
      %s1546 = sshll.u32 [#allocation2], 4
      %s1547 = int_to_ptr.vmem [resolvable:$true] %s1546
      %1549 = dma.vmem_to_hbm [thread:$0]  %s1547, 32, %s10, [#allocation3]
    $region45: #{seeg_cnn_vae_forward.2} parent=1 // pred_fallthru
      _
    // Predicated region
    $region46: #{seeg_cnn_vae_forward.2} parent=1 // pred_check
      _
    $region47: #{seeg_cnn_vae_forward.2} parent=1 // pred_check_branch
      %1551 = sbr.rel (0) target = $region49
    $region48: #{seeg_cnn_vae_forward.2} parent=1 // pred_region
      %s1553 = ssub.s32 32, 32
      %1554 = vsyncadd [#allocation5], %s1553
      %s1556 = sshll.u32 [#allocation4], 4
      %s1557 = int_to_ptr.vmem [resolvable:$true] %s1556
      %1559 = dma.vmem_to_hbm [thread:$0]  %s1557, 32, %s11, [#allocation5]
    $region49: #{seeg_cnn_vae_forward.2} parent=1 // pred_fallthru
      _
    // Predicated region
    $region50: #{seeg_cnn_vae_forward.2} parent=1 // pred_check
      _
    $region51: #{seeg_cnn_vae_forward.2} parent=1 // pred_check_branch
      %1561 = sbr.rel (0) target = $region53
    $region52: #{seeg_cnn_vae_forward.2} parent=1 // pred_region
      _
    $region53: #{seeg_cnn_vae_forward.2} parent=1 // pred_fallthru
      _
    // Predicated region
    $region54: #{seeg_cnn_vae_forward.2} parent=1 // pred_check
      _
    $region55: #{seeg_cnn_vae_forward.2} parent=1 // pred_check_branch
      %1563 = sbr.rel (0) target = $region57
    $region56: #{seeg_cnn_vae_forward.2} parent=1 // pred_region
      %1564 = dma.done [#allocation3], 32
    $region57: #{seeg_cnn_vae_forward.2} parent=1 // pred_fallthru
      _
    // Predicated region
    $region58: #{seeg_cnn_vae_forward.2} parent=1 // pred_check
      _
    $region59: #{seeg_cnn_vae_forward.2} parent=1 // pred_check_branch
      %1566 = sbr.rel (0) target = $region61
    $region60: #{seeg_cnn_vae_forward.2} parent=1 // pred_region
      %1567 = dma.done [#allocation5], 32
    $region61: #{seeg_cnn_vae_forward.2} parent=1 // pred_fallthru
      _
    // Predicated region
    $region62: #{seeg_cnn_vae_forward.2} parent=1 // pred_check
      _
    $region63: #{seeg_cnn_vae_forward.2} parent=1 // pred_check_branch
      %1569 = sbr.rel (0) target = $region65
    $region64: #{seeg_cnn_vae_forward.2} parent=1 // pred_region
      _
    $region65: #{seeg_cnn_vae_forward.2} parent=1 // pred_fallthru
      _
    %1570 = vsyncpa [#allocation3], 1
    %1571 = vsyncpa [#allocation5], 1

// kernel: seeg_cnn_vae_forward.3
$region0: #{seeg_cnn_vae_forward.3}
  #allocation0 [shape = 'u32[]', space=smem, size = 0x4, offset = 0x4, fixed_abs, tag = 'smem constant byte address 0x4 - core index']
  #allocation1 [shape = 'u32[144,128]{1,0:T(1,128)}', space=vmem, size = 0x12000, scoped, tag = 'internal scratch']
  %s0 = inlined_call_operand.vmem [shape: bf16[32,64], index: 0, kind: input, shape index: {}]
  %s1 = inlined_call_operand.vmem [shape: bf16[16,320], index: 1, kind: input, shape index: {}]
  %s2 = inlined_call_operand.vmem [shape: f32[16,1], index: 2, kind: input, shape index: {}]
  %s3 = inlined_call_operand.vmem [shape: bf16[16,320], index: 3, kind: input, shape index: {}]
  %s4 = inlined_call_operand.vmem [shape: f32[16,1], index: 4, kind: input, shape index: {}]
  %s5 = inlined_call_operand.vmem [shape: bf16[83,203], index: 5, kind: input, shape index: {}]
  %s6 = inlined_call_operand.vmem [shape: bf16[16,320], index: 6, kind: input, shape index: {}]
  %s7 = inlined_call_operand.vmem [shape: f32[16,1], index: 7, kind: input, shape index: {}]
  %s8 = inlined_call_operand.vmem [shape: bf16[184,405], index: 8, kind: input, shape index: {}]
  %s9 = inlined_call_operand.vmem [shape: bf16[16,640], index: 9, kind: input, shape index: {}]
  %s10 = inlined_call_operand.vmem [shape: f32[16,1], index: 10, kind: input, shape index: {}]
  %s11 = inlined_call_operand.vmem [shape: bf16[425,519], index: 11, kind: input, shape index: {}]
  %s12 = inlined_call_operand.vmem [shape: f32[1,519], index: 12, kind: input, shape index: {}]
  %s13 = inlined_call_operand.vmem [shape: f32[32,500], index: 13, kind: output, shape index: {}]
  %s14 = sld [smem:[#allocation0]]
  $region62: #{seeg_cnn_vae_forward.3} parent=0
    _
  %s16 = ssub.s32 1, %s14
  %s17 = scalar_select 0, %s16, %s14
  // Predicated region
  $region2: #{seeg_cnn_vae_forward.3} parent=0 // pred_check
    _
  $region3: #{seeg_cnn_vae_forward.3} parent=0 // pred_check_branch
    %19 = sbr.rel (0) target = $region5
  $region4: #{seeg_cnn_vae_forward.3} parent=0 // pred_region
    _
  $region5: #{seeg_cnn_vae_forward.3} parent=0 // pred_fallthru
    _
  // Predicated region
  $region6: #{seeg_cnn_vae_forward.3} parent=0 // pred_check
    _
  $region7: #{seeg_cnn_vae_forward.3} parent=0 // pred_check_branch
    %21 = sbr.rel (0) target = $region9
  $region8: #{seeg_cnn_vae_forward.3} parent=0 // pred_region
    _
  $region9: #{seeg_cnn_vae_forward.3} parent=0 // pred_fallthru
    _
  // Predicated region
  $region10: #{seeg_cnn_vae_forward.3} parent=0 // pred_check
    _
  $region11: #{seeg_cnn_vae_forward.3} parent=0 // pred_check_branch
    %23 = sbr.rel (0) target = $region13
  $region12: #{seeg_cnn_vae_forward.3} parent=0 // pred_region
    _
  $region13: #{seeg_cnn_vae_forward.3} parent=0 // pred_fallthru
    _
  // Predicated region
  $region14: #{seeg_cnn_vae_forward.3} parent=0 // pred_check
    _
  $region15: #{seeg_cnn_vae_forward.3} parent=0 // pred_check_branch
    %25 = sbr.rel (0) target = $region17
  $region16: #{seeg_cnn_vae_forward.3} parent=0 // pred_region
    _
  $region17: #{seeg_cnn_vae_forward.3} parent=0 // pred_fallthru
    _
  // Predicated region
  $region18: #{seeg_cnn_vae_forward.3} parent=0 // pred_check
    _
  $region19: #{seeg_cnn_vae_forward.3} parent=0 // pred_check_branch
    %27 = sbr.rel (0) target = $region21
  $region20: #{seeg_cnn_vae_forward.3} parent=0 // pred_region
    _
  $region21: #{seeg_cnn_vae_forward.3} parent=0 // pred_fallthru
    _
  // Predicated region
  $region22: #{seeg_cnn_vae_forward.3} parent=0 // pred_check
    _
  $region23: #{seeg_cnn_vae_forward.3} parent=0 // pred_check_branch
    %29 = sbr.rel (0) target = $region25
  $region24: #{seeg_cnn_vae_forward.3} parent=0 // pred_region
    _
  $region25: #{seeg_cnn_vae_forward.3} parent=0 // pred_fallthru
    _
  // Predicated region
  $region26: #{seeg_cnn_vae_forward.3} parent=0 // pred_check
    _
  $region27: #{seeg_cnn_vae_forward.3} parent=0 // pred_check_branch
    %31 = sbr.rel (0) target = $region29
  $region28: #{seeg_cnn_vae_forward.3} parent=0 // pred_region
    _
  $region29: #{seeg_cnn_vae_forward.3} parent=0 // pred_fallthru
    _
  // Predicated region
  $region30: #{seeg_cnn_vae_forward.3} parent=0 // pred_check
    _
  $region31: #{seeg_cnn_vae_forward.3} parent=0 // pred_check_branch
    %33 = sbr.rel (0) target = $region33
  $region32: #{seeg_cnn_vae_forward.3} parent=0 // pred_region
    _
  $region33: #{seeg_cnn_vae_forward.3} parent=0 // pred_fallthru
    _
  // Predicated region
  $region34: #{seeg_cnn_vae_forward.3} parent=0 // pred_check
    _
  $region35: #{seeg_cnn_vae_forward.3} parent=0 // pred_check_branch
    %35 = sbr.rel (0) target = $region37
  $region36: #{seeg_cnn_vae_forward.3} parent=0 // pred_region
    _
  $region37: #{seeg_cnn_vae_forward.3} parent=0 // pred_fallthru
    _
  // Predicated region
  $region38: #{seeg_cnn_vae_forward.3} parent=0 // pred_check
    _
  $region39: #{seeg_cnn_vae_forward.3} parent=0 // pred_check_branch
    %37 = sbr.rel (0) target = $region41
  $region40: #{seeg_cnn_vae_forward.3} parent=0 // pred_region
    _
  $region41: #{seeg_cnn_vae_forward.3} parent=0 // pred_fallthru
    _
  // Predicated region
  $region42: #{seeg_cnn_vae_forward.3} parent=0 // pred_check
    _
  $region43: #{seeg_cnn_vae_forward.3} parent=0 // pred_check_branch
    %39 = sbr.rel (0) target = $region45
  $region44: #{seeg_cnn_vae_forward.3} parent=0 // pred_region
    _
  $region45: #{seeg_cnn_vae_forward.3} parent=0 // pred_fallthru
    _
  // Predicated region
  $region46: #{seeg_cnn_vae_forward.3} parent=0 // pred_check
    _
  $region47: #{seeg_cnn_vae_forward.3} parent=0 // pred_check_branch
    %41 = sbr.rel (0) target = $region49
  $region48: #{seeg_cnn_vae_forward.3} parent=0 // pred_region
    _
  $region49: #{seeg_cnn_vae_forward.3} parent=0 // pred_fallthru
    _
  // Predicated region
  $region50: #{seeg_cnn_vae_forward.3} parent=0 // pred_check
    _
  $region51: #{seeg_cnn_vae_forward.3} parent=0 // pred_check_branch
    %43 = sbr.rel (0) target = $region53
  $region52: #{seeg_cnn_vae_forward.3} parent=0 // pred_region
    _
  $region53: #{seeg_cnn_vae_forward.3} parent=0 // pred_fallthru
    _
  %v45 = vld [vmem:[%s0] sm:$0xf]
  %v46 = vld [vmem:[%s0 + $0x4] sm:$0xf]
  %v49 = vunpack.c.l.b16 %v45
  %v50 = vunpack.c.l.b16 %v46
  %v51 = vpack.c.b16 %v50, %v49
  %52 = vrot.lane.b32.xlu0 %v51, 19
  %v53 = vpop.permute.xlu0 %52
  %vm54 = vcmask 154624
  %v57 = vsel %vm54, 0, %v53
  %vm58 = vcmask 678912
  %v59 = vsel %vm58, %v57, 0
  %62 = vrot.lane.b32.xlu0 %v59, 127
  %v63 = vpop.permute.xlu0 %62
  %65 = vrot.lane.b32.xlu0 %v59, 126
  %v66 = vpop.permute.xlu0 %65
  %68 = vrot.lane.b32.xlu0 %v59, 125
  %v69 = vpop.permute.xlu0 %68
  %71 = vrot.lane.b32.xlu0 %v59, 124
  %v72 = vpop.permute.xlu0 %71
  %74 = vrot.lane.b32.xlu0 %v59, 123
  %v75 = vpop.permute.xlu0 %74
  %77 = vrot.lane.b32.xlu0 %v59, 122
  %v78 = vpop.permute.xlu0 %77
  %80 = vrot.lane.b32.xlu0 %v59, 121
  %v81 = vpop.permute.xlu0 %80
  %83 = vrot.lane.b32.xlu0 %v59, 120
  %v84 = vpop.permute.xlu0 %83
  %86 = vrot.lane.b32.xlu0 %v59, 119
  %v87 = vpop.permute.xlu0 %86
  %89 = vrot.lane.b32.xlu0 %v59, 118
  %v90 = vpop.permute.xlu0 %89
  %92 = vrot.lane.b32.xlu0 %v59, 117
  %v93 = vpop.permute.xlu0 %92
  %95 = vrot.lane.b32.xlu0 %v59, 116
  %v96 = vpop.permute.xlu0 %95
  %98 = vrot.lane.b32.xlu0 %v59, 115
  %v99 = vpop.permute.xlu0 %98
  %101 = vrot.lane.b32.xlu0 %v59, 114
  %v102 = vpop.permute.xlu0 %101
  %104 = vrot.lane.b32.xlu0 %v59, 113
  %v105 = vpop.permute.xlu0 %104
  %107 = vrot.lane.b32.xlu0 %v59, 112
  %v108 = vpop.permute.xlu0 %107
  %109 = vrot.lane.b32.xlu0 %v63, 112
  %v110 = vpop.permute.xlu0 %109
  %111 = vrot.lane.b32.xlu0 %v66, 112
  %v112 = vpop.permute.xlu0 %111
  %113 = vrot.lane.b32.xlu0 %v69, 112
  %v114 = vpop.permute.xlu0 %113
  %v119 = vld [vmem:[%s1] sm:$0xff]
  %v120 = vld [vmem:[%s1 + $0x8] sm:$0xf]
  %v121 = vld [vmem:[%s1 + $0xc] sm:$0xff]
  %v122 = vld [vmem:[%s1 + $0x14] sm:$0xf]
  %v123 = vld [vmem:[%s2] sm:$0xff]
  %v124 = vld [vmem:[%s2 + $0x8] sm:$0xff]
  %126 = vset.pattern.permute.xlu0 0
  %127 = vperm.xlu0 %126, %v123
  %v128 = vpop.permute.xlu0 %127
  %131 = vset.pattern.permute.xlu0 0
  %132 = vperm.xlu0 %131, %v124
  %v133 = vpop.permute.xlu0 %132
  %v139 = vunpack.c.l.b16 %v119
  %v140 = vunpack.c.h.b16 %v119
  %v141 = vunpack.c.l.b16 %v120
  %v142 = vunpack.c.l.b16 %v121
  %v143 = vunpack.c.h.b16 %v121
  %v144 = vunpack.c.l.b16 %v122
  %v145 = vpack.c.b16 %v142, %v139
  %v146 = vpack.c.b16 %v143, %v140
  %v147 = vpack.c.b16 %v144, %v141
  %vm150 = vcmask 523264
  %v152 = vsel %vm150, %v147, 0
  %154 = vmatprep.subr.bf16.mxu0 0
  %155 = vmatpush1.bf16.msra.mxu0 %v59
  %156 = vmatprep.subr.bf16.mxu0 0
  %157 = vmatpush1.bf16.msra.mxu0 %v63
  %158 = vmatprep.subr.bf16.mxu0 0
  %159 = vmatpush1.bf16.msra.mxu0 %v66
  %160 = vmatprep.subr.bf16.mxu0 0
  %161 = vmatpush1.bf16.msra.mxu0 %v69
  %162 = vmatprep.subr.bf16.mxu0 0
  %163 = vmatpush1.bf16.msra.mxu0 %v72
  %164 = vmatprep.subr.bf16.mxu0 0
  %165 = vmatpush1.bf16.msra.mxu0 %v75
  %166 = vmatprep.subr.bf16.mxu0 0
  %167 = vmatpush1.bf16.msra.mxu0 %v78
  %168 = vmatprep.subr.bf16.mxu0 0
  %169 = vmatpush1.bf16.msra.mxu0 %v81
  %170 = vmatprep.subr.bf16.mxu0 0
  %171 = vmatpush1.bf16.msra.mxu0 %v84
  %172 = vmatprep.subr.bf16.mxu0 0
  %173 = vmatpush1.bf16.msra.mxu0 %v87
  %174 = vmatprep.subr.bf16.mxu0 0
  %175 = vmatpush1.bf16.msra.mxu0 %v90
  %176 = vmatprep.subr.bf16.mxu0 0
  %177 = vmatpush1.bf16.msra.mxu0 %v93
  %178 = vmatprep.subr.bf16.mxu0 0
  %179 = vmatpush1.bf16.msra.mxu0 %v96
  %180 = vmatprep.subr.bf16.mxu0 0
  %181 = vmatpush1.bf16.msra.mxu0 %v99
  %182 = vmatprep.subr.bf16.mxu0 0
  %183 = vmatpush1.bf16.msra.mxu0 %v102
  %184 = vmatprep.subr.bf16.mxu0 0
  %185 = vmatpush1.bf16.msra.mxu0 %v105
  %186 = vmatprep.mubr.bf16.mxu0 %v146
  %187 = vmatmul.mubr.bf16.gmra.mrb[0].mxu0 %v145
  %v188 = vpop.f32.mrb[0].mxu0
  %v189 = vadd.f32 %v128, %v188
  %v190 = vpop.f32.mrb[0].mxu0
  %v191 = vpop.f32.mrb[0].mxu0
  %v192 = vadd.f32 %v133, %v191
  %v193 = vpop.f32.mrb[0].mxu0
  %194 = vdwg.mxu0
  %195 = vmatprep.subr.bf16.mxu0 0
  %196 = vmatpush1.bf16.msra.mxu0 %v108
  %197 = vmatprep.subr.bf16.mxu0 0
  %198 = vmatpush1.bf16.msra.mxu0 %v110
  %199 = vmatprep.subr.bf16.mxu0 0
  %200 = vmatpush1.bf16.msra.mxu0 %v112
  %201 = vmatprep.subr.bf16.mxu0 0
  %202 = vmatpush1.bf16.msra.mxu0 %v114
  %203 = vmatprep.subr.bf16.mxu0 0
  %204 = vmatpush1.bf16.msra.mxu0 0
  %205 = vmatprep.subr.bf16.mxu0 0
  %206 = vmatpush1.bf16.msra.mxu0 0
  %207 = vmatprep.subr.bf16.mxu0 0
  %208 = vmatpush1.bf16.msra.mxu0 0
  %209 = vmatprep.subr.bf16.mxu0 0
  %210 = vmatpush1.bf16.msra.mxu0 0
  %211 = vmatprep.subr.bf16.mxu0 0
  %212 = vmatpush1.bf16.msra.mxu0 0
  %213 = vmatprep.subr.bf16.mxu0 0
  %214 = vmatpush1.bf16.msra.mxu0 0
  %215 = vmatprep.subr.bf16.mxu0 0
  %216 = vmatpush1.bf16.msra.mxu0 0
  %217 = vmatprep.subr.bf16.mxu0 0
  %218 = vmatpush1.bf16.msra.mxu0 0
  %219 = vmatprep.subr.bf16.mxu0 0
  %220 = vmatpush1.bf16.msra.mxu0 0
  %221 = vmatprep.subr.bf16.mxu0 0
  %222 = vmatpush1.bf16.msra.mxu0 0
  %223 = vmatprep.subr.bf16.mxu0 0
  %224 = vmatpush1.bf16.msra.mxu0 0
  %225 = vmatprep.subr.bf16.mxu0 0
  %226 = vmatpush1.bf16.msra.mxu0 0
  %227 = vmatprep.mubr.bf16.mxu0 0
  %228 = vmatmul.mubr.bf16.gmra.mrb[0].mxu0 %v152
  %v229 = vpop.f32.mrb[0].mxu0
  %v230 = vadd.f32 %v189, %v229
  %v231 = vpop.f32.mrb[0].mxu0
  %v232 = vpop.f32.mrb[0].mxu0
  %v233 = vadd.f32 %v192, %v232
  %v234 = vpop.f32.mrb[0].mxu0
  %235 = vdwg.mxu0
  %vm236 = vcmp.gt.f32.partialorder %v230, 0.0
  %vm237 = vcmp.gt.f32.partialorder %v233, 0.0
  %v238 = vmul.f32 %v230, 0.25
  %v239 = vmul.f32 %v233, 0.25
  %v240 = vsel %vm236, %v230, %v238
  %v241 = vsel %vm237, %v233, %v239
  %v242 = vpack.c.bf16 %v241, %v240
  %v243 = vld [vmem:[%s5] sm:$0xff]
  %v244 = vld [vmem:[%s5 + $0x8] sm:$0xff]
  %v245 = vld [vmem:[%s5 + $0x10] sm:$0xff]
  %v246 = vld [vmem:[%s5 + $0x18] sm:$0xff]
  %v247 = vld [vmem:[%s5 + $0x20] sm:$0xff]
  %v248 = vld [vmem:[%s5 + $0x28] sm:$0xff]
  %v249 = vld [vmem:[%s5 + $0x30] sm:$0xff]
  %v250 = vld [vmem:[%s5 + $0x38] sm:$0xff]
  %v251 = vld [vmem:[%s5 + $0x40] sm:$0xff]
  %v252 = vld [vmem:[%s5 + $0x48] sm:$0xff]
  %v253 = vld [vmem:[%s5 + $0x50] sm:$0x33]
  %v265 = vunpack.c.l.b16 %v243
  %v266 = vunpack.c.h.b16 %v243
  %v267 = vunpack.c.l.b16 %v244
  %v268 = vunpack.c.h.b16 %v244
  %v269 = vunpack.c.l.b16 %v245
  %v270 = vunpack.c.h.b16 %v245
  %v271 = vunpack.c.l.b16 %v246
  %v272 = vunpack.c.h.b16 %v246
  %v273 = vunpack.c.l.b16 %v247
  %v274 = vunpack.c.h.b16 %v247
  %v275 = vunpack.c.l.b16 %v248
  %v276 = vunpack.c.h.b16 %v248
  %v277 = vunpack.c.l.b16 %v249
  %v278 = vunpack.c.h.b16 %v249
  %v279 = vunpack.c.l.b16 %v250
  %v280 = vunpack.c.h.b16 %v250
  %v281 = vunpack.c.l.b16 %v251
  %v282 = vunpack.c.h.b16 %v251
  %v283 = vunpack.c.l.b16 %v252
  %v284 = vunpack.c.h.b16 %v252
  %v285 = vunpack.c.l.b16 %v253
  %v286 = vunpack.c.h.b16 %v253
  %v287 = vpack.c.b16 %v267, %v265
  %v288 = vpack.c.b16 %v268, %v266
  %v289 = vpack.c.b16 %v271, %v269
  %v290 = vpack.c.b16 %v272, %v270
  %v291 = vpack.c.b16 %v275, %v273
  %v292 = vpack.c.b16 %v276, %v274
  %v293 = vpack.c.b16 %v279, %v277
  %v294 = vpack.c.b16 %v280, %v278
  %v295 = vpack.c.b16 %v283, %v281
  %v296 = vpack.c.b16 %v284, %v282
  %v297 = vpack.c.b16 %v285, %v285
  %v298 = vpack.c.b16 %v286, %v286
  %v310 = vsel %vm58, %v242, 0
  %vm312 = vcmask 1040384
  %vm313 = vcmask 1041408
  %v314 = vsel %vm312, 4294967295, 65535
  %v315 = vsel %vm313, %v314, 0
  %v317 = vand.u32 %v297, %v315
  %v320 = vand.u32 %v298, %v315
  %322 = vmatprep.subr.bf16.mxu0 %v288
  %323 = vmatpush1.bf16.msra.mxu0 %v287
  %324 = vmatprep.subr.bf16.mxu0 %v290
  %325 = vmatpush1.bf16.msra.mxu0 %v289
  %326 = vmatprep.subr.bf16.mxu0 %v292
  %327 = vmatpush1.bf16.msra.mxu0 %v291
  %328 = vmatprep.subr.bf16.mxu0 %v294
  %329 = vmatpush1.bf16.msra.mxu0 %v293
  %330 = vmatprep.subr.bf16.mxu0 %v296
  %331 = vmatpush1.bf16.msra.mxu0 %v295
  %332 = vmatprep.subr.bf16.mxu0 %v320
  %333 = vmatpush1.bf16.msra.mxu0 %v317
  %334 = vmatprep.subr.bf16.mxu0 0
  %335 = vmatpush1.bf16.msra.mxu0 0
  %336 = vmatprep.subr.bf16.mxu0 0
  %337 = vmatpush1.bf16.msra.mxu0 0
  %338 = vmatprep.subr.bf16.mxu0 0
  %339 = vmatpush1.bf16.msra.mxu0 0
  %340 = vmatprep.subr.bf16.mxu0 0
  %341 = vmatpush1.bf16.msra.mxu0 0
  %342 = vmatprep.subr.bf16.mxu0 0
  %343 = vmatpush1.bf16.msra.mxu0 0
  %344 = vmatprep.subr.bf16.mxu0 0
  %345 = vmatpush1.bf16.msra.mxu0 0
  %346 = vmatprep.subr.bf16.mxu0 0
  %347 = vmatpush1.bf16.msra.mxu0 0
  %348 = vmatprep.subr.bf16.mxu0 0
  %349 = vmatpush1.bf16.msra.mxu0 0
  %350 = vmatprep.subr.bf16.mxu0 0
  %351 = vmatpush1.bf16.msra.mxu0 0
  %352 = vmatprep.subr.bf16.mxu0 0
  %353 = vmatpush1.bf16.msra.mxu0 0
  %354 = vmatprep.mubr.bf16.mxu0 0
  %355 = vmatmul.mubr.bf16.gmra.mrb[0].mxu0 %v310
  %v356 = vpop.f32.mrb[0].mxu0
  %v357 = vadd.f32 0.0, %v356
  %v358 = vpop.f32.mrb[0].mxu0
  %v359 = vadd.f32 0.0, %v358
  %v360 = vpop.f32.mrb[0].mxu0
  %v361 = vadd.f32 0.0, %v360
  %v362 = vpop.f32.mrb[0].mxu0
  %v363 = vadd.f32 0.0, %v362
  %364 = vdwg.mxu0
  %v365 = vpack.c.bf16 %v361, %v357
  %v366 = vpack.c.bf16 %v363, %v359
  %369 = vrot.lane.b32.xlu0 %v365, 127
  %v370 = vpop.permute.xlu0 %369
  %371 = vrot.lane.b32.xlu0 %v366, 127
  %v372 = vpop.permute.xlu0 %371
  %vm373 = vcmask 1039360
  %v374 = vsel %vm373, %v370, %v372
  %377 = vrot.lane.b32.xlu0 %v365, 126
  %v378 = vpop.permute.xlu0 %377
  %379 = vrot.lane.b32.xlu0 %v366, 126
  %v380 = vpop.permute.xlu0 %379
  %vm381 = vcmask 1031168
  %v382 = vsel %vm381, %v378, %v380
  %385 = vrot.lane.b32.xlu0 %v365, 125
  %v386 = vpop.permute.xlu0 %385
  %387 = vrot.lane.b32.xlu0 %v366, 125
  %v388 = vpop.permute.xlu0 %387
  %vm389 = vcmask 1022976
  %v390 = vsel %vm389, %v386, %v388
  %393 = vrot.lane.b32.xlu0 %v365, 124
  %v394 = vpop.permute.xlu0 %393
  %395 = vrot.lane.b32.xlu0 %v366, 124
  %v396 = vpop.permute.xlu0 %395
  %vm397 = vcmask 1014784
  %v398 = vsel %vm397, %v394, %v396
  %401 = vrot.lane.b32.xlu0 %v365, 123
  %v402 = vpop.permute.xlu0 %401
  %403 = vrot.lane.b32.xlu0 %v366, 123
  %v404 = vpop.permute.xlu0 %403
  %vm405 = vcmask 1006592
  %v406 = vsel %vm405, %v402, %v404
  %409 = vrot.lane.b32.xlu0 %v365, 122
  %v410 = vpop.permute.xlu0 %409
  %411 = vrot.lane.b32.xlu0 %v366, 122
  %v412 = vpop.permute.xlu0 %411
  %vm413 = vcmask 998400
  %v414 = vsel %vm413, %v410, %v412
  %417 = vrot.lane.b32.xlu0 %v365, 121
  %v418 = vpop.permute.xlu0 %417
  %419 = vrot.lane.b32.xlu0 %v366, 121
  %v420 = vpop.permute.xlu0 %419
  %vm421 = vcmask 990208
  %v422 = vsel %vm421, %v418, %v420
  %425 = vrot.lane.b32.xlu0 %v365, 120
  %v426 = vpop.permute.xlu0 %425
  %427 = vrot.lane.b32.xlu0 %v366, 120
  %v428 = vpop.permute.xlu0 %427
  %vm429 = vcmask 982016
  %v430 = vsel %vm429, %v426, %v428
  %433 = vrot.lane.b32.xlu0 %v365, 119
  %v434 = vpop.permute.xlu0 %433
  %435 = vrot.lane.b32.xlu0 %v366, 119
  %v436 = vpop.permute.xlu0 %435
  %vm437 = vcmask 973824
  %v438 = vsel %vm437, %v434, %v436
  %441 = vrot.lane.b32.xlu0 %v365, 118
  %v442 = vpop.permute.xlu0 %441
  %443 = vrot.lane.b32.xlu0 %v366, 118
  %v444 = vpop.permute.xlu0 %443
  %vm445 = vcmask 965632
  %v446 = vsel %vm445, %v442, %v444
  %449 = vrot.lane.b32.xlu0 %v365, 117
  %v450 = vpop.permute.xlu0 %449
  %451 = vrot.lane.b32.xlu0 %v366, 117
  %v452 = vpop.permute.xlu0 %451
  %vm453 = vcmask 957440
  %v454 = vsel %vm453, %v450, %v452
  %457 = vrot.lane.b32.xlu0 %v365, 116
  %v458 = vpop.permute.xlu0 %457
  %459 = vrot.lane.b32.xlu0 %v366, 116
  %v460 = vpop.permute.xlu0 %459
  %vm461 = vcmask 949248
  %v462 = vsel %vm461, %v458, %v460
  %465 = vrot.lane.b32.xlu0 %v365, 115
  %v466 = vpop.permute.xlu0 %465
  %467 = vrot.lane.b32.xlu0 %v366, 115
  %v468 = vpop.permute.xlu0 %467
  %vm469 = vcmask 941056
  %v470 = vsel %vm469, %v466, %v468
  %473 = vrot.lane.b32.xlu0 %v365, 114
  %v474 = vpop.permute.xlu0 %473
  %475 = vrot.lane.b32.xlu0 %v366, 114
  %v476 = vpop.permute.xlu0 %475
  %vm477 = vcmask 932864
  %v478 = vsel %vm477, %v474, %v476
  %481 = vrot.lane.b32.xlu0 %v365, 113
  %v482 = vpop.permute.xlu0 %481
  %483 = vrot.lane.b32.xlu0 %v366, 113
  %v484 = vpop.permute.xlu0 %483
  %vm485 = vcmask 924672
  %v486 = vsel %vm485, %v482, %v484
  %489 = vrot.lane.b32.xlu0 %v365, 112
  %v490 = vpop.permute.xlu0 %489
  %491 = vrot.lane.b32.xlu0 %v366, 112
  %v492 = vpop.permute.xlu0 %491
  %493 = vrot.lane.b32.xlu0 %v374, 112
  %v494 = vpop.permute.xlu0 %493
  %495 = vrot.lane.b32.xlu0 %v372, 112
  %v496 = vpop.permute.xlu0 %495
  %497 = vrot.lane.b32.xlu0 %v382, 112
  %v498 = vpop.permute.xlu0 %497
  %499 = vrot.lane.b32.xlu0 %v380, 112
  %v500 = vpop.permute.xlu0 %499
  %501 = vrot.lane.b32.xlu0 %v390, 112
  %v502 = vpop.permute.xlu0 %501
  %503 = vrot.lane.b32.xlu0 %v388, 112
  %v504 = vpop.permute.xlu0 %503
  %vm505 = vcmask 916480
  %v506 = vsel %vm505, %v490, %v492
  %v507 = vsel %vm505, %v494, %v496
  %v508 = vsel %vm505, %v498, %v500
  %v509 = vsel %vm505, %v502, %v504
  %v518 = vld [vmem:[%s3] sm:$0xff]
  %v519 = vld [vmem:[%s3 + $0x8] sm:$0xf]
  %v520 = vld [vmem:[%s3 + $0xc] sm:$0xff]
  %v521 = vld [vmem:[%s3 + $0x14] sm:$0xf]
  %v522 = vld [vmem:[%s4] sm:$0xff]
  %v523 = vld [vmem:[%s4 + $0x8] sm:$0xff]
  %525 = vset.pattern.permute.xlu0 0
  %526 = vperm.xlu0 %525, %v522
  %v527 = vpop.permute.xlu0 %526
  %530 = vset.pattern.permute.xlu0 0
  %531 = vperm.xlu0 %530, %v523
  %v532 = vpop.permute.xlu0 %531
  %v538 = vunpack.c.l.b16 %v518
  %v539 = vunpack.c.h.b16 %v518
  %v540 = vunpack.c.l.b16 %v519
  %v541 = vunpack.c.l.b16 %v520
  %v542 = vunpack.c.h.b16 %v520
  %v543 = vunpack.c.l.b16 %v521
  %v544 = vpack.c.b16 %v541, %v538
  %v545 = vpack.c.b16 %v542, %v539
  %v546 = vpack.c.b16 %v543, %v540
  %v550 = vsel %vm150, %v546, 0
  %552 = vmatprep.subr.bf16.mxu0 %v366
  %553 = vmatpush1.bf16.msra.mxu0 %v365
  %554 = vmatprep.subr.bf16.mxu0 %v372
  %555 = vmatpush1.bf16.msra.mxu0 %v374
  %556 = vmatprep.subr.bf16.mxu0 %v380
  %557 = vmatpush1.bf16.msra.mxu0 %v382
  %558 = vmatprep.subr.bf16.mxu0 %v388
  %559 = vmatpush1.bf16.msra.mxu0 %v390
  %560 = vmatprep.subr.bf16.mxu0 %v396
  %561 = vmatpush1.bf16.msra.mxu0 %v398
  %562 = vmatprep.subr.bf16.mxu0 %v404
  %563 = vmatpush1.bf16.msra.mxu0 %v406
  %564 = vmatprep.subr.bf16.mxu0 %v412
  %565 = vmatpush1.bf16.msra.mxu0 %v414
  %566 = vmatprep.subr.bf16.mxu0 %v420
  %567 = vmatpush1.bf16.msra.mxu0 %v422
  %568 = vmatprep.subr.bf16.mxu0 %v428
  %569 = vmatpush1.bf16.msra.mxu0 %v430
  %570 = vmatprep.subr.bf16.mxu0 %v436
  %571 = vmatpush1.bf16.msra.mxu0 %v438
  %572 = vmatprep.subr.bf16.mxu0 %v444
  %573 = vmatpush1.bf16.msra.mxu0 %v446
  %574 = vmatprep.subr.bf16.mxu0 %v452
  %575 = vmatpush1.bf16.msra.mxu0 %v454
  %576 = vmatprep.subr.bf16.mxu0 %v460
  %577 = vmatpush1.bf16.msra.mxu0 %v462
  %578 = vmatprep.subr.bf16.mxu0 %v468
  %579 = vmatpush1.bf16.msra.mxu0 %v470
  %580 = vmatprep.subr.bf16.mxu0 %v476
  %581 = vmatpush1.bf16.msra.mxu0 %v478
  %582 = vmatprep.subr.bf16.mxu0 %v484
  %583 = vmatpush1.bf16.msra.mxu0 %v486
  %584 = vmatprep.mubr.bf16.mxu0 %v545
  %585 = vmatmul.mubr.bf16.gmra.mrb[0].mxu0 %v544
  %v586 = vpop.f32.mrb[0].mxu0
  %v587 = vadd.f32 %v527, %v586
  %v588 = vpop.f32.mrb[0].mxu0
  %v589 = vadd.f32 %v527, %v588
  %v590 = vpop.f32.mrb[0].mxu0
  %v591 = vadd.f32 %v532, %v590
  %v592 = vpop.f32.mrb[0].mxu0
  %v593 = vadd.f32 %v532, %v592
  %594 = vdwg.mxu0
  %595 = vmatprep.subr.bf16.mxu0 %v492
  %596 = vmatpush1.bf16.msra.mxu0 %v506
  %597 = vmatprep.subr.bf16.mxu0 %v496
  %598 = vmatpush1.bf16.msra.mxu0 %v507
  %599 = vmatprep.subr.bf16.mxu0 %v500
  %600 = vmatpush1.bf16.msra.mxu0 %v508
  %601 = vmatprep.subr.bf16.mxu0 %v504
  %602 = vmatpush1.bf16.msra.mxu0 %v509
  %603 = vmatprep.subr.bf16.mxu0 0
  %604 = vmatpush1.bf16.msra.mxu0 0
  %605 = vmatprep.subr.bf16.mxu0 0
  %606 = vmatpush1.bf16.msra.mxu0 0
  %607 = vmatprep.subr.bf16.mxu0 0
  %608 = vmatpush1.bf16.msra.mxu0 0
  %609 = vmatprep.subr.bf16.mxu0 0
  %610 = vmatpush1.bf16.msra.mxu0 0
  %611 = vmatprep.subr.bf16.mxu0 0
  %612 = vmatpush1.bf16.msra.mxu0 0
  %613 = vmatprep.subr.bf16.mxu0 0
  %614 = vmatpush1.bf16.msra.mxu0 0
  %615 = vmatprep.subr.bf16.mxu0 0
  %616 = vmatpush1.bf16.msra.mxu0 0
  %617 = vmatprep.subr.bf16.mxu0 0
  %618 = vmatpush1.bf16.msra.mxu0 0
  %619 = vmatprep.subr.bf16.mxu0 0
  %620 = vmatpush1.bf16.msra.mxu0 0
  %621 = vmatprep.subr.bf16.mxu0 0
  %622 = vmatpush1.bf16.msra.mxu0 0
  %623 = vmatprep.subr.bf16.mxu0 0
  %624 = vmatpush1.bf16.msra.mxu0 0
  %625 = vmatprep.subr.bf16.mxu0 0
  %626 = vmatpush1.bf16.msra.mxu0 0
  %627 = vmatprep.mubr.bf16.mxu0 0
  %628 = vmatmul.mubr.bf16.gmra.mrb[0].mxu0 %v550
  %v629 = vpop.f32.mrb[0].mxu0
  %v630 = vadd.f32 %v587, %v629
  %v631 = vpop.f32.mrb[0].mxu0
  %v632 = vadd.f32 %v589, %v631
  %v633 = vpop.f32.mrb[0].mxu0
  %v634 = vadd.f32 %v591, %v633
  %v635 = vpop.f32.mrb[0].mxu0
  %v636 = vadd.f32 %v593, %v635
  %637 = vdwg.mxu0
  %vm638 = vcmp.gt.f32.partialorder %v630, 0.0
  %vm639 = vcmp.gt.f32.partialorder %v632, 0.0
  %vm640 = vcmp.gt.f32.partialorder %v634, 0.0
  %vm641 = vcmp.gt.f32.partialorder %v636, 0.0
  %v642 = vmul.f32 %v630, 0.25
  %v643 = vmul.f32 %v632, 0.25
  %v644 = vmul.f32 %v634, 0.25
  %v645 = vmul.f32 %v636, 0.25
  %v646 = vsel %vm638, %v630, %v642
  %v647 = vsel %vm639, %v632, %v643
  %v648 = vsel %vm640, %v634, %v644
  %v649 = vsel %vm641, %v636, %v645
  %v650 = vpack.c.bf16 %v648, %v646
  %v651 = vpack.c.bf16 %v649, %v647
  %v652 = vld [vmem:[%s8] sm:$0xff]
  %v653 = vld [vmem:[%s8 + $0x8] sm:$0xff]
  %v654 = vld [vmem:[%s8 + $0x10] sm:$0xff]
  %v655 = vld [vmem:[%s8 + $0x18] sm:$0xff]
  %v656 = vld [vmem:[%s8 + $0x20] sm:$0xff]
  %v657 = vld [vmem:[%s8 + $0x28] sm:$0xff]
  %v658 = vld [vmem:[%s8 + $0x30] sm:$0xff]
  %v659 = vld [vmem:[%s8 + $0x38] sm:$0xff]
  %v660 = vld [vmem:[%s8 + $0x40] sm:$0xff]
  %v661 = vld [vmem:[%s8 + $0x48] sm:$0xff]
  %v662 = vld [vmem:[%s8 + $0x50] sm:$0xff]
  %v663 = vld [vmem:[%s8 + $0x58] sm:$0xff]
  %v664 = vld [vmem:[%s8 + $0x60] sm:$0xff]
  %v665 = vld [vmem:[%s8 + $0x68] sm:$0xff]
  %v666 = vld [vmem:[%s8 + $0x70] sm:$0xff]
  %v667 = vld [vmem:[%s8 + $0x78] sm:$0xff]
  %v668 = vld [vmem:[%s8 + $0x80] sm:$0xff]
  %v669 = vld [vmem:[%s8 + $0x88] sm:$0xff]
  %v670 = vld [vmem:[%s8 + $0x90] sm:$0xff]
  %v671 = vld [vmem:[%s8 + $0x98] sm:$0xff]
  %v672 = vld [vmem:[%s8 + $0xa0] sm:$0xff]
  %v673 = vld [vmem:[%s8 + $0xa8] sm:$0xff]
  %v674 = vld [vmem:[%s8 + $0xb0] sm:$0xff]
  %v675 = vld [vmem:[%s8 + $0xb8] sm:$0xff]
  %v676 = vld [vmem:[%s8 + $0xc0] sm:$0xff]
  %v677 = vld [vmem:[%s8 + $0xc8] sm:$0xff]
  %v678 = vld [vmem:[%s8 + $0xd0] sm:$0xff]
  %v679 = vld [vmem:[%s8 + $0xd8] sm:$0xff]
  %v680 = vld [vmem:[%s8 + $0xe0] sm:$0xff]
  %v681 = vld [vmem:[%s8 + $0xe8] sm:$0xff]
  %v682 = vld [vmem:[%s8 + $0xf0] sm:$0xff]
  %v683 = vld [vmem:[%s8 + $0xf8] sm:$0xff]
  %v684 = vld [vmem:[%s8 + $0x100] sm:$0xff]
  %v685 = vld [vmem:[%s8 + $0x108] sm:$0xff]
  %v686 = vld [vmem:[%s8 + $0x110] sm:$0xff]
  %v687 = vld [vmem:[%s8 + $0x118] sm:$0xff]
  %v688 = vld [vmem:[%s8 + $0x120] sm:$0xff]
  %v689 = vld [vmem:[%s8 + $0x128] sm:$0xff]
  %v690 = vld [vmem:[%s8 + $0x130] sm:$0xff]
  %v691 = vld [vmem:[%s8 + $0x138] sm:$0xff]
  %v692 = vld [vmem:[%s8 + $0x140] sm:$0xff]
  %v693 = vld [vmem:[%s8 + $0x148] sm:$0xff]
  %v694 = vld [vmem:[%s8 + $0x150] sm:$0xff]
  %v695 = vld [vmem:[%s8 + $0x158] sm:$0xff]
  %v696 = vld [vmem:[%s8 + $0x160] sm:$0xff]
  %v697 = vld [vmem:[%s8 + $0x168] sm:$0xff]
  %v744 = vunpack.c.l.b16 %v652
  %v745 = vunpack.c.h.b16 %v652
  %v746 = vunpack.c.l.b16 %v653
  %v747 = vunpack.c.h.b16 %v653
  %v748 = vunpack.c.l.b16 %v654
  %v749 = vunpack.c.h.b16 %v654
  %v750 = vunpack.c.l.b16 %v655
  %v751 = vunpack.c.h.b16 %v655
  %v752 = vunpack.c.l.b16 %v656
  %v753 = vunpack.c.h.b16 %v656
  %v754 = vunpack.c.l.b16 %v657
  %v755 = vunpack.c.h.b16 %v657
  %v756 = vunpack.c.l.b16 %v658
  %v757 = vunpack.c.h.b16 %v658
  %v758 = vunpack.c.l.b16 %v659
  %v759 = vunpack.c.h.b16 %v659
  %v760 = vunpack.c.l.b16 %v660
  %v761 = vunpack.c.h.b16 %v660
  %v762 = vunpack.c.l.b16 %v661
  %v763 = vunpack.c.h.b16 %v661
  %v764 = vunpack.c.l.b16 %v662
  %v765 = vunpack.c.h.b16 %v662
  %v766 = vunpack.c.l.b16 %v663
  %v767 = vunpack.c.h.b16 %v663
  %v768 = vunpack.c.l.b16 %v664
  %v769 = vunpack.c.h.b16 %v664
  %v770 = vunpack.c.l.b16 %v665
  %v771 = vunpack.c.h.b16 %v665
  %v772 = vunpack.c.l.b16 %v666
  %v773 = vunpack.c.h.b16 %v666
  %v774 = vunpack.c.l.b16 %v667
  %v775 = vunpack.c.h.b16 %v667
  %v776 = vunpack.c.l.b16 %v668
  %v777 = vunpack.c.h.b16 %v668
  %v778 = vunpack.c.l.b16 %v669
  %v779 = vunpack.c.h.b16 %v669
  %v780 = vunpack.c.l.b16 %v670
  %v781 = vunpack.c.h.b16 %v670
  %v782 = vunpack.c.l.b16 %v671
  %v783 = vunpack.c.h.b16 %v671
  %v784 = vunpack.c.l.b16 %v672
  %v785 = vunpack.c.h.b16 %v672
  %v786 = vunpack.c.l.b16 %v673
  %v787 = vunpack.c.h.b16 %v673
  %v788 = vunpack.c.l.b16 %v674
  %v789 = vunpack.c.h.b16 %v674
  %v790 = vunpack.c.l.b16 %v675
  %v791 = vunpack.c.h.b16 %v675
  %v792 = vunpack.c.l.b16 %v676
  %v793 = vunpack.c.h.b16 %v676
  %v794 = vunpack.c.l.b16 %v677
  %v795 = vunpack.c.h.b16 %v677
  %v796 = vunpack.c.l.b16 %v678
  %v797 = vunpack.c.h.b16 %v678
  %v798 = vunpack.c.l.b16 %v679
  %v799 = vunpack.c.h.b16 %v679
  %v800 = vunpack.c.l.b16 %v680
  %v801 = vunpack.c.h.b16 %v680
  %v802 = vunpack.c.l.b16 %v681
  %v803 = vunpack.c.h.b16 %v681
  %v804 = vunpack.c.l.b16 %v682
  %v805 = vunpack.c.h.b16 %v682
  %v806 = vunpack.c.l.b16 %v683
  %v807 = vunpack.c.h.b16 %v683
  %v808 = vunpack.c.l.b16 %v684
  %v809 = vunpack.c.h.b16 %v684
  %v810 = vunpack.c.l.b16 %v685
  %v811 = vunpack.c.h.b16 %v685
  %v812 = vunpack.c.l.b16 %v686
  %v813 = vunpack.c.h.b16 %v686
  %v814 = vunpack.c.l.b16 %v687
  %v815 = vunpack.c.h.b16 %v687
  %v816 = vunpack.c.l.b16 %v688
  %v817 = vunpack.c.h.b16 %v688
  %v818 = vunpack.c.l.b16 %v689
  %v819 = vunpack.c.h.b16 %v689
  %v820 = vunpack.c.l.b16 %v690
  %v821 = vunpack.c.h.b16 %v690
  %v822 = vunpack.c.l.b16 %v691
  %v823 = vunpack.c.h.b16 %v691
  %v824 = vunpack.c.l.b16 %v692
  %v825 = vunpack.c.h.b16 %v692
  %v826 = vunpack.c.l.b16 %v693
  %v827 = vunpack.c.h.b16 %v693
  %v828 = vunpack.c.l.b16 %v694
  %v829 = vunpack.c.h.b16 %v694
  %v830 = vunpack.c.l.b16 %v695
  %v831 = vunpack.c.h.b16 %v695
  %v832 = vunpack.c.l.b16 %v696
  %v833 = vunpack.c.h.b16 %v696
  %v834 = vunpack.c.l.b16 %v697
  %v835 = vunpack.c.h.b16 %v697
  %v836 = vpack.c.b16 %v748, %v744
  %v837 = vpack.c.b16 %v749, %v745
  %v838 = vpack.c.b16 %v750, %v746
  %v839 = vpack.c.b16 %v751, %v747
  %v840 = vpack.c.b16 %v756, %v752
  %v841 = vpack.c.b16 %v757, %v753
  %v842 = vpack.c.b16 %v758, %v754
  %v843 = vpack.c.b16 %v759, %v755
  %v844 = vpack.c.b16 %v764, %v760
  %v845 = vpack.c.b16 %v765, %v761
  %v846 = vpack.c.b16 %v766, %v762
  %v847 = vpack.c.b16 %v767, %v763
  %v848 = vpack.c.b16 %v772, %v768
  %v849 = vpack.c.b16 %v773, %v769
  %v850 = vpack.c.b16 %v774, %v770
  %v851 = vpack.c.b16 %v775, %v771
  %v852 = vpack.c.b16 %v780, %v776
  %v853 = vpack.c.b16 %v781, %v777
  %v854 = vpack.c.b16 %v782, %v778
  %v855 = vpack.c.b16 %v783, %v779
  %v856 = vpack.c.b16 %v788, %v784
  %v857 = vpack.c.b16 %v789, %v785
  %v858 = vpack.c.b16 %v790, %v786
  %v859 = vpack.c.b16 %v791, %v787
  %v860 = vpack.c.b16 %v796, %v792
  %v861 = vpack.c.b16 %v797, %v793
  %v862 = vpack.c.b16 %v798, %v794
  %v863 = vpack.c.b16 %v799, %v795
  %v864 = vpack.c.b16 %v804, %v800
  %v865 = vpack.c.b16 %v805, %v801
  %v866 = vpack.c.b16 %v806, %v802
  %v867 = vpack.c.b16 %v807, %v803
  %v868 = vpack.c.b16 %v812, %v808
  %v869 = vpack.c.b16 %v813, %v809
  %v870 = vpack.c.b16 %v814, %v810
  %v871 = vpack.c.b16 %v815, %v811
  %v872 = vpack.c.b16 %v820, %v816
  %v873 = vpack.c.b16 %v821, %v817
  %v874 = vpack.c.b16 %v822, %v818
  %v875 = vpack.c.b16 %v823, %v819
  %v876 = vpack.c.b16 %v828, %v824
  %v877 = vpack.c.b16 %v829, %v825
  %v878 = vpack.c.b16 %v830, %v826
  %v879 = vpack.c.b16 %v831, %v827
  %v880 = vpack.c.b16 %v832, %v832
  %v881 = vpack.c.b16 %v833, %v833
  %v882 = vpack.c.b16 %v834, %v834
  %v883 = vpack.c.b16 %v835, %v835
  %vm928 = vcmask 457728
  %v930 = vsel %vm928, %v651, 0
  %vm932 = vcmask 1043456
  %v934 = vsel %vm932, %v880, 0
  %v937 = vsel %vm932, %v881, 0
  %v940 = vsel %vm932, %v882, 0
  %v943 = vsel %vm932, %v883, 0
  %945 = vmatprep.subr.bf16.mxu0 %v837
  %946 = vmatpush1.bf16.msra.mxu0 %v836
  %947 = vmatprep.subr.bf16.mxu0 %v841
  %948 = vmatpush1.bf16.msra.mxu0 %v840
  %949 = vmatprep.subr.bf16.mxu0 %v845
  %950 = vmatpush1.bf16.msra.mxu0 %v844
  %951 = vmatprep.subr.bf16.mxu0 %v849
  %952 = vmatpush1.bf16.msra.mxu0 %v848
  %953 = vmatprep.subr.bf16.mxu0 %v853
  %954 = vmatpush1.bf16.msra.mxu0 %v852
  %955 = vmatprep.subr.bf16.mxu0 %v857
  %956 = vmatpush1.bf16.msra.mxu0 %v856
  %957 = vmatprep.subr.bf16.mxu0 %v861
  %958 = vmatpush1.bf16.msra.mxu0 %v860
  %959 = vmatprep.subr.bf16.mxu0 %v865
  %960 = vmatpush1.bf16.msra.mxu0 %v864
  %961 = vmatprep.subr.bf16.mxu0 %v869
  %962 = vmatpush1.bf16.msra.mxu0 %v868
  %963 = vmatprep.subr.bf16.mxu0 %v873
  %964 = vmatpush1.bf16.msra.mxu0 %v872
  %965 = vmatprep.subr.bf16.mxu0 %v877
  %966 = vmatpush1.bf16.msra.mxu0 %v876
  %967 = vmatprep.subr.bf16.mxu0 %v937
  %968 = vmatpush1.bf16.msra.mxu0 %v934
  %969 = vmatprep.subr.bf16.mxu0 0
  %970 = vmatpush1.bf16.msra.mxu0 0
  %971 = vmatprep.subr.bf16.mxu0 0
  %972 = vmatpush1.bf16.msra.mxu0 0
  %973 = vmatprep.subr.bf16.mxu0 0
  %974 = vmatpush1.bf16.msra.mxu0 0
  %975 = vmatprep.subr.bf16.mxu0 0
  %976 = vmatpush1.bf16.msra.mxu0 0
  %977 = vmatprep.mubr.bf16.mxu0 %v930
  %978 = vmatmul.mubr.bf16.gmra.mrb[0].mxu0 %v650
  %v979 = vpop.f32.mrb[0].mxu0
  %v980 = vadd.f32 0.0, %v979
  %v981 = vpop.f32.mrb[0].mxu0
  %v982 = vadd.f32 0.0, %v981
  %v983 = vpop.f32.mrb[0].mxu0
  %v984 = vadd.f32 0.0, %v983
  %v985 = vpop.f32.mrb[0].mxu0
  %v986 = vadd.f32 0.0, %v985
  %987 = vdwg.mxu0
  %988 = vmatprep.subr.bf16.mxu0 %v839
  %989 = vmatpush1.bf16.msra.mxu0 %v838
  %990 = vmatprep.subr.bf16.mxu0 %v843
  %991 = vmatpush1.bf16.msra.mxu0 %v842
  %992 = vmatprep.subr.bf16.mxu0 %v847
  %993 = vmatpush1.bf16.msra.mxu0 %v846
  %994 = vmatprep.subr.bf16.mxu0 %v851
  %995 = vmatpush1.bf16.msra.mxu0 %v850
  %996 = vmatprep.subr.bf16.mxu0 %v855
  %997 = vmatpush1.bf16.msra.mxu0 %v854
  %998 = vmatprep.subr.bf16.mxu0 %v859
  %999 = vmatpush1.bf16.msra.mxu0 %v858
  %1000 = vmatprep.subr.bf16.mxu0 %v863
  %1001 = vmatpush1.bf16.msra.mxu0 %v862
  %1002 = vmatprep.subr.bf16.mxu0 %v867
  %1003 = vmatpush1.bf16.msra.mxu0 %v866
  %1004 = vmatprep.subr.bf16.mxu0 %v871
  %1005 = vmatpush1.bf16.msra.mxu0 %v870
  %1006 = vmatprep.subr.bf16.mxu0 %v875
  %1007 = vmatpush1.bf16.msra.mxu0 %v874
  %1008 = vmatprep.subr.bf16.mxu0 %v879
  %1009 = vmatpush1.bf16.msra.mxu0 %v878
  %1010 = vmatprep.subr.bf16.mxu0 %v943
  %1011 = vmatpush1.bf16.msra.mxu0 %v940
  %1012 = vmatprep.subr.bf16.mxu0 0
  %1013 = vmatpush1.bf16.msra.mxu0 0
  %1014 = vmatprep.subr.bf16.mxu0 0
  %1015 = vmatpush1.bf16.msra.mxu0 0
  %1016 = vmatprep.subr.bf16.mxu0 0
  %1017 = vmatpush1.bf16.msra.mxu0 0
  %1018 = vmatprep.subr.bf16.mxu0 0
  %1019 = vmatpush1.bf16.msra.mxu0 0
  %1020 = vmatprep.mubr.bf16.mxu0 %v930
  %1021 = vmatmul.mubr.bf16.gmra.mrb[0].mxu0 %v650
  %v1022 = vpop.f32.mrb[0].mxu0
  %v1023 = vadd.f32 0.0, %v1022
  %v1024 = vpop.f32.mrb[0].mxu0
  %v1025 = vadd.f32 0.0, %v1024
  %v1026 = vpop.f32.mrb[0].mxu0
  %v1027 = vadd.f32 0.0, %v1026
  %v1028 = vpop.f32.mrb[0].mxu0
  %v1029 = vadd.f32 0.0, %v1028
  %1030 = vdwg.mxu0
  %v1031 = vpack.c.bf16 %v984, %v980
  %v1032 = vpack.c.bf16 %v986, %v982
  %v1033 = vpack.c.bf16 %v1027, %v1023
  %v1034 = vpack.c.bf16 %v1029, %v1025
  %1039 = vrot.lane.b32.xlu0 %v1031, 127
  %v1040 = vpop.permute.xlu0 %1039
  %1041 = vrot.lane.b32.xlu0 %v1032, 127
  %v1042 = vpop.permute.xlu0 %1041
  %1043 = vrot.lane.b32.xlu0 %v1033, 127
  %v1044 = vpop.permute.xlu0 %1043
  %1045 = vrot.lane.b32.xlu0 %v1034, 127
  %v1046 = vpop.permute.xlu0 %1045
  %v1047 = vsel %vm373, %v1040, %v1042
  %v1048 = vsel %vm373, %v1042, %v1044
  %v1049 = vsel %vm373, %v1044, %v1046
  %1054 = vrot.lane.b32.xlu0 %v1031, 126
  %v1055 = vpop.permute.xlu0 %1054
  %1056 = vrot.lane.b32.xlu0 %v1032, 126
  %v1057 = vpop.permute.xlu0 %1056
  %1058 = vrot.lane.b32.xlu0 %v1033, 126
  %v1059 = vpop.permute.xlu0 %1058
  %1060 = vrot.lane.b32.xlu0 %v1034, 126
  %v1061 = vpop.permute.xlu0 %1060
  %v1062 = vsel %vm381, %v1055, %v1057
  %v1063 = vsel %vm381, %v1057, %v1059
  %v1064 = vsel %vm381, %v1059, %v1061
  %1069 = vrot.lane.b32.xlu0 %v1031, 125
  %v1070 = vpop.permute.xlu0 %1069
  %1071 = vrot.lane.b32.xlu0 %v1032, 125
  %v1072 = vpop.permute.xlu0 %1071
  %1073 = vrot.lane.b32.xlu0 %v1033, 125
  %v1074 = vpop.permute.xlu0 %1073
  %1075 = vrot.lane.b32.xlu0 %v1034, 125
  %v1076 = vpop.permute.xlu0 %1075
  %v1077 = vsel %vm389, %v1070, %v1072
  %v1078 = vsel %vm389, %v1072, %v1074
  %v1079 = vsel %vm389, %v1074, %v1076
  %1084 = vrot.lane.b32.xlu0 %v1031, 124
  %v1085 = vpop.permute.xlu0 %1084
  %1086 = vrot.lane.b32.xlu0 %v1032, 124
  %v1087 = vpop.permute.xlu0 %1086
  %1088 = vrot.lane.b32.xlu0 %v1033, 124
  %v1089 = vpop.permute.xlu0 %1088
  %1090 = vrot.lane.b32.xlu0 %v1034, 124
  %v1091 = vpop.permute.xlu0 %1090
  %v1092 = vsel %vm397, %v1085, %v1087
  %v1093 = vsel %vm397, %v1087, %v1089
  %v1094 = vsel %vm397, %v1089, %v1091
  %1099 = vrot.lane.b32.xlu0 %v1031, 123
  %v1100 = vpop.permute.xlu0 %1099
  %1101 = vrot.lane.b32.xlu0 %v1032, 123
  %v1102 = vpop.permute.xlu0 %1101
  %1103 = vrot.lane.b32.xlu0 %v1033, 123
  %v1104 = vpop.permute.xlu0 %1103
  %1105 = vrot.lane.b32.xlu0 %v1034, 123
  %v1106 = vpop.permute.xlu0 %1105
  %v1107 = vsel %vm405, %v1100, %v1102
  %v1108 = vsel %vm405, %v1102, %v1104
  %v1109 = vsel %vm405, %v1104, %v1106
  %1114 = vrot.lane.b32.xlu0 %v1031, 122
  %v1115 = vpop.permute.xlu0 %1114
  %1116 = vrot.lane.b32.xlu0 %v1032, 122
  %v1117 = vpop.permute.xlu0 %1116
  %1118 = vrot.lane.b32.xlu0 %v1033, 122
  %v1119 = vpop.permute.xlu0 %1118
  %1120 = vrot.lane.b32.xlu0 %v1034, 122
  %v1121 = vpop.permute.xlu0 %1120
  %v1122 = vsel %vm413, %v1115, %v1117
  %v1123 = vsel %vm413, %v1117, %v1119
  %v1124 = vsel %vm413, %v1119, %v1121
  %1129 = vrot.lane.b32.xlu0 %v1031, 121
  %v1130 = vpop.permute.xlu0 %1129
  %1131 = vrot.lane.b32.xlu0 %v1032, 121
  %v1132 = vpop.permute.xlu0 %1131
  %1133 = vrot.lane.b32.xlu0 %v1033, 121
  %v1134 = vpop.permute.xlu0 %1133
  %1135 = vrot.lane.b32.xlu0 %v1034, 121
  %v1136 = vpop.permute.xlu0 %1135
  %v1137 = vsel %vm421, %v1130, %v1132
  %v1138 = vsel %vm421, %v1132, %v1134
  %v1139 = vsel %vm421, %v1134, %v1136
  %1144 = vrot.lane.b32.xlu0 %v1031, 120
  %v1145 = vpop.permute.xlu0 %1144
  %1146 = vrot.lane.b32.xlu0 %v1032, 120
  %v1147 = vpop.permute.xlu0 %1146
  %1148 = vrot.lane.b32.xlu0 %v1033, 120
  %v1149 = vpop.permute.xlu0 %1148
  %1150 = vrot.lane.b32.xlu0 %v1034, 120
  %v1151 = vpop.permute.xlu0 %1150
  %v1152 = vsel %vm429, %v1145, %v1147
  %v1153 = vsel %vm429, %v1147, %v1149
  %v1154 = vsel %vm429, %v1149, %v1151
  %1159 = vrot.lane.b32.xlu0 %v1031, 119
  %v1160 = vpop.permute.xlu0 %1159
  %1161 = vrot.lane.b32.xlu0 %v1032, 119
  %v1162 = vpop.permute.xlu0 %1161
  %1163 = vrot.lane.b32.xlu0 %v1033, 119
  %v1164 = vpop.permute.xlu0 %1163
  %1165 = vrot.lane.b32.xlu0 %v1034, 119
  %v1166 = vpop.permute.xlu0 %1165
  %v1167 = vsel %vm437, %v1160, %v1162
  %v1168 = vsel %vm437, %v1162, %v1164
  %v1169 = vsel %vm437, %v1164, %v1166
  %1174 = vrot.lane.b32.xlu0 %v1031, 118
  %v1175 = vpop.permute.xlu0 %1174
  %1176 = vrot.lane.b32.xlu0 %v1032, 118
  %v1177 = vpop.permute.xlu0 %1176
  %1178 = vrot.lane.b32.xlu0 %v1033, 118
  %v1179 = vpop.permute.xlu0 %1178
  %1180 = vrot.lane.b32.xlu0 %v1034, 118
  %v1181 = vpop.permute.xlu0 %1180
  %v1182 = vsel %vm445, %v1175, %v1177
  %v1183 = vsel %vm445, %v1177, %v1179
  %v1184 = vsel %vm445, %v1179, %v1181
  %1189 = vrot.lane.b32.xlu0 %v1031, 117
  %v1190 = vpop.permute.xlu0 %1189
  %1191 = vrot.lane.b32.xlu0 %v1032, 117
  %v1192 = vpop.permute.xlu0 %1191
  %1193 = vrot.lane.b32.xlu0 %v1033, 117
  %v1194 = vpop.permute.xlu0 %1193
  %1195 = vrot.lane.b32.xlu0 %v1034, 117
  %v1196 = vpop.permute.xlu0 %1195
  %v1197 = vsel %vm453, %v1190, %v1192
  %v1198 = vsel %vm453, %v1192, %v1194
  %v1199 = vsel %vm453, %v1194, %v1196
  %1204 = vrot.lane.b32.xlu0 %v1031, 116
  %v1205 = vpop.permute.xlu0 %1204
  %1206 = vrot.lane.b32.xlu0 %v1032, 116
  %v1207 = vpop.permute.xlu0 %1206
  %1208 = vrot.lane.b32.xlu0 %v1033, 116
  %v1209 = vpop.permute.xlu0 %1208
  %1210 = vrot.lane.b32.xlu0 %v1034, 116
  %v1211 = vpop.permute.xlu0 %1210
  %v1212 = vsel %vm461, %v1205, %v1207
  %v1213 = vsel %vm461, %v1207, %v1209
  %v1214 = vsel %vm461, %v1209, %v1211
  %1219 = vrot.lane.b32.xlu0 %v1031, 115
  %v1220 = vpop.permute.xlu0 %1219
  %1221 = vrot.lane.b32.xlu0 %v1032, 115
  %v1222 = vpop.permute.xlu0 %1221
  %1223 = vrot.lane.b32.xlu0 %v1033, 115
  %v1224 = vpop.permute.xlu0 %1223
  %1225 = vrot.lane.b32.xlu0 %v1034, 115
  %v1226 = vpop.permute.xlu0 %1225
  %v1227 = vsel %vm469, %v1220, %v1222
  %v1228 = vsel %vm469, %v1222, %v1224
  %v1229 = vsel %vm469, %v1224, %v1226
  %1234 = vrot.lane.b32.xlu0 %v1031, 114
  %v1235 = vpop.permute.xlu0 %1234
  %1236 = vrot.lane.b32.xlu0 %v1032, 114
  %v1237 = vpop.permute.xlu0 %1236
  %1238 = vrot.lane.b32.xlu0 %v1033, 114
  %v1239 = vpop.permute.xlu0 %1238
  %1240 = vrot.lane.b32.xlu0 %v1034, 114
  %v1241 = vpop.permute.xlu0 %1240
  %v1242 = vsel %vm477, %v1235, %v1237
  %v1243 = vsel %vm477, %v1237, %v1239
  %v1244 = vsel %vm477, %v1239, %v1241
  %1249 = vrot.lane.b32.xlu0 %v1031, 113
  %v1250 = vpop.permute.xlu0 %1249
  %1251 = vrot.lane.b32.xlu0 %v1032, 113
  %v1252 = vpop.permute.xlu0 %1251
  %1253 = vrot.lane.b32.xlu0 %v1033, 113
  %v1254 = vpop.permute.xlu0 %1253
  %1255 = vrot.lane.b32.xlu0 %v1034, 113
  %v1256 = vpop.permute.xlu0 %1255
  %v1257 = vsel %vm485, %v1250, %v1252
  %v1258 = vsel %vm485, %v1252, %v1254
  %v1259 = vsel %vm485, %v1254, %v1256
  %1264 = vrot.lane.b32.xlu0 %v1031, 112
  %v1265 = vpop.permute.xlu0 %1264
  %1266 = vrot.lane.b32.xlu0 %v1032, 112
  %v1267 = vpop.permute.xlu0 %1266
  %1268 = vrot.lane.b32.xlu0 %v1033, 112
  %v1269 = vpop.permute.xlu0 %1268
  %1270 = vrot.lane.b32.xlu0 %v1034, 112
  %v1271 = vpop.permute.xlu0 %1270
  %1272 = vrot.lane.b32.xlu0 %v1047, 112
  %v1273 = vpop.permute.xlu0 %1272
  %1274 = vrot.lane.b32.xlu0 %v1048, 112
  %v1275 = vpop.permute.xlu0 %1274
  %1276 = vrot.lane.b32.xlu0 %v1049, 112
  %v1277 = vpop.permute.xlu0 %1276
  %1278 = vrot.lane.b32.xlu0 %v1046, 112
  %v1279 = vpop.permute.xlu0 %1278
  %1280 = vrot.lane.b32.xlu0 %v1062, 112
  %v1281 = vpop.permute.xlu0 %1280
  %1282 = vrot.lane.b32.xlu0 %v1063, 112
  %v1283 = vpop.permute.xlu0 %1282
  %1284 = vrot.lane.b32.xlu0 %v1064, 112
  %v1285 = vpop.permute.xlu0 %1284
  %1286 = vrot.lane.b32.xlu0 %v1061, 112
  %v1287 = vpop.permute.xlu0 %1286
  %1288 = vrot.lane.b32.xlu0 %v1077, 112
  %v1289 = vpop.permute.xlu0 %1288
  %1290 = vrot.lane.b32.xlu0 %v1078, 112
  %v1291 = vpop.permute.xlu0 %1290
  %1292 = vrot.lane.b32.xlu0 %v1079, 112
  %v1293 = vpop.permute.xlu0 %1292
  %1294 = vrot.lane.b32.xlu0 %v1076, 112
  %v1295 = vpop.permute.xlu0 %1294
  %v1296 = vsel %vm505, %v1265, %v1267
  %v1297 = vsel %vm505, %v1267, %v1269
  %v1298 = vsel %vm505, %v1269, %v1271
  %v1299 = vsel %vm505, %v1273, %v1275
  %v1300 = vsel %vm505, %v1275, %v1277
  %v1301 = vsel %vm505, %v1277, %v1279
  %v1302 = vsel %vm505, %v1281, %v1283
  %v1303 = vsel %vm505, %v1283, %v1285
  %v1304 = vsel %vm505, %v1285, %v1287
  %v1305 = vsel %vm505, %v1289, %v1291
  %v1306 = vsel %vm505, %v1291, %v1293
  %v1307 = vsel %vm505, %v1293, %v1295
  %v1324 = vld [vmem:[%s6] sm:$0xff]
  %v1325 = vld [vmem:[%s6 + $0x8] sm:$0xf]
  %v1326 = vld [vmem:[%s6 + $0xc] sm:$0xff]
  %v1327 = vld [vmem:[%s6 + $0x14] sm:$0xf]
  %v1328 = vld [vmem:[%s7] sm:$0xff]
  %v1329 = vld [vmem:[%s7 + $0x8] sm:$0xff]
  %1331 = vset.pattern.permute.xlu0 0
  %1332 = vperm.xlu0 %1331, %v1328
  %v1333 = vpop.permute.xlu0 %1332
  %1336 = vset.pattern.permute.xlu0 0
  %1337 = vperm.xlu0 %1336, %v1329
  %v1338 = vpop.permute.xlu0 %1337
  %v1344 = vunpack.c.l.b16 %v1324
  %v1345 = vunpack.c.h.b16 %v1324
  %v1346 = vunpack.c.l.b16 %v1325
  %v1347 = vunpack.c.l.b16 %v1326
  %v1348 = vunpack.c.h.b16 %v1326
  %v1349 = vunpack.c.l.b16 %v1327
  %v1350 = vpack.c.b16 %v1347, %v1344
  %v1351 = vpack.c.b16 %v1348, %v1345
  %v1352 = vpack.c.b16 %v1349, %v1346
  %v1356 = vsel %vm150, %v1352, 0
  %1358 = vmatprep.subr.bf16.mxu0 %v1032
  %1359 = vmatpush1.bf16.msra.mxu0 %v1031
  %1360 = vmatprep.subr.bf16.mxu0 %v1048
  %1361 = vmatpush1.bf16.msra.mxu0 %v1047
  %1362 = vmatprep.subr.bf16.mxu0 %v1063
  %1363 = vmatpush1.bf16.msra.mxu0 %v1062
  %1364 = vmatprep.subr.bf16.mxu0 %v1078
  %1365 = vmatpush1.bf16.msra.mxu0 %v1077
  %1366 = vmatprep.subr.bf16.mxu0 %v1093
  %1367 = vmatpush1.bf16.msra.mxu0 %v1092
  %1368 = vmatprep.subr.bf16.mxu0 %v1108
  %1369 = vmatpush1.bf16.msra.mxu0 %v1107
  %1370 = vmatprep.subr.bf16.mxu0 %v1123
  %1371 = vmatpush1.bf16.msra.mxu0 %v1122
  %1372 = vmatprep.subr.bf16.mxu0 %v1138
  %1373 = vmatpush1.bf16.msra.mxu0 %v1137
  %1374 = vmatprep.subr.bf16.mxu0 %v1153
  %1375 = vmatpush1.bf16.msra.mxu0 %v1152
  %1376 = vmatprep.subr.bf16.mxu0 %v1168
  %1377 = vmatpush1.bf16.msra.mxu0 %v1167
  %1378 = vmatprep.subr.bf16.mxu0 %v1183
  %1379 = vmatpush1.bf16.msra.mxu0 %v1182
  %1380 = vmatprep.subr.bf16.mxu0 %v1198
  %1381 = vmatpush1.bf16.msra.mxu0 %v1197
  %1382 = vmatprep.subr.bf16.mxu0 %v1213
  %1383 = vmatpush1.bf16.msra.mxu0 %v1212
  %1384 = vmatprep.subr.bf16.mxu0 %v1228
  %1385 = vmatpush1.bf16.msra.mxu0 %v1227
  %1386 = vmatprep.subr.bf16.mxu0 %v1243
  %1387 = vmatpush1.bf16.msra.mxu0 %v1242
  %1388 = vmatprep.subr.bf16.mxu0 %v1258
  %1389 = vmatpush1.bf16.msra.mxu0 %v1257
  %1390 = vmatprep.mubr.bf16.mxu0 %v1351
  %1391 = vmatmul.mubr.bf16.gmra.mrb[0].mxu0 %v1350
  %v1392 = vpop.f32.mrb[0].mxu0
  %v1393 = vadd.f32 %v1333, %v1392
  %v1394 = vpop.f32.mrb[0].mxu0
  %v1395 = vadd.f32 %v1333, %v1394
  %v1396 = vpop.f32.mrb[0].mxu0
  %v1397 = vadd.f32 %v1338, %v1396
  %v1398 = vpop.f32.mrb[0].mxu0
  %v1399 = vadd.f32 %v1338, %v1398
  %1400 = vdwg.mxu0
  %1401 = vmatprep.subr.bf16.mxu0 %v1297
  %1402 = vmatpush1.bf16.msra.mxu0 %v1296
  %1403 = vmatprep.subr.bf16.mxu0 %v1300
  %1404 = vmatpush1.bf16.msra.mxu0 %v1299
  %1405 = vmatprep.subr.bf16.mxu0 %v1303
  %1406 = vmatpush1.bf16.msra.mxu0 %v1302
  %1407 = vmatprep.subr.bf16.mxu0 %v1306
  %1408 = vmatpush1.bf16.msra.mxu0 %v1305
  %1409 = vmatprep.subr.bf16.mxu0 0
  %1410 = vmatpush1.bf16.msra.mxu0 0
  %1411 = vmatprep.subr.bf16.mxu0 0
  %1412 = vmatpush1.bf16.msra.mxu0 0
  %1413 = vmatprep.subr.bf16.mxu0 0
  %1414 = vmatpush1.bf16.msra.mxu0 0
  %1415 = vmatprep.subr.bf16.mxu0 0
  %1416 = vmatpush1.bf16.msra.mxu0 0
  %1417 = vmatprep.subr.bf16.mxu0 0
  %1418 = vmatpush1.bf16.msra.mxu0 0
  %1419 = vmatprep.subr.bf16.mxu0 0
  %1420 = vmatpush1.bf16.msra.mxu0 0
  %1421 = vmatprep.subr.bf16.mxu0 0
  %1422 = vmatpush1.bf16.msra.mxu0 0
  %1423 = vmatprep.subr.bf16.mxu0 0
  %1424 = vmatpush1.bf16.msra.mxu0 0
  %1425 = vmatprep.subr.bf16.mxu0 0
  %1426 = vmatpush1.bf16.msra.mxu0 0
  %1427 = vmatprep.subr.bf16.mxu0 0
  %1428 = vmatpush1.bf16.msra.mxu0 0
  %1429 = vmatprep.subr.bf16.mxu0 0
  %1430 = vmatpush1.bf16.msra.mxu0 0
  %1431 = vmatprep.subr.bf16.mxu0 0
  %1432 = vmatpush1.bf16.msra.mxu0 0
  %1433 = vmatprep.mubr.bf16.mxu0 0
  %1434 = vmatmul.mubr.bf16.gmra.mrb[0].mxu0 %v1356
  %v1435 = vpop.f32.mrb[0].mxu0
  %v1436 = vadd.f32 %v1393, %v1435
  %v1437 = vpop.f32.mrb[0].mxu0
  %v1438 = vadd.f32 %v1395, %v1437
  %v1439 = vpop.f32.mrb[0].mxu0
  %v1440 = vadd.f32 %v1397, %v1439
  %v1441 = vpop.f32.mrb[0].mxu0
  %v1442 = vadd.f32 %v1399, %v1441
  %1443 = vdwg.mxu0
  %1444 = vmatprep.subr.bf16.mxu0 %v1034
  %1445 = vmatpush1.bf16.msra.mxu0 %v1033
  %1446 = vmatprep.subr.bf16.mxu0 %v1046
  %1447 = vmatpush1.bf16.msra.mxu0 %v1049
  %1448 = vmatprep.subr.bf16.mxu0 %v1061
  %1449 = vmatpush1.bf16.msra.mxu0 %v1064
  %1450 = vmatprep.subr.bf16.mxu0 %v1076
  %1451 = vmatpush1.bf16.msra.mxu0 %v1079
  %1452 = vmatprep.subr.bf16.mxu0 %v1091
  %1453 = vmatpush1.bf16.msra.mxu0 %v1094
  %1454 = vmatprep.subr.bf16.mxu0 %v1106
  %1455 = vmatpush1.bf16.msra.mxu0 %v1109
  %1456 = vmatprep.subr.bf16.mxu0 %v1121
  %1457 = vmatpush1.bf16.msra.mxu0 %v1124
  %1458 = vmatprep.subr.bf16.mxu0 %v1136
  %1459 = vmatpush1.bf16.msra.mxu0 %v1139
  %1460 = vmatprep.subr.bf16.mxu0 %v1151
  %1461 = vmatpush1.bf16.msra.mxu0 %v1154
  %1462 = vmatprep.subr.bf16.mxu0 %v1166
  %1463 = vmatpush1.bf16.msra.mxu0 %v1169
  %1464 = vmatprep.subr.bf16.mxu0 %v1181
  %1465 = vmatpush1.bf16.msra.mxu0 %v1184
  %1466 = vmatprep.subr.bf16.mxu0 %v1196
  %1467 = vmatpush1.bf16.msra.mxu0 %v1199
  %1468 = vmatprep.subr.bf16.mxu0 %v1211
  %1469 = vmatpush1.bf16.msra.mxu0 %v1214
  %1470 = vmatprep.subr.bf16.mxu0 %v1226
  %1471 = vmatpush1.bf16.msra.mxu0 %v1229
  %1472 = vmatprep.subr.bf16.mxu0 %v1241
  %1473 = vmatpush1.bf16.msra.mxu0 %v1244
  %1474 = vmatprep.subr.bf16.mxu0 %v1256
  %1475 = vmatpush1.bf16.msra.mxu0 %v1259
  %1476 = vmatprep.mubr.bf16.mxu0 %v1351
  %1477 = vmatmul.mubr.bf16.gmra.mrb[0].mxu0 %v1350
  %v1478 = vpop.f32.mrb[0].mxu0
  %v1479 = vadd.f32 %v1333, %v1478
  %v1480 = vpop.f32.mrb[0].mxu0
  %v1481 = vadd.f32 %v1333, %v1480
  %v1482 = vpop.f32.mrb[0].mxu0
  %v1483 = vadd.f32 %v1338, %v1482
  %v1484 = vpop.f32.mrb[0].mxu0
  %v1485 = vadd.f32 %v1338, %v1484
  %1486 = vdwg.mxu0
  %1487 = vmatprep.subr.bf16.mxu0 %v1271
  %1488 = vmatpush1.bf16.msra.mxu0 %v1298
  %1489 = vmatprep.subr.bf16.mxu0 %v1279
  %1490 = vmatpush1.bf16.msra.mxu0 %v1301
  %1491 = vmatprep.subr.bf16.mxu0 %v1287
  %1492 = vmatpush1.bf16.msra.mxu0 %v1304
  %1493 = vmatprep.subr.bf16.mxu0 %v1295
  %1494 = vmatpush1.bf16.msra.mxu0 %v1307
  %1495 = vmatprep.subr.bf16.mxu0 0
  %1496 = vmatpush1.bf16.msra.mxu0 0
  %1497 = vmatprep.subr.bf16.mxu0 0
  %1498 = vmatpush1.bf16.msra.mxu0 0
  %1499 = vmatprep.subr.bf16.mxu0 0
  %1500 = vmatpush1.bf16.msra.mxu0 0
  %1501 = vmatprep.subr.bf16.mxu0 0
  %1502 = vmatpush1.bf16.msra.mxu0 0
  %1503 = vmatprep.subr.bf16.mxu0 0
  %1504 = vmatpush1.bf16.msra.mxu0 0
  %1505 = vmatprep.subr.bf16.mxu0 0
  %1506 = vmatpush1.bf16.msra.mxu0 0
  %1507 = vmatprep.subr.bf16.mxu0 0
  %1508 = vmatpush1.bf16.msra.mxu0 0
  %1509 = vmatprep.subr.bf16.mxu0 0
  %1510 = vmatpush1.bf16.msra.mxu0 0
  %1511 = vmatprep.subr.bf16.mxu0 0
  %1512 = vmatpush1.bf16.msra.mxu0 0
  %1513 = vmatprep.subr.bf16.mxu0 0
  %1514 = vmatpush1.bf16.msra.mxu0 0
  %1515 = vmatprep.subr.bf16.mxu0 0
  %1516 = vmatpush1.bf16.msra.mxu0 0
  %1517 = vmatprep.subr.bf16.mxu0 0
  %1518 = vmatpush1.bf16.msra.mxu0 0
  %1519 = vmatprep.mubr.bf16.mxu0 0
  %1520 = vmatmul.mubr.bf16.gmra.mrb[0].mxu0 %v1356
  %v1521 = vpop.f32.mrb[0].mxu0
  %v1522 = vadd.f32 %v1479, %v1521
  %v1523 = vpop.f32.mrb[0].mxu0
  %v1524 = vadd.f32 %v1481, %v1523
  %v1525 = vpop.f32.mrb[0].mxu0
  %v1526 = vadd.f32 %v1483, %v1525
  %v1527 = vpop.f32.mrb[0].mxu0
  %v1528 = vadd.f32 %v1485, %v1527
  %1529 = vdwg.mxu0
  %vm1530 = vcmp.gt.f32.partialorder %v1436, 0.0
  %vm1531 = vcmp.gt.f32.partialorder %v1438, 0.0
  %vm1532 = vcmp.gt.f32.partialorder %v1522, 0.0
  %vm1533 = vcmp.gt.f32.partialorder %v1524, 0.0
  %vm1534 = vcmp.gt.f32.partialorder %v1440, 0.0
  %vm1535 = vcmp.gt.f32.partialorder %v1442, 0.0
  %vm1536 = vcmp.gt.f32.partialorder %v1526, 0.0
  %vm1537 = vcmp.gt.f32.partialorder %v1528, 0.0
  %v1538 = vmul.f32 %v1436, 0.25
  %v1539 = vmul.f32 %v1438, 0.25
  %v1540 = vmul.f32 %v1522, 0.25
  %v1541 = vmul.f32 %v1524, 0.25
  %v1542 = vmul.f32 %v1440, 0.25
  %v1543 = vmul.f32 %v1442, 0.25
  %v1544 = vmul.f32 %v1526, 0.25
  %v1545 = vmul.f32 %v1528, 0.25
  %v1546 = vsel %vm1530, %v1436, %v1538
  %v1547 = vsel %vm1531, %v1438, %v1539
  %v1548 = vsel %vm1532, %v1522, %v1540
  %v1549 = vsel %vm1533, %v1524, %v1541
  %v1550 = vsel %vm1534, %v1440, %v1542
  %v1551 = vsel %vm1535, %v1442, %v1543
  %v1552 = vsel %vm1536, %v1526, %v1544
  %v1553 = vsel %vm1537, %v1528, %v1545
  %v1554 = vpack.c.bf16 %v1550, %v1546
  %v1555 = vpack.c.bf16 %v1551, %v1547
  %v1556 = vpack.c.bf16 %v1552, %v1548
  %v1557 = vpack.c.bf16 %v1553, %v1549
  %1562 = vrot.lane.b32.xlu0 %v1554, 39
  %v1563 = vpop.permute.xlu0 %1562
  %1564 = vrot.lane.b32.xlu0 %v1555, 39
  %v1565 = vpop.permute.xlu0 %1564
  %1566 = vrot.lane.b32.xlu0 %v1556, 39
  %v1567 = vpop.permute.xlu0 %1566
  %1568 = vrot.lane.b32.xlu0 %v1557, 39
  %v1569 = vpop.permute.xlu0 %1568
  %vm1570 = vcmask 318464
  %v1571 = vsel %vm1570, %v1563, %v1565
  %v1572 = vsel %vm1570, %v1565, %v1567
  %v1573 = vsel %vm1570, %v1567, %v1569
  %vm1576 = vcmask 318464
  %v1578 = vsel %vm1576, 0, %v1563
  %vm1580 = vcmask 334848
  %v1582 = vsel %vm1580, %v1573, 0
  %1586 = vrot.lane.b32.xlu0 %v1578, 127
  %v1587 = vpop.permute.xlu0 %1586
  %1588 = vrot.lane.b32.xlu0 %v1571, 127
  %v1589 = vpop.permute.xlu0 %1588
  %1590 = vrot.lane.b32.xlu0 %v1572, 127
  %v1591 = vpop.permute.xlu0 %1590
  %1592 = vrot.lane.b32.xlu0 %v1582, 127
  %v1593 = vpop.permute.xlu0 %1592
  %v1594 = vsel %vm373, %v1587, %v1589
  %v1595 = vsel %vm373, %v1589, %v1591
  %v1596 = vsel %vm373, %v1591, %v1593
  %1601 = vrot.lane.b32.xlu0 %v1578, 126
  %v1602 = vpop.permute.xlu0 %1601
  %1603 = vrot.lane.b32.xlu0 %v1571, 126
  %v1604 = vpop.permute.xlu0 %1603
  %1605 = vrot.lane.b32.xlu0 %v1572, 126
  %v1606 = vpop.permute.xlu0 %1605
  %1607 = vrot.lane.b32.xlu0 %v1582, 126
  %v1608 = vpop.permute.xlu0 %1607
  %v1609 = vsel %vm381, %v1602, %v1604
  %v1610 = vsel %vm381, %v1604, %v1606
  %v1611 = vsel %vm381, %v1606, %v1608
  %1616 = vrot.lane.b32.xlu0 %v1578, 125
  %v1617 = vpop.permute.xlu0 %1616
  %1618 = vrot.lane.b32.xlu0 %v1571, 125
  %v1619 = vpop.permute.xlu0 %1618
  %1620 = vrot.lane.b32.xlu0 %v1572, 125
  %v1621 = vpop.permute.xlu0 %1620
  %1622 = vrot.lane.b32.xlu0 %v1582, 125
  %v1623 = vpop.permute.xlu0 %1622
  %v1624 = vsel %vm389, %v1617, %v1619
  %v1625 = vsel %vm389, %v1619, %v1621
  %v1626 = vsel %vm389, %v1621, %v1623
  %1631 = vrot.lane.b32.xlu0 %v1578, 124
  %v1632 = vpop.permute.xlu0 %1631
  %1633 = vrot.lane.b32.xlu0 %v1571, 124
  %v1634 = vpop.permute.xlu0 %1633
  %1635 = vrot.lane.b32.xlu0 %v1572, 124
  %v1636 = vpop.permute.xlu0 %1635
  %1637 = vrot.lane.b32.xlu0 %v1582, 124
  %v1638 = vpop.permute.xlu0 %1637
  %v1639 = vsel %vm397, %v1632, %v1634
  %v1640 = vsel %vm397, %v1634, %v1636
  %v1641 = vsel %vm397, %v1636, %v1638
  %1646 = vrot.lane.b32.xlu0 %v1578, 123
  %v1647 = vpop.permute.xlu0 %1646
  %1648 = vrot.lane.b32.xlu0 %v1571, 123
  %v1649 = vpop.permute.xlu0 %1648
  %1650 = vrot.lane.b32.xlu0 %v1572, 123
  %v1651 = vpop.permute.xlu0 %1650
  %1652 = vrot.lane.b32.xlu0 %v1582, 123
  %v1653 = vpop.permute.xlu0 %1652
  %v1654 = vsel %vm405, %v1647, %v1649
  %v1655 = vsel %vm405, %v1649, %v1651
  %v1656 = vsel %vm405, %v1651, %v1653
  %1661 = vrot.lane.b32.xlu0 %v1578, 122
  %v1662 = vpop.permute.xlu0 %1661
  %1663 = vrot.lane.b32.xlu0 %v1571, 122
  %v1664 = vpop.permute.xlu0 %1663
  %1665 = vrot.lane.b32.xlu0 %v1572, 122
  %v1666 = vpop.permute.xlu0 %1665
  %1667 = vrot.lane.b32.xlu0 %v1582, 122
  %v1668 = vpop.permute.xlu0 %1667
  %v1669 = vsel %vm413, %v1662, %v1664
  %v1670 = vsel %vm413, %v1664, %v1666
  %v1671 = vsel %vm413, %v1666, %v1668
  %1676 = vrot.lane.b32.xlu0 %v1578, 121
  %v1677 = vpop.permute.xlu0 %1676
  %1678 = vrot.lane.b32.xlu0 %v1571, 121
  %v1679 = vpop.permute.xlu0 %1678
  %1680 = vrot.lane.b32.xlu0 %v1572, 121
  %v1681 = vpop.permute.xlu0 %1680
  %1682 = vrot.lane.b32.xlu0 %v1582, 121
  %v1683 = vpop.permute.xlu0 %1682
  %v1684 = vsel %vm421, %v1677, %v1679
  %v1685 = vsel %vm421, %v1679, %v1681
  %v1686 = vsel %vm421, %v1681, %v1683
  %1691 = vrot.lane.b32.xlu0 %v1578, 120
  %v1692 = vpop.permute.xlu0 %1691
  %1693 = vrot.lane.b32.xlu0 %v1571, 120
  %v1694 = vpop.permute.xlu0 %1693
  %1695 = vrot.lane.b32.xlu0 %v1572, 120
  %v1696 = vpop.permute.xlu0 %1695
  %1697 = vrot.lane.b32.xlu0 %v1582, 120
  %v1698 = vpop.permute.xlu0 %1697
  %v1699 = vsel %vm429, %v1692, %v1694
  %v1700 = vsel %vm429, %v1694, %v1696
  %v1701 = vsel %vm429, %v1696, %v1698
  %1706 = vrot.lane.b32.xlu0 %v1578, 119
  %v1707 = vpop.permute.xlu0 %1706
  %1708 = vrot.lane.b32.xlu0 %v1571, 119
  %v1709 = vpop.permute.xlu0 %1708
  %1710 = vrot.lane.b32.xlu0 %v1572, 119
  %v1711 = vpop.permute.xlu0 %1710
  %1712 = vrot.lane.b32.xlu0 %v1582, 119
  %v1713 = vpop.permute.xlu0 %1712
  %v1714 = vsel %vm437, %v1707, %v1709
  %v1715 = vsel %vm437, %v1709, %v1711
  %v1716 = vsel %vm437, %v1711, %v1713
  %1721 = vrot.lane.b32.xlu0 %v1578, 118
  %v1722 = vpop.permute.xlu0 %1721
  %1723 = vrot.lane.b32.xlu0 %v1571, 118
  %v1724 = vpop.permute.xlu0 %1723
  %1725 = vrot.lane.b32.xlu0 %v1572, 118
  %v1726 = vpop.permute.xlu0 %1725
  %1727 = vrot.lane.b32.xlu0 %v1582, 118
  %v1728 = vpop.permute.xlu0 %1727
  %v1729 = vsel %vm445, %v1722, %v1724
  %v1730 = vsel %vm445, %v1724, %v1726
  %v1731 = vsel %vm445, %v1726, %v1728
  %1736 = vrot.lane.b32.xlu0 %v1578, 117
  %v1737 = vpop.permute.xlu0 %1736
  %1738 = vrot.lane.b32.xlu0 %v1571, 117
  %v1739 = vpop.permute.xlu0 %1738
  %1740 = vrot.lane.b32.xlu0 %v1572, 117
  %v1741 = vpop.permute.xlu0 %1740
  %1742 = vrot.lane.b32.xlu0 %v1582, 117
  %v1743 = vpop.permute.xlu0 %1742
  %v1744 = vsel %vm453, %v1737, %v1739
  %v1745 = vsel %vm453, %v1739, %v1741
  %v1746 = vsel %vm453, %v1741, %v1743
  %1751 = vrot.lane.b32.xlu0 %v1578, 116
  %v1752 = vpop.permute.xlu0 %1751
  %1753 = vrot.lane.b32.xlu0 %v1571, 116
  %v1754 = vpop.permute.xlu0 %1753
  %1755 = vrot.lane.b32.xlu0 %v1572, 116
  %v1756 = vpop.permute.xlu0 %1755
  %1757 = vrot.lane.b32.xlu0 %v1582, 116
  %v1758 = vpop.permute.xlu0 %1757
  %v1759 = vsel %vm461, %v1752, %v1754
  %v1760 = vsel %vm461, %v1754, %v1756
  %v1761 = vsel %vm461, %v1756, %v1758
  %1766 = vrot.lane.b32.xlu0 %v1578, 115
  %v1767 = vpop.permute.xlu0 %1766
  %1768 = vrot.lane.b32.xlu0 %v1571, 115
  %v1769 = vpop.permute.xlu0 %1768
  %1770 = vrot.lane.b32.xlu0 %v1572, 115
  %v1771 = vpop.permute.xlu0 %1770
  %1772 = vrot.lane.b32.xlu0 %v1582, 115
  %v1773 = vpop.permute.xlu0 %1772
  %v1774 = vsel %vm469, %v1767, %v1769
  %v1775 = vsel %vm469, %v1769, %v1771
  %v1776 = vsel %vm469, %v1771, %v1773
  %1781 = vrot.lane.b32.xlu0 %v1578, 114
  %v1782 = vpop.permute.xlu0 %1781
  %1783 = vrot.lane.b32.xlu0 %v1571, 114
  %v1784 = vpop.permute.xlu0 %1783
  %1785 = vrot.lane.b32.xlu0 %v1572, 114
  %v1786 = vpop.permute.xlu0 %1785
  %1787 = vrot.lane.b32.xlu0 %v1582, 114
  %v1788 = vpop.permute.xlu0 %1787
  %v1789 = vsel %vm477, %v1782, %v1784
  %v1790 = vsel %vm477, %v1784, %v1786
  %v1791 = vsel %vm477, %v1786, %v1788
  %1796 = vrot.lane.b32.xlu0 %v1578, 113
  %v1797 = vpop.permute.xlu0 %1796
  %1798 = vrot.lane.b32.xlu0 %v1571, 113
  %v1799 = vpop.permute.xlu0 %1798
  %1800 = vrot.lane.b32.xlu0 %v1572, 113
  %v1801 = vpop.permute.xlu0 %1800
  %1802 = vrot.lane.b32.xlu0 %v1582, 113
  %v1803 = vpop.permute.xlu0 %1802
  %v1804 = vsel %vm485, %v1797, %v1799
  %v1805 = vsel %vm485, %v1799, %v1801
  %v1806 = vsel %vm485, %v1801, %v1803
  %1811 = vrot.lane.b32.xlu0 %v1578, 112
  %v1812 = vpop.permute.xlu0 %1811
  %1813 = vrot.lane.b32.xlu0 %v1571, 112
  %v1814 = vpop.permute.xlu0 %1813
  %1815 = vrot.lane.b32.xlu0 %v1572, 112
  %v1816 = vpop.permute.xlu0 %1815
  %1817 = vrot.lane.b32.xlu0 %v1582, 112
  %v1818 = vpop.permute.xlu0 %1817
  %1819 = vrot.lane.b32.xlu0 %v1594, 112
  %v1820 = vpop.permute.xlu0 %1819
  %1821 = vrot.lane.b32.xlu0 %v1595, 112
  %v1822 = vpop.permute.xlu0 %1821
  %1823 = vrot.lane.b32.xlu0 %v1596, 112
  %v1824 = vpop.permute.xlu0 %1823
  %1825 = vrot.lane.b32.xlu0 %v1593, 112
  %v1826 = vpop.permute.xlu0 %1825
  %1827 = vrot.lane.b32.xlu0 %v1609, 112
  %v1828 = vpop.permute.xlu0 %1827
  %1829 = vrot.lane.b32.xlu0 %v1610, 112
  %v1830 = vpop.permute.xlu0 %1829
  %1831 = vrot.lane.b32.xlu0 %v1611, 112
  %v1832 = vpop.permute.xlu0 %1831
  %1833 = vrot.lane.b32.xlu0 %v1608, 112
  %v1834 = vpop.permute.xlu0 %1833
  %1835 = vrot.lane.b32.xlu0 %v1624, 112
  %v1836 = vpop.permute.xlu0 %1835
  %1837 = vrot.lane.b32.xlu0 %v1625, 112
  %v1838 = vpop.permute.xlu0 %1837
  %1839 = vrot.lane.b32.xlu0 %v1626, 112
  %v1840 = vpop.permute.xlu0 %1839
  %1841 = vrot.lane.b32.xlu0 %v1623, 112
  %v1842 = vpop.permute.xlu0 %1841
  %1843 = vrot.lane.b32.xlu0 %v1639, 112
  %v1844 = vpop.permute.xlu0 %1843
  %1845 = vrot.lane.b32.xlu0 %v1640, 112
  %v1846 = vpop.permute.xlu0 %1845
  %1847 = vrot.lane.b32.xlu0 %v1641, 112
  %v1848 = vpop.permute.xlu0 %1847
  %1849 = vrot.lane.b32.xlu0 %v1638, 112
  %v1850 = vpop.permute.xlu0 %1849
  %1851 = vrot.lane.b32.xlu0 %v1654, 112
  %v1852 = vpop.permute.xlu0 %1851
  %1853 = vrot.lane.b32.xlu0 %v1655, 112
  %v1854 = vpop.permute.xlu0 %1853
  %1855 = vrot.lane.b32.xlu0 %v1656, 112
  %v1856 = vpop.permute.xlu0 %1855
  %1857 = vrot.lane.b32.xlu0 %v1653, 112
  %v1858 = vpop.permute.xlu0 %1857
  %1859 = vrot.lane.b32.xlu0 %v1669, 112
  %v1860 = vpop.permute.xlu0 %1859
  %1861 = vrot.lane.b32.xlu0 %v1670, 112
  %v1862 = vpop.permute.xlu0 %1861
  %1863 = vrot.lane.b32.xlu0 %v1671, 112
  %v1864 = vpop.permute.xlu0 %1863
  %1865 = vrot.lane.b32.xlu0 %v1668, 112
  %v1866 = vpop.permute.xlu0 %1865
  %1867 = vrot.lane.b32.xlu0 %v1684, 112
  %v1868 = vpop.permute.xlu0 %1867
  %1869 = vrot.lane.b32.xlu0 %v1685, 112
  %v1870 = vpop.permute.xlu0 %1869
  %1871 = vrot.lane.b32.xlu0 %v1686, 112
  %v1872 = vpop.permute.xlu0 %1871
  %1873 = vrot.lane.b32.xlu0 %v1683, 112
  %v1874 = vpop.permute.xlu0 %1873
  %1875 = vrot.lane.b32.xlu0 %v1699, 112
  %v1876 = vpop.permute.xlu0 %1875
  %1877 = vrot.lane.b32.xlu0 %v1700, 112
  %v1878 = vpop.permute.xlu0 %1877
  %1879 = vrot.lane.b32.xlu0 %v1701, 112
  %v1880 = vpop.permute.xlu0 %1879
  %1881 = vrot.lane.b32.xlu0 %v1698, 112
  %v1882 = vpop.permute.xlu0 %1881
  %1883 = vrot.lane.b32.xlu0 %v1714, 112
  %v1884 = vpop.permute.xlu0 %1883
  %1885 = vrot.lane.b32.xlu0 %v1715, 112
  %v1886 = vpop.permute.xlu0 %1885
  %1887 = vrot.lane.b32.xlu0 %v1716, 112
  %v1888 = vpop.permute.xlu0 %1887
  %1889 = vrot.lane.b32.xlu0 %v1713, 112
  %v1890 = vpop.permute.xlu0 %1889
  %1891 = vrot.lane.b32.xlu0 %v1729, 112
  %v1892 = vpop.permute.xlu0 %1891
  %1893 = vrot.lane.b32.xlu0 %v1730, 112
  %v1894 = vpop.permute.xlu0 %1893
  %1895 = vrot.lane.b32.xlu0 %v1731, 112
  %v1896 = vpop.permute.xlu0 %1895
  %1897 = vrot.lane.b32.xlu0 %v1728, 112
  %v1898 = vpop.permute.xlu0 %1897
  %1899 = vrot.lane.b32.xlu0 %v1744, 112
  %v1900 = vpop.permute.xlu0 %1899
  %1901 = vrot.lane.b32.xlu0 %v1745, 112
  %v1902 = vpop.permute.xlu0 %1901
  %1903 = vrot.lane.b32.xlu0 %v1746, 112
  %v1904 = vpop.permute.xlu0 %1903
  %1905 = vrot.lane.b32.xlu0 %v1743, 112
  %v1906 = vpop.permute.xlu0 %1905
  %1907 = vrot.lane.b32.xlu0 %v1759, 112
  %v1908 = vpop.permute.xlu0 %1907
  %1909 = vrot.lane.b32.xlu0 %v1760, 112
  %v1910 = vpop.permute.xlu0 %1909
  %1911 = vrot.lane.b32.xlu0 %v1761, 112
  %v1912 = vpop.permute.xlu0 %1911
  %1913 = vrot.lane.b32.xlu0 %v1758, 112
  %v1914 = vpop.permute.xlu0 %1913
  %1915 = vrot.lane.b32.xlu0 %v1774, 112
  %v1916 = vpop.permute.xlu0 %1915
  %1917 = vrot.lane.b32.xlu0 %v1775, 112
  %v1918 = vpop.permute.xlu0 %1917
  %1919 = vrot.lane.b32.xlu0 %v1776, 112
  %v1920 = vpop.permute.xlu0 %1919
  %1921 = vrot.lane.b32.xlu0 %v1773, 112
  %v1922 = vpop.permute.xlu0 %1921
  %1923 = vrot.lane.b32.xlu0 %v1789, 112
  %v1924 = vpop.permute.xlu0 %1923
  %1925 = vrot.lane.b32.xlu0 %v1790, 112
  %v1926 = vpop.permute.xlu0 %1925
  %1927 = vrot.lane.b32.xlu0 %v1791, 112
  %v1928 = vpop.permute.xlu0 %1927
  %1929 = vrot.lane.b32.xlu0 %v1788, 112
  %v1930 = vpop.permute.xlu0 %1929
  %1931 = vrot.lane.b32.xlu0 %v1804, 112
  %v1932 = vpop.permute.xlu0 %1931
  %1933 = vrot.lane.b32.xlu0 %v1805, 112
  %v1934 = vpop.permute.xlu0 %1933
  %1935 = vrot.lane.b32.xlu0 %v1806, 112
  %v1936 = vpop.permute.xlu0 %1935
  %1937 = vrot.lane.b32.xlu0 %v1803, 112
  %v1938 = vpop.permute.xlu0 %1937
  %v1939 = vsel %vm505, %v1812, %v1814
  %v1940 = vsel %vm505, %v1814, %v1816
  %v1941 = vsel %vm505, %v1816, %v1818
  %v1942 = vsel %vm505, %v1820, %v1822
  %v1943 = vsel %vm505, %v1822, %v1824
  %v1944 = vsel %vm505, %v1824, %v1826
  %v1945 = vsel %vm505, %v1828, %v1830
  %v1946 = vsel %vm505, %v1830, %v1832
  %v1947 = vsel %vm505, %v1832, %v1834
  %v1948 = vsel %vm505, %v1836, %v1838
  %v1949 = vsel %vm505, %v1838, %v1840
  %v1950 = vsel %vm505, %v1840, %v1842
  %v1951 = vsel %vm505, %v1844, %v1846
  %v1952 = vsel %vm505, %v1846, %v1848
  %v1953 = vsel %vm505, %v1848, %v1850
  %v1954 = vsel %vm505, %v1852, %v1854
  %v1955 = vsel %vm505, %v1854, %v1856
  %v1956 = vsel %vm505, %v1856, %v1858
  %v1957 = vsel %vm505, %v1860, %v1862
  %v1958 = vsel %vm505, %v1862, %v1864
  %v1959 = vsel %vm505, %v1864, %v1866
  %v1960 = vsel %vm505, %v1868, %v1870
  %v1961 = vsel %vm505, %v1870, %v1872
  %v1962 = vsel %vm505, %v1872, %v1874
  %v1963 = vsel %vm505, %v1876, %v1878
  %v1964 = vsel %vm505, %v1878, %v1880
  %v1965 = vsel %vm505, %v1880, %v1882
  %v1966 = vsel %vm505, %v1884, %v1886
  %v1967 = vsel %vm505, %v1886, %v1888
  %v1968 = vsel %vm505, %v1888, %v1890
  %v1969 = vsel %vm505, %v1892, %v1894
  %v1970 = vsel %vm505, %v1894, %v1896
  %v1971 = vsel %vm505, %v1896, %v1898
  %v1972 = vsel %vm505, %v1900, %v1902
  %v1973 = vsel %vm505, %v1902, %v1904
  %v1974 = vsel %vm505, %v1904, %v1906
  %v1975 = vsel %vm505, %v1908, %v1910
  %v1976 = vsel %vm505, %v1910, %v1912
  %v1977 = vsel %vm505, %v1912, %v1914
  %v1978 = vsel %vm505, %v1916, %v1918
  %v1979 = vsel %vm505, %v1918, %v1920
  %v1980 = vsel %vm505, %v1920, %v1922
  %v1981 = vsel %vm505, %v1924, %v1926
  %v1982 = vsel %vm505, %v1926, %v1928
  %v1983 = vsel %vm505, %v1928, %v1930
  %v1984 = vsel %vm505, %v1932, %v1934
  %v1985 = vsel %vm505, %v1934, %v1936
  %v1986 = vsel %vm505, %v1936, %v1938
  %2051 = vrot.lane.b32.xlu0 %v1578, 96
  %v2052 = vpop.permute.xlu0 %2051
  %2053 = vrot.lane.b32.xlu0 %v1571, 96
  %v2054 = vpop.permute.xlu0 %2053
  %2055 = vrot.lane.b32.xlu0 %v1572, 96
  %v2056 = vpop.permute.xlu0 %2055
  %2057 = vrot.lane.b32.xlu0 %v1582, 96
  %v2058 = vpop.permute.xlu0 %2057
  %2059 = vrot.lane.b32.xlu0 %v1594, 96
  %v2060 = vpop.permute.xlu0 %2059
  %2061 = vrot.lane.b32.xlu0 %v1595, 96
  %v2062 = vpop.permute.xlu0 %2061
  %2063 = vrot.lane.b32.xlu0 %v1596, 96
  %v2064 = vpop.permute.xlu0 %2063
  %2065 = vrot.lane.b32.xlu0 %v1593, 96
  %v2066 = vpop.permute.xlu0 %2065
  %2067 = vrot.lane.b32.xlu0 %v1609, 96
  %v2068 = vpop.permute.xlu0 %2067
  %2069 = vrot.lane.b32.xlu0 %v1610, 96
  %v2070 = vpop.permute.xlu0 %2069
  %2071 = vrot.lane.b32.xlu0 %v1611, 96
  %v2072 = vpop.permute.xlu0 %2071
  %2073 = vrot.lane.b32.xlu0 %v1608, 96
  %v2074 = vpop.permute.xlu0 %2073
  %2075 = vrot.lane.b32.xlu0 %v1624, 96
  %v2076 = vpop.permute.xlu0 %2075
  %2077 = vrot.lane.b32.xlu0 %v1625, 96
  %v2078 = vpop.permute.xlu0 %2077
  %2079 = vrot.lane.b32.xlu0 %v1626, 96
  %v2080 = vpop.permute.xlu0 %2079
  %2081 = vrot.lane.b32.xlu0 %v1623, 96
  %v2082 = vpop.permute.xlu0 %2081
  %2083 = vrot.lane.b32.xlu0 %v1639, 96
  %v2084 = vpop.permute.xlu0 %2083
  %2085 = vrot.lane.b32.xlu0 %v1640, 96
  %v2086 = vpop.permute.xlu0 %2085
  %2087 = vrot.lane.b32.xlu0 %v1641, 96
  %v2088 = vpop.permute.xlu0 %2087
  %2089 = vrot.lane.b32.xlu0 %v1638, 96
  %v2090 = vpop.permute.xlu0 %2089
  %2091 = vrot.lane.b32.xlu0 %v1654, 96
  %v2092 = vpop.permute.xlu0 %2091
  %2093 = vrot.lane.b32.xlu0 %v1655, 96
  %v2094 = vpop.permute.xlu0 %2093
  %2095 = vrot.lane.b32.xlu0 %v1656, 96
  %v2096 = vpop.permute.xlu0 %2095
  %2097 = vrot.lane.b32.xlu0 %v1653, 96
  %v2098 = vpop.permute.xlu0 %2097
  %2099 = vrot.lane.b32.xlu0 %v1669, 96
  %v2100 = vpop.permute.xlu0 %2099
  %2101 = vrot.lane.b32.xlu0 %v1670, 96
  %v2102 = vpop.permute.xlu0 %2101
  %2103 = vrot.lane.b32.xlu0 %v1671, 96
  %v2104 = vpop.permute.xlu0 %2103
  %2105 = vrot.lane.b32.xlu0 %v1668, 96
  %v2106 = vpop.permute.xlu0 %2105
  %2107 = vrot.lane.b32.xlu0 %v1684, 96
  %v2108 = vpop.permute.xlu0 %2107
  %2109 = vrot.lane.b32.xlu0 %v1685, 96
  %v2110 = vpop.permute.xlu0 %2109
  %2111 = vrot.lane.b32.xlu0 %v1686, 96
  %v2112 = vpop.permute.xlu0 %2111
  %2113 = vrot.lane.b32.xlu0 %v1683, 96
  %v2114 = vpop.permute.xlu0 %2113
  %vm2115 = vcmask 785408
  %v2116 = vsel %vm2115, %v2052, %v2054
  %v2117 = vsel %vm2115, %v2054, %v2056
  %v2118 = vsel %vm2115, %v2056, %v2058
  %v2119 = vsel %vm2115, %v2060, %v2062
  %v2120 = vsel %vm2115, %v2062, %v2064
  %v2121 = vsel %vm2115, %v2064, %v2066
  %v2122 = vsel %vm2115, %v2068, %v2070
  %v2123 = vsel %vm2115, %v2070, %v2072
  %v2124 = vsel %vm2115, %v2072, %v2074
  %v2125 = vsel %vm2115, %v2076, %v2078
  %v2126 = vsel %vm2115, %v2078, %v2080
  %v2127 = vsel %vm2115, %v2080, %v2082
  %v2128 = vsel %vm2115, %v2084, %v2086
  %v2129 = vsel %vm2115, %v2086, %v2088
  %v2130 = vsel %vm2115, %v2088, %v2090
  %v2131 = vsel %vm2115, %v2092, %v2094
  %v2132 = vsel %vm2115, %v2094, %v2096
  %v2133 = vsel %vm2115, %v2096, %v2098
  %v2134 = vsel %vm2115, %v2100, %v2102
  %v2135 = vsel %vm2115, %v2102, %v2104
  %v2136 = vsel %vm2115, %v2104, %v2106
  %v2137 = vsel %vm2115, %v2108, %v2110
  %v2138 = vsel %vm2115, %v2110, %v2112
  %v2139 = vsel %vm2115, %v2112, %v2114
  %v2172 = vld [vmem:[%s9] sm:$0xff]
  %v2173 = vld [vmem:[%s9 + $0x8] sm:$0xff]
  %v2174 = vld [vmem:[%s9 + $0x10] sm:$0xf]
  %v2175 = vld [vmem:[%s9 + $0x14] sm:$0xff]
  %v2176 = vld [vmem:[%s9 + $0x1c] sm:$0xff]
  %v2177 = vld [vmem:[%s9 + $0x24] sm:$0xf]
  %v2178 = vld [vmem:[%s10] sm:$0xff]
  %v2179 = vld [vmem:[%s10 + $0x8] sm:$0xff]
  %2181 = vset.pattern.permute.xlu0 0
  %2182 = vperm.xlu0 %2181, %v2178
  %v2183 = vpop.permute.xlu0 %2182
  %2186 = vset.pattern.permute.xlu0 0
  %2187 = vperm.xlu0 %2186, %v2179
  %v2188 = vpop.permute.xlu0 %2187
  %v2196 = vunpack.c.l.b16 %v2172
  %v2197 = vunpack.c.h.b16 %v2172
  %v2198 = vunpack.c.l.b16 %v2173
  %v2199 = vunpack.c.h.b16 %v2173
  %v2200 = vunpack.c.l.b16 %v2174
  %v2201 = vunpack.c.l.b16 %v2175
  %v2202 = vunpack.c.h.b16 %v2175
  %v2203 = vunpack.c.l.b16 %v2176
  %v2204 = vunpack.c.h.b16 %v2176
  %v2205 = vunpack.c.l.b16 %v2177
  %v2206 = vpack.c.b16 %v2201, %v2196
  %v2207 = vpack.c.b16 %v2202, %v2197
  %v2208 = vpack.c.b16 %v2203, %v2198
  %v2209 = vpack.c.b16 %v2204, %v2199
  %v2210 = vpack.c.b16 %v2205, %v2200
  %2216 = vmatprep.subr.bf16.mxu0 %v1571
  %2217 = vmatpush1.bf16.msra.mxu0 %v1578
  %2218 = vmatprep.subr.bf16.mxu0 %v1595
  %2219 = vmatpush1.bf16.msra.mxu0 %v1594
  %2220 = vmatprep.subr.bf16.mxu0 %v1610
  %2221 = vmatpush1.bf16.msra.mxu0 %v1609
  %2222 = vmatprep.subr.bf16.mxu0 %v1625
  %2223 = vmatpush1.bf16.msra.mxu0 %v1624
  %2224 = vmatprep.subr.bf16.mxu0 %v1640
  %2225 = vmatpush1.bf16.msra.mxu0 %v1639
  %2226 = vmatprep.subr.bf16.mxu0 %v1655
  %2227 = vmatpush1.bf16.msra.mxu0 %v1654
  %2228 = vmatprep.subr.bf16.mxu0 %v1670
  %2229 = vmatpush1.bf16.msra.mxu0 %v1669
  %2230 = vmatprep.subr.bf16.mxu0 %v1685
  %2231 = vmatpush1.bf16.msra.mxu0 %v1684
  %2232 = vmatprep.subr.bf16.mxu0 %v1700
  %2233 = vmatpush1.bf16.msra.mxu0 %v1699
  %2234 = vmatprep.subr.bf16.mxu0 %v1715
  %2235 = vmatpush1.bf16.msra.mxu0 %v1714
  %2236 = vmatprep.subr.bf16.mxu0 %v1730
  %2237 = vmatpush1.bf16.msra.mxu0 %v1729
  %2238 = vmatprep.subr.bf16.mxu0 %v1745
  %2239 = vmatpush1.bf16.msra.mxu0 %v1744
  %2240 = vmatprep.subr.bf16.mxu0 %v1760
  %2241 = vmatpush1.bf16.msra.mxu0 %v1759
  %2242 = vmatprep.subr.bf16.mxu0 %v1775
  %2243 = vmatpush1.bf16.msra.mxu0 %v1774
  %2244 = vmatprep.subr.bf16.mxu0 %v1790
  %2245 = vmatpush1.bf16.msra.mxu0 %v1789
  %2246 = vmatprep.subr.bf16.mxu0 %v1805
  %2247 = vmatpush1.bf16.msra.mxu0 %v1804
  %2248 = vmatprep.mubr.bf16.mxu0 %v2207
  %2249 = vmatmul.mubr.bf16.gmra.mrb[0].mxu0 %v2206
  %v2250 = vpop.f32.mrb[0].mxu0
  %v2251 = vadd.f32 %v2183, %v2250
  %v2252 = vpop.f32.mrb[0].mxu0
  %v2253 = vadd.f32 %v2183, %v2252
  %v2254 = vpop.f32.mrb[0].mxu0
  %v2255 = vadd.f32 %v2188, %v2254
  %v2256 = vpop.f32.mrb[0].mxu0
  %v2257 = vadd.f32 %v2188, %v2256
  %2258 = vdwg.mxu0
  %2259 = vmatprep.subr.bf16.mxu0 %v1940
  %2260 = vmatpush1.bf16.msra.mxu0 %v1939
  %2261 = vmatprep.subr.bf16.mxu0 %v1943
  %2262 = vmatpush1.bf16.msra.mxu0 %v1942
  %2263 = vmatprep.subr.bf16.mxu0 %v1946
  %2264 = vmatpush1.bf16.msra.mxu0 %v1945
  %2265 = vmatprep.subr.bf16.mxu0 %v1949
  %2266 = vmatpush1.bf16.msra.mxu0 %v1948
  %2267 = vmatprep.subr.bf16.mxu0 %v1952
  %2268 = vmatpush1.bf16.msra.mxu0 %v1951
  %2269 = vmatprep.subr.bf16.mxu0 %v1955
  %2270 = vmatpush1.bf16.msra.mxu0 %v1954
  %2271 = vmatprep.subr.bf16.mxu0 %v1958
  %2272 = vmatpush1.bf16.msra.mxu0 %v1957
  %2273 = vmatprep.subr.bf16.mxu0 %v1961
  %2274 = vmatpush1.bf16.msra.mxu0 %v1960
  %2275 = vmatprep.subr.bf16.mxu0 %v1964
  %2276 = vmatpush1.bf16.msra.mxu0 %v1963
  %2277 = vmatprep.subr.bf16.mxu0 %v1967
  %2278 = vmatpush1.bf16.msra.mxu0 %v1966
  %2279 = vmatprep.subr.bf16.mxu0 %v1970
  %2280 = vmatpush1.bf16.msra.mxu0 %v1969
  %2281 = vmatprep.subr.bf16.mxu0 %v1973
  %2282 = vmatpush1.bf16.msra.mxu0 %v1972
  %2283 = vmatprep.subr.bf16.mxu0 %v1976
  %2284 = vmatpush1.bf16.msra.mxu0 %v1975
  %2285 = vmatprep.subr.bf16.mxu0 %v1979
  %2286 = vmatpush1.bf16.msra.mxu0 %v1978
  %2287 = vmatprep.subr.bf16.mxu0 %v1982
  %2288 = vmatpush1.bf16.msra.mxu0 %v1981
  %2289 = vmatprep.subr.bf16.mxu0 %v1985
  %2290 = vmatpush1.bf16.msra.mxu0 %v1984
  %2291 = vmatprep.mubr.bf16.mxu0 %v2209
  %2292 = vmatmul.mubr.bf16.gmra.mrb[0].mxu0 %v2208
  %v2293 = vpop.f32.mrb[0].mxu0
  %v2294 = vadd.f32 %v2251, %v2293
  %v2295 = vpop.f32.mrb[0].mxu0
  %v2296 = vadd.f32 %v2253, %v2295
  %v2297 = vpop.f32.mrb[0].mxu0
  %v2298 = vadd.f32 %v2255, %v2297
  %v2299 = vpop.f32.mrb[0].mxu0
  %v2300 = vadd.f32 %v2257, %v2299
  %2301 = vdwg.mxu0
  %2302 = vmatprep.subr.bf16.mxu0 %v2117
  %2303 = vmatpush1.bf16.msra.mxu0 %v2116
  %2304 = vmatprep.subr.bf16.mxu0 %v2120
  %2305 = vmatpush1.bf16.msra.mxu0 %v2119
  %2306 = vmatprep.subr.bf16.mxu0 %v2123
  %2307 = vmatpush1.bf16.msra.mxu0 %v2122
  %2308 = vmatprep.subr.bf16.mxu0 %v2126
  %2309 = vmatpush1.bf16.msra.mxu0 %v2125
  %2310 = vmatprep.subr.bf16.mxu0 %v2129
  %2311 = vmatpush1.bf16.msra.mxu0 %v2128
  %2312 = vmatprep.subr.bf16.mxu0 %v2132
  %2313 = vmatpush1.bf16.msra.mxu0 %v2131
  %2314 = vmatprep.subr.bf16.mxu0 %v2135
  %2315 = vmatpush1.bf16.msra.mxu0 %v2134
  %2316 = vmatprep.subr.bf16.mxu0 %v2138
  %2317 = vmatpush1.bf16.msra.mxu0 %v2137
  %2318 = vmatprep.subr.bf16.mxu0 0
  %2319 = vmatpush1.bf16.msra.mxu0 0
  %2320 = vmatprep.subr.bf16.mxu0 0
  %2321 = vmatpush1.bf16.msra.mxu0 0
  %2322 = vmatprep.subr.bf16.mxu0 0
  %2323 = vmatpush1.bf16.msra.mxu0 0
  %2324 = vmatprep.subr.bf16.mxu0 0
  %2325 = vmatpush1.bf16.msra.mxu0 0
  %2326 = vmatprep.subr.bf16.mxu0 0
  %2327 = vmatpush1.bf16.msra.mxu0 0
  %2328 = vmatprep.subr.bf16.mxu0 0
  %2329 = vmatpush1.bf16.msra.mxu0 0
  %2330 = vmatprep.subr.bf16.mxu0 0
  %2331 = vmatpush1.bf16.msra.mxu0 0
  %2332 = vmatprep.subr.bf16.mxu0 0
  %2333 = vmatpush1.bf16.msra.mxu0 0
  %2334 = vmatprep.mubr.bf16.mxu0 0
  %2335 = vmatmul.mubr.bf16.gmra.mrb[0].mxu0 %v2210
  %v2336 = vpop.f32.mrb[0].mxu0
  %v2337 = vadd.f32 %v2294, %v2336
  %v2338 = vpop.f32.mrb[0].mxu0
  %v2339 = vadd.f32 %v2296, %v2338
  %v2340 = vpop.f32.mrb[0].mxu0
  %v2341 = vadd.f32 %v2298, %v2340
  %v2342 = vpop.f32.mrb[0].mxu0
  %v2343 = vadd.f32 %v2300, %v2342
  %2344 = vdwg.mxu0
  %2345 = vmatprep.subr.bf16.mxu0 %v1582
  %2346 = vmatpush1.bf16.msra.mxu0 %v1572
  %2347 = vmatprep.subr.bf16.mxu0 %v1593
  %2348 = vmatpush1.bf16.msra.mxu0 %v1596
  %2349 = vmatprep.subr.bf16.mxu0 %v1608
  %2350 = vmatpush1.bf16.msra.mxu0 %v1611
  %2351 = vmatprep.subr.bf16.mxu0 %v1623
  %2352 = vmatpush1.bf16.msra.mxu0 %v1626
  %2353 = vmatprep.subr.bf16.mxu0 %v1638
  %2354 = vmatpush1.bf16.msra.mxu0 %v1641
  %2355 = vmatprep.subr.bf16.mxu0 %v1653
  %2356 = vmatpush1.bf16.msra.mxu0 %v1656
  %2357 = vmatprep.subr.bf16.mxu0 %v1668
  %2358 = vmatpush1.bf16.msra.mxu0 %v1671
  %2359 = vmatprep.subr.bf16.mxu0 %v1683
  %2360 = vmatpush1.bf16.msra.mxu0 %v1686
  %2361 = vmatprep.subr.bf16.mxu0 %v1698
  %2362 = vmatpush1.bf16.msra.mxu0 %v1701
  %2363 = vmatprep.subr.bf16.mxu0 %v1713
  %2364 = vmatpush1.bf16.msra.mxu0 %v1716
  %2365 = vmatprep.subr.bf16.mxu0 %v1728
  %2366 = vmatpush1.bf16.msra.mxu0 %v1731
  %2367 = vmatprep.subr.bf16.mxu0 %v1743
  %2368 = vmatpush1.bf16.msra.mxu0 %v1746
  %2369 = vmatprep.subr.bf16.mxu0 %v1758
  %2370 = vmatpush1.bf16.msra.mxu0 %v1761
  %2371 = vmatprep.subr.bf16.mxu0 %v1773
  %2372 = vmatpush1.bf16.msra.mxu0 %v1776
  %2373 = vmatprep.subr.bf16.mxu0 %v1788
  %2374 = vmatpush1.bf16.msra.mxu0 %v1791
  %2375 = vmatprep.subr.bf16.mxu0 %v1803
  %2376 = vmatpush1.bf16.msra.mxu0 %v1806
  %2377 = vmatprep.mubr.bf16.mxu0 %v2207
  %2378 = vmatmul.mubr.bf16.gmra.mrb[0].mxu0 %v2206
  %v2379 = vpop.f32.mrb[0].mxu0
  %v2380 = vadd.f32 %v2183, %v2379
  %v2381 = vpop.f32.mrb[0].mxu0
  %v2382 = vadd.f32 %v2183, %v2381
  %v2383 = vpop.f32.mrb[0].mxu0
  %v2384 = vadd.f32 %v2188, %v2383
  %v2385 = vpop.f32.mrb[0].mxu0
  %v2386 = vadd.f32 %v2188, %v2385
  %2387 = vdwg.mxu0
  %2388 = vmatprep.subr.bf16.mxu0 %v1818
  %2389 = vmatpush1.bf16.msra.mxu0 %v1941
  %2390 = vmatprep.subr.bf16.mxu0 %v1826
  %2391 = vmatpush1.bf16.msra.mxu0 %v1944
  %2392 = vmatprep.subr.bf16.mxu0 %v1834
  %2393 = vmatpush1.bf16.msra.mxu0 %v1947
  %2394 = vmatprep.subr.bf16.mxu0 %v1842
  %2395 = vmatpush1.bf16.msra.mxu0 %v1950
  %2396 = vmatprep.subr.bf16.mxu0 %v1850
  %2397 = vmatpush1.bf16.msra.mxu0 %v1953
  %2398 = vmatprep.subr.bf16.mxu0 %v1858
  %2399 = vmatpush1.bf16.msra.mxu0 %v1956
  %2400 = vmatprep.subr.bf16.mxu0 %v1866
  %2401 = vmatpush1.bf16.msra.mxu0 %v1959
  %2402 = vmatprep.subr.bf16.mxu0 %v1874
  %2403 = vmatpush1.bf16.msra.mxu0 %v1962
  %2404 = vmatprep.subr.bf16.mxu0 %v1882
  %2405 = vmatpush1.bf16.msra.mxu0 %v1965
  %2406 = vmatprep.subr.bf16.mxu0 %v1890
  %2407 = vmatpush1.bf16.msra.mxu0 %v1968
  %2408 = vmatprep.subr.bf16.mxu0 %v1898
  %2409 = vmatpush1.bf16.msra.mxu0 %v1971
  %2410 = vmatprep.subr.bf16.mxu0 %v1906
  %2411 = vmatpush1.bf16.msra.mxu0 %v1974
  %2412 = vmatprep.subr.bf16.mxu0 %v1914
  %2413 = vmatpush1.bf16.msra.mxu0 %v1977
  %2414 = vmatprep.subr.bf16.mxu0 %v1922
  %2415 = vmatpush1.bf16.msra.mxu0 %v1980
  %2416 = vmatprep.subr.bf16.mxu0 %v1930
  %2417 = vmatpush1.bf16.msra.mxu0 %v1983
  %2418 = vmatprep.subr.bf16.mxu0 %v1938
  %2419 = vmatpush1.bf16.msra.mxu0 %v1986
  %2420 = vmatprep.mubr.bf16.mxu0 %v2209
  %2421 = vmatmul.mubr.bf16.gmra.mrb[0].mxu0 %v2208
  %v2422 = vpop.f32.mrb[0].mxu0
  %v2423 = vadd.f32 %v2380, %v2422
  %v2424 = vpop.f32.mrb[0].mxu0
  %v2425 = vadd.f32 %v2382, %v2424
  %v2426 = vpop.f32.mrb[0].mxu0
  %v2427 = vadd.f32 %v2384, %v2426
  %v2428 = vpop.f32.mrb[0].mxu0
  %v2429 = vadd.f32 %v2386, %v2428
  %2430 = vdwg.mxu0
  %2431 = vmatprep.subr.bf16.mxu0 %v2058
  %2432 = vmatpush1.bf16.msra.mxu0 %v2118
  %2433 = vmatprep.subr.bf16.mxu0 %v2066
  %2434 = vmatpush1.bf16.msra.mxu0 %v2121
  %2435 = vmatprep.subr.bf16.mxu0 %v2074
  %2436 = vmatpush1.bf16.msra.mxu0 %v2124
  %2437 = vmatprep.subr.bf16.mxu0 %v2082
  %2438 = vmatpush1.bf16.msra.mxu0 %v2127
  %2439 = vmatprep.subr.bf16.mxu0 %v2090
  %2440 = vmatpush1.bf16.msra.mxu0 %v2130
  %2441 = vmatprep.subr.bf16.mxu0 %v2098
  %2442 = vmatpush1.bf16.msra.mxu0 %v2133
  %2443 = vmatprep.subr.bf16.mxu0 %v2106
  %2444 = vmatpush1.bf16.msra.mxu0 %v2136
  %2445 = vmatprep.subr.bf16.mxu0 %v2114
  %2446 = vmatpush1.bf16.msra.mxu0 %v2139
  %2447 = vmatprep.subr.bf16.mxu0 0
  %2448 = vmatpush1.bf16.msra.mxu0 0
  %2449 = vmatprep.subr.bf16.mxu0 0
  %2450 = vmatpush1.bf16.msra.mxu0 0
  %2451 = vmatprep.subr.bf16.mxu0 0
  %2452 = vmatpush1.bf16.msra.mxu0 0
  %2453 = vmatprep.subr.bf16.mxu0 0
  %2454 = vmatpush1.bf16.msra.mxu0 0
  %2455 = vmatprep.subr.bf16.mxu0 0
  %2456 = vmatpush1.bf16.msra.mxu0 0
  %2457 = vmatprep.subr.bf16.mxu0 0
  %2458 = vmatpush1.bf16.msra.mxu0 0
  %2459 = vmatprep.subr.bf16.mxu0 0
  %2460 = vmatpush1.bf16.msra.mxu0 0
  %2461 = vmatprep.subr.bf16.mxu0 0
  %2462 = vmatpush1.bf16.msra.mxu0 0
  %2463 = vmatprep.mubr.bf16.mxu0 0
  %2464 = vmatmul.mubr.bf16.gmra.mrb[0].mxu0 %v2210
  %v2465 = vpop.f32.mrb[0].mxu0
  %v2466 = vadd.f32 %v2423, %v2465
  %v2467 = vpop.f32.mrb[0].mxu0
  %v2468 = vadd.f32 %v2425, %v2467
  %v2469 = vpop.f32.mrb[0].mxu0
  %v2470 = vadd.f32 %v2427, %v2469
  %v2471 = vpop.f32.mrb[0].mxu0
  %v2472 = vadd.f32 %v2429, %v2471
  %2473 = vdwg.mxu0
  %v2474 = vpack.c.bf16 %v2341, %v2337
  %v2475 = vpack.c.bf16 %v2343, %v2339
  %v2476 = vpack.c.bf16 %v2470, %v2466
  %v2477 = vpack.c.bf16 %v2472, %v2468
  %v2478 = vld [vmem:[%s11] sm:$0xff]
  %v2479 = vld [vmem:[%s11 + $0x8] sm:$0xff]
  %v2480 = vld [vmem:[%s11 + $0x10] sm:$0xf]
  %v2481 = vld [vmem:[%s11 + $0x14] sm:$0xff]
  %v2482 = vld [vmem:[%s11 + $0x1c] sm:$0xff]
  %v2483 = vld [vmem:[%s11 + $0x24] sm:$0xf]
  %v2484 = vld [vmem:[%s11 + $0x28] sm:$0xff]
  %v2485 = vld [vmem:[%s11 + $0x30] sm:$0xff]
  %v2486 = vld [vmem:[%s11 + $0x38] sm:$0xf]
  %v2487 = vld [vmem:[%s11 + $0x3c] sm:$0xff]
  %v2488 = vld [vmem:[%s11 + $0x44] sm:$0xff]
  %v2489 = vld [vmem:[%s11 + $0x4c] sm:$0xf]
  %v2490 = vld [vmem:[%s11 + $0x50] sm:$0xff]
  %v2491 = vld [vmem:[%s11 + $0x58] sm:$0xff]
  %v2492 = vld [vmem:[%s11 + $0x60] sm:$0xf]
  %v2493 = vld [vmem:[%s11 + $0x64] sm:$0xff]
  %v2494 = vld [vmem:[%s11 + $0x6c] sm:$0xff]
  %v2495 = vld [vmem:[%s11 + $0x74] sm:$0xf]
  %v2496 = vld [vmem:[%s11 + $0x78] sm:$0xff]
  %v2497 = vld [vmem:[%s11 + $0x80] sm:$0xff]
  %v2498 = vld [vmem:[%s11 + $0x88] sm:$0xf]
  %v2499 = vld [vmem:[%s11 + $0x8c] sm:$0xff]
  %v2500 = vld [vmem:[%s11 + $0x94] sm:$0xff]
  %v2501 = vld [vmem:[%s11 + $0x9c] sm:$0xf]
  %v2502 = vld [vmem:[%s11 + $0xa0] sm:$0xff]
  %v2503 = vld [vmem:[%s11 + $0xa8] sm:$0xff]
  %v2504 = vld [vmem:[%s11 + $0xb0] sm:$0xf]
  %v2505 = vld [vmem:[%s11 + $0xb4] sm:$0xff]
  %v2506 = vld [vmem:[%s11 + $0xbc] sm:$0xff]
  %v2507 = vld [vmem:[%s11 + $0xc4] sm:$0xf]
  %v2508 = vld [vmem:[%s11 + $0xc8] sm:$0xff]
  %v2509 = vld [vmem:[%s11 + $0xd0] sm:$0xff]
  %v2510 = vld [vmem:[%s11 + $0xd8] sm:$0xf]
  %v2511 = vld [vmem:[%s11 + $0xdc] sm:$0xff]
  %v2512 = vld [vmem:[%s11 + $0xe4] sm:$0xff]
  %v2513 = vld [vmem:[%s11 + $0xec] sm:$0xf]
  %v2514 = vld [vmem:[%s11 + $0xf0] sm:$0xff]
  %v2515 = vld [vmem:[%s11 + $0xf8] sm:$0xff]
  %v2516 = vld [vmem:[%s11 + $0x100] sm:$0xf]
  %v2517 = vld [vmem:[%s11 + $0x104] sm:$0xff]
  %v2518 = vld [vmem:[%s11 + $0x10c] sm:$0xff]
  %v2519 = vld [vmem:[%s11 + $0x114] sm:$0xf]
  %v2520 = vld [vmem:[%s11 + $0x118] sm:$0xff]
  %v2521 = vld [vmem:[%s11 + $0x120] sm:$0xff]
  %v2522 = vld [vmem:[%s11 + $0x128] sm:$0xf]
  %v2523 = vld [vmem:[%s11 + $0x12c] sm:$0xff]
  %v2524 = vld [vmem:[%s11 + $0x134] sm:$0xff]
  %v2525 = vld [vmem:[%s11 + $0x13c] sm:$0xf]
  %v2526 = vld [vmem:[%s11 + $0x140] sm:$0xff]
  %v2527 = vld [vmem:[%s11 + $0x148] sm:$0xff]
  %v2528 = vld [vmem:[%s11 + $0x150] sm:$0xf]
  %v2529 = vld [vmem:[%s11 + $0x154] sm:$0xff]
  %v2530 = vld [vmem:[%s11 + $0x15c] sm:$0xff]
  %v2531 = vld [vmem:[%s11 + $0x164] sm:$0xf]
  %v2532 = vld [vmem:[%s11 + $0x168] sm:$0xff]
  %v2533 = vld [vmem:[%s11 + $0x170] sm:$0xff]
  %v2534 = vld [vmem:[%s11 + $0x178] sm:$0xf]
  %v2535 = vld [vmem:[%s11 + $0x17c] sm:$0xff]
  %v2536 = vld [vmem:[%s11 + $0x184] sm:$0xff]
  %v2537 = vld [vmem:[%s11 + $0x18c] sm:$0xf]
  %v2538 = vld [vmem:[%s11 + $0x190] sm:$0xff]
  %v2539 = vld [vmem:[%s11 + $0x198] sm:$0xff]
  %v2540 = vld [vmem:[%s11 + $0x1a0] sm:$0xf]
  %v2541 = vld [vmem:[%s11 + $0x1a4] sm:$0xff]
  %v2542 = vld [vmem:[%s11 + $0x1ac] sm:$0xff]
  %v2543 = vld [vmem:[%s11 + $0x1b4] sm:$0xf]
  %v2544 = vld [vmem:[%s11 + $0x1b8] sm:$0xff]
  %v2545 = vld [vmem:[%s11 + $0x1c0] sm:$0xff]
  %v2546 = vld [vmem:[%s11 + $0x1c8] sm:$0xf]
  %v2547 = vld [vmem:[%s11 + $0x1cc] sm:$0xff]
  %v2548 = vld [vmem:[%s11 + $0x1d4] sm:$0xff]
  %v2549 = vld [vmem:[%s11 + $0x1dc] sm:$0xf]
  %v2550 = vld [vmem:[%s11 + $0x1e0] sm:$0xff]
  %v2551 = vld [vmem:[%s11 + $0x1e8] sm:$0xff]
  %v2552 = vld [vmem:[%s11 + $0x1f0] sm:$0xf]
  %v2553 = vld [vmem:[%s11 + $0x1f4] sm:$0xff]
  %v2554 = vld [vmem:[%s11 + $0x1fc] sm:$0xff]
  %v2555 = vld [vmem:[%s11 + $0x204] sm:$0xf]
  %v2556 = vld [vmem:[%s11 + $0x208] sm:$0xff]
  %v2557 = vld [vmem:[%s11 + $0x210] sm:$0xff]
  %v2558 = vld [vmem:[%s11 + $0x218] sm:$0xf]
  %v2559 = vld [vmem:[%s11 + $0x21c] sm:$0xff]
  %v2560 = vld [vmem:[%s11 + $0x224] sm:$0xff]
  %v2561 = vld [vmem:[%s11 + $0x22c] sm:$0xf]
  %v2562 = vld [vmem:[%s11 + $0x230] sm:$0xff]
  %v2563 = vld [vmem:[%s11 + $0x238] sm:$0xff]
  %v2564 = vld [vmem:[%s11 + $0x240] sm:$0xf]
  %v2565 = vld [vmem:[%s11 + $0x244] sm:$0xff]
  %v2566 = vld [vmem:[%s11 + $0x24c] sm:$0xff]
  %v2567 = vld [vmem:[%s11 + $0x254] sm:$0xf]
  %v2568 = vld [vmem:[%s11 + $0x258] sm:$0xff]
  %v2569 = vld [vmem:[%s11 + $0x260] sm:$0xff]
  %v2570 = vld [vmem:[%s11 + $0x268] sm:$0xf]
  %v2571 = vld [vmem:[%s11 + $0x26c] sm:$0xff]
  %v2572 = vld [vmem:[%s11 + $0x274] sm:$0xff]
  %v2573 = vld [vmem:[%s11 + $0x27c] sm:$0xf]
  %v2574 = vld [vmem:[%s11 + $0x280] sm:$0xff]
  %v2575 = vld [vmem:[%s11 + $0x288] sm:$0xff]
  %v2576 = vld [vmem:[%s11 + $0x290] sm:$0xf]
  %v2577 = vld [vmem:[%s11 + $0x294] sm:$0xff]
  %v2578 = vld [vmem:[%s11 + $0x29c] sm:$0xff]
  %v2579 = vld [vmem:[%s11 + $0x2a4] sm:$0xf]
  %v2580 = vld [vmem:[%s11 + $0x2a8] sm:$0xff]
  %v2581 = vld [vmem:[%s11 + $0x2b0] sm:$0xff]
  %v2582 = vld [vmem:[%s11 + $0x2b8] sm:$0xf]
  %v2583 = vld [vmem:[%s11 + $0x2bc] sm:$0xff]
  %v2584 = vld [vmem:[%s11 + $0x2c4] sm:$0xff]
  %v2585 = vld [vmem:[%s11 + $0x2cc] sm:$0xf]
  %v2586 = vld [vmem:[%s11 + $0x2d0] sm:$0xff]
  %v2587 = vld [vmem:[%s11 + $0x2d8] sm:$0xff]
  %v2588 = vld [vmem:[%s11 + $0x2e0] sm:$0xf]
  %v2589 = vld [vmem:[%s11 + $0x2e4] sm:$0xff]
  %v2590 = vld [vmem:[%s11 + $0x2ec] sm:$0xff]
  %v2591 = vld [vmem:[%s11 + $0x2f4] sm:$0xf]
  %v2592 = vld [vmem:[%s11 + $0x2f8] sm:$0xff]
  %v2593 = vld [vmem:[%s11 + $0x300] sm:$0xff]
  %v2594 = vld [vmem:[%s11 + $0x308] sm:$0xf]
  %v2595 = vld [vmem:[%s11 + $0x30c] sm:$0xff]
  %v2596 = vld [vmem:[%s11 + $0x314] sm:$0xff]
  %v2597 = vld [vmem:[%s11 + $0x31c] sm:$0xf]
  %v2598 = vld [vmem:[%s11 + $0x320] sm:$0xff]
  %v2599 = vld [vmem:[%s11 + $0x328] sm:$0xff]
  %v2600 = vld [vmem:[%s11 + $0x330] sm:$0xf]
  %v2601 = vld [vmem:[%s11 + $0x334] sm:$0xff]
  %v2602 = vld [vmem:[%s11 + $0x33c] sm:$0xff]
  %v2603 = vld [vmem:[%s11 + $0x344] sm:$0xf]
  %v2604 = vld [vmem:[%s11 + $0x348] sm:$0xff]
  %v2605 = vld [vmem:[%s11 + $0x350] sm:$0xff]
  %v2606 = vld [vmem:[%s11 + $0x358] sm:$0xf]
  %v2607 = vld [vmem:[%s11 + $0x35c] sm:$0xff]
  %v2608 = vld [vmem:[%s11 + $0x364] sm:$0xff]
  %v2609 = vld [vmem:[%s11 + $0x36c] sm:$0xf]
  %v2610 = vld [vmem:[%s11 + $0x370] sm:$0xff]
  %v2611 = vld [vmem:[%s11 + $0x378] sm:$0xff]
  %v2612 = vld [vmem:[%s11 + $0x380] sm:$0xf]
  %v2613 = vld [vmem:[%s11 + $0x384] sm:$0xff]
  %v2614 = vld [vmem:[%s11 + $0x38c] sm:$0xff]
  %v2615 = vld [vmem:[%s11 + $0x394] sm:$0xf]
  %v2616 = vld [vmem:[%s11 + $0x398] sm:$0xff]
  %v2617 = vld [vmem:[%s11 + $0x3a0] sm:$0xff]
  %v2618 = vld [vmem:[%s11 + $0x3a8] sm:$0xf]
  %v2619 = vld [vmem:[%s11 + $0x3ac] sm:$0xff]
  %v2620 = vld [vmem:[%s11 + $0x3b4] sm:$0xff]
  %v2621 = vld [vmem:[%s11 + $0x3bc] sm:$0xf]
  %v2622 = vld [vmem:[%s11 + $0x3c0] sm:$0xff]
  %v2623 = vld [vmem:[%s11 + $0x3c8] sm:$0xff]
  %v2624 = vld [vmem:[%s11 + $0x3d0] sm:$0xf]
  %v2625 = vld [vmem:[%s11 + $0x3d4] sm:$0xff]
  %v2626 = vld [vmem:[%s11 + $0x3dc] sm:$0xff]
  %v2627 = vld [vmem:[%s11 + $0x3e4] sm:$0xf]
  %v2628 = vld [vmem:[%s11 + $0x3e8] sm:$0xff]
  %v2629 = vld [vmem:[%s11 + $0x3f0] sm:$0xff]
  %v2630 = vld [vmem:[%s11 + $0x3f8] sm:$0xf]
  %v2631 = vld [vmem:[%s11 + $0x3fc] sm:$0xff]
  %v2632 = vld [vmem:[%s11 + $0x404] sm:$0xff]
  %v2633 = vld [vmem:[%s11 + $0x40c] sm:$0xf]
  %v2634 = vld [vmem:[%s11 + $0x410] sm:$0xff]
  %v2635 = vld [vmem:[%s11 + $0x418] sm:$0xff]
  %v2636 = vld [vmem:[%s11 + $0x420] sm:$0xf]
  %v2637 = vld [vmem:[%s11 + $0x424] sm:$0x11]
  %v2638 = vld [vmem:[%s11 + $0x42c] sm:$0x11]
  %v2639 = vld [vmem:[%s11 + $0x434] sm:$0x1]
  %v2640 = vld [vmem:[%s12] sm:$0x1f]
  %v2642 = vlaneseq
  %v2643 = vshrl.u32 %v2642, 7
  %v2644 = vsub.s32 0, %v2643
  %v2645 = vrot.slane %v2640, %v2644
  %v2646 = vlaneseq
  %v2647 = vshrl.u32 %v2646, 7
  %v2648 = vsub.s32 1, %v2647
  %v2649 = vrot.slane %v2640, %v2648
  %v2650 = vlaneseq
  %v2651 = vshrl.u32 %v2650, 7
  %v2652 = vsub.s32 2, %v2651
  %v2653 = vrot.slane %v2640, %v2652
  %v2654 = vlaneseq
  %v2655 = vshrl.u32 %v2654, 7
  %v2656 = vsub.s32 3, %v2655
  %v2657 = vrot.slane %v2640, %v2656
  %v2658 = vlaneseq
  %v2659 = vshrl.u32 %v2658, 7
  %v2660 = vsub.s32 4, %v2659
  %v2661 = vrot.slane %v2640, %v2660
  %v2829 = vunpack.c.l.b16 %v2478
  %v2830 = vunpack.c.h.b16 %v2478
  %v2831 = vunpack.c.l.b16 %v2479
  %v2832 = vunpack.c.h.b16 %v2479
  %v2833 = vunpack.c.l.b16 %v2480
  %v2834 = vunpack.c.l.b16 %v2481
  %v2835 = vunpack.c.h.b16 %v2481
  %v2836 = vunpack.c.l.b16 %v2482
  %v2837 = vunpack.c.h.b16 %v2482
  %v2838 = vunpack.c.l.b16 %v2483
  %v2839 = vunpack.c.l.b16 %v2484
  %v2840 = vunpack.c.h.b16 %v2484
  %v2841 = vunpack.c.l.b16 %v2485
  %v2842 = vunpack.c.h.b16 %v2485
  %v2843 = vunpack.c.l.b16 %v2486
  %v2844 = vunpack.c.l.b16 %v2487
  %v2845 = vunpack.c.h.b16 %v2487
  %v2846 = vunpack.c.l.b16 %v2488
  %v2847 = vunpack.c.h.b16 %v2488
  %v2848 = vunpack.c.l.b16 %v2489
  %v2849 = vunpack.c.l.b16 %v2490
  %v2850 = vunpack.c.h.b16 %v2490
  %v2851 = vunpack.c.l.b16 %v2491
  %v2852 = vunpack.c.h.b16 %v2491
  %v2853 = vunpack.c.l.b16 %v2492
  %v2854 = vunpack.c.l.b16 %v2493
  %v2855 = vunpack.c.h.b16 %v2493
  %v2856 = vunpack.c.l.b16 %v2494
  %v2857 = vunpack.c.h.b16 %v2494
  %v2858 = vunpack.c.l.b16 %v2495
  %v2859 = vunpack.c.l.b16 %v2496
  %v2860 = vunpack.c.h.b16 %v2496
  %v2861 = vunpack.c.l.b16 %v2497
  %v2862 = vunpack.c.h.b16 %v2497
  %v2863 = vunpack.c.l.b16 %v2498
  %v2864 = vunpack.c.l.b16 %v2499
  %v2865 = vunpack.c.h.b16 %v2499
  %v2866 = vunpack.c.l.b16 %v2500
  %v2867 = vunpack.c.h.b16 %v2500
  %v2868 = vunpack.c.l.b16 %v2501
  %v2869 = vunpack.c.l.b16 %v2502
  %v2870 = vunpack.c.h.b16 %v2502
  %v2871 = vunpack.c.l.b16 %v2503
  %v2872 = vunpack.c.h.b16 %v2503
  %v2873 = vunpack.c.l.b16 %v2504
  %v2874 = vunpack.c.l.b16 %v2505
  %v2875 = vunpack.c.h.b16 %v2505
  %v2876 = vunpack.c.l.b16 %v2506
  %v2877 = vunpack.c.h.b16 %v2506
  %v2878 = vunpack.c.l.b16 %v2507
  %v2879 = vunpack.c.l.b16 %v2508
  %v2880 = vunpack.c.h.b16 %v2508
  %v2881 = vunpack.c.l.b16 %v2509
  %v2882 = vunpack.c.h.b16 %v2509
  %v2883 = vunpack.c.l.b16 %v2510
  %v2884 = vunpack.c.l.b16 %v2511
  %v2885 = vunpack.c.h.b16 %v2511
  %v2886 = vunpack.c.l.b16 %v2512
  %v2887 = vunpack.c.h.b16 %v2512
  %v2888 = vunpack.c.l.b16 %v2513
  %v2889 = vunpack.c.l.b16 %v2514
  %v2890 = vunpack.c.h.b16 %v2514
  %v2891 = vunpack.c.l.b16 %v2515
  %v2892 = vunpack.c.h.b16 %v2515
  %v2893 = vunpack.c.l.b16 %v2516
  %v2894 = vunpack.c.l.b16 %v2517
  %v2895 = vunpack.c.h.b16 %v2517
  %v2896 = vunpack.c.l.b16 %v2518
  %v2897 = vunpack.c.h.b16 %v2518
  %v2898 = vunpack.c.l.b16 %v2519
  %v2899 = vunpack.c.l.b16 %v2520
  %v2900 = vunpack.c.h.b16 %v2520
  %v2901 = vunpack.c.l.b16 %v2521
  %v2902 = vunpack.c.h.b16 %v2521
  %v2903 = vunpack.c.l.b16 %v2522
  %v2904 = vunpack.c.l.b16 %v2523
  %v2905 = vunpack.c.h.b16 %v2523
  %v2906 = vunpack.c.l.b16 %v2524
  %v2907 = vunpack.c.h.b16 %v2524
  %v2908 = vunpack.c.l.b16 %v2525
  %v2909 = vunpack.c.l.b16 %v2526
  %v2910 = vunpack.c.h.b16 %v2526
  %v2911 = vunpack.c.l.b16 %v2527
  %v2912 = vunpack.c.h.b16 %v2527
  %v2913 = vunpack.c.l.b16 %v2528
  %v2914 = vunpack.c.l.b16 %v2529
  %v2915 = vunpack.c.h.b16 %v2529
  %v2916 = vunpack.c.l.b16 %v2530
  %v2917 = vunpack.c.h.b16 %v2530
  %v2918 = vunpack.c.l.b16 %v2531
  %v2919 = vunpack.c.l.b16 %v2532
  %v2920 = vunpack.c.h.b16 %v2532
  %v2921 = vunpack.c.l.b16 %v2533
  %v2922 = vunpack.c.h.b16 %v2533
  %v2923 = vunpack.c.l.b16 %v2534
  %v2924 = vunpack.c.l.b16 %v2535
  %v2925 = vunpack.c.h.b16 %v2535
  %v2926 = vunpack.c.l.b16 %v2536
  %v2927 = vunpack.c.h.b16 %v2536
  %v2928 = vunpack.c.l.b16 %v2537
  %v2929 = vunpack.c.l.b16 %v2538
  %v2930 = vunpack.c.h.b16 %v2538
  %v2931 = vunpack.c.l.b16 %v2539
  %v2932 = vunpack.c.h.b16 %v2539
  %v2933 = vunpack.c.l.b16 %v2540
  %v2934 = vunpack.c.l.b16 %v2541
  %v2935 = vunpack.c.h.b16 %v2541
  %v2936 = vunpack.c.l.b16 %v2542
  %v2937 = vunpack.c.h.b16 %v2542
  %v2938 = vunpack.c.l.b16 %v2543
  %v2939 = vunpack.c.l.b16 %v2544
  %v2940 = vunpack.c.h.b16 %v2544
  %v2941 = vunpack.c.l.b16 %v2545
  %v2942 = vunpack.c.h.b16 %v2545
  %v2943 = vunpack.c.l.b16 %v2546
  %v2944 = vunpack.c.l.b16 %v2547
  %v2945 = vunpack.c.h.b16 %v2547
  %v2946 = vunpack.c.l.b16 %v2548
  %v2947 = vunpack.c.h.b16 %v2548
  %v2948 = vunpack.c.l.b16 %v2549
  %v2949 = vunpack.c.l.b16 %v2550
  %v2950 = vunpack.c.h.b16 %v2550
  %v2951 = vunpack.c.l.b16 %v2551
  %v2952 = vunpack.c.h.b16 %v2551
  %v2953 = vunpack.c.l.b16 %v2552
  %v2954 = vunpack.c.l.b16 %v2553
  %v2955 = vunpack.c.h.b16 %v2553
  %v2956 = vunpack.c.l.b16 %v2554
  %v2957 = vunpack.c.h.b16 %v2554
  %v2958 = vunpack.c.l.b16 %v2555
  %v2959 = vunpack.c.l.b16 %v2556
  %v2960 = vunpack.c.h.b16 %v2556
  %v2961 = vunpack.c.l.b16 %v2557
  %v2962 = vunpack.c.h.b16 %v2557
  %v2963 = vunpack.c.l.b16 %v2558
  %v2964 = vunpack.c.l.b16 %v2559
  %v2965 = vunpack.c.h.b16 %v2559
  %v2966 = vunpack.c.l.b16 %v2560
  %v2967 = vunpack.c.h.b16 %v2560
  %v2968 = vunpack.c.l.b16 %v2561
  %v2969 = vunpack.c.l.b16 %v2562
  %v2970 = vunpack.c.h.b16 %v2562
  %v2971 = vunpack.c.l.b16 %v2563
  %v2972 = vunpack.c.h.b16 %v2563
  %v2973 = vunpack.c.l.b16 %v2564
  %v2974 = vunpack.c.l.b16 %v2565
  %v2975 = vunpack.c.h.b16 %v2565
  %v2976 = vunpack.c.l.b16 %v2566
  %v2977 = vunpack.c.h.b16 %v2566
  %v2978 = vunpack.c.l.b16 %v2567
  %v2979 = vunpack.c.l.b16 %v2568
  %v2980 = vunpack.c.h.b16 %v2568
  %v2981 = vunpack.c.l.b16 %v2569
  %v2982 = vunpack.c.h.b16 %v2569
  %v2983 = vunpack.c.l.b16 %v2570
  %v2984 = vunpack.c.l.b16 %v2571
  %v2985 = vunpack.c.h.b16 %v2571
  %v2986 = vunpack.c.l.b16 %v2572
  %v2987 = vunpack.c.h.b16 %v2572
  %v2988 = vunpack.c.l.b16 %v2573
  %v2989 = vunpack.c.l.b16 %v2574
  %v2990 = vunpack.c.h.b16 %v2574
  %v2991 = vunpack.c.l.b16 %v2575
  %v2992 = vunpack.c.h.b16 %v2575
  %v2993 = vunpack.c.l.b16 %v2576
  %v2994 = vunpack.c.l.b16 %v2577
  %v2995 = vunpack.c.h.b16 %v2577
  %v2996 = vunpack.c.l.b16 %v2578
  %v2997 = vunpack.c.h.b16 %v2578
  %v2998 = vunpack.c.l.b16 %v2579
  %v2999 = vunpack.c.l.b16 %v2580
  %v3000 = vunpack.c.h.b16 %v2580
  %v3001 = vunpack.c.l.b16 %v2581
  %v3002 = vunpack.c.h.b16 %v2581
  %v3003 = vunpack.c.l.b16 %v2582
  %v3004 = vunpack.c.l.b16 %v2583
  %v3005 = vunpack.c.h.b16 %v2583
  %v3006 = vunpack.c.l.b16 %v2584
  %v3007 = vunpack.c.h.b16 %v2584
  %v3008 = vunpack.c.l.b16 %v2585
  %v3009 = vunpack.c.l.b16 %v2586
  %v3010 = vunpack.c.h.b16 %v2586
  %v3011 = vunpack.c.l.b16 %v2587
  %v3012 = vunpack.c.h.b16 %v2587
  %v3013 = vunpack.c.l.b16 %v2588
  %v3014 = vunpack.c.l.b16 %v2589
  %v3015 = vunpack.c.h.b16 %v2589
  %v3016 = vunpack.c.l.b16 %v2590
  %v3017 = vunpack.c.h.b16 %v2590
  %v3018 = vunpack.c.l.b16 %v2591
  %v3019 = vunpack.c.l.b16 %v2592
  %v3020 = vunpack.c.h.b16 %v2592
  %v3021 = vunpack.c.l.b16 %v2593
  %v3022 = vunpack.c.h.b16 %v2593
  %v3023 = vunpack.c.l.b16 %v2594
  %v3024 = vunpack.c.l.b16 %v2595
  %v3025 = vunpack.c.h.b16 %v2595
  %v3026 = vunpack.c.l.b16 %v2596
  %v3027 = vunpack.c.h.b16 %v2596
  %v3028 = vunpack.c.l.b16 %v2597
  %v3029 = vunpack.c.l.b16 %v2598
  %v3030 = vunpack.c.h.b16 %v2598
  %v3031 = vunpack.c.l.b16 %v2599
  %v3032 = vunpack.c.h.b16 %v2599
  %v3033 = vunpack.c.l.b16 %v2600
  %v3034 = vunpack.c.l.b16 %v2601
  %v3035 = vunpack.c.h.b16 %v2601
  %v3036 = vunpack.c.l.b16 %v2602
  %v3037 = vunpack.c.h.b16 %v2602
  %v3038 = vunpack.c.l.b16 %v2603
  %v3039 = vunpack.c.l.b16 %v2604
  %v3040 = vunpack.c.h.b16 %v2604
  %v3041 = vunpack.c.l.b16 %v2605
  %v3042 = vunpack.c.h.b16 %v2605
  %v3043 = vunpack.c.l.b16 %v2606
  %v3044 = vunpack.c.l.b16 %v2607
  %v3045 = vunpack.c.h.b16 %v2607
  %v3046 = vunpack.c.l.b16 %v2608
  %v3047 = vunpack.c.h.b16 %v2608
  %v3048 = vunpack.c.l.b16 %v2609
  %v3049 = vunpack.c.l.b16 %v2610
  %v3050 = vunpack.c.h.b16 %v2610
  %v3051 = vunpack.c.l.b16 %v2611
  %v3052 = vunpack.c.h.b16 %v2611
  %v3053 = vunpack.c.l.b16 %v2612
  %v3054 = vunpack.c.l.b16 %v2613
  %v3055 = vunpack.c.h.b16 %v2613
  %v3056 = vunpack.c.l.b16 %v2614
  %v3057 = vunpack.c.h.b16 %v2614
  %v3058 = vunpack.c.l.b16 %v2615
  %v3059 = vunpack.c.l.b16 %v2616
  %v3060 = vunpack.c.h.b16 %v2616
  %v3061 = vunpack.c.l.b16 %v2617
  %v3062 = vunpack.c.h.b16 %v2617
  %v3063 = vunpack.c.l.b16 %v2618
  %v3064 = vunpack.c.l.b16 %v2619
  %v3065 = vunpack.c.h.b16 %v2619
  %v3066 = vunpack.c.l.b16 %v2620
  %v3067 = vunpack.c.h.b16 %v2620
  %v3068 = vunpack.c.l.b16 %v2621
  %v3069 = vunpack.c.l.b16 %v2622
  %v3070 = vunpack.c.h.b16 %v2622
  %v3071 = vunpack.c.l.b16 %v2623
  %v3072 = vunpack.c.h.b16 %v2623
  %v3073 = vunpack.c.l.b16 %v2624
  %v3074 = vunpack.c.l.b16 %v2625
  %v3075 = vunpack.c.h.b16 %v2625
  %v3076 = vunpack.c.l.b16 %v2626
  %v3077 = vunpack.c.h.b16 %v2626
  %v3078 = vunpack.c.l.b16 %v2627
  %v3079 = vunpack.c.l.b16 %v2628
  %v3080 = vunpack.c.h.b16 %v2628
  %v3081 = vunpack.c.l.b16 %v2629
  %v3082 = vunpack.c.h.b16 %v2629
  %v3083 = vunpack.c.l.b16 %v2630
  %v3084 = vunpack.c.l.b16 %v2631
  %v3085 = vunpack.c.h.b16 %v2631
  %v3086 = vunpack.c.l.b16 %v2632
  %v3087 = vunpack.c.h.b16 %v2632
  %v3088 = vunpack.c.l.b16 %v2633
  %v3089 = vunpack.c.l.b16 %v2634
  %v3090 = vunpack.c.h.b16 %v2634
  %v3091 = vunpack.c.l.b16 %v2635
  %v3092 = vunpack.c.h.b16 %v2635
  %v3093 = vunpack.c.l.b16 %v2636
  %v3094 = vunpack.c.l.b16 %v2637
  %v3095 = vunpack.c.h.b16 %v2637
  %v3096 = vunpack.c.l.b16 %v2638
  %v3097 = vunpack.c.h.b16 %v2638
  %v3098 = vunpack.c.l.b16 %v2639
  %v3099 = vpack.c.b16 %v2834, %v2829
  %v3100 = vpack.c.b16 %v2835, %v2830
  %v3101 = vpack.c.b16 %v2836, %v2831
  %v3102 = vpack.c.b16 %v2837, %v2832
  %v3103 = vpack.c.b16 %v2838, %v2833
  %v3104 = vpack.c.b16 %v2844, %v2839
  %v3105 = vpack.c.b16 %v2845, %v2840
  %v3106 = vpack.c.b16 %v2846, %v2841
  %v3107 = vpack.c.b16 %v2847, %v2842
  %v3108 = vpack.c.b16 %v2848, %v2843
  %v3109 = vpack.c.b16 %v2854, %v2849
  %v3110 = vpack.c.b16 %v2855, %v2850
  %v3111 = vpack.c.b16 %v2856, %v2851
  %v3112 = vpack.c.b16 %v2857, %v2852
  %v3113 = vpack.c.b16 %v2858, %v2853
  %v3114 = vpack.c.b16 %v2864, %v2859
  %v3115 = vpack.c.b16 %v2865, %v2860
  %v3116 = vpack.c.b16 %v2866, %v2861
  %v3117 = vpack.c.b16 %v2867, %v2862
  %v3118 = vpack.c.b16 %v2868, %v2863
  %v3119 = vpack.c.b16 %v2874, %v2869
  %v3120 = vpack.c.b16 %v2875, %v2870
  %v3121 = vpack.c.b16 %v2876, %v2871
  %v3122 = vpack.c.b16 %v2877, %v2872
  %v3123 = vpack.c.b16 %v2878, %v2873
  %v3124 = vpack.c.b16 %v2884, %v2879
  %v3125 = vpack.c.b16 %v2885, %v2880
  %v3126 = vpack.c.b16 %v2886, %v2881
  %v3127 = vpack.c.b16 %v2887, %v2882
  %v3128 = vpack.c.b16 %v2888, %v2883
  %v3129 = vpack.c.b16 %v2894, %v2889
  %v3130 = vpack.c.b16 %v2895, %v2890
  %v3131 = vpack.c.b16 %v2896, %v2891
  %v3132 = vpack.c.b16 %v2897, %v2892
  %v3133 = vpack.c.b16 %v2898, %v2893
  %v3134 = vpack.c.b16 %v2904, %v2899
  %v3135 = vpack.c.b16 %v2905, %v2900
  %v3136 = vpack.c.b16 %v2906, %v2901
  %v3137 = vpack.c.b16 %v2907, %v2902
  %v3138 = vpack.c.b16 %v2908, %v2903
  %v3139 = vpack.c.b16 %v2914, %v2909
  %v3140 = vpack.c.b16 %v2915, %v2910
  %v3141 = vpack.c.b16 %v2916, %v2911
  %v3142 = vpack.c.b16 %v2917, %v2912
  %v3143 = vpack.c.b16 %v2918, %v2913
  %v3144 = vpack.c.b16 %v2924, %v2919
  %v3145 = vpack.c.b16 %v2925, %v2920
  %v3146 = vpack.c.b16 %v2926, %v2921
  %v3147 = vpack.c.b16 %v2927, %v2922
  %v3148 = vpack.c.b16 %v2928, %v2923
  %v3149 = vpack.c.b16 %v2934, %v2929
  %v3150 = vpack.c.b16 %v2935, %v2930
  %v3151 = vpack.c.b16 %v2936, %v2931
  %v3152 = vpack.c.b16 %v2937, %v2932
  %v3153 = vpack.c.b16 %v2938, %v2933
  %v3154 = vpack.c.b16 %v2944, %v2939
  %v3155 = vpack.c.b16 %v2945, %v2940
  %v3156 = vpack.c.b16 %v2946, %v2941
  %v3157 = vpack.c.b16 %v2947, %v2942
  %v3158 = vpack.c.b16 %v2948, %v2943
  %v3159 = vpack.c.b16 %v2954, %v2949
  %v3160 = vpack.c.b16 %v2955, %v2950
  %v3161 = vpack.c.b16 %v2956, %v2951
  %v3162 = vpack.c.b16 %v2957, %v2952
  %v3163 = vpack.c.b16 %v2958, %v2953
  %v3164 = vpack.c.b16 %v2964, %v2959
  %v3165 = vpack.c.b16 %v2965, %v2960
  %v3166 = vpack.c.b16 %v2966, %v2961
  %v3167 = vpack.c.b16 %v2967, %v2962
  %v3168 = vpack.c.b16 %v2968, %v2963
  %v3169 = vpack.c.b16 %v2974, %v2969
  %v3170 = vpack.c.b16 %v2975, %v2970
  %v3171 = vpack.c.b16 %v2976, %v2971
  %v3172 = vpack.c.b16 %v2977, %v2972
  %v3173 = vpack.c.b16 %v2978, %v2973
  %v3174 = vpack.c.b16 %v2984, %v2979
  %v3175 = vpack.c.b16 %v2985, %v2980
  %v3176 = vpack.c.b16 %v2986, %v2981
  %v3177 = vpack.c.b16 %v2987, %v2982
  %v3178 = vpack.c.b16 %v2988, %v2983
  %v3179 = vpack.c.b16 %v2994, %v2989
  %v3180 = vpack.c.b16 %v2995, %v2990
  %v3181 = vpack.c.b16 %v2996, %v2991
  %v3182 = vpack.c.b16 %v2997, %v2992
  %v3183 = vpack.c.b16 %v2998, %v2993
  %v3184 = vpack.c.b16 %v3004, %v2999
  %v3185 = vpack.c.b16 %v3005, %v3000
  %v3186 = vpack.c.b16 %v3006, %v3001
  %v3187 = vpack.c.b16 %v3007, %v3002
  %v3188 = vpack.c.b16 %v3008, %v3003
  %v3189 = vpack.c.b16 %v3014, %v3009
  %v3190 = vpack.c.b16 %v3015, %v3010
  %v3191 = vpack.c.b16 %v3016, %v3011
  %v3192 = vpack.c.b16 %v3017, %v3012
  %v3193 = vpack.c.b16 %v3018, %v3013
  %v3194 = vpack.c.b16 %v3024, %v3019
  %v3195 = vpack.c.b16 %v3025, %v3020
  %v3196 = vpack.c.b16 %v3026, %v3021
  %v3197 = vpack.c.b16 %v3027, %v3022
  %v3198 = vpack.c.b16 %v3028, %v3023
  %v3199 = vpack.c.b16 %v3034, %v3029
  %v3200 = vpack.c.b16 %v3035, %v3030
  %v3201 = vpack.c.b16 %v3036, %v3031
  %v3202 = vpack.c.b16 %v3037, %v3032
  %v3203 = vpack.c.b16 %v3038, %v3033
  %v3204 = vpack.c.b16 %v3044, %v3039
  %v3205 = vpack.c.b16 %v3045, %v3040
  %v3206 = vpack.c.b16 %v3046, %v3041
  %v3207 = vpack.c.b16 %v3047, %v3042
  %v3208 = vpack.c.b16 %v3048, %v3043
  %v3209 = vpack.c.b16 %v3054, %v3049
  %v3210 = vpack.c.b16 %v3055, %v3050
  %v3211 = vpack.c.b16 %v3056, %v3051
  %v3212 = vpack.c.b16 %v3057, %v3052
  %v3213 = vpack.c.b16 %v3058, %v3053
  %v3214 = vpack.c.b16 %v3064, %v3059
  %v3215 = vpack.c.b16 %v3065, %v3060
  %v3216 = vpack.c.b16 %v3066, %v3061
  %v3217 = vpack.c.b16 %v3067, %v3062
  %v3218 = vpack.c.b16 %v3068, %v3063
  %v3219 = vpack.c.b16 %v3074, %v3069
  %v3220 = vpack.c.b16 %v3075, %v3070
  %v3221 = vpack.c.b16 %v3076, %v3071
  %v3222 = vpack.c.b16 %v3077, %v3072
  %v3223 = vpack.c.b16 %v3078, %v3073
  %v3224 = vpack.c.b16 %v3084, %v3079
  %v3225 = vpack.c.b16 %v3085, %v3080
  %v3226 = vpack.c.b16 %v3086, %v3081
  %v3227 = vpack.c.b16 %v3087, %v3082
  %v3228 = vpack.c.b16 %v3088, %v3083
  %v3229 = vpack.c.b16 %v3094, %v3089
  %v3230 = vpack.c.b16 %v3095, %v3090
  %v3231 = vpack.c.b16 %v3096, %v3091
  %v3232 = vpack.c.b16 %v3097, %v3092
  %v3233 = vpack.c.b16 %v3098, %v3093
  %v3365 = vsel %vm1580, %v2477, 0
  %vm3367 = vcmask 1044480
  %v3368 = vsel %vm932, 4294967295, 65535
  %v3369 = vsel %vm3367, %v3368, 0
  %v3371 = vand.u32 %v3229, %v3369
  %v3374 = vand.u32 %v3230, %v3369
  %v3377 = vand.u32 %v3231, %v3369
  %v3380 = vand.u32 %v3232, %v3369
  %v3383 = vand.u32 %v3233, %v3369
  %3385 = vmatprep.subr.bf16.mxu0 %v3100
  %3386 = vmatpush1.bf16.msra.mxu0 %v3099
  %3387 = vmatprep.subr.bf16.mxu0 %v3105
  %3388 = vmatpush1.bf16.msra.mxu0 %v3104
  %3389 = vmatprep.subr.bf16.mxu0 %v3110
  %3390 = vmatpush1.bf16.msra.mxu0 %v3109
  %3391 = vmatprep.subr.bf16.mxu0 %v3115
  %3392 = vmatpush1.bf16.msra.mxu0 %v3114
  %3393 = vmatprep.subr.bf16.mxu0 %v3120
  %3394 = vmatpush1.bf16.msra.mxu0 %v3119
  %3395 = vmatprep.subr.bf16.mxu0 %v3125
  %3396 = vmatpush1.bf16.msra.mxu0 %v3124
  %3397 = vmatprep.subr.bf16.mxu0 %v3130
  %3398 = vmatpush1.bf16.msra.mxu0 %v3129
  %3399 = vmatprep.subr.bf16.mxu0 %v3135
  %3400 = vmatpush1.bf16.msra.mxu0 %v3134
  %3401 = vmatprep.subr.bf16.mxu0 %v3140
  %3402 = vmatpush1.bf16.msra.mxu0 %v3139
  %3403 = vmatprep.subr.bf16.mxu0 %v3145
  %3404 = vmatpush1.bf16.msra.mxu0 %v3144
  %3405 = vmatprep.subr.bf16.mxu0 %v3150
  %3406 = vmatpush1.bf16.msra.mxu0 %v3149
  %3407 = vmatprep.subr.bf16.mxu0 %v3155
  %3408 = vmatpush1.bf16.msra.mxu0 %v3154
  %3409 = vmatprep.subr.bf16.mxu0 %v3160
  %3410 = vmatpush1.bf16.msra.mxu0 %v3159
  %3411 = vmatprep.subr.bf16.mxu0 %v3165
  %3412 = vmatpush1.bf16.msra.mxu0 %v3164
  %3413 = vmatprep.subr.bf16.mxu0 %v3170
  %3414 = vmatpush1.bf16.msra.mxu0 %v3169
  %3415 = vmatprep.subr.bf16.mxu0 %v3175
  %3416 = vmatpush1.bf16.msra.mxu0 %v3174
  %3417 = vmatprep.mubr.bf16.mxu0 %v2475
  %3418 = vmatmul.mubr.bf16.gmra.mrb[0].mxu0 %v2474
  %v3419 = vpop.f32.mrb[0].mxu0
  %v3420 = vadd.f32 %v2645, %v3419
  %v3421 = vpop.f32.mrb[0].mxu0
  %v3422 = vadd.f32 %v2649, %v3421
  %v3423 = vpop.f32.mrb[0].mxu0
  %v3424 = vadd.f32 %v2645, %v3423
  %v3425 = vpop.f32.mrb[0].mxu0
  %v3426 = vadd.f32 %v2649, %v3425
  %3427 = vdwg.mxu0
  %3428 = vmatprep.subr.bf16.mxu0 %v3180
  %3429 = vmatpush1.bf16.msra.mxu0 %v3179
  %3430 = vmatprep.subr.bf16.mxu0 %v3185
  %3431 = vmatpush1.bf16.msra.mxu0 %v3184
  %3432 = vmatprep.subr.bf16.mxu0 %v3190
  %3433 = vmatpush1.bf16.msra.mxu0 %v3189
  %3434 = vmatprep.subr.bf16.mxu0 %v3195
  %3435 = vmatpush1.bf16.msra.mxu0 %v3194
  %3436 = vmatprep.subr.bf16.mxu0 %v3200
  %3437 = vmatpush1.bf16.msra.mxu0 %v3199
  %3438 = vmatprep.subr.bf16.mxu0 %v3205
  %3439 = vmatpush1.bf16.msra.mxu0 %v3204
  %3440 = vmatprep.subr.bf16.mxu0 %v3210
  %3441 = vmatpush1.bf16.msra.mxu0 %v3209
  %3442 = vmatprep.subr.bf16.mxu0 %v3215
  %3443 = vmatpush1.bf16.msra.mxu0 %v3214
  %3444 = vmatprep.subr.bf16.mxu0 %v3220
  %3445 = vmatpush1.bf16.msra.mxu0 %v3219
  %3446 = vmatprep.subr.bf16.mxu0 %v3225
  %3447 = vmatpush1.bf16.msra.mxu0 %v3224
  %3448 = vmatprep.subr.bf16.mxu0 %v3374
  %3449 = vmatpush1.bf16.msra.mxu0 %v3371
  %3450 = vmatprep.subr.bf16.mxu0 0
  %3451 = vmatpush1.bf16.msra.mxu0 0
  %3452 = vmatprep.subr.bf16.mxu0 0
  %3453 = vmatpush1.bf16.msra.mxu0 0
  %3454 = vmatprep.subr.bf16.mxu0 0
  %3455 = vmatpush1.bf16.msra.mxu0 0
  %3456 = vmatprep.subr.bf16.mxu0 0
  %3457 = vmatpush1.bf16.msra.mxu0 0
  %3458 = vmatprep.subr.bf16.mxu0 0
  %3459 = vmatpush1.bf16.msra.mxu0 0
  %3460 = vmatprep.mubr.bf16.mxu0 %v3365
  %3461 = vmatmul.mubr.bf16.gmra.mrb[0].mxu0 %v2476
  %v3462 = vpop.f32.mrb[0].mxu0
  %v3463 = vadd.f32 %v3420, %v3462
  %v3464 = vpop.f32.mrb[0].mxu0
  %v3465 = vadd.f32 %v3422, %v3464
  %v3466 = vpop.f32.mrb[0].mxu0
  %v3467 = vadd.f32 %v3424, %v3466
  %v3468 = vpop.f32.mrb[0].mxu0
  %v3469 = vadd.f32 %v3426, %v3468
  %3470 = vdwg.mxu0
  %3471 = vmatprep.subr.bf16.mxu0 %v3102
  %3472 = vmatpush1.bf16.msra.mxu0 %v3101
  %3473 = vmatprep.subr.bf16.mxu0 %v3107
  %3474 = vmatpush1.bf16.msra.mxu0 %v3106
  %3475 = vmatprep.subr.bf16.mxu0 %v3112
  %3476 = vmatpush1.bf16.msra.mxu0 %v3111
  %3477 = vmatprep.subr.bf16.mxu0 %v3117
  %3478 = vmatpush1.bf16.msra.mxu0 %v3116
  %3479 = vmatprep.subr.bf16.mxu0 %v3122
  %3480 = vmatpush1.bf16.msra.mxu0 %v3121
  %3481 = vmatprep.subr.bf16.mxu0 %v3127
  %3482 = vmatpush1.bf16.msra.mxu0 %v3126
  %3483 = vmatprep.subr.bf16.mxu0 %v3132
  %3484 = vmatpush1.bf16.msra.mxu0 %v3131
  %3485 = vmatprep.subr.bf16.mxu0 %v3137
  %3486 = vmatpush1.bf16.msra.mxu0 %v3136
  %3487 = vmatprep.subr.bf16.mxu0 %v3142
  %3488 = vmatpush1.bf16.msra.mxu0 %v3141
  %3489 = vmatprep.subr.bf16.mxu0 %v3147
  %3490 = vmatpush1.bf16.msra.mxu0 %v3146
  %3491 = vmatprep.subr.bf16.mxu0 %v3152
  %3492 = vmatpush1.bf16.msra.mxu0 %v3151
  %3493 = vmatprep.subr.bf16.mxu0 %v3157
  %3494 = vmatpush1.bf16.msra.mxu0 %v3156
  %3495 = vmatprep.subr.bf16.mxu0 %v3162
  %3496 = vmatpush1.bf16.msra.mxu0 %v3161
  %3497 = vmatprep.subr.bf16.mxu0 %v3167
  %3498 = vmatpush1.bf16.msra.mxu0 %v3166
  %3499 = vmatprep.subr.bf16.mxu0 %v3172
  %3500 = vmatpush1.bf16.msra.mxu0 %v3171
  %3501 = vmatprep.subr.bf16.mxu0 %v3177
  %3502 = vmatpush1.bf16.msra.mxu0 %v3176
  %3503 = vmatprep.mubr.bf16.mxu0 %v2475
  %3504 = vmatmul.mubr.bf16.gmra.mrb[0].mxu0 %v2474
  %v3505 = vpop.f32.mrb[0].mxu0
  %v3506 = vadd.f32 %v2653, %v3505
  %v3507 = vpop.f32.mrb[0].mxu0
  %v3508 = vadd.f32 %v2657, %v3507
  %v3509 = vpop.f32.mrb[0].mxu0
  %v3510 = vadd.f32 %v2653, %v3509
  %v3511 = vpop.f32.mrb[0].mxu0
  %v3512 = vadd.f32 %v2657, %v3511
  %3513 = vdwg.mxu0
  %3514 = vmatprep.subr.bf16.mxu0 %v3182
  %3515 = vmatpush1.bf16.msra.mxu0 %v3181
  %3516 = vmatprep.subr.bf16.mxu0 %v3187
  %3517 = vmatpush1.bf16.msra.mxu0 %v3186
  %3518 = vmatprep.subr.bf16.mxu0 %v3192
  %3519 = vmatpush1.bf16.msra.mxu0 %v3191
  %3520 = vmatprep.subr.bf16.mxu0 %v3197
  %3521 = vmatpush1.bf16.msra.mxu0 %v3196
  %3522 = vmatprep.subr.bf16.mxu0 %v3202
  %3523 = vmatpush1.bf16.msra.mxu0 %v3201
  %3524 = vmatprep.subr.bf16.mxu0 %v3207
  %3525 = vmatpush1.bf16.msra.mxu0 %v3206
  %3526 = vmatprep.subr.bf16.mxu0 %v3212
  %3527 = vmatpush1.bf16.msra.mxu0 %v3211
  %3528 = vmatprep.subr.bf16.mxu0 %v3217
  %3529 = vmatpush1.bf16.msra.mxu0 %v3216
  %3530 = vmatprep.subr.bf16.mxu0 %v3222
  %3531 = vmatpush1.bf16.msra.mxu0 %v3221
  %3532 = vmatprep.subr.bf16.mxu0 %v3227
  %3533 = vmatpush1.bf16.msra.mxu0 %v3226
  %3534 = vmatprep.subr.bf16.mxu0 %v3380
  %3535 = vmatpush1.bf16.msra.mxu0 %v3377
  %3536 = vmatprep.subr.bf16.mxu0 0
  %3537 = vmatpush1.bf16.msra.mxu0 0
  %3538 = vmatprep.subr.bf16.mxu0 0
  %3539 = vmatpush1.bf16.msra.mxu0 0
  %3540 = vmatprep.subr.bf16.mxu0 0
  %3541 = vmatpush1.bf16.msra.mxu0 0
  %3542 = vmatprep.subr.bf16.mxu0 0
  %3543 = vmatpush1.bf16.msra.mxu0 0
  %3544 = vmatprep.subr.bf16.mxu0 0
  %3545 = vmatpush1.bf16.msra.mxu0 0
  %3546 = vmatprep.mubr.bf16.mxu0 %v3365
  %3547 = vmatmul.mubr.bf16.gmra.mrb[0].mxu0 %v2476
  %v3548 = vpop.f32.mrb[0].mxu0
  %v3549 = vadd.f32 %v3506, %v3548
  %v3550 = vpop.f32.mrb[0].mxu0
  %v3551 = vadd.f32 %v3508, %v3550
  %v3552 = vpop.f32.mrb[0].mxu0
  %v3553 = vadd.f32 %v3510, %v3552
  %v3554 = vpop.f32.mrb[0].mxu0
  %v3555 = vadd.f32 %v3512, %v3554
  %3556 = vdwg.mxu0
  %3557 = vmatprep.subr.bf16.mxu0 0
  %3558 = vmatpush1.bf16.msra.mxu0 %v3103
  %3559 = vmatprep.subr.bf16.mxu0 0
  %3560 = vmatpush1.bf16.msra.mxu0 %v3108
  %3561 = vmatprep.subr.bf16.mxu0 0
  %3562 = vmatpush1.bf16.msra.mxu0 %v3113
  %3563 = vmatprep.subr.bf16.mxu0 0
  %3564 = vmatpush1.bf16.msra.mxu0 %v3118
  %3565 = vmatprep.subr.bf16.mxu0 0
  %3566 = vmatpush1.bf16.msra.mxu0 %v3123
  %3567 = vmatprep.subr.bf16.mxu0 0
  %3568 = vmatpush1.bf16.msra.mxu0 %v3128
  %3569 = vmatprep.subr.bf16.mxu0 0
  %3570 = vmatpush1.bf16.msra.mxu0 %v3133
  %3571 = vmatprep.subr.bf16.mxu0 0
  %3572 = vmatpush1.bf16.msra.mxu0 %v3138
  %3573 = vmatprep.subr.bf16.mxu0 0
  %3574 = vmatpush1.bf16.msra.mxu0 %v3143
  %3575 = vmatprep.subr.bf16.mxu0 0
  %3576 = vmatpush1.bf16.msra.mxu0 %v3148
  %3577 = vmatprep.subr.bf16.mxu0 0
  %3578 = vmatpush1.bf16.msra.mxu0 %v3153
  %3579 = vmatprep.subr.bf16.mxu0 0
  %3580 = vmatpush1.bf16.msra.mxu0 %v3158
  %3581 = vmatprep.subr.bf16.mxu0 0
  %3582 = vmatpush1.bf16.msra.mxu0 %v3163
  %3583 = vmatprep.subr.bf16.mxu0 0
  %3584 = vmatpush1.bf16.msra.mxu0 %v3168
  %3585 = vmatprep.subr.bf16.mxu0 0
  %3586 = vmatpush1.bf16.msra.mxu0 %v3173
  %3587 = vmatprep.subr.bf16.mxu0 0
  %3588 = vmatpush1.bf16.msra.mxu0 %v3178
  %3589 = vmatprep.mubr.bf16.mxu0 %v2475
  %3590 = vmatmul.mubr.bf16.gmra.mrb[0].mxu0 %v2474
  %v3591 = vpop.f32.mrb[0].mxu0
  %v3592 = vadd.f32 %v2661, %v3591
  %v3593 = vpop.f32.mrb[0].mxu0
  %v3594 = vpop.f32.mrb[0].mxu0
  %v3595 = vadd.f32 %v2661, %v3594
  %v3596 = vpop.f32.mrb[0].mxu0
  %3597 = vdwg.mxu0
  %3598 = vmatprep.subr.bf16.mxu0 0
  %3599 = vmatpush1.bf16.msra.mxu0 %v3183
  %3600 = vmatprep.subr.bf16.mxu0 0
  %3601 = vmatpush1.bf16.msra.mxu0 %v3188
  %3602 = vmatprep.subr.bf16.mxu0 0
  %3603 = vmatpush1.bf16.msra.mxu0 %v3193
  %3604 = vmatprep.subr.bf16.mxu0 0
  %3605 = vmatpush1.bf16.msra.mxu0 %v3198
  %3606 = vmatprep.subr.bf16.mxu0 0
  %3607 = vmatpush1.bf16.msra.mxu0 %v3203
  %3608 = vmatprep.subr.bf16.mxu0 0
  %3609 = vmatpush1.bf16.msra.mxu0 %v3208
  %3610 = vmatprep.subr.bf16.mxu0 0
  %3611 = vmatpush1.bf16.msra.mxu0 %v3213
  %3612 = vmatprep.subr.bf16.mxu0 0
  %3613 = vmatpush1.bf16.msra.mxu0 %v3218
  %3614 = vmatprep.subr.bf16.mxu0 0
  %3615 = vmatpush1.bf16.msra.mxu0 %v3223
  %3616 = vmatprep.subr.bf16.mxu0 0
  %3617 = vmatpush1.bf16.msra.mxu0 %v3228
  %3618 = vmatprep.subr.bf16.mxu0 0
  %3619 = vmatpush1.bf16.msra.mxu0 %v3383
  %3620 = vmatprep.subr.bf16.mxu0 0
  %3621 = vmatpush1.bf16.msra.mxu0 0
  %3622 = vmatprep.subr.bf16.mxu0 0
  %3623 = vmatpush1.bf16.msra.mxu0 0
  %3624 = vmatprep.subr.bf16.mxu0 0
  %3625 = vmatpush1.bf16.msra.mxu0 0
  %3626 = vmatprep.subr.bf16.mxu0 0
  %3627 = vmatpush1.bf16.msra.mxu0 0
  %3628 = vmatprep.subr.bf16.mxu0 0
  %3629 = vmatpush1.bf16.msra.mxu0 0
  %3630 = vmatprep.mubr.bf16.mxu0 %v3365
  %3631 = vmatmul.mubr.bf16.gmra.mrb[0].mxu0 %v2476
  %v3632 = vpop.f32.mrb[0].mxu0
  %v3633 = vadd.f32 %v3592, %v3632
  %v3634 = vpop.f32.mrb[0].mxu0
  %v3635 = vpop.f32.mrb[0].mxu0
  %v3636 = vadd.f32 %v3595, %v3635
  %v3637 = vpop.f32.mrb[0].mxu0
  %3638 = vdwg.mxu0
  %v3639 = vsub.f32 0.0, %v3463
  %v3640 = vsub.f32 0.0, %v3465
  %v3641 = vsub.f32 0.0, %v3549
  %v3642 = vsub.f32 0.0, %v3551
  %v3643 = vsub.f32 0.0, %v3633
  %v3644 = vsub.f32 0.0, %v3467
  %v3645 = vsub.f32 0.0, %v3469
  %v3646 = vsub.f32 0.0, %v3553
  %v3647 = vsub.f32 0.0, %v3555
  %v3648 = vsub.f32 0.0, %v3636
  %v3649 = vmul.f32 %v3639, 1.442695
  %v3650 = vpow.pop %v3649
  %v3651 = vmul.f32 %v3640, 1.442695
  %v3652 = vpow.pop %v3651
  %v3653 = vmul.f32 %v3641, 1.442695
  %v3654 = vpow.pop %v3653
  %v3655 = vmul.f32 %v3642, 1.442695
  %v3656 = vpow.pop %v3655
  %v3657 = vmul.f32 %v3643, 1.442695
  %v3658 = vpow.pop %v3657
  %v3659 = vmul.f32 %v3644, 1.442695
  %v3660 = vpow.pop %v3659
  %v3661 = vmul.f32 %v3645, 1.442695
  %v3662 = vpow.pop %v3661
  %v3663 = vmul.f32 %v3646, 1.442695
  %v3664 = vpow.pop %v3663
  %v3665 = vmul.f32 %v3647, 1.442695
  %v3666 = vpow.pop %v3665
  %v3667 = vmul.f32 %v3648, 1.442695
  %v3668 = vpow.pop %v3667
  %v3669 = vadd.f32 %v3650, 1.0
  %v3670 = vadd.f32 %v3652, 1.0
  %v3671 = vadd.f32 %v3654, 1.0
  %v3672 = vadd.f32 %v3656, 1.0
  %v3673 = vadd.f32 %v3658, 1.0
  %v3674 = vadd.f32 %v3660, 1.0
  %v3675 = vadd.f32 %v3662, 1.0
  %v3676 = vadd.f32 %v3664, 1.0
  %v3677 = vadd.f32 %v3666, 1.0
  %v3678 = vadd.f32 %v3668, 1.0
  %v3679 = vrcp.pop %v3669
  %v3680 = vmul.f32 1.0, %v3679
  %v3681 = vrcp.pop %v3670
  %v3682 = vmul.f32 1.0, %v3681
  %v3683 = vrcp.pop %v3671
  %v3684 = vmul.f32 1.0, %v3683
  %v3685 = vrcp.pop %v3672
  %v3686 = vmul.f32 1.0, %v3685
  %v3687 = vrcp.pop %v3673
  %v3688 = vmul.f32 1.0, %v3687
  %v3689 = vrcp.pop %v3674
  %v3690 = vmul.f32 1.0, %v3689
  %v3691 = vrcp.pop %v3675
  %v3692 = vmul.f32 1.0, %v3691
  %v3693 = vrcp.pop %v3676
  %v3694 = vmul.f32 1.0, %v3693
  %v3695 = vrcp.pop %v3677
  %v3696 = vmul.f32 1.0, %v3695
  %v3697 = vrcp.pop %v3678
  %v3698 = vmul.f32 1.0, %v3697
  %3707 = vrot.lane.b32.xlu0 %v3680, 127
  %v3708 = vpop.permute.xlu0 %3707
  %3709 = vrot.lane.b32.xlu0 %v3682, 127
  %v3710 = vpop.permute.xlu0 %3709
  %3711 = vrot.lane.b32.xlu0 %v3684, 127
  %v3712 = vpop.permute.xlu0 %3711
  %3713 = vrot.lane.b32.xlu0 %v3686, 127
  %v3714 = vpop.permute.xlu0 %3713
  %3715 = vrot.lane.b32.xlu0 %v3690, 127
  %v3716 = vpop.permute.xlu0 %3715
  %3717 = vrot.lane.b32.xlu0 %v3692, 127
  %v3718 = vpop.permute.xlu0 %3717
  %3719 = vrot.lane.b32.xlu0 %v3694, 127
  %v3720 = vpop.permute.xlu0 %3719
  %3721 = vrot.lane.b32.xlu0 %v3696, 127
  %v3722 = vpop.permute.xlu0 %3721
  %vm3723 = vcmask 1039360
  %v3724 = vsel %vm3723, %v3708, %v3710
  %v3725 = vsel %vm3723, %v3710, %v3712
  %v3726 = vsel %vm3723, %v3712, %v3714
  %v3727 = vsel %vm3723, %v3716, %v3718
  %v3728 = vsel %vm3723, %v3718, %v3720
  %v3729 = vsel %vm3723, %v3720, %v3722
  %v3738 = vadd.f32 %v3680, %v3724
  %v3739 = vadd.f32 %v3682, %v3725
  %v3740 = vadd.f32 %v3684, %v3726
  %v3741 = vadd.f32 %v3686, %v3714
  %v3742 = vadd.f32 %v3690, %v3727
  %v3743 = vadd.f32 %v3692, %v3728
  %v3744 = vadd.f32 %v3694, %v3729
  %v3745 = vadd.f32 %v3696, %v3722
  %3746 = vrot.lane.b32.xlu0 %v3680, 126
  %v3747 = vpop.permute.xlu0 %3746
  %3748 = vrot.lane.b32.xlu0 %v3682, 126
  %v3749 = vpop.permute.xlu0 %3748
  %3750 = vrot.lane.b32.xlu0 %v3684, 126
  %v3751 = vpop.permute.xlu0 %3750
  %3752 = vrot.lane.b32.xlu0 %v3686, 126
  %v3753 = vpop.permute.xlu0 %3752
  %3754 = vrot.lane.b32.xlu0 %v3690, 126
  %v3755 = vpop.permute.xlu0 %3754
  %3756 = vrot.lane.b32.xlu0 %v3692, 126
  %v3757 = vpop.permute.xlu0 %3756
  %3758 = vrot.lane.b32.xlu0 %v3694, 126
  %v3759 = vpop.permute.xlu0 %3758
  %3760 = vrot.lane.b32.xlu0 %v3696, 126
  %v3761 = vpop.permute.xlu0 %3760
  %vm3762 = vcmask 1031168
  %v3763 = vsel %vm3762, %v3747, %v3749
  %v3764 = vsel %vm3762, %v3749, %v3751
  %v3765 = vsel %vm3762, %v3751, %v3753
  %v3766 = vsel %vm3762, %v3755, %v3757
  %v3767 = vsel %vm3762, %v3757, %v3759
  %v3768 = vsel %vm3762, %v3759, %v3761
  %v3777 = vadd.f32 %v3738, %v3763
  %v3778 = vadd.f32 %v3739, %v3764
  %v3779 = vadd.f32 %v3740, %v3765
  %v3780 = vadd.f32 %v3741, %v3753
  %v3781 = vadd.f32 %v3742, %v3766
  %v3782 = vadd.f32 %v3743, %v3767
  %v3783 = vadd.f32 %v3744, %v3768
  %v3784 = vadd.f32 %v3745, %v3761
  %3785 = vrot.lane.b32.xlu0 %v3680, 125
  %v3786 = vpop.permute.xlu0 %3785
  %3787 = vrot.lane.b32.xlu0 %v3682, 125
  %v3788 = vpop.permute.xlu0 %3787
  %3789 = vrot.lane.b32.xlu0 %v3684, 125
  %v3790 = vpop.permute.xlu0 %3789
  %3791 = vrot.lane.b32.xlu0 %v3686, 125
  %v3792 = vpop.permute.xlu0 %3791
  %3793 = vrot.lane.b32.xlu0 %v3690, 125
  %v3794 = vpop.permute.xlu0 %3793
  %3795 = vrot.lane.b32.xlu0 %v3692, 125
  %v3796 = vpop.permute.xlu0 %3795
  %3797 = vrot.lane.b32.xlu0 %v3694, 125
  %v3798 = vpop.permute.xlu0 %3797
  %3799 = vrot.lane.b32.xlu0 %v3696, 125
  %v3800 = vpop.permute.xlu0 %3799
  %vm3801 = vcmask 1022976
  %v3802 = vsel %vm3801, %v3786, %v3788
  %v3803 = vsel %vm3801, %v3788, %v3790
  %v3804 = vsel %vm3801, %v3790, %v3792
  %v3805 = vsel %vm3801, %v3794, %v3796
  %v3806 = vsel %vm3801, %v3796, %v3798
  %v3807 = vsel %vm3801, %v3798, %v3800
  %v3816 = vadd.f32 %v3777, %v3802
  %v3817 = vadd.f32 %v3778, %v3803
  %v3818 = vadd.f32 %v3779, %v3804
  %v3819 = vadd.f32 %v3780, %v3792
  %v3820 = vadd.f32 %v3781, %v3805
  %v3821 = vadd.f32 %v3782, %v3806
  %v3822 = vadd.f32 %v3783, %v3807
  %v3823 = vadd.f32 %v3784, %v3800
  %3824 = vrot.lane.b32.xlu0 %v3680, 124
  %v3825 = vpop.permute.xlu0 %3824
  %3826 = vrot.lane.b32.xlu0 %v3682, 124
  %v3827 = vpop.permute.xlu0 %3826
  %3828 = vrot.lane.b32.xlu0 %v3684, 124
  %v3829 = vpop.permute.xlu0 %3828
  %3830 = vrot.lane.b32.xlu0 %v3686, 124
  %v3831 = vpop.permute.xlu0 %3830
  %3832 = vrot.lane.b32.xlu0 %v3690, 124
  %v3833 = vpop.permute.xlu0 %3832
  %3834 = vrot.lane.b32.xlu0 %v3692, 124
  %v3835 = vpop.permute.xlu0 %3834
  %3836 = vrot.lane.b32.xlu0 %v3694, 124
  %v3837 = vpop.permute.xlu0 %3836
  %3838 = vrot.lane.b32.xlu0 %v3696, 124
  %v3839 = vpop.permute.xlu0 %3838
  %vm3840 = vcmask 1014784
  %v3841 = vsel %vm3840, %v3825, %v3827
  %v3842 = vsel %vm3840, %v3827, %v3829
  %v3843 = vsel %vm3840, %v3829, %v3831
  %v3844 = vsel %vm3840, %v3833, %v3835
  %v3845 = vsel %vm3840, %v3835, %v3837
  %v3846 = vsel %vm3840, %v3837, %v3839
  %v3855 = vadd.f32 %v3816, %v3841
  %v3856 = vadd.f32 %v3817, %v3842
  %v3857 = vadd.f32 %v3818, %v3843
  %v3858 = vadd.f32 %v3819, %v3831
  %v3859 = vadd.f32 %v3820, %v3844
  %v3860 = vadd.f32 %v3821, %v3845
  %v3861 = vadd.f32 %v3822, %v3846
  %v3862 = vadd.f32 %v3823, %v3839
  %3863 = vrot.lane.b32.xlu0 %v3680, 123
  %v3864 = vpop.permute.xlu0 %3863
  %3865 = vrot.lane.b32.xlu0 %v3682, 123
  %v3866 = vpop.permute.xlu0 %3865
  %3867 = vrot.lane.b32.xlu0 %v3684, 123
  %v3868 = vpop.permute.xlu0 %3867
  %3869 = vrot.lane.b32.xlu0 %v3686, 123
  %v3870 = vpop.permute.xlu0 %3869
  %3871 = vrot.lane.b32.xlu0 %v3690, 123
  %v3872 = vpop.permute.xlu0 %3871
  %3873 = vrot.lane.b32.xlu0 %v3692, 123
  %v3874 = vpop.permute.xlu0 %3873
  %3875 = vrot.lane.b32.xlu0 %v3694, 123
  %v3876 = vpop.permute.xlu0 %3875
  %3877 = vrot.lane.b32.xlu0 %v3696, 123
  %v3878 = vpop.permute.xlu0 %3877
  %vm3879 = vcmask 1006592
  %v3880 = vsel %vm3879, %v3864, %v3866
  %v3881 = vsel %vm3879, %v3866, %v3868
  %v3882 = vsel %vm3879, %v3868, %v3870
  %v3883 = vsel %vm3879, %v3872, %v3874
  %v3884 = vsel %vm3879, %v3874, %v3876
  %v3885 = vsel %vm3879, %v3876, %v3878
  %v3894 = vadd.f32 %v3855, %v3880
  %v3895 = vadd.f32 %v3856, %v3881
  %v3896 = vadd.f32 %v3857, %v3882
  %v3897 = vadd.f32 %v3858, %v3870
  %v3898 = vadd.f32 %v3859, %v3883
  %v3899 = vadd.f32 %v3860, %v3884
  %v3900 = vadd.f32 %v3861, %v3885
  %v3901 = vadd.f32 %v3862, %v3878
  %3902 = vrot.lane.b32.xlu0 %v3680, 122
  %v3903 = vpop.permute.xlu0 %3902
  %3904 = vrot.lane.b32.xlu0 %v3682, 122
  %v3905 = vpop.permute.xlu0 %3904
  %3906 = vrot.lane.b32.xlu0 %v3684, 122
  %v3907 = vpop.permute.xlu0 %3906
  %3908 = vrot.lane.b32.xlu0 %v3686, 122
  %v3909 = vpop.permute.xlu0 %3908
  %3910 = vrot.lane.b32.xlu0 %v3690, 122
  %v3911 = vpop.permute.xlu0 %3910
  %3912 = vrot.lane.b32.xlu0 %v3692, 122
  %v3913 = vpop.permute.xlu0 %3912
  %3914 = vrot.lane.b32.xlu0 %v3694, 122
  %v3915 = vpop.permute.xlu0 %3914
  %3916 = vrot.lane.b32.xlu0 %v3696, 122
  %v3917 = vpop.permute.xlu0 %3916
  %vm3918 = vcmask 998400
  %v3919 = vsel %vm3918, %v3903, %v3905
  %v3920 = vsel %vm3918, %v3905, %v3907
  %v3921 = vsel %vm3918, %v3907, %v3909
  %v3922 = vsel %vm3918, %v3911, %v3913
  %v3923 = vsel %vm3918, %v3913, %v3915
  %v3924 = vsel %vm3918, %v3915, %v3917
  %v3933 = vadd.f32 %v3894, %v3919
  %v3934 = vadd.f32 %v3895, %v3920
  %v3935 = vadd.f32 %v3896, %v3921
  %v3936 = vadd.f32 %v3897, %v3909
  %v3937 = vadd.f32 %v3898, %v3922
  %v3938 = vadd.f32 %v3899, %v3923
  %v3939 = vadd.f32 %v3900, %v3924
  %v3940 = vadd.f32 %v3901, %v3917
  %3941 = vrot.lane.b32.xlu0 %v3680, 121
  %v3942 = vpop.permute.xlu0 %3941
  %3943 = vrot.lane.b32.xlu0 %v3682, 121
  %v3944 = vpop.permute.xlu0 %3943
  %3945 = vrot.lane.b32.xlu0 %v3684, 121
  %v3946 = vpop.permute.xlu0 %3945
  %3947 = vrot.lane.b32.xlu0 %v3686, 121
  %v3948 = vpop.permute.xlu0 %3947
  %3949 = vrot.lane.b32.xlu0 %v3690, 121
  %v3950 = vpop.permute.xlu0 %3949
  %3951 = vrot.lane.b32.xlu0 %v3692, 121
  %v3952 = vpop.permute.xlu0 %3951
  %3953 = vrot.lane.b32.xlu0 %v3694, 121
  %v3954 = vpop.permute.xlu0 %3953
  %3955 = vrot.lane.b32.xlu0 %v3696, 121
  %v3956 = vpop.permute.xlu0 %3955
  %vm3957 = vcmask 990208
  %v3958 = vsel %vm3957, %v3942, %v3944
  %v3959 = vsel %vm3957, %v3944, %v3946
  %v3960 = vsel %vm3957, %v3946, %v3948
  %v3961 = vsel %vm3957, %v3950, %v3952
  %v3962 = vsel %vm3957, %v3952, %v3954
  %v3963 = vsel %vm3957, %v3954, %v3956
  %v3972 = vadd.f32 %v3933, %v3958
  %v3973 = vadd.f32 %v3934, %v3959
  %v3974 = vadd.f32 %v3935, %v3960
  %v3975 = vadd.f32 %v3936, %v3948
  %v3976 = vadd.f32 %v3937, %v3961
  %v3977 = vadd.f32 %v3938, %v3962
  %v3978 = vadd.f32 %v3939, %v3963
  %v3979 = vadd.f32 %v3940, %v3956
  %3980 = vrot.lane.b32.xlu0 %v3680, 120
  %v3981 = vpop.permute.xlu0 %3980
  %3982 = vrot.lane.b32.xlu0 %v3682, 120
  %v3983 = vpop.permute.xlu0 %3982
  %3984 = vrot.lane.b32.xlu0 %v3684, 120
  %v3985 = vpop.permute.xlu0 %3984
  %3986 = vrot.lane.b32.xlu0 %v3686, 120
  %v3987 = vpop.permute.xlu0 %3986
  %3988 = vrot.lane.b32.xlu0 %v3690, 120
  %v3989 = vpop.permute.xlu0 %3988
  %3990 = vrot.lane.b32.xlu0 %v3692, 120
  %v3991 = vpop.permute.xlu0 %3990
  %3992 = vrot.lane.b32.xlu0 %v3694, 120
  %v3993 = vpop.permute.xlu0 %3992
  %3994 = vrot.lane.b32.xlu0 %v3696, 120
  %v3995 = vpop.permute.xlu0 %3994
  %vm3996 = vcmask 982016
  %v3997 = vsel %vm3996, %v3981, %v3983
  %v3998 = vsel %vm3996, %v3983, %v3985
  %v3999 = vsel %vm3996, %v3985, %v3987
  %v4000 = vsel %vm3996, %v3989, %v3991
  %v4001 = vsel %vm3996, %v3991, %v3993
  %v4002 = vsel %vm3996, %v3993, %v3995
  %v4011 = vadd.f32 %v3972, %v3997
  %v4012 = vadd.f32 %v3973, %v3998
  %v4013 = vadd.f32 %v3974, %v3999
  %v4014 = vadd.f32 %v3975, %v3987
  %v4015 = vadd.f32 %v3976, %v4000
  %v4016 = vadd.f32 %v3977, %v4001
  %v4017 = vadd.f32 %v3978, %v4002
  %v4018 = vadd.f32 %v3979, %v3995
  %4019 = vrot.lane.b32.xlu0 %v3680, 119
  %v4020 = vpop.permute.xlu0 %4019
  %4021 = vrot.lane.b32.xlu0 %v3682, 119
  %v4022 = vpop.permute.xlu0 %4021
  %4023 = vrot.lane.b32.xlu0 %v3684, 119
  %v4024 = vpop.permute.xlu0 %4023
  %4025 = vrot.lane.b32.xlu0 %v3686, 119
  %v4026 = vpop.permute.xlu0 %4025
  %4027 = vrot.lane.b32.xlu0 %v3690, 119
  %v4028 = vpop.permute.xlu0 %4027
  %4029 = vrot.lane.b32.xlu0 %v3692, 119
  %v4030 = vpop.permute.xlu0 %4029
  %4031 = vrot.lane.b32.xlu0 %v3694, 119
  %v4032 = vpop.permute.xlu0 %4031
  %4033 = vrot.lane.b32.xlu0 %v3696, 119
  %v4034 = vpop.permute.xlu0 %4033
  %vm4035 = vcmask 973824
  %v4036 = vsel %vm4035, %v4020, %v4022
  %v4037 = vsel %vm4035, %v4022, %v4024
  %v4038 = vsel %vm4035, %v4024, %v4026
  %v4039 = vsel %vm4035, %v4028, %v4030
  %v4040 = vsel %vm4035, %v4030, %v4032
  %v4041 = vsel %vm4035, %v4032, %v4034
  %v4050 = vadd.f32 %v4011, %v4036
  %v4051 = vadd.f32 %v4012, %v4037
  %v4052 = vadd.f32 %v4013, %v4038
  %v4053 = vadd.f32 %v4014, %v4026
  %v4054 = vadd.f32 %v4015, %v4039
  %v4055 = vadd.f32 %v4016, %v4040
  %v4056 = vadd.f32 %v4017, %v4041
  %v4057 = vadd.f32 %v4018, %v4034
  %4058 = vrot.lane.b32.xlu0 %v3680, 118
  %v4059 = vpop.permute.xlu0 %4058
  %4060 = vrot.lane.b32.xlu0 %v3682, 118
  %v4061 = vpop.permute.xlu0 %4060
  %4062 = vrot.lane.b32.xlu0 %v3684, 118
  %v4063 = vpop.permute.xlu0 %4062
  %4064 = vrot.lane.b32.xlu0 %v3686, 118
  %v4065 = vpop.permute.xlu0 %4064
  %4066 = vrot.lane.b32.xlu0 %v3690, 118
  %v4067 = vpop.permute.xlu0 %4066
  %4068 = vrot.lane.b32.xlu0 %v3692, 118
  %v4069 = vpop.permute.xlu0 %4068
  %4070 = vrot.lane.b32.xlu0 %v3694, 118
  %v4071 = vpop.permute.xlu0 %4070
  %4072 = vrot.lane.b32.xlu0 %v3696, 118
  %v4073 = vpop.permute.xlu0 %4072
  %vm4074 = vcmask 965632
  %v4075 = vsel %vm4074, %v4059, %v4061
  %v4076 = vsel %vm4074, %v4061, %v4063
  %v4077 = vsel %vm4074, %v4063, %v4065
  %v4078 = vsel %vm4074, %v4067, %v4069
  %v4079 = vsel %vm4074, %v4069, %v4071
  %v4080 = vsel %vm4074, %v4071, %v4073
  %v4089 = vadd.f32 %v4050, %v4075
  %v4090 = vadd.f32 %v4051, %v4076
  %v4091 = vadd.f32 %v4052, %v4077
  %v4092 = vadd.f32 %v4053, %v4065
  %v4093 = vadd.f32 %v4054, %v4078
  %v4094 = vadd.f32 %v4055, %v4079
  %v4095 = vadd.f32 %v4056, %v4080
  %v4096 = vadd.f32 %v4057, %v4073
  %4097 = vrot.lane.b32.xlu0 %v3680, 117
  %v4098 = vpop.permute.xlu0 %4097
  %4099 = vrot.lane.b32.xlu0 %v3682, 117
  %v4100 = vpop.permute.xlu0 %4099
  %4101 = vrot.lane.b32.xlu0 %v3684, 117
  %v4102 = vpop.permute.xlu0 %4101
  %4103 = vrot.lane.b32.xlu0 %v3686, 117
  %v4104 = vpop.permute.xlu0 %4103
  %4105 = vrot.lane.b32.xlu0 %v3690, 117
  %v4106 = vpop.permute.xlu0 %4105
  %4107 = vrot.lane.b32.xlu0 %v3692, 117
  %v4108 = vpop.permute.xlu0 %4107
  %4109 = vrot.lane.b32.xlu0 %v3694, 117
  %v4110 = vpop.permute.xlu0 %4109
  %4111 = vrot.lane.b32.xlu0 %v3696, 117
  %v4112 = vpop.permute.xlu0 %4111
  %vm4113 = vcmask 957440
  %v4114 = vsel %vm4113, %v4098, %v4100
  %v4115 = vsel %vm4113, %v4100, %v4102
  %v4116 = vsel %vm4113, %v4102, %v4104
  %v4117 = vsel %vm4113, %v4106, %v4108
  %v4118 = vsel %vm4113, %v4108, %v4110
  %v4119 = vsel %vm4113, %v4110, %v4112
  %v4128 = vadd.f32 %v4089, %v4114
  %v4129 = vadd.f32 %v4090, %v4115
  %v4130 = vadd.f32 %v4091, %v4116
  %v4131 = vadd.f32 %v4092, %v4104
  %v4132 = vadd.f32 %v4093, %v4117
  %v4133 = vadd.f32 %v4094, %v4118
  %v4134 = vadd.f32 %v4095, %v4119
  %v4135 = vadd.f32 %v4096, %v4112
  %4136 = vrot.lane.b32.xlu0 %v3680, 116
  %v4137 = vpop.permute.xlu0 %4136
  %4138 = vrot.lane.b32.xlu0 %v3682, 116
  %v4139 = vpop.permute.xlu0 %4138
  %4140 = vrot.lane.b32.xlu0 %v3684, 116
  %v4141 = vpop.permute.xlu0 %4140
  %4142 = vrot.lane.b32.xlu0 %v3686, 116
  %v4143 = vpop.permute.xlu0 %4142
  %4144 = vrot.lane.b32.xlu0 %v3690, 116
  %v4145 = vpop.permute.xlu0 %4144
  %4146 = vrot.lane.b32.xlu0 %v3692, 116
  %v4147 = vpop.permute.xlu0 %4146
  %4148 = vrot.lane.b32.xlu0 %v3694, 116
  %v4149 = vpop.permute.xlu0 %4148
  %4150 = vrot.lane.b32.xlu0 %v3696, 116
  %v4151 = vpop.permute.xlu0 %4150
  %vm4152 = vcmask 949248
  %v4153 = vsel %vm4152, %v4137, %v4139
  %v4154 = vsel %vm4152, %v4139, %v4141
  %v4155 = vsel %vm4152, %v4141, %v4143
  %v4156 = vsel %vm4152, %v4145, %v4147
  %v4157 = vsel %vm4152, %v4147, %v4149
  %v4158 = vsel %vm4152, %v4149, %v4151
  %v4167 = vadd.f32 %v4128, %v4153
  %v4168 = vadd.f32 %v4129, %v4154
  %v4169 = vadd.f32 %v4130, %v4155
  %v4170 = vadd.f32 %v4131, %v4143
  %v4171 = vadd.f32 %v4132, %v4156
  %v4172 = vadd.f32 %v4133, %v4157
  %v4173 = vadd.f32 %v4134, %v4158
  %v4174 = vadd.f32 %v4135, %v4151
  %4177 = vrot.lane.b32.xlu0 %v3680, 115
  %v4178 = vpop.permute.xlu0 %4177
  %4179 = vrot.lane.b32.xlu0 %v3682, 115
  %v4180 = vpop.permute.xlu0 %4179
  %4181 = vrot.lane.b32.xlu0 %v3684, 115
  %v4182 = vpop.permute.xlu0 %4181
  %4183 = vrot.lane.b32.xlu0 %v3686, 115
  %v4184 = vpop.permute.xlu0 %4183
  %4185 = vrot.lane.b32.xlu0 %v3688, 115
  %v4186 = vpop.permute.xlu0 %4185
  %4187 = vrot.lane.b32.xlu0 %v3690, 115
  %v4188 = vpop.permute.xlu0 %4187
  %4189 = vrot.lane.b32.xlu0 %v3692, 115
  %v4190 = vpop.permute.xlu0 %4189
  %4191 = vrot.lane.b32.xlu0 %v3694, 115
  %v4192 = vpop.permute.xlu0 %4191
  %4193 = vrot.lane.b32.xlu0 %v3696, 115
  %v4194 = vpop.permute.xlu0 %4193
  %4195 = vrot.lane.b32.xlu0 %v3698, 115
  %v4196 = vpop.permute.xlu0 %4195
  %vm4197 = vcmask 941056
  %v4198 = vsel %vm4197, %v4178, %v4180
  %v4199 = vsel %vm4197, %v4180, %v4182
  %v4200 = vsel %vm4197, %v4182, %v4184
  %v4201 = vsel %vm4197, %v4184, %v4186
  %v4202 = vsel %vm4197, %v4188, %v4190
  %v4203 = vsel %vm4197, %v4190, %v4192
  %v4204 = vsel %vm4197, %v4192, %v4194
  %v4205 = vsel %vm4197, %v4194, %v4196
  %v4214 = vadd.f32 %v4167, %v4198
  %v4215 = vadd.f32 %v4168, %v4199
  %v4216 = vadd.f32 %v4169, %v4200
  %v4217 = vadd.f32 %v4170, %v4201
  %v4218 = vadd.f32 %v4171, %v4202
  %v4219 = vadd.f32 %v4172, %v4203
  %v4220 = vadd.f32 %v4173, %v4204
  %v4221 = vadd.f32 %v4174, %v4205
  %4222 = vrot.lane.b32.xlu0 %v3680, 114
  %v4223 = vpop.permute.xlu0 %4222
  %4224 = vrot.lane.b32.xlu0 %v3682, 114
  %v4225 = vpop.permute.xlu0 %4224
  %4226 = vrot.lane.b32.xlu0 %v3684, 114
  %v4227 = vpop.permute.xlu0 %4226
  %4228 = vrot.lane.b32.xlu0 %v3686, 114
  %v4229 = vpop.permute.xlu0 %4228
  %4230 = vrot.lane.b32.xlu0 %v3688, 114
  %v4231 = vpop.permute.xlu0 %4230
  %4232 = vrot.lane.b32.xlu0 %v3690, 114
  %v4233 = vpop.permute.xlu0 %4232
  %4234 = vrot.lane.b32.xlu0 %v3692, 114
  %v4235 = vpop.permute.xlu0 %4234
  %4236 = vrot.lane.b32.xlu0 %v3694, 114
  %v4237 = vpop.permute.xlu0 %4236
  %4238 = vrot.lane.b32.xlu0 %v3696, 114
  %v4239 = vpop.permute.xlu0 %4238
  %4240 = vrot.lane.b32.xlu0 %v3698, 114
  %v4241 = vpop.permute.xlu0 %4240
  %vm4242 = vcmask 932864
  %v4243 = vsel %vm4242, %v4223, %v4225
  %v4244 = vsel %vm4242, %v4225, %v4227
  %v4245 = vsel %vm4242, %v4227, %v4229
  %v4246 = vsel %vm4242, %v4229, %v4231
  %v4247 = vsel %vm4242, %v4233, %v4235
  %v4248 = vsel %vm4242, %v4235, %v4237
  %v4249 = vsel %vm4242, %v4237, %v4239
  %v4250 = vsel %vm4242, %v4239, %v4241
  %v4259 = vadd.f32 %v4214, %v4243
  %v4260 = vadd.f32 %v4215, %v4244
  %v4261 = vadd.f32 %v4216, %v4245
  %v4262 = vadd.f32 %v4217, %v4246
  %v4263 = vadd.f32 %v4218, %v4247
  %v4264 = vadd.f32 %v4219, %v4248
  %v4265 = vadd.f32 %v4220, %v4249
  %v4266 = vadd.f32 %v4221, %v4250
  %4267 = vrot.lane.b32.xlu0 %v3680, 113
  %v4268 = vpop.permute.xlu0 %4267
  %4269 = vrot.lane.b32.xlu0 %v3682, 113
  %v4270 = vpop.permute.xlu0 %4269
  %4271 = vrot.lane.b32.xlu0 %v3684, 113
  %v4272 = vpop.permute.xlu0 %4271
  %4273 = vrot.lane.b32.xlu0 %v3686, 113
  %v4274 = vpop.permute.xlu0 %4273
  %4275 = vrot.lane.b32.xlu0 %v3688, 113
  %v4276 = vpop.permute.xlu0 %4275
  %4277 = vrot.lane.b32.xlu0 %v3690, 113
  %v4278 = vpop.permute.xlu0 %4277
  %4279 = vrot.lane.b32.xlu0 %v3692, 113
  %v4280 = vpop.permute.xlu0 %4279
  %4281 = vrot.lane.b32.xlu0 %v3694, 113
  %v4282 = vpop.permute.xlu0 %4281
  %4283 = vrot.lane.b32.xlu0 %v3696, 113
  %v4284 = vpop.permute.xlu0 %4283
  %4285 = vrot.lane.b32.xlu0 %v3698, 113
  %v4286 = vpop.permute.xlu0 %4285
  %vm4287 = vcmask 924672
  %v4288 = vsel %vm4287, %v4268, %v4270
  %v4289 = vsel %vm4287, %v4270, %v4272
  %v4290 = vsel %vm4287, %v4272, %v4274
  %v4291 = vsel %vm4287, %v4274, %v4276
  %v4292 = vsel %vm4287, %v4278, %v4280
  %v4293 = vsel %vm4287, %v4280, %v4282
  %v4294 = vsel %vm4287, %v4282, %v4284
  %v4295 = vsel %vm4287, %v4284, %v4286
  %v4304 = vadd.f32 %v4259, %v4288
  %v4305 = vadd.f32 %v4260, %v4289
  %v4306 = vadd.f32 %v4261, %v4290
  %v4307 = vadd.f32 %v4262, %v4291
  %v4308 = vadd.f32 %v4263, %v4292
  %v4309 = vadd.f32 %v4264, %v4293
  %v4310 = vadd.f32 %v4265, %v4294
  %v4311 = vadd.f32 %v4266, %v4295
  %4312 = vrot.lane.b32.xlu0 %v3680, 112
  %v4313 = vpop.permute.xlu0 %4312
  %4314 = vrot.lane.b32.xlu0 %v3682, 112
  %v4315 = vpop.permute.xlu0 %4314
  %4316 = vrot.lane.b32.xlu0 %v3684, 112
  %v4317 = vpop.permute.xlu0 %4316
  %4318 = vrot.lane.b32.xlu0 %v3686, 112
  %v4319 = vpop.permute.xlu0 %4318
  %4320 = vrot.lane.b32.xlu0 %v3688, 112
  %v4321 = vpop.permute.xlu0 %4320
  %4322 = vrot.lane.b32.xlu0 %v3690, 112
  %v4323 = vpop.permute.xlu0 %4322
  %4324 = vrot.lane.b32.xlu0 %v3692, 112
  %v4325 = vpop.permute.xlu0 %4324
  %4326 = vrot.lane.b32.xlu0 %v3694, 112
  %v4327 = vpop.permute.xlu0 %4326
  %4328 = vrot.lane.b32.xlu0 %v3696, 112
  %v4329 = vpop.permute.xlu0 %4328
  %4330 = vrot.lane.b32.xlu0 %v3698, 112
  %v4331 = vpop.permute.xlu0 %4330
  %vm4332 = vcmask 916480
  %v4333 = vsel %vm4332, %v4313, %v4315
  %v4334 = vsel %vm4332, %v4315, %v4317
  %v4335 = vsel %vm4332, %v4317, %v4319
  %v4336 = vsel %vm4332, %v4319, %v4321
  %v4337 = vsel %vm4332, %v4323, %v4325
  %v4338 = vsel %vm4332, %v4325, %v4327
  %v4339 = vsel %vm4332, %v4327, %v4329
  %v4340 = vsel %vm4332, %v4329, %v4331
  %v4349 = vadd.f32 %v4304, %v4333
  %v4350 = vadd.f32 %v4305, %v4334
  %v4351 = vadd.f32 %v4306, %v4335
  %v4352 = vadd.f32 %v4307, %v4336
  %v4353 = vadd.f32 %v4308, %v4337
  %v4354 = vadd.f32 %v4309, %v4338
  %v4355 = vadd.f32 %v4310, %v4339
  %v4356 = vadd.f32 %v4311, %v4340
  %4357 = vrot.lane.b32.xlu0 %v3680, 111
  %v4358 = vpop.permute.xlu0 %4357
  %4359 = vrot.lane.b32.xlu0 %v3682, 111
  %v4360 = vpop.permute.xlu0 %4359
  %4361 = vrot.lane.b32.xlu0 %v3684, 111
  %v4362 = vpop.permute.xlu0 %4361
  %4363 = vrot.lane.b32.xlu0 %v3686, 111
  %v4364 = vpop.permute.xlu0 %4363
  %4365 = vrot.lane.b32.xlu0 %v3688, 111
  %v4366 = vpop.permute.xlu0 %4365
  %4367 = vrot.lane.b32.xlu0 %v3690, 111
  %v4368 = vpop.permute.xlu0 %4367
  %4369 = vrot.lane.b32.xlu0 %v3692, 111
  %v4370 = vpop.permute.xlu0 %4369
  %4371 = vrot.lane.b32.xlu0 %v3694, 111
  %v4372 = vpop.permute.xlu0 %4371
  %4373 = vrot.lane.b32.xlu0 %v3696, 111
  %v4374 = vpop.permute.xlu0 %4373
  %4375 = vrot.lane.b32.xlu0 %v3698, 111
  %v4376 = vpop.permute.xlu0 %4375
  %vm4377 = vcmask 908288
  %v4378 = vsel %vm4377, %v4358, %v4360
  %v4379 = vsel %vm4377, %v4360, %v4362
  %v4380 = vsel %vm4377, %v4362, %v4364
  %v4381 = vsel %vm4377, %v4364, %v4366
  %v4382 = vsel %vm4377, %v4368, %v4370
  %v4383 = vsel %vm4377, %v4370, %v4372
  %v4384 = vsel %vm4377, %v4372, %v4374
  %v4385 = vsel %vm4377, %v4374, %v4376
  %v4394 = vadd.f32 %v4349, %v4378
  %v4395 = vadd.f32 %v4350, %v4379
  %v4396 = vadd.f32 %v4351, %v4380
  %v4397 = vadd.f32 %v4352, %v4381
  %v4398 = vadd.f32 %v4353, %v4382
  %v4399 = vadd.f32 %v4354, %v4383
  %v4400 = vadd.f32 %v4355, %v4384
  %v4401 = vadd.f32 %v4356, %v4385
  %4402 = vrot.lane.b32.xlu0 %v3680, 110
  %v4403 = vpop.permute.xlu0 %4402
  %4404 = vrot.lane.b32.xlu0 %v3682, 110
  %v4405 = vpop.permute.xlu0 %4404
  %4406 = vrot.lane.b32.xlu0 %v3684, 110
  %v4407 = vpop.permute.xlu0 %4406
  %4408 = vrot.lane.b32.xlu0 %v3686, 110
  %v4409 = vpop.permute.xlu0 %4408
  %4410 = vrot.lane.b32.xlu0 %v3688, 110
  %v4411 = vpop.permute.xlu0 %4410
  %4412 = vrot.lane.b32.xlu0 %v3690, 110
  %v4413 = vpop.permute.xlu0 %4412
  %4414 = vrot.lane.b32.xlu0 %v3692, 110
  %v4415 = vpop.permute.xlu0 %4414
  %4416 = vrot.lane.b32.xlu0 %v3694, 110
  %v4417 = vpop.permute.xlu0 %4416
  %4418 = vrot.lane.b32.xlu0 %v3696, 110
  %v4419 = vpop.permute.xlu0 %4418
  %4420 = vrot.lane.b32.xlu0 %v3698, 110
  %v4421 = vpop.permute.xlu0 %4420
  %vm4422 = vcmask 900096
  %v4423 = vsel %vm4422, %v4403, %v4405
  %v4424 = vsel %vm4422, %v4405, %v4407
  %v4425 = vsel %vm4422, %v4407, %v4409
  %v4426 = vsel %vm4422, %v4409, %v4411
  %v4427 = vsel %vm4422, %v4413, %v4415
  %v4428 = vsel %vm4422, %v4415, %v4417
  %v4429 = vsel %vm4422, %v4417, %v4419
  %v4430 = vsel %vm4422, %v4419, %v4421
  %v4439 = vadd.f32 %v4394, %v4423
  %v4440 = vadd.f32 %v4395, %v4424
  %v4441 = vadd.f32 %v4396, %v4425
  %v4442 = vadd.f32 %v4397, %v4426
  %v4443 = vadd.f32 %v4398, %v4427
  %v4444 = vadd.f32 %v4399, %v4428
  %v4445 = vadd.f32 %v4400, %v4429
  %v4446 = vadd.f32 %v4401, %v4430
  %4447 = vrot.lane.b32.xlu0 %v3680, 109
  %v4448 = vpop.permute.xlu0 %4447
  %4449 = vrot.lane.b32.xlu0 %v3682, 109
  %v4450 = vpop.permute.xlu0 %4449
  %4451 = vrot.lane.b32.xlu0 %v3684, 109
  %v4452 = vpop.permute.xlu0 %4451
  %4453 = vrot.lane.b32.xlu0 %v3686, 109
  %v4454 = vpop.permute.xlu0 %4453
  %4455 = vrot.lane.b32.xlu0 %v3688, 109
  %v4456 = vpop.permute.xlu0 %4455
  %4457 = vrot.lane.b32.xlu0 %v3690, 109
  %v4458 = vpop.permute.xlu0 %4457
  %4459 = vrot.lane.b32.xlu0 %v3692, 109
  %v4460 = vpop.permute.xlu0 %4459
  %4461 = vrot.lane.b32.xlu0 %v3694, 109
  %v4462 = vpop.permute.xlu0 %4461
  %4463 = vrot.lane.b32.xlu0 %v3696, 109
  %v4464 = vpop.permute.xlu0 %4463
  %4465 = vrot.lane.b32.xlu0 %v3698, 109
  %v4466 = vpop.permute.xlu0 %4465
  %vm4467 = vcmask 891904
  %v4468 = vsel %vm4467, %v4448, %v4450
  %v4469 = vsel %vm4467, %v4450, %v4452
  %v4470 = vsel %vm4467, %v4452, %v4454
  %v4471 = vsel %vm4467, %v4454, %v4456
  %v4472 = vsel %vm4467, %v4458, %v4460
  %v4473 = vsel %vm4467, %v4460, %v4462
  %v4474 = vsel %vm4467, %v4462, %v4464
  %v4475 = vsel %vm4467, %v4464, %v4466
  %v4484 = vadd.f32 %v4439, %v4468
  %v4485 = vadd.f32 %v4440, %v4469
  %v4486 = vadd.f32 %v4441, %v4470
  %v4487 = vadd.f32 %v4442, %v4471
  %v4488 = vadd.f32 %v4443, %v4472
  %v4489 = vadd.f32 %v4444, %v4473
  %v4490 = vadd.f32 %v4445, %v4474
  %v4491 = vadd.f32 %v4446, %v4475
  %v4492 = vmul.f32 %v4484, 0.05
  %v4493 = vmul.f32 %v4485, 0.05
  %v4494 = vmul.f32 %v4486, 0.05
  %v4495 = vmul.f32 %v4487, 0.05
  %v4496 = vmul.f32 %v4488, 0.05
  %v4497 = vmul.f32 %v4489, 0.05
  %v4498 = vmul.f32 %v4490, 0.05
  %v4499 = vmul.f32 %v4491, 0.05
  %4500 = vst [vmem:[%s13] sm:$0xff] %v4492
  %4501 = vst [vmem:[%s13 + $0x8] sm:$0xff] %v4493
  %4502 = vst [vmem:[%s13 + $0x10] sm:$0xff] %v4494
  %4503 = vst.msk [vmem:[%s13 + $0x18] sm:$0xff] %vm4152, %v4495
  %4504 = vst [vmem:[%s13 + $0x20] sm:$0xff] %v4496
  %4505 = vst [vmem:[%s13 + $0x28] sm:$0xff] %v4497
  %4506 = vst [vmem:[%s13 + $0x30] sm:$0xff] %v4498
  %4507 = vst.msk [vmem:[%s13 + $0x38] sm:$0xff] %vm4152, %v4499
  %v4508 = vld [vmem:[%s0 + $0x8] sm:$0xf]
  %v4509 = vld [vmem:[%s0 + $0xc] sm:$0xf]
  %v4512 = vunpack.c.l.b16 %v4508
  %v4513 = vunpack.c.l.b16 %v4509
  %v4514 = vpack.c.b16 %v4513, %v4512
  %4515 = vrot.lane.b32.xlu0 %v4514, 19
  %v4516 = vpop.permute.xlu0 %4515
  %v4518 = vsel %vm54, 0, %v4516
  %v4519 = vsel %vm58, %v4518, 0
  %4522 = vrot.lane.b32.xlu0 %v4519, 127
  %v4523 = vpop.permute.xlu0 %4522
  %4525 = vrot.lane.b32.xlu0 %v4519, 126
  %v4526 = vpop.permute.xlu0 %4525
  %4528 = vrot.lane.b32.xlu0 %v4519, 125
  %v4529 = vpop.permute.xlu0 %4528
  %4531 = vrot.lane.b32.xlu0 %v4519, 124
  %v4532 = vpop.permute.xlu0 %4531
  %4534 = vrot.lane.b32.xlu0 %v4519, 123
  %v4535 = vpop.permute.xlu0 %4534
  %4537 = vrot.lane.b32.xlu0 %v4519, 122
  %v4538 = vpop.permute.xlu0 %4537
  %4540 = vrot.lane.b32.xlu0 %v4519, 121
  %v4541 = vpop.permute.xlu0 %4540
  %4543 = vrot.lane.b32.xlu0 %v4519, 120
  %v4544 = vpop.permute.xlu0 %4543
  %4546 = vrot.lane.b32.xlu0 %v4519, 119
  %v4547 = vpop.permute.xlu0 %4546
  %4549 = vrot.lane.b32.xlu0 %v4519, 118
  %v4550 = vpop.permute.xlu0 %4549
  %4552 = vrot.lane.b32.xlu0 %v4519, 117
  %v4553 = vpop.permute.xlu0 %4552
  %4555 = vrot.lane.b32.xlu0 %v4519, 116
  %v4556 = vpop.permute.xlu0 %4555
  %4558 = vrot.lane.b32.xlu0 %v4519, 115
  %v4559 = vpop.permute.xlu0 %4558
  %4561 = vrot.lane.b32.xlu0 %v4519, 114
  %v4562 = vpop.permute.xlu0 %4561
  %4564 = vrot.lane.b32.xlu0 %v4519, 113
  %v4565 = vpop.permute.xlu0 %4564
  %4567 = vrot.lane.b32.xlu0 %v4519, 112
  %v4568 = vpop.permute.xlu0 %4567
  %4569 = vrot.lane.b32.xlu0 %v4523, 112
  %v4570 = vpop.permute.xlu0 %4569
  %4571 = vrot.lane.b32.xlu0 %v4526, 112
  %v4572 = vpop.permute.xlu0 %4571
  %4573 = vrot.lane.b32.xlu0 %v4529, 112
  %v4574 = vpop.permute.xlu0 %4573
  %v4579 = vld [vmem:[%s1] sm:$0xff]
  %v4580 = vld [vmem:[%s1 + $0x8] sm:$0xf]
  %v4581 = vld [vmem:[%s1 + $0xc] sm:$0xff]
  %v4582 = vld [vmem:[%s1 + $0x14] sm:$0xf]
  %v4583 = vld [vmem:[%s2] sm:$0xff]
  %v4584 = vld [vmem:[%s2 + $0x8] sm:$0xff]
  %4586 = vset.pattern.permute.xlu0 0
  %4587 = vperm.xlu0 %4586, %v4583
  %v4588 = vpop.permute.xlu0 %4587
  %4591 = vset.pattern.permute.xlu0 0
  %4592 = vperm.xlu0 %4591, %v4584
  %v4593 = vpop.permute.xlu0 %4592
  %v4599 = vunpack.c.l.b16 %v4579
  %v4600 = vunpack.c.h.b16 %v4579
  %v4601 = vunpack.c.l.b16 %v4580
  %v4602 = vunpack.c.l.b16 %v4581
  %v4603 = vunpack.c.h.b16 %v4581
  %v4604 = vunpack.c.l.b16 %v4582
  %v4605 = vpack.c.b16 %v4602, %v4599
  %v4606 = vpack.c.b16 %v4603, %v4600
  %v4607 = vpack.c.b16 %v4604, %v4601
  %v4611 = vsel %vm150, %v4607, 0
  %4613 = vmatprep.subr.bf16.mxu0 0
  %4614 = vmatpush1.bf16.msra.mxu0 %v4519
  %4615 = vmatprep.subr.bf16.mxu0 0
  %4616 = vmatpush1.bf16.msra.mxu0 %v4523
  %4617 = vmatprep.subr.bf16.mxu0 0
  %4618 = vmatpush1.bf16.msra.mxu0 %v4526
  %4619 = vmatprep.subr.bf16.mxu0 0
  %4620 = vmatpush1.bf16.msra.mxu0 %v4529
  %4621 = vmatprep.subr.bf16.mxu0 0
  %4622 = vmatpush1.bf16.msra.mxu0 %v4532
  %4623 = vmatprep.subr.bf16.mxu0 0
  %4624 = vmatpush1.bf16.msra.mxu0 %v4535
  %4625 = vmatprep.subr.bf16.mxu0 0
  %4626 = vmatpush1.bf16.msra.mxu0 %v4538
  %4627 = vmatprep.subr.bf16.mxu0 0
  %4628 = vmatpush1.bf16.msra.mxu0 %v4541
  %4629 = vmatprep.subr.bf16.mxu0 0
  %4630 = vmatpush1.bf16.msra.mxu0 %v4544
  %4631 = vmatprep.subr.bf16.mxu0 0
  %4632 = vmatpush1.bf16.msra.mxu0 %v4547
  %4633 = vmatprep.subr.bf16.mxu0 0
  %4634 = vmatpush1.bf16.msra.mxu0 %v4550
  %4635 = vmatprep.subr.bf16.mxu0 0
  %4636 = vmatpush1.bf16.msra.mxu0 %v4553
  %4637 = vmatprep.subr.bf16.mxu0 0
  %4638 = vmatpush1.bf16.msra.mxu0 %v4556
  %4639 = vmatprep.subr.bf16.mxu0 0
  %4640 = vmatpush1.bf16.msra.mxu0 %v4559
  %4641 = vmatprep.subr.bf16.mxu0 0
  %4642 = vmatpush1.bf16.msra.mxu0 %v4562
  %4643 = vmatprep.subr.bf16.mxu0 0
  %4644 = vmatpush1.bf16.msra.mxu0 %v4565
  %4645 = vmatprep.mubr.bf16.mxu0 %v4606
  %4646 = vmatmul.mubr.bf16.gmra.mrb[0].mxu0 %v4605
  %v4647 = vpop.f32.mrb[0].mxu0
  %v4648 = vadd.f32 %v4588, %v4647
  %v4649 = vpop.f32.mrb[0].mxu0
  %v4650 = vpop.f32.mrb[0].mxu0
  %v4651 = vadd.f32 %v4593, %v4650
  %v4652 = vpop.f32.mrb[0].mxu0
  %4653 = vdwg.mxu0
  %4654 = vmatprep.subr.bf16.mxu0 0
  %4655 = vmatpush1.bf16.msra.mxu0 %v4568
  %4656 = vmatprep.subr.bf16.mxu0 0
  %4657 = vmatpush1.bf16.msra.mxu0 %v4570
  %4658 = vmatprep.subr.bf16.mxu0 0
  %4659 = vmatpush1.bf16.msra.mxu0 %v4572
  %4660 = vmatprep.subr.bf16.mxu0 0
  %4661 = vmatpush1.bf16.msra.mxu0 %v4574
  %4662 = vmatprep.subr.bf16.mxu0 0
  %4663 = vmatpush1.bf16.msra.mxu0 0
  %4664 = vmatprep.subr.bf16.mxu0 0
  %4665 = vmatpush1.bf16.msra.mxu0 0
  %4666 = vmatprep.subr.bf16.mxu0 0
  %4667 = vmatpush1.bf16.msra.mxu0 0
  %4668 = vmatprep.subr.bf16.mxu0 0
  %4669 = vmatpush1.bf16.msra.mxu0 0
  %4670 = vmatprep.subr.bf16.mxu0 0
  %4671 = vmatpush1.bf16.msra.mxu0 0
  %4672 = vmatprep.subr.bf16.mxu0 0
  %4673 = vmatpush1.bf16.msra.mxu0 0
  %4674 = vmatprep.subr.bf16.mxu0 0
  %4675 = vmatpush1.bf16.msra.mxu0 0
  %4676 = vmatprep.subr.bf16.mxu0 0
  %4677 = vmatpush1.bf16.msra.mxu0 0
  %4678 = vmatprep.subr.bf16.mxu0 0
  %4679 = vmatpush1.bf16.msra.mxu0 0
  %4680 = vmatprep.subr.bf16.mxu0 0
  %4681 = vmatpush1.bf16.msra.mxu0 0
  %4682 = vmatprep.subr.bf16.mxu0 0
  %4683 = vmatpush1.bf16.msra.mxu0 0
  %4684 = vmatprep.subr.bf16.mxu0 0
  %4685 = vmatpush1.bf16.msra.mxu0 0
  %4686 = vmatprep.mubr.bf16.mxu0 0
  %4687 = vmatmul.mubr.bf16.gmra.mrb[0].mxu0 %v4611
  %v4688 = vpop.f32.mrb[0].mxu0
  %v4689 = vadd.f32 %v4648, %v4688
  %v4690 = vpop.f32.mrb[0].mxu0
  %v4691 = vpop.f32.mrb[0].mxu0
  %v4692 = vadd.f32 %v4651, %v4691
  %v4693 = vpop.f32.mrb[0].mxu0
  %4694 = vdwg.mxu0
  %vm4695 = vcmp.gt.f32.partialorder %v4689, 0.0
  %vm4696 = vcmp.gt.f32.partialorder %v4692, 0.0
  %v4697 = vmul.f32 %v4689, 0.25
  %v4698 = vmul.f32 %v4692, 0.25
  %v4699 = vsel %vm4695, %v4689, %v4697
  %v4700 = vsel %vm4696, %v4692, %v4698
  %v4701 = vpack.c.bf16 %v4700, %v4699
  %v4702 = vld [vmem:[%s5] sm:$0xff]
  %v4703 = vld [vmem:[%s5 + $0x8] sm:$0xff]
  %v4704 = vld [vmem:[%s5 + $0x10] sm:$0xff]
  %v4705 = vld [vmem:[%s5 + $0x18] sm:$0xff]
  %v4706 = vld [vmem:[%s5 + $0x20] sm:$0xff]
  %v4707 = vld [vmem:[%s5 + $0x28] sm:$0xff]
  %v4708 = vld [vmem:[%s5 + $0x30] sm:$0xff]
  %v4709 = vld [vmem:[%s5 + $0x38] sm:$0xff]
  %v4710 = vld [vmem:[%s5 + $0x40] sm:$0xff]
  %v4711 = vld [vmem:[%s5 + $0x48] sm:$0xff]
  %v4712 = vld [vmem:[%s5 + $0x50] sm:$0x33]
  %v4724 = vunpack.c.l.b16 %v4702
  %v4725 = vunpack.c.h.b16 %v4702
  %v4726 = vunpack.c.l.b16 %v4703
  %v4727 = vunpack.c.h.b16 %v4703
  %v4728 = vunpack.c.l.b16 %v4704
  %v4729 = vunpack.c.h.b16 %v4704
  %v4730 = vunpack.c.l.b16 %v4705
  %v4731 = vunpack.c.h.b16 %v4705
  %v4732 = vunpack.c.l.b16 %v4706
  %v4733 = vunpack.c.h.b16 %v4706
  %v4734 = vunpack.c.l.b16 %v4707
  %v4735 = vunpack.c.h.b16 %v4707
  %v4736 = vunpack.c.l.b16 %v4708
  %v4737 = vunpack.c.h.b16 %v4708
  %v4738 = vunpack.c.l.b16 %v4709
  %v4739 = vunpack.c.h.b16 %v4709
  %v4740 = vunpack.c.l.b16 %v4710
  %v4741 = vunpack.c.h.b16 %v4710
  %v4742 = vunpack.c.l.b16 %v4711
  %v4743 = vunpack.c.h.b16 %v4711
  %v4744 = vunpack.c.l.b16 %v4712
  %v4745 = vunpack.c.h.b16 %v4712
  %v4746 = vpack.c.b16 %v4726, %v4724
  %v4747 = vpack.c.b16 %v4727, %v4725
  %v4748 = vpack.c.b16 %v4730, %v4728
  %v4749 = vpack.c.b16 %v4731, %v4729
  %v4750 = vpack.c.b16 %v4734, %v4732
  %v4751 = vpack.c.b16 %v4735, %v4733
  %v4752 = vpack.c.b16 %v4738, %v4736
  %v4753 = vpack.c.b16 %v4739, %v4737
  %v4754 = vpack.c.b16 %v4742, %v4740
  %v4755 = vpack.c.b16 %v4743, %v4741
  %v4756 = vpack.c.b16 %v4744, %v4744
  %v4757 = vpack.c.b16 %v4745, %v4745
  %v4769 = vsel %vm58, %v4701, 0
  %v4772 = vand.u32 %v4756, %v315
  %v4775 = vand.u32 %v4757, %v315
  %4777 = vmatprep.subr.bf16.mxu0 %v4747
  %4778 = vmatpush1.bf16.msra.mxu0 %v4746
  %4779 = vmatprep.subr.bf16.mxu0 %v4749
  %4780 = vmatpush1.bf16.msra.mxu0 %v4748
  %4781 = vmatprep.subr.bf16.mxu0 %v4751
  %4782 = vmatpush1.bf16.msra.mxu0 %v4750
  %4783 = vmatprep.subr.bf16.mxu0 %v4753
  %4784 = vmatpush1.bf16.msra.mxu0 %v4752
  %4785 = vmatprep.subr.bf16.mxu0 %v4755
  %4786 = vmatpush1.bf16.msra.mxu0 %v4754
  %4787 = vmatprep.subr.bf16.mxu0 %v4775
  %4788 = vmatpush1.bf16.msra.mxu0 %v4772
  %4789 = vmatprep.subr.bf16.mxu0 0
  %4790 = vmatpush1.bf16.msra.mxu0 0
  %4791 = vmatprep.subr.bf16.mxu0 0
  %4792 = vmatpush1.bf16.msra.mxu0 0
  %4793 = vmatprep.subr.bf16.mxu0 0
  %4794 = vmatpush1.bf16.msra.mxu0 0
  %4795 = vmatprep.subr.bf16.mxu0 0
  %4796 = vmatpush1.bf16.msra.mxu0 0
  %4797 = vmatprep.subr.bf16.mxu0 0
  %4798 = vmatpush1.bf16.msra.mxu0 0
  %4799 = vmatprep.subr.bf16.mxu0 0
  %4800 = vmatpush1.bf16.msra.mxu0 0
  %4801 = vmatprep.subr.bf16.mxu0 0
  %4802 = vmatpush1.bf16.msra.mxu0 0
  %4803 = vmatprep.subr.bf16.mxu0 0
  %4804 = vmatpush1.bf16.msra.mxu0 0
  %4805 = vmatprep.subr.bf16.mxu0 0
  %4806 = vmatpush1.bf16.msra.mxu0 0
  %4807 = vmatprep.subr.bf16.mxu0 0
  %4808 = vmatpush1.bf16.msra.mxu0 0
  %4809 = vmatprep.mubr.bf16.mxu0 0
  %4810 = vmatmul.mubr.bf16.gmra.mrb[0].mxu0 %v4769
  %v4811 = vpop.f32.mrb[0].mxu0
  %v4812 = vadd.f32 0.0, %v4811
  %v4813 = vpop.f32.mrb[0].mxu0
  %v4814 = vadd.f32 0.0, %v4813
  %v4815 = vpop.f32.mrb[0].mxu0
  %v4816 = vadd.f32 0.0, %v4815
  %v4817 = vpop.f32.mrb[0].mxu0
  %v4818 = vadd.f32 0.0, %v4817
  %4819 = vdwg.mxu0
  %v4820 = vpack.c.bf16 %v4816, %v4812
  %v4821 = vpack.c.bf16 %v4818, %v4814
  %4824 = vrot.lane.b32.xlu0 %v4820, 127
  %v4825 = vpop.permute.xlu0 %4824
  %4826 = vrot.lane.b32.xlu0 %v4821, 127
  %v4827 = vpop.permute.xlu0 %4826
  %v4828 = vsel %vm373, %v4825, %v4827
  %4831 = vrot.lane.b32.xlu0 %v4820, 126
  %v4832 = vpop.permute.xlu0 %4831
  %4833 = vrot.lane.b32.xlu0 %v4821, 126
  %v4834 = vpop.permute.xlu0 %4833
  %v4835 = vsel %vm381, %v4832, %v4834
  %4838 = vrot.lane.b32.xlu0 %v4820, 125
  %v4839 = vpop.permute.xlu0 %4838
  %4840 = vrot.lane.b32.xlu0 %v4821, 125
  %v4841 = vpop.permute.xlu0 %4840
  %v4842 = vsel %vm389, %v4839, %v4841
  %4845 = vrot.lane.b32.xlu0 %v4820, 124
  %v4846 = vpop.permute.xlu0 %4845
  %4847 = vrot.lane.b32.xlu0 %v4821, 124
  %v4848 = vpop.permute.xlu0 %4847
  %v4849 = vsel %vm397, %v4846, %v4848
  %4852 = vrot.lane.b32.xlu0 %v4820, 123
  %v4853 = vpop.permute.xlu0 %4852
  %4854 = vrot.lane.b32.xlu0 %v4821, 123
  %v4855 = vpop.permute.xlu0 %4854
  %v4856 = vsel %vm405, %v4853, %v4855
  %4859 = vrot.lane.b32.xlu0 %v4820, 122
  %v4860 = vpop.permute.xlu0 %4859
  %4861 = vrot.lane.b32.xlu0 %v4821, 122
  %v4862 = vpop.permute.xlu0 %4861
  %v4863 = vsel %vm413, %v4860, %v4862
  %4866 = vrot.lane.b32.xlu0 %v4820, 121
  %v4867 = vpop.permute.xlu0 %4866
  %4868 = vrot.lane.b32.xlu0 %v4821, 121
  %v4869 = vpop.permute.xlu0 %4868
  %v4870 = vsel %vm421, %v4867, %v4869
  %4873 = vrot.lane.b32.xlu0 %v4820, 120
  %v4874 = vpop.permute.xlu0 %4873
  %4875 = vrot.lane.b32.xlu0 %v4821, 120
  %v4876 = vpop.permute.xlu0 %4875
  %v4877 = vsel %vm429, %v4874, %v4876
  %4880 = vrot.lane.b32.xlu0 %v4820, 119
  %v4881 = vpop.permute.xlu0 %4880
  %4882 = vrot.lane.b32.xlu0 %v4821, 119
  %v4883 = vpop.permute.xlu0 %4882
  %v4884 = vsel %vm437, %v4881, %v4883
  %4887 = vrot.lane.b32.xlu0 %v4820, 118
  %v4888 = vpop.permute.xlu0 %4887
  %4889 = vrot.lane.b32.xlu0 %v4821, 118
  %v4890 = vpop.permute.xlu0 %4889
  %v4891 = vsel %vm445, %v4888, %v4890
  %4894 = vrot.lane.b32.xlu0 %v4820, 117
  %v4895 = vpop.permute.xlu0 %4894
  %4896 = vrot.lane.b32.xlu0 %v4821, 117
  %v4897 = vpop.permute.xlu0 %4896
  %v4898 = vsel %vm453, %v4895, %v4897
  %4901 = vrot.lane.b32.xlu0 %v4820, 116
  %v4902 = vpop.permute.xlu0 %4901
  %4903 = vrot.lane.b32.xlu0 %v4821, 116
  %v4904 = vpop.permute.xlu0 %4903
  %v4905 = vsel %vm461, %v4902, %v4904
  %4908 = vrot.lane.b32.xlu0 %v4820, 115
  %v4909 = vpop.permute.xlu0 %4908
  %4910 = vrot.lane.b32.xlu0 %v4821, 115
  %v4911 = vpop.permute.xlu0 %4910
  %v4912 = vsel %vm469, %v4909, %v4911
  %4915 = vrot.lane.b32.xlu0 %v4820, 114
  %v4916 = vpop.permute.xlu0 %4915
  %4917 = vrot.lane.b32.xlu0 %v4821, 114
  %v4918 = vpop.permute.xlu0 %4917
  %v4919 = vsel %vm477, %v4916, %v4918
  %4922 = vrot.lane.b32.xlu0 %v4820, 113
  %v4923 = vpop.permute.xlu0 %4922
  %4924 = vrot.lane.b32.xlu0 %v4821, 113
  %v4925 = vpop.permute.xlu0 %4924
  %v4926 = vsel %vm485, %v4923, %v4925
  %4929 = vrot.lane.b32.xlu0 %v4820, 112
  %v4930 = vpop.permute.xlu0 %4929
  %4931 = vrot.lane.b32.xlu0 %v4821, 112
  %v4932 = vpop.permute.xlu0 %4931
  %4933 = vrot.lane.b32.xlu0 %v4828, 112
  %v4934 = vpop.permute.xlu0 %4933
  %4935 = vrot.lane.b32.xlu0 %v4827, 112
  %v4936 = vpop.permute.xlu0 %4935
  %4937 = vrot.lane.b32.xlu0 %v4835, 112
  %v4938 = vpop.permute.xlu0 %4937
  %4939 = vrot.lane.b32.xlu0 %v4834, 112
  %v4940 = vpop.permute.xlu0 %4939
  %4941 = vrot.lane.b32.xlu0 %v4842, 112
  %v4942 = vpop.permute.xlu0 %4941
  %4943 = vrot.lane.b32.xlu0 %v4841, 112
  %v4944 = vpop.permute.xlu0 %4943
  %v4945 = vsel %vm505, %v4930, %v4932
  %v4946 = vsel %vm505, %v4934, %v4936
  %v4947 = vsel %vm505, %v4938, %v4940
  %v4948 = vsel %vm505, %v4942, %v4944
  %v4957 = vld [vmem:[%s3] sm:$0xff]
  %v4958 = vld [vmem:[%s3 + $0x8] sm:$0xf]
  %v4959 = vld [vmem:[%s3 + $0xc] sm:$0xff]
  %v4960 = vld [vmem:[%s3 + $0x14] sm:$0xf]
  %v4961 = vld [vmem:[%s4] sm:$0xff]
  %v4962 = vld [vmem:[%s4 + $0x8] sm:$0xff]
  %4964 = vset.pattern.permute.xlu0 0
  %4965 = vperm.xlu0 %4964, %v4961
  %v4966 = vpop.permute.xlu0 %4965
  %4969 = vset.pattern.permute.xlu0 0
  %4970 = vperm.xlu0 %4969, %v4962
  %v4971 = vpop.permute.xlu0 %4970
  %v4977 = vunpack.c.l.b16 %v4957
  %v4978 = vunpack.c.h.b16 %v4957
  %v4979 = vunpack.c.l.b16 %v4958
  %v4980 = vunpack.c.l.b16 %v4959
  %v4981 = vunpack.c.h.b16 %v4959
  %v4982 = vunpack.c.l.b16 %v4960
  %v4983 = vpack.c.b16 %v4980, %v4977
  %v4984 = vpack.c.b16 %v4981, %v4978
  %v4985 = vpack.c.b16 %v4982, %v4979
  %v4989 = vsel %vm150, %v4985, 0
  %4991 = vmatprep.subr.bf16.mxu0 %v4821
  %4992 = vmatpush1.bf16.msra.mxu0 %v4820
  %4993 = vmatprep.subr.bf16.mxu0 %v4827
  %4994 = vmatpush1.bf16.msra.mxu0 %v4828
  %4995 = vmatprep.subr.bf16.mxu0 %v4834
  %4996 = vmatpush1.bf16.msra.mxu0 %v4835
  %4997 = vmatprep.subr.bf16.mxu0 %v4841
  %4998 = vmatpush1.bf16.msra.mxu0 %v4842
  %4999 = vmatprep.subr.bf16.mxu0 %v4848
  %5000 = vmatpush1.bf16.msra.mxu0 %v4849
  %5001 = vmatprep.subr.bf16.mxu0 %v4855
  %5002 = vmatpush1.bf16.msra.mxu0 %v4856
  %5003 = vmatprep.subr.bf16.mxu0 %v4862
  %5004 = vmatpush1.bf16.msra.mxu0 %v4863
  %5005 = vmatprep.subr.bf16.mxu0 %v4869
  %5006 = vmatpush1.bf16.msra.mxu0 %v4870
  %5007 = vmatprep.subr.bf16.mxu0 %v4876
  %5008 = vmatpush1.bf16.msra.mxu0 %v4877
  %5009 = vmatprep.subr.bf16.mxu0 %v4883
  %5010 = vmatpush1.bf16.msra.mxu0 %v4884
  %5011 = vmatprep.subr.bf16.mxu0 %v4890
  %5012 = vmatpush1.bf16.msra.mxu0 %v4891
  %5013 = vmatprep.subr.bf16.mxu0 %v4897
  %5014 = vmatpush1.bf16.msra.mxu0 %v4898
  %5015 = vmatprep.subr.bf16.mxu0 %v4904
  %5016 = vmatpush1.bf16.msra.mxu0 %v4905
  %5017 = vmatprep.subr.bf16.mxu0 %v4911
  %5018 = vmatpush1.bf16.msra.mxu0 %v4912
  %5019 = vmatprep.subr.bf16.mxu0 %v4918
  %5020 = vmatpush1.bf16.msra.mxu0 %v4919
  %5021 = vmatprep.subr.bf16.mxu0 %v4925
  %5022 = vmatpush1.bf16.msra.mxu0 %v4926
  %5023 = vmatprep.mubr.bf16.mxu0 %v4984
  %5024 = vmatmul.mubr.bf16.gmra.mrb[0].mxu0 %v4983
  %v5025 = vpop.f32.mrb[0].mxu0
  %v5026 = vadd.f32 %v4966, %v5025
  %v5027 = vpop.f32.mrb[0].mxu0
  %v5028 = vadd.f32 %v4966, %v5027
  %v5029 = vpop.f32.mrb[0].mxu0
  %v5030 = vadd.f32 %v4971, %v5029
  %v5031 = vpop.f32.mrb[0].mxu0
  %v5032 = vadd.f32 %v4971, %v5031
  %5033 = vdwg.mxu0
  %5034 = vmatprep.subr.bf16.mxu0 %v4932
  %5035 = vmatpush1.bf16.msra.mxu0 %v4945
  %5036 = vmatprep.subr.bf16.mxu0 %v4936
  %5037 = vmatpush1.bf16.msra.mxu0 %v4946
  %5038 = vmatprep.subr.bf16.mxu0 %v4940
  %5039 = vmatpush1.bf16.msra.mxu0 %v4947
  %5040 = vmatprep.subr.bf16.mxu0 %v4944
  %5041 = vmatpush1.bf16.msra.mxu0 %v4948
  %5042 = vmatprep.subr.bf16.mxu0 0
  %5043 = vmatpush1.bf16.msra.mxu0 0
  %5044 = vmatprep.subr.bf16.mxu0 0
  %5045 = vmatpush1.bf16.msra.mxu0 0
  %5046 = vmatprep.subr.bf16.mxu0 0
  %5047 = vmatpush1.bf16.msra.mxu0 0
  %5048 = vmatprep.subr.bf16.mxu0 0
  %5049 = vmatpush1.bf16.msra.mxu0 0
  %5050 = vmatprep.subr.bf16.mxu0 0
  %5051 = vmatpush1.bf16.msra.mxu0 0
  %5052 = vmatprep.subr.bf16.mxu0 0
  %5053 = vmatpush1.bf16.msra.mxu0 0
  %5054 = vmatprep.subr.bf16.mxu0 0
  %5055 = vmatpush1.bf16.msra.mxu0 0
  %5056 = vmatprep.subr.bf16.mxu0 0
  %5057 = vmatpush1.bf16.msra.mxu0 0
  %5058 = vmatprep.subr.bf16.mxu0 0
  %5059 = vmatpush1.bf16.msra.mxu0 0
  %5060 = vmatprep.subr.bf16.mxu0 0
  %5061 = vmatpush1.bf16.msra.mxu0 0
  %5062 = vmatprep.subr.bf16.mxu0 0
  %5063 = vmatpush1.bf16.msra.mxu0 0
  %5064 = vmatprep.subr.bf16.mxu0 0
  %5065 = vmatpush1.bf16.msra.mxu0 0
  %5066 = vmatprep.mubr.bf16.mxu0 0
  %5067 = vmatmul.mubr.bf16.gmra.mrb[0].mxu0 %v4989
  %v5068 = vpop.f32.mrb[0].mxu0
  %v5069 = vadd.f32 %v5026, %v5068
  %v5070 = vpop.f32.mrb[0].mxu0
  %v5071 = vadd.f32 %v5028, %v5070
  %v5072 = vpop.f32.mrb[0].mxu0
  %v5073 = vadd.f32 %v5030, %v5072
  %v5074 = vpop.f32.mrb[0].mxu0
  %v5075 = vadd.f32 %v5032, %v5074
  %5076 = vdwg.mxu0
  %vm5077 = vcmp.gt.f32.partialorder %v5069, 0.0
  %vm5078 = vcmp.gt.f32.partialorder %v5071, 0.0
  %vm5079 = vcmp.gt.f32.partialorder %v5073, 0.0
  %vm5080 = vcmp.gt.f32.partialorder %v5075, 0.0
  %v5081 = vmul.f32 %v5069, 0.25
  %v5082 = vmul.f32 %v5071, 0.25
  %v5083 = vmul.f32 %v5073, 0.25
  %v5084 = vmul.f32 %v5075, 0.25
  %v5085 = vsel %vm5077, %v5069, %v5081
  %v5086 = vsel %vm5078, %v5071, %v5082
  %v5087 = vsel %vm5079, %v5073, %v5083
  %v5088 = vsel %vm5080, %v5075, %v5084
  %v5089 = vpack.c.bf16 %v5087, %v5085
  %v5090 = vpack.c.bf16 %v5088, %v5086
  %v5091 = vld [vmem:[%s8] sm:$0xff]
  %v5092 = vld [vmem:[%s8 + $0x8] sm:$0xff]
  %v5093 = vld [vmem:[%s8 + $0x10] sm:$0xff]
  %v5094 = vld [vmem:[%s8 + $0x18] sm:$0xff]
  %v5095 = vld [vmem:[%s8 + $0x20] sm:$0xff]
  %v5096 = vld [vmem:[%s8 + $0x28] sm:$0xff]
  %v5097 = vld [vmem:[%s8 + $0x30] sm:$0xff]
  %v5098 = vld [vmem:[%s8 + $0x38] sm:$0xff]
  %v5099 = vld [vmem:[%s8 + $0x40] sm:$0xff]
  %v5100 = vld [vmem:[%s8 + $0x48] sm:$0xff]
  %v5101 = vld [vmem:[%s8 + $0x50] sm:$0xff]
  %v5102 = vld [vmem:[%s8 + $0x58] sm:$0xff]
  %v5103 = vld [vmem:[%s8 + $0x60] sm:$0xff]
  %v5104 = vld [vmem:[%s8 + $0x68] sm:$0xff]
  %v5105 = vld [vmem:[%s8 + $0x70] sm:$0xff]
  %v5106 = vld [vmem:[%s8 + $0x78] sm:$0xff]
  %v5107 = vld [vmem:[%s8 + $0x80] sm:$0xff]
  %v5108 = vld [vmem:[%s8 + $0x88] sm:$0xff]
  %v5109 = vld [vmem:[%s8 + $0x90] sm:$0xff]
  %v5110 = vld [vmem:[%s8 + $0x98] sm:$0xff]
  %v5111 = vld [vmem:[%s8 + $0xa0] sm:$0xff]
  %v5112 = vld [vmem:[%s8 + $0xa8] sm:$0xff]
  %v5113 = vld [vmem:[%s8 + $0xb0] sm:$0xff]
  %v5114 = vld [vmem:[%s8 + $0xb8] sm:$0xff]
  %v5115 = vld [vmem:[%s8 + $0xc0] sm:$0xff]
  %v5116 = vld [vmem:[%s8 + $0xc8] sm:$0xff]
  %v5117 = vld [vmem:[%s8 + $0xd0] sm:$0xff]
  %v5118 = vld [vmem:[%s8 + $0xd8] sm:$0xff]
  %v5119 = vld [vmem:[%s8 + $0xe0] sm:$0xff]
  %v5120 = vld [vmem:[%s8 + $0xe8] sm:$0xff]
  %v5121 = vld [vmem:[%s8 + $0xf0] sm:$0xff]
  %v5122 = vld [vmem:[%s8 + $0xf8] sm:$0xff]
  %v5123 = vld [vmem:[%s8 + $0x100] sm:$0xff]
  %v5124 = vld [vmem:[%s8 + $0x108] sm:$0xff]
  %v5125 = vld [vmem:[%s8 + $0x110] sm:$0xff]
  %v5126 = vld [vmem:[%s8 + $0x118] sm:$0xff]
  %v5127 = vld [vmem:[%s8 + $0x120] sm:$0xff]
  %v5128 = vld [vmem:[%s8 + $0x128] sm:$0xff]
  %v5129 = vld [vmem:[%s8 + $0x130] sm:$0xff]
  %v5130 = vld [vmem:[%s8 + $0x138] sm:$0xff]
  %v5131 = vld [vmem:[%s8 + $0x140] sm:$0xff]
  %v5132 = vld [vmem:[%s8 + $0x148] sm:$0xff]
  %v5133 = vld [vmem:[%s8 + $0x150] sm:$0xff]
  %v5134 = vld [vmem:[%s8 + $0x158] sm:$0xff]
  %v5135 = vld [vmem:[%s8 + $0x160] sm:$0xff]
  %v5136 = vld [vmem:[%s8 + $0x168] sm:$0xff]
  %v5183 = vunpack.c.l.b16 %v5091
  %v5184 = vunpack.c.h.b16 %v5091
  %v5185 = vunpack.c.l.b16 %v5092
  %v5186 = vunpack.c.h.b16 %v5092
  %v5187 = vunpack.c.l.b16 %v5093
  %v5188 = vunpack.c.h.b16 %v5093
  %v5189 = vunpack.c.l.b16 %v5094
  %v5190 = vunpack.c.h.b16 %v5094
  %v5191 = vunpack.c.l.b16 %v5095
  %v5192 = vunpack.c.h.b16 %v5095
  %v5193 = vunpack.c.l.b16 %v5096
  %v5194 = vunpack.c.h.b16 %v5096
  %v5195 = vunpack.c.l.b16 %v5097
  %v5196 = vunpack.c.h.b16 %v5097
  %v5197 = vunpack.c.l.b16 %v5098
  %v5198 = vunpack.c.h.b16 %v5098
  %v5199 = vunpack.c.l.b16 %v5099
  %v5200 = vunpack.c.h.b16 %v5099
  %v5201 = vunpack.c.l.b16 %v5100
  %v5202 = vunpack.c.h.b16 %v5100
  %v5203 = vunpack.c.l.b16 %v5101
  %v5204 = vunpack.c.h.b16 %v5101
  %v5205 = vunpack.c.l.b16 %v5102
  %v5206 = vunpack.c.h.b16 %v5102
  %v5207 = vunpack.c.l.b16 %v5103
  %v5208 = vunpack.c.h.b16 %v5103
  %v5209 = vunpack.c.l.b16 %v5104
  %v5210 = vunpack.c.h.b16 %v5104
  %v5211 = vunpack.c.l.b16 %v5105
  %v5212 = vunpack.c.h.b16 %v5105
  %v5213 = vunpack.c.l.b16 %v5106
  %v5214 = vunpack.c.h.b16 %v5106
  %v5215 = vunpack.c.l.b16 %v5107
  %v5216 = vunpack.c.h.b16 %v5107
  %v5217 = vunpack.c.l.b16 %v5108
  %v5218 = vunpack.c.h.b16 %v5108
  %v5219 = vunpack.c.l.b16 %v5109
  %v5220 = vunpack.c.h.b16 %v5109
  %v5221 = vunpack.c.l.b16 %v5110
  %v5222 = vunpack.c.h.b16 %v5110
  %v5223 = vunpack.c.l.b16 %v5111
  %v5224 = vunpack.c.h.b16 %v5111
  %v5225 = vunpack.c.l.b16 %v5112
  %v5226 = vunpack.c.h.b16 %v5112
  %v5227 = vunpack.c.l.b16 %v5113
  %v5228 = vunpack.c.h.b16 %v5113
  %v5229 = vunpack.c.l.b16 %v5114
  %v5230 = vunpack.c.h.b16 %v5114
  %v5231 = vunpack.c.l.b16 %v5115
  %v5232 = vunpack.c.h.b16 %v5115
  %v5233 = vunpack.c.l.b16 %v5116
  %v5234 = vunpack.c.h.b16 %v5116
  %v5235 = vunpack.c.l.b16 %v5117
  %v5236 = vunpack.c.h.b16 %v5117
  %v5237 = vunpack.c.l.b16 %v5118
  %v5238 = vunpack.c.h.b16 %v5118
  %v5239 = vunpack.c.l.b16 %v5119
  %v5240 = vunpack.c.h.b16 %v5119
  %v5241 = vunpack.c.l.b16 %v5120
  %v5242 = vunpack.c.h.b16 %v5120
  %v5243 = vunpack.c.l.b16 %v5121
  %v5244 = vunpack.c.h.b16 %v5121
  %v5245 = vunpack.c.l.b16 %v5122
  %v5246 = vunpack.c.h.b16 %v5122
  %v5247 = vunpack.c.l.b16 %v5123
  %v5248 = vunpack.c.h.b16 %v5123
  %v5249 = vunpack.c.l.b16 %v5124
  %v5250 = vunpack.c.h.b16 %v5124
  %v5251 = vunpack.c.l.b16 %v5125
  %v5252 = vunpack.c.h.b16 %v5125
  %v5253 = vunpack.c.l.b16 %v5126
  %v5254 = vunpack.c.h.b16 %v5126
  %v5255 = vunpack.c.l.b16 %v5127
  %v5256 = vunpack.c.h.b16 %v5127
  %v5257 = vunpack.c.l.b16 %v5128
  %v5258 = vunpack.c.h.b16 %v5128
  %v5259 = vunpack.c.l.b16 %v5129
  %v5260 = vunpack.c.h.b16 %v5129
  %v5261 = vunpack.c.l.b16 %v5130
  %v5262 = vunpack.c.h.b16 %v5130
  %v5263 = vunpack.c.l.b16 %v5131
  %v5264 = vunpack.c.h.b16 %v5131
  %v5265 = vunpack.c.l.b16 %v5132
  %v5266 = vunpack.c.h.b16 %v5132
  %v5267 = vunpack.c.l.b16 %v5133
  %v5268 = vunpack.c.h.b16 %v5133
  %v5269 = vunpack.c.l.b16 %v5134
  %v5270 = vunpack.c.h.b16 %v5134
  %v5271 = vunpack.c.l.b16 %v5135
  %v5272 = vunpack.c.h.b16 %v5135
  %v5273 = vunpack.c.l.b16 %v5136
  %v5274 = vunpack.c.h.b16 %v5136
  %v5275 = vpack.c.b16 %v5187, %v5183
  %v5276 = vpack.c.b16 %v5188, %v5184
  %v5277 = vpack.c.b16 %v5189, %v5185
  %v5278 = vpack.c.b16 %v5190, %v5186
  %v5279 = vpack.c.b16 %v5195, %v5191
  %v5280 = vpack.c.b16 %v5196, %v5192
  %v5281 = vpack.c.b16 %v5197, %v5193
  %v5282 = vpack.c.b16 %v5198, %v5194
  %v5283 = vpack.c.b16 %v5203, %v5199
  %v5284 = vpack.c.b16 %v5204, %v5200
  %v5285 = vpack.c.b16 %v5205, %v5201
  %v5286 = vpack.c.b16 %v5206, %v5202
  %v5287 = vpack.c.b16 %v5211, %v5207
  %v5288 = vpack.c.b16 %v5212, %v5208
  %v5289 = vpack.c.b16 %v5213, %v5209
  %v5290 = vpack.c.b16 %v5214, %v5210
  %v5291 = vpack.c.b16 %v5219, %v5215
  %v5292 = vpack.c.b16 %v5220, %v5216
  %v5293 = vpack.c.b16 %v5221, %v5217
  %v5294 = vpack.c.b16 %v5222, %v5218
  %v5295 = vpack.c.b16 %v5227, %v5223
  %v5296 = vpack.c.b16 %v5228, %v5224
  %v5297 = vpack.c.b16 %v5229, %v5225
  %v5298 = vpack.c.b16 %v5230, %v5226
  %v5299 = vpack.c.b16 %v5235, %v5231
  %v5300 = vpack.c.b16 %v5236, %v5232
  %v5301 = vpack.c.b16 %v5237, %v5233
  %v5302 = vpack.c.b16 %v5238, %v5234
  %v5303 = vpack.c.b16 %v5243, %v5239
  %v5304 = vpack.c.b16 %v5244, %v5240
  %v5305 = vpack.c.b16 %v5245, %v5241
  %v5306 = vpack.c.b16 %v5246, %v5242
  %v5307 = vpack.c.b16 %v5251, %v5247
  %v5308 = vpack.c.b16 %v5252, %v5248
  %v5309 = vpack.c.b16 %v5253, %v5249
  %v5310 = vpack.c.b16 %v5254, %v5250
  %v5311 = vpack.c.b16 %v5259, %v5255
  %v5312 = vpack.c.b16 %v5260, %v5256
  %v5313 = vpack.c.b16 %v5261, %v5257
  %v5314 = vpack.c.b16 %v5262, %v5258
  %v5315 = vpack.c.b16 %v5267, %v5263
  %v5316 = vpack.c.b16 %v5268, %v5264
  %v5317 = vpack.c.b16 %v5269, %v5265
  %v5318 = vpack.c.b16 %v5270, %v5266
  %v5319 = vpack.c.b16 %v5271, %v5271
  %v5320 = vpack.c.b16 %v5272, %v5272
  %v5321 = vpack.c.b16 %v5273, %v5273
  %v5322 = vpack.c.b16 %v5274, %v5274
  %v5368 = vsel %vm928, %v5090, 0
  %v5371 = vsel %vm932, %v5319, 0
  %v5374 = vsel %vm932, %v5320, 0
  %v5377 = vsel %vm932, %v5321, 0
  %v5380 = vsel %vm932, %v5322, 0
  %5382 = vmatprep.subr.bf16.mxu0 %v5276
  %5383 = vmatpush1.bf16.msra.mxu0 %v5275
  %5384 = vmatprep.subr.bf16.mxu0 %v5280
  %5385 = vmatpush1.bf16.msra.mxu0 %v5279
  %5386 = vmatprep.subr.bf16.mxu0 %v5284
  %5387 = vmatpush1.bf16.msra.mxu0 %v5283
  %5388 = vmatprep.subr.bf16.mxu0 %v5288
  %5389 = vmatpush1.bf16.msra.mxu0 %v5287
  %5390 = vmatprep.subr.bf16.mxu0 %v5292
  %5391 = vmatpush1.bf16.msra.mxu0 %v5291
  %5392 = vmatprep.subr.bf16.mxu0 %v5296
  %5393 = vmatpush1.bf16.msra.mxu0 %v5295
  %5394 = vmatprep.subr.bf16.mxu0 %v5300
  %5395 = vmatpush1.bf16.msra.mxu0 %v5299
  %5396 = vmatprep.subr.bf16.mxu0 %v5304
  %5397 = vmatpush1.bf16.msra.mxu0 %v5303
  %5398 = vmatprep.subr.bf16.mxu0 %v5308
  %5399 = vmatpush1.bf16.msra.mxu0 %v5307
  %5400 = vmatprep.subr.bf16.mxu0 %v5312
  %5401 = vmatpush1.bf16.msra.mxu0 %v5311
  %5402 = vmatprep.subr.bf16.mxu0 %v5316
  %5403 = vmatpush1.bf16.msra.mxu0 %v5315
  %5404 = vmatprep.subr.bf16.mxu0 %v5374
  %5405 = vmatpush1.bf16.msra.mxu0 %v5371
  %5406 = vmatprep.subr.bf16.mxu0 0
  %5407 = vmatpush1.bf16.msra.mxu0 0
  %5408 = vmatprep.subr.bf16.mxu0 0
  %5409 = vmatpush1.bf16.msra.mxu0 0
  %5410 = vmatprep.subr.bf16.mxu0 0
  %5411 = vmatpush1.bf16.msra.mxu0 0
  %5412 = vmatprep.subr.bf16.mxu0 0
  %5413 = vmatpush1.bf16.msra.mxu0 0
  %5414 = vmatprep.mubr.bf16.mxu0 %v5368
  %5415 = vmatmul.mubr.bf16.gmra.mrb[0].mxu0 %v5089
  %v5416 = vpop.f32.mrb[0].mxu0
  %v5417 = vadd.f32 0.0, %v5416
  %v5418 = vpop.f32.mrb[0].mxu0
  %v5419 = vadd.f32 0.0, %v5418
  %v5420 = vpop.f32.mrb[0].mxu0
  %v5421 = vadd.f32 0.0, %v5420
  %v5422 = vpop.f32.mrb[0].mxu0
  %v5423 = vadd.f32 0.0, %v5422
  %5424 = vdwg.mxu0
  %5425 = vmatprep.subr.bf16.mxu0 %v5278
  %5426 = vmatpush1.bf16.msra.mxu0 %v5277
  %5427 = vmatprep.subr.bf16.mxu0 %v5282
  %5428 = vmatpush1.bf16.msra.mxu0 %v5281
  %5429 = vmatprep.subr.bf16.mxu0 %v5286
  %5430 = vmatpush1.bf16.msra.mxu0 %v5285
  %5431 = vmatprep.subr.bf16.mxu0 %v5290
  %5432 = vmatpush1.bf16.msra.mxu0 %v5289
  %5433 = vmatprep.subr.bf16.mxu0 %v5294
  %5434 = vmatpush1.bf16.msra.mxu0 %v5293
  %5435 = vmatprep.subr.bf16.mxu0 %v5298
  %5436 = vmatpush1.bf16.msra.mxu0 %v5297
  %5437 = vmatprep.subr.bf16.mxu0 %v5302
  %5438 = vmatpush1.bf16.msra.mxu0 %v5301
  %5439 = vmatprep.subr.bf16.mxu0 %v5306
  %5440 = vmatpush1.bf16.msra.mxu0 %v5305
  %5441 = vmatprep.subr.bf16.mxu0 %v5310
  %5442 = vmatpush1.bf16.msra.mxu0 %v5309
  %5443 = vmatprep.subr.bf16.mxu0 %v5314
  %5444 = vmatpush1.bf16.msra.mxu0 %v5313
  %5445 = vmatprep.subr.bf16.mxu0 %v5318
  %5446 = vmatpush1.bf16.msra.mxu0 %v5317
  %5447 = vmatprep.subr.bf16.mxu0 %v5380
  %5448 = vmatpush1.bf16.msra.mxu0 %v5377
  %5449 = vmatprep.subr.bf16.mxu0 0
  %5450 = vmatpush1.bf16.msra.mxu0 0
  %5451 = vmatprep.subr.bf16.mxu0 0
  %5452 = vmatpush1.bf16.msra.mxu0 0
  %5453 = vmatprep.subr.bf16.mxu0 0
  %5454 = vmatpush1.bf16.msra.mxu0 0
  %5455 = vmatprep.subr.bf16.mxu0 0
  %5456 = vmatpush1.bf16.msra.mxu0 0
  %5457 = vmatprep.mubr.bf16.mxu0 %v5368
  %5458 = vmatmul.mubr.bf16.gmra.mrb[0].mxu0 %v5089
  %v5459 = vpop.f32.mrb[0].mxu0
  %v5460 = vadd.f32 0.0, %v5459
  %v5461 = vpop.f32.mrb[0].mxu0
  %v5462 = vadd.f32 0.0, %v5461
  %v5463 = vpop.f32.mrb[0].mxu0
  %v5464 = vadd.f32 0.0, %v5463
  %v5465 = vpop.f32.mrb[0].mxu0
  %v5466 = vadd.f32 0.0, %v5465
  %5467 = vdwg.mxu0
  %v5468 = vpack.c.bf16 %v5421, %v5417
  %v5469 = vpack.c.bf16 %v5423, %v5419
  %v5470 = vpack.c.bf16 %v5464, %v5460
  %v5471 = vpack.c.bf16 %v5466, %v5462
  %5476 = vrot.lane.b32.xlu0 %v5468, 127
  %v5477 = vpop.permute.xlu0 %5476
  %5478 = vrot.lane.b32.xlu0 %v5469, 127
  %v5479 = vpop.permute.xlu0 %5478
  %5480 = vrot.lane.b32.xlu0 %v5470, 127
  %v5481 = vpop.permute.xlu0 %5480
  %5482 = vrot.lane.b32.xlu0 %v5471, 127
  %v5483 = vpop.permute.xlu0 %5482
  %v5484 = vsel %vm373, %v5477, %v5479
  %v5485 = vsel %vm373, %v5479, %v5481
  %v5486 = vsel %vm373, %v5481, %v5483
  %5491 = vrot.lane.b32.xlu0 %v5468, 126
  %v5492 = vpop.permute.xlu0 %5491
  %5493 = vrot.lane.b32.xlu0 %v5469, 126
  %v5494 = vpop.permute.xlu0 %5493
  %5495 = vrot.lane.b32.xlu0 %v5470, 126
  %v5496 = vpop.permute.xlu0 %5495
  %5497 = vrot.lane.b32.xlu0 %v5471, 126
  %v5498 = vpop.permute.xlu0 %5497
  %v5499 = vsel %vm381, %v5492, %v5494
  %v5500 = vsel %vm381, %v5494, %v5496
  %v5501 = vsel %vm381, %v5496, %v5498
  %5506 = vrot.lane.b32.xlu0 %v5468, 125
  %v5507 = vpop.permute.xlu0 %5506
  %5508 = vrot.lane.b32.xlu0 %v5469, 125
  %v5509 = vpop.permute.xlu0 %5508
  %5510 = vrot.lane.b32.xlu0 %v5470, 125
  %v5511 = vpop.permute.xlu0 %5510
  %5512 = vrot.lane.b32.xlu0 %v5471, 125
  %v5513 = vpop.permute.xlu0 %5512
  %v5514 = vsel %vm389, %v5507, %v5509
  %v5515 = vsel %vm389, %v5509, %v5511
  %v5516 = vsel %vm389, %v5511, %v5513
  %5521 = vrot.lane.b32.xlu0 %v5468, 124
  %v5522 = vpop.permute.xlu0 %5521
  %5523 = vrot.lane.b32.xlu0 %v5469, 124
  %v5524 = vpop.permute.xlu0 %5523
  %5525 = vrot.lane.b32.xlu0 %v5470, 124
  %v5526 = vpop.permute.xlu0 %5525
  %5527 = vrot.lane.b32.xlu0 %v5471, 124
  %v5528 = vpop.permute.xlu0 %5527
  %v5529 = vsel %vm397, %v5522, %v5524
  %v5530 = vsel %vm397, %v5524, %v5526
  %v5531 = vsel %vm397, %v5526, %v5528
  %5536 = vrot.lane.b32.xlu0 %v5468, 123
  %v5537 = vpop.permute.xlu0 %5536
  %5538 = vrot.lane.b32.xlu0 %v5469, 123
  %v5539 = vpop.permute.xlu0 %5538
  %5540 = vrot.lane.b32.xlu0 %v5470, 123
  %v5541 = vpop.permute.xlu0 %5540
  %5542 = vrot.lane.b32.xlu0 %v5471, 123
  %v5543 = vpop.permute.xlu0 %5542
  %v5544 = vsel %vm405, %v5537, %v5539
  %v5545 = vsel %vm405, %v5539, %v5541
  %v5546 = vsel %vm405, %v5541, %v5543
  %5551 = vrot.lane.b32.xlu0 %v5468, 122
  %v5552 = vpop.permute.xlu0 %5551
  %5553 = vrot.lane.b32.xlu0 %v5469, 122
  %v5554 = vpop.permute.xlu0 %5553
  %5555 = vrot.lane.b32.xlu0 %v5470, 122
  %v5556 = vpop.permute.xlu0 %5555
  %5557 = vrot.lane.b32.xlu0 %v5471, 122
  %v5558 = vpop.permute.xlu0 %5557
  %v5559 = vsel %vm413, %v5552, %v5554
  %v5560 = vsel %vm413, %v5554, %v5556
  %v5561 = vsel %vm413, %v5556, %v5558
  %5566 = vrot.lane.b32.xlu0 %v5468, 121
  %v5567 = vpop.permute.xlu0 %5566
  %5568 = vrot.lane.b32.xlu0 %v5469, 121
  %v5569 = vpop.permute.xlu0 %5568
  %5570 = vrot.lane.b32.xlu0 %v5470, 121
  %v5571 = vpop.permute.xlu0 %5570
  %5572 = vrot.lane.b32.xlu0 %v5471, 121
  %v5573 = vpop.permute.xlu0 %5572
  %v5574 = vsel %vm421, %v5567, %v5569
  %v5575 = vsel %vm421, %v5569, %v5571
  %v5576 = vsel %vm421, %v5571, %v5573
  %5581 = vrot.lane.b32.xlu0 %v5468, 120
  %v5582 = vpop.permute.xlu0 %5581
  %5583 = vrot.lane.b32.xlu0 %v5469, 120
  %v5584 = vpop.permute.xlu0 %5583
  %5585 = vrot.lane.b32.xlu0 %v5470, 120
  %v5586 = vpop.permute.xlu0 %5585
  %5587 = vrot.lane.b32.xlu0 %v5471, 120
  %v5588 = vpop.permute.xlu0 %5587
  %v5589 = vsel %vm429, %v5582, %v5584
  %v5590 = vsel %vm429, %v5584, %v5586
  %v5591 = vsel %vm429, %v5586, %v5588
  %5596 = vrot.lane.b32.xlu0 %v5468, 119
  %v5597 = vpop.permute.xlu0 %5596
  %5598 = vrot.lane.b32.xlu0 %v5469, 119
  %v5599 = vpop.permute.xlu0 %5598
  %5600 = vrot.lane.b32.xlu0 %v5470, 119
  %v5601 = vpop.permute.xlu0 %5600
  %5602 = vrot.lane.b32.xlu0 %v5471, 119
  %v5603 = vpop.permute.xlu0 %5602
  %v5604 = vsel %vm437, %v5597, %v5599
  %v5605 = vsel %vm437, %v5599, %v5601
  %v5606 = vsel %vm437, %v5601, %v5603
  %5611 = vrot.lane.b32.xlu0 %v5468, 118
  %v5612 = vpop.permute.xlu0 %5611
  %5613 = vrot.lane.b32.xlu0 %v5469, 118
  %v5614 = vpop.permute.xlu0 %5613
  %5615 = vrot.lane.b32.xlu0 %v5470, 118
  %v5616 = vpop.permute.xlu0 %5615
  %5617 = vrot.lane.b32.xlu0 %v5471, 118
  %v5618 = vpop.permute.xlu0 %5617
  %v5619 = vsel %vm445, %v5612, %v5614
  %v5620 = vsel %vm445, %v5614, %v5616
  %v5621 = vsel %vm445, %v5616, %v5618
  %5626 = vrot.lane.b32.xlu0 %v5468, 117
  %v5627 = vpop.permute.xlu0 %5626
  %5628 = vrot.lane.b32.xlu0 %v5469, 117
  %v5629 = vpop.permute.xlu0 %5628
  %5630 = vrot.lane.b32.xlu0 %v5470, 117
  %v5631 = vpop.permute.xlu0 %5630
  %5632 = vrot.lane.b32.xlu0 %v5471, 117
  %v5633 = vpop.permute.xlu0 %5632
  %v5634 = vsel %vm453, %v5627, %v5629
  %v5635 = vsel %vm453, %v5629, %v5631
  %v5636 = vsel %vm453, %v5631, %v5633
  %5641 = vrot.lane.b32.xlu0 %v5468, 116
  %v5642 = vpop.permute.xlu0 %5641
  %5643 = vrot.lane.b32.xlu0 %v5469, 116
  %v5644 = vpop.permute.xlu0 %5643
  %5645 = vrot.lane.b32.xlu0 %v5470, 116
  %v5646 = vpop.permute.xlu0 %5645
  %5647 = vrot.lane.b32.xlu0 %v5471, 116
  %v5648 = vpop.permute.xlu0 %5647
  %v5649 = vsel %vm461, %v5642, %v5644
  %v5650 = vsel %vm461, %v5644, %v5646
  %v5651 = vsel %vm461, %v5646, %v5648
  %5656 = vrot.lane.b32.xlu0 %v5468, 115
  %v5657 = vpop.permute.xlu0 %5656
  %5658 = vrot.lane.b32.xlu0 %v5469, 115
  %v5659 = vpop.permute.xlu0 %5658
  %5660 = vrot.lane.b32.xlu0 %v5470, 115
  %v5661 = vpop.permute.xlu0 %5660
  %5662 = vrot.lane.b32.xlu0 %v5471, 115
  %v5663 = vpop.permute.xlu0 %5662
  %v5664 = vsel %vm469, %v5657, %v5659
  %v5665 = vsel %vm469, %v5659, %v5661
  %v5666 = vsel %vm469, %v5661, %v5663
  %5671 = vrot.lane.b32.xlu0 %v5468, 114
  %v5672 = vpop.permute.xlu0 %5671
  %5673 = vrot.lane.b32.xlu0 %v5469, 114
  %v5674 = vpop.permute.xlu0 %5673
  %5675 = vrot.lane.b32.xlu0 %v5470, 114
  %v5676 = vpop.permute.xlu0 %5675
  %5677 = vrot.lane.b32.xlu0 %v5471, 114
  %v5678 = vpop.permute.xlu0 %5677
  %v5679 = vsel %vm477, %v5672, %v5674
  %v5680 = vsel %vm477, %v5674, %v5676
  %v5681 = vsel %vm477, %v5676, %v5678
  %5686 = vrot.lane.b32.xlu0 %v5468, 113
  %v5687 = vpop.permute.xlu0 %5686
  %5688 = vrot.lane.b32.xlu0 %v5469, 113
  %v5689 = vpop.permute.xlu0 %5688
  %5690 = vrot.lane.b32.xlu0 %v5470, 113
  %v5691 = vpop.permute.xlu0 %5690
  %5692 = vrot.lane.b32.xlu0 %v5471, 113
  %v5693 = vpop.permute.xlu0 %5692
  %v5694 = vsel %vm485, %v5687, %v5689
  %v5695 = vsel %vm485, %v5689, %v5691
  %v5696 = vsel %vm485, %v5691, %v5693
  %5701 = vrot.lane.b32.xlu0 %v5468, 112
  %v5702 = vpop.permute.xlu0 %5701
  %5703 = vrot.lane.b32.xlu0 %v5469, 112
  %v5704 = vpop.permute.xlu0 %5703
  %5705 = vrot.lane.b32.xlu0 %v5470, 112
  %v5706 = vpop.permute.xlu0 %5705
  %5707 = vrot.lane.b32.xlu0 %v5471, 112
  %v5708 = vpop.permute.xlu0 %5707
  %5709 = vrot.lane.b32.xlu0 %v5484, 112
  %v5710 = vpop.permute.xlu0 %5709
  %5711 = vrot.lane.b32.xlu0 %v5485, 112
  %v5712 = vpop.permute.xlu0 %5711
  %5713 = vrot.lane.b32.xlu0 %v5486, 112
  %v5714 = vpop.permute.xlu0 %5713
  %5715 = vrot.lane.b32.xlu0 %v5483, 112
  %v5716 = vpop.permute.xlu0 %5715
  %5717 = vrot.lane.b32.xlu0 %v5499, 112
  %v5718 = vpop.permute.xlu0 %5717
  %5719 = vrot.lane.b32.xlu0 %v5500, 112
  %v5720 = vpop.permute.xlu0 %5719
  %5721 = vrot.lane.b32.xlu0 %v5501, 112
  %v5722 = vpop.permute.xlu0 %5721
  %5723 = vrot.lane.b32.xlu0 %v5498, 112
  %v5724 = vpop.permute.xlu0 %5723
  %5725 = vrot.lane.b32.xlu0 %v5514, 112
  %v5726 = vpop.permute.xlu0 %5725
  %5727 = vrot.lane.b32.xlu0 %v5515, 112
  %v5728 = vpop.permute.xlu0 %5727
  %5729 = vrot.lane.b32.xlu0 %v5516, 112
  %v5730 = vpop.permute.xlu0 %5729
  %5731 = vrot.lane.b32.xlu0 %v5513, 112
  %v5732 = vpop.permute.xlu0 %5731
  %v5733 = vsel %vm505, %v5702, %v5704
  %v5734 = vsel %vm505, %v5704, %v5706
  %v5735 = vsel %vm505, %v5706, %v5708
  %v5736 = vsel %vm505, %v5710, %v5712
  %v5737 = vsel %vm505, %v5712, %v5714
  %v5738 = vsel %vm505, %v5714, %v5716
  %v5739 = vsel %vm505, %v5718, %v5720
  %v5740 = vsel %vm505, %v5720, %v5722
  %v5741 = vsel %vm505, %v5722, %v5724
  %v5742 = vsel %vm505, %v5726, %v5728
  %v5743 = vsel %vm505, %v5728, %v5730
  %v5744 = vsel %vm505, %v5730, %v5732
  %v5761 = vld [vmem:[%s6] sm:$0xff]
  %v5762 = vld [vmem:[%s6 + $0x8] sm:$0xf]
  %v5763 = vld [vmem:[%s6 + $0xc] sm:$0xff]
  %v5764 = vld [vmem:[%s6 + $0x14] sm:$0xf]
  %v5765 = vld [vmem:[%s7] sm:$0xff]
  %v5766 = vld [vmem:[%s7 + $0x8] sm:$0xff]
  %5768 = vset.pattern.permute.xlu0 0
  %5769 = vperm.xlu0 %5768, %v5765
  %v5770 = vpop.permute.xlu0 %5769
  %5773 = vset.pattern.permute.xlu0 0
  %5774 = vperm.xlu0 %5773, %v5766
  %v5775 = vpop.permute.xlu0 %5774
  %v5781 = vunpack.c.l.b16 %v5761
  %v5782 = vunpack.c.h.b16 %v5761
  %v5783 = vunpack.c.l.b16 %v5762
  %v5784 = vunpack.c.l.b16 %v5763
  %v5785 = vunpack.c.h.b16 %v5763
  %v5786 = vunpack.c.l.b16 %v5764
  %v5787 = vpack.c.b16 %v5784, %v5781
  %v5788 = vpack.c.b16 %v5785, %v5782
  %v5789 = vpack.c.b16 %v5786, %v5783
  %v5793 = vsel %vm150, %v5789, 0
  %5795 = vmatprep.subr.bf16.mxu0 %v5469
  %5796 = vmatpush1.bf16.msra.mxu0 %v5468
  %5797 = vmatprep.subr.bf16.mxu0 %v5485
  %5798 = vmatpush1.bf16.msra.mxu0 %v5484
  %5799 = vmatprep.subr.bf16.mxu0 %v5500
  %5800 = vmatpush1.bf16.msra.mxu0 %v5499
  %5801 = vmatprep.subr.bf16.mxu0 %v5515
  %5802 = vmatpush1.bf16.msra.mxu0 %v5514
  %5803 = vmatprep.subr.bf16.mxu0 %v5530
  %5804 = vmatpush1.bf16.msra.mxu0 %v5529
  %5805 = vmatprep.subr.bf16.mxu0 %v5545
  %5806 = vmatpush1.bf16.msra.mxu0 %v5544
  %5807 = vmatprep.subr.bf16.mxu0 %v5560
  %5808 = vmatpush1.bf16.msra.mxu0 %v5559
  %5809 = vmatprep.subr.bf16.mxu0 %v5575
  %5810 = vmatpush1.bf16.msra.mxu0 %v5574
  %5811 = vmatprep.subr.bf16.mxu0 %v5590
  %5812 = vmatpush1.bf16.msra.mxu0 %v5589
  %5813 = vmatprep.subr.bf16.mxu0 %v5605
  %5814 = vmatpush1.bf16.msra.mxu0 %v5604
  %5815 = vmatprep.subr.bf16.mxu0 %v5620
  %5816 = vmatpush1.bf16.msra.mxu0 %v5619
  %5817 = vmatprep.subr.bf16.mxu0 %v5635
  %5818 = vmatpush1.bf16.msra.mxu0 %v5634
  %5819 = vmatprep.subr.bf16.mxu0 %v5650
  %5820 = vmatpush1.bf16.msra.mxu0 %v5649
  %5821 = vmatprep.subr.bf16.mxu0 %v5665
  %5822 = vmatpush1.bf16.msra.mxu0 %v5664
  %5823 = vmatprep.subr.bf16.mxu0 %v5680
  %5824 = vmatpush1.bf16.msra.mxu0 %v5679
  %5825 = vmatprep.subr.bf16.mxu0 %v5695
  %5826 = vmatpush1.bf16.msra.mxu0 %v5694
  %5827 = vmatprep.mubr.bf16.mxu0 %v5788
  %5828 = vmatmul.mubr.bf16.gmra.mrb[0].mxu0 %v5787
  %v5829 = vpop.f32.mrb[0].mxu0
  %v5830 = vadd.f32 %v5770, %v5829
  %v5831 = vpop.f32.mrb[0].mxu0
  %v5832 = vadd.f32 %v5770, %v5831
  %v5833 = vpop.f32.mrb[0].mxu0
  %v5834 = vadd.f32 %v5775, %v5833
  %v5835 = vpop.f32.mrb[0].mxu0
  %v5836 = vadd.f32 %v5775, %v5835
  %5837 = vdwg.mxu0
  %5838 = vmatprep.subr.bf16.mxu0 %v5734
  %5839 = vmatpush1.bf16.msra.mxu0 %v5733
  %5840 = vmatprep.subr.bf16.mxu0 %v5737
  %5841 = vmatpush1.bf16.msra.mxu0 %v5736
  %5842 = vmatprep.subr.bf16.mxu0 %v5740
  %5843 = vmatpush1.bf16.msra.mxu0 %v5739
  %5844 = vmatprep.subr.bf16.mxu0 %v5743
  %5845 = vmatpush1.bf16.msra.mxu0 %v5742
  %5846 = vmatprep.subr.bf16.mxu0 0
  %5847 = vmatpush1.bf16.msra.mxu0 0
  %5848 = vmatprep.subr.bf16.mxu0 0
  %5849 = vmatpush1.bf16.msra.mxu0 0
  %5850 = vmatprep.subr.bf16.mxu0 0
  %5851 = vmatpush1.bf16.msra.mxu0 0
  %5852 = vmatprep.subr.bf16.mxu0 0
  %5853 = vmatpush1.bf16.msra.mxu0 0
  %5854 = vmatprep.subr.bf16.mxu0 0
  %5855 = vmatpush1.bf16.msra.mxu0 0
  %5856 = vmatprep.subr.bf16.mxu0 0
  %5857 = vmatpush1.bf16.msra.mxu0 0
  %5858 = vmatprep.subr.bf16.mxu0 0
  %5859 = vmatpush1.bf16.msra.mxu0 0
  %5860 = vmatprep.subr.bf16.mxu0 0
  %5861 = vmatpush1.bf16.msra.mxu0 0
  %5862 = vmatprep.subr.bf16.mxu0 0
  %5863 = vmatpush1.bf16.msra.mxu0 0
  %5864 = vmatprep.subr.bf16.mxu0 0
  %5865 = vmatpush1.bf16.msra.mxu0 0
  %5866 = vmatprep.subr.bf16.mxu0 0
  %5867 = vmatpush1.bf16.msra.mxu0 0
  %5868 = vmatprep.subr.bf16.mxu0 0
  %5869 = vmatpush1.bf16.msra.mxu0 0
  %5870 = vmatprep.mubr.bf16.mxu0 0
  %5871 = vmatmul.mubr.bf16.gmra.mrb[0].mxu0 %v5793
  %v5872 = vpop.f32.mrb[0].mxu0
  %v5873 = vadd.f32 %v5830, %v5872
  %v5874 = vpop.f32.mrb[0].mxu0
  %v5875 = vadd.f32 %v5832, %v5874
  %v5876 = vpop.f32.mrb[0].mxu0
  %v5877 = vadd.f32 %v5834, %v5876
  %v5878 = vpop.f32.mrb[0].mxu0
  %v5879 = vadd.f32 %v5836, %v5878
  %5880 = vdwg.mxu0
  %5881 = vmatprep.subr.bf16.mxu0 %v5471
  %5882 = vmatpush1.bf16.msra.mxu0 %v5470
  %5883 = vmatprep.subr.bf16.mxu0 %v5483
  %5884 = vmatpush1.bf16.msra.mxu0 %v5486
  %5885 = vmatprep.subr.bf16.mxu0 %v5498
  %5886 = vmatpush1.bf16.msra.mxu0 %v5501
  %5887 = vmatprep.subr.bf16.mxu0 %v5513
  %5888 = vmatpush1.bf16.msra.mxu0 %v5516
  %5889 = vmatprep.subr.bf16.mxu0 %v5528
  %5890 = vmatpush1.bf16.msra.mxu0 %v5531
  %5891 = vmatprep.subr.bf16.mxu0 %v5543
  %5892 = vmatpush1.bf16.msra.mxu0 %v5546
  %5893 = vmatprep.subr.bf16.mxu0 %v5558
  %5894 = vmatpush1.bf16.msra.mxu0 %v5561
  %5895 = vmatprep.subr.bf16.mxu0 %v5573
  %5896 = vmatpush1.bf16.msra.mxu0 %v5576
  %5897 = vmatprep.subr.bf16.mxu0 %v5588
  %5898 = vmatpush1.bf16.msra.mxu0 %v5591
  %5899 = vmatprep.subr.bf16.mxu0 %v5603
  %5900 = vmatpush1.bf16.msra.mxu0 %v5606
  %5901 = vmatprep.subr.bf16.mxu0 %v5618
  %5902 = vmatpush1.bf16.msra.mxu0 %v5621
  %5903 = vmatprep.subr.bf16.mxu0 %v5633
  %5904 = vmatpush1.bf16.msra.mxu0 %v5636
  %5905 = vmatprep.subr.bf16.mxu0 %v5648
  %5906 = vmatpush1.bf16.msra.mxu0 %v5651
  %5907 = vmatprep.subr.bf16.mxu0 %v5663
  %5908 = vmatpush1.bf16.msra.mxu0 %v5666
  %5909 = vmatprep.subr.bf16.mxu0 %v5678
  %5910 = vmatpush1.bf16.msra.mxu0 %v5681
  %5911 = vmatprep.subr.bf16.mxu0 %v5693
  %5912 = vmatpush1.bf16.msra.mxu0 %v5696
  %5913 = vmatprep.mubr.bf16.mxu0 %v5788
  %5914 = vmatmul.mubr.bf16.gmra.mrb[0].mxu0 %v5787
  %v5915 = vpop.f32.mrb[0].mxu0
  %v5916 = vadd.f32 %v5770, %v5915
  %v5917 = vpop.f32.mrb[0].mxu0
  %v5918 = vadd.f32 %v5770, %v5917
  %v5919 = vpop.f32.mrb[0].mxu0
  %v5920 = vadd.f32 %v5775, %v5919
  %v5921 = vpop.f32.mrb[0].mxu0
  %v5922 = vadd.f32 %v5775, %v5921
  %5923 = vdwg.mxu0
  %5924 = vmatprep.subr.bf16.mxu0 %v5708
  %5925 = vmatpush1.bf16.msra.mxu0 %v5735
  %5926 = vmatprep.subr.bf16.mxu0 %v5716
  %5927 = vmatpush1.bf16.msra.mxu0 %v5738
  %5928 = vmatprep.subr.bf16.mxu0 %v5724
  %5929 = vmatpush1.bf16.msra.mxu0 %v5741
  %5930 = vmatprep.subr.bf16.mxu0 %v5732
  %5931 = vmatpush1.bf16.msra.mxu0 %v5744
  %5932 = vmatprep.subr.bf16.mxu0 0
  %5933 = vmatpush1.bf16.msra.mxu0 0
  %5934 = vmatprep.subr.bf16.mxu0 0
  %5935 = vmatpush1.bf16.msra.mxu0 0
  %5936 = vmatprep.subr.bf16.mxu0 0
  %5937 = vmatpush1.bf16.msra.mxu0 0
  %5938 = vmatprep.subr.bf16.mxu0 0
  %5939 = vmatpush1.bf16.msra.mxu0 0
  %5940 = vmatprep.subr.bf16.mxu0 0
  %5941 = vmatpush1.bf16.msra.mxu0 0
  %5942 = vmatprep.subr.bf16.mxu0 0
  %5943 = vmatpush1.bf16.msra.mxu0 0
  %5944 = vmatprep.subr.bf16.mxu0 0
  %5945 = vmatpush1.bf16.msra.mxu0 0
  %5946 = vmatprep.subr.bf16.mxu0 0
  %5947 = vmatpush1.bf16.msra.mxu0 0
  %5948 = vmatprep.subr.bf16.mxu0 0
  %5949 = vmatpush1.bf16.msra.mxu0 0
  %5950 = vmatprep.subr.bf16.mxu0 0
  %5951 = vmatpush1.bf16.msra.mxu0 0
  %5952 = vmatprep.subr.bf16.mxu0 0
  %5953 = vmatpush1.bf16.msra.mxu0 0
  %5954 = vmatprep.subr.bf16.mxu0 0
  %5955 = vmatpush1.bf16.msra.mxu0 0
  %5956 = vmatprep.mubr.bf16.mxu0 0
  %5957 = vmatmul.mubr.bf16.gmra.mrb[0].mxu0 %v5793
  %v5958 = vpop.f32.mrb[0].mxu0
  %v5959 = vadd.f32 %v5916, %v5958
  %v5960 = vpop.f32.mrb[0].mxu0
  %v5961 = vadd.f32 %v5918, %v5960
  %v5962 = vpop.f32.mrb[0].mxu0
  %v5963 = vadd.f32 %v5920, %v5962
  %v5964 = vpop.f32.mrb[0].mxu0
  %v5965 = vadd.f32 %v5922, %v5964
  %5966 = vdwg.mxu0
  %vm5967 = vcmp.gt.f32.partialorder %v5873, 0.0
  %vm5968 = vcmp.gt.f32.partialorder %v5875, 0.0
  %vm5969 = vcmp.gt.f32.partialorder %v5959, 0.0
  %vm5970 = vcmp.gt.f32.partialorder %v5961, 0.0
  %vm5971 = vcmp.gt.f32.partialorder %v5877, 0.0
  %vm5972 = vcmp.gt.f32.partialorder %v5879, 0.0
  %vm5973 = vcmp.gt.f32.partialorder %v5963, 0.0
  %vm5974 = vcmp.gt.f32.partialorder %v5965, 0.0
  %v5975 = vmul.f32 %v5873, 0.25
  %v5976 = vmul.f32 %v5875, 0.25
  %v5977 = vmul.f32 %v5959, 0.25
  %v5978 = vmul.f32 %v5961, 0.25
  %v5979 = vmul.f32 %v5877, 0.25
  %v5980 = vmul.f32 %v5879, 0.25
  %v5981 = vmul.f32 %v5963, 0.25
  %v5982 = vmul.f32 %v5965, 0.25
  %v5983 = vsel %vm5967, %v5873, %v5975
  %v5984 = vsel %vm5968, %v5875, %v5976
  %v5985 = vsel %vm5969, %v5959, %v5977
  %v5986 = vsel %vm5970, %v5961, %v5978
  %v5987 = vsel %vm5971, %v5877, %v5979
  %v5988 = vsel %vm5972, %v5879, %v5980
  %v5989 = vsel %vm5973, %v5963, %v5981
  %v5990 = vsel %vm5974, %v5965, %v5982
  %v5991 = vpack.c.bf16 %v5987, %v5983
  %v5992 = vpack.c.bf16 %v5988, %v5984
  %v5993 = vpack.c.bf16 %v5989, %v5985
  %v5994 = vpack.c.bf16 %v5990, %v5986
  %5999 = vrot.lane.b32.xlu0 %v5991, 39
  %v6000 = vpop.permute.xlu0 %5999
  %6001 = vrot.lane.b32.xlu0 %v5992, 39
  %v6002 = vpop.permute.xlu0 %6001
  %6003 = vrot.lane.b32.xlu0 %v5993, 39
  %v6004 = vpop.permute.xlu0 %6003
  %6005 = vrot.lane.b32.xlu0 %v5994, 39
  %v6006 = vpop.permute.xlu0 %6005
  %v6007 = vsel %vm1570, %v6000, %v6002
  %v6008 = vsel %vm1570, %v6002, %v6004
  %v6009 = vsel %vm1570, %v6004, %v6006
  %v6013 = vsel %vm1576, 0, %v6000
  %v6016 = vsel %vm1580, %v6009, 0
  %6020 = vrot.lane.b32.xlu0 %v6013, 127
  %v6021 = vpop.permute.xlu0 %6020
  %6022 = vrot.lane.b32.xlu0 %v6007, 127
  %v6023 = vpop.permute.xlu0 %6022
  %6024 = vrot.lane.b32.xlu0 %v6008, 127
  %v6025 = vpop.permute.xlu0 %6024
  %6026 = vrot.lane.b32.xlu0 %v6016, 127
  %v6027 = vpop.permute.xlu0 %6026
  %v6028 = vsel %vm373, %v6021, %v6023
  %v6029 = vsel %vm373, %v6023, %v6025
  %v6030 = vsel %vm373, %v6025, %v6027
  %6035 = vrot.lane.b32.xlu0 %v6013, 126
  %v6036 = vpop.permute.xlu0 %6035
  %6037 = vrot.lane.b32.xlu0 %v6007, 126
  %v6038 = vpop.permute.xlu0 %6037
  %6039 = vrot.lane.b32.xlu0 %v6008, 126
  %v6040 = vpop.permute.xlu0 %6039
  %6041 = vrot.lane.b32.xlu0 %v6016, 126
  %v6042 = vpop.permute.xlu0 %6041
  %v6043 = vsel %vm381, %v6036, %v6038
  %v6044 = vsel %vm381, %v6038, %v6040
  %v6045 = vsel %vm381, %v6040, %v6042
  %6050 = vrot.lane.b32.xlu0 %v6013, 125
  %v6051 = vpop.permute.xlu0 %6050
  %6052 = vrot.lane.b32.xlu0 %v6007, 125
  %v6053 = vpop.permute.xlu0 %6052
  %6054 = vrot.lane.b32.xlu0 %v6008, 125
  %v6055 = vpop.permute.xlu0 %6054
  %6056 = vrot.lane.b32.xlu0 %v6016, 125
  %v6057 = vpop.permute.xlu0 %6056
  %v6058 = vsel %vm389, %v6051, %v6053
  %v6059 = vsel %vm389, %v6053, %v6055
  %v6060 = vsel %vm389, %v6055, %v6057
  %6065 = vrot.lane.b32.xlu0 %v6013, 124
  %v6066 = vpop.permute.xlu0 %6065
  %6067 = vrot.lane.b32.xlu0 %v6007, 124
  %v6068 = vpop.permute.xlu0 %6067
  %6069 = vrot.lane.b32.xlu0 %v6008, 124
  %v6070 = vpop.permute.xlu0 %6069
  %6071 = vrot.lane.b32.xlu0 %v6016, 124
  %v6072 = vpop.permute.xlu0 %6071
  %v6073 = vsel %vm397, %v6066, %v6068
  %v6074 = vsel %vm397, %v6068, %v6070
  %v6075 = vsel %vm397, %v6070, %v6072
  %6080 = vrot.lane.b32.xlu0 %v6013, 123
  %v6081 = vpop.permute.xlu0 %6080
  %6082 = vrot.lane.b32.xlu0 %v6007, 123
  %v6083 = vpop.permute.xlu0 %6082
  %6084 = vrot.lane.b32.xlu0 %v6008, 123
  %v6085 = vpop.permute.xlu0 %6084
  %6086 = vrot.lane.b32.xlu0 %v6016, 123
  %v6087 = vpop.permute.xlu0 %6086
  %v6088 = vsel %vm405, %v6081, %v6083
  %v6089 = vsel %vm405, %v6083, %v6085
  %v6090 = vsel %vm405, %v6085, %v6087
  %6095 = vrot.lane.b32.xlu0 %v6013, 122
  %v6096 = vpop.permute.xlu0 %6095
  %6097 = vrot.lane.b32.xlu0 %v6007, 122
  %v6098 = vpop.permute.xlu0 %6097
  %6099 = vrot.lane.b32.xlu0 %v6008, 122
  %v6100 = vpop.permute.xlu0 %6099
  %6101 = vrot.lane.b32.xlu0 %v6016, 122
  %v6102 = vpop.permute.xlu0 %6101
  %v6103 = vsel %vm413, %v6096, %v6098
  %v6104 = vsel %vm413, %v6098, %v6100
  %v6105 = vsel %vm413, %v6100, %v6102
  %6110 = vrot.lane.b32.xlu0 %v6013, 121
  %v6111 = vpop.permute.xlu0 %6110
  %6112 = vrot.lane.b32.xlu0 %v6007, 121
  %v6113 = vpop.permute.xlu0 %6112
  %6114 = vrot.lane.b32.xlu0 %v6008, 121
  %v6115 = vpop.permute.xlu0 %6114
  %6116 = vrot.lane.b32.xlu0 %v6016, 121
  %v6117 = vpop.permute.xlu0 %6116
  %v6118 = vsel %vm421, %v6111, %v6113
  %v6119 = vsel %vm421, %v6113, %v6115
  %v6120 = vsel %vm421, %v6115, %v6117
  %6125 = vrot.lane.b32.xlu0 %v6013, 120
  %v6126 = vpop.permute.xlu0 %6125
  %6127 = vrot.lane.b32.xlu0 %v6007, 120
  %v6128 = vpop.permute.xlu0 %6127
  %6129 = vrot.lane.b32.xlu0 %v6008, 120
  %v6130 = vpop.permute.xlu0 %6129
  %6131 = vrot.lane.b32.xlu0 %v6016, 120
  %v6132 = vpop.permute.xlu0 %6131
  %v6133 = vsel %vm429, %v6126, %v6128
  %v6134 = vsel %vm429, %v6128, %v6130
  %v6135 = vsel %vm429, %v6130, %v6132
  %6140 = vrot.lane.b32.xlu0 %v6013, 119
  %v6141 = vpop.permute.xlu0 %6140
  %6142 = vrot.lane.b32.xlu0 %v6007, 119
  %v6143 = vpop.permute.xlu0 %6142
  %6144 = vrot.lane.b32.xlu0 %v6008, 119
  %v6145 = vpop.permute.xlu0 %6144
  %6146 = vrot.lane.b32.xlu0 %v6016, 119
  %v6147 = vpop.permute.xlu0 %6146
  %v6148 = vsel %vm437, %v6141, %v6143
  %v6149 = vsel %vm437, %v6143, %v6145
  %v6150 = vsel %vm437, %v6145, %v6147
  %6155 = vrot.lane.b32.xlu0 %v6013, 118
  %v6156 = vpop.permute.xlu0 %6155
  %6157 = vrot.lane.b32.xlu0 %v6007, 118
  %v6158 = vpop.permute.xlu0 %6157
  %6159 = vrot.lane.b32.xlu0 %v6008, 118
  %v6160 = vpop.permute.xlu0 %6159
  %6161 = vrot.lane.b32.xlu0 %v6016, 118
  %v6162 = vpop.permute.xlu0 %6161
  %v6163 = vsel %vm445, %v6156, %v6158
  %v6164 = vsel %vm445, %v6158, %v6160
  %v6165 = vsel %vm445, %v6160, %v6162
  %6170 = vrot.lane.b32.xlu0 %v6013, 117
  %v6171 = vpop.permute.xlu0 %6170
  %6172 = vrot.lane.b32.xlu0 %v6007, 117
  %v6173 = vpop.permute.xlu0 %6172
  %6174 = vrot.lane.b32.xlu0 %v6008, 117
  %v6175 = vpop.permute.xlu0 %6174
  %6176 = vrot.lane.b32.xlu0 %v6016, 117
  %v6177 = vpop.permute.xlu0 %6176
  %v6178 = vsel %vm453, %v6171, %v6173
  %v6179 = vsel %vm453, %v6173, %v6175
  %v6180 = vsel %vm453, %v6175, %v6177
  %6185 = vrot.lane.b32.xlu0 %v6013, 116
  %v6186 = vpop.permute.xlu0 %6185
  %6187 = vrot.lane.b32.xlu0 %v6007, 116
  %v6188 = vpop.permute.xlu0 %6187
  %6189 = vrot.lane.b32.xlu0 %v6008, 116
  %v6190 = vpop.permute.xlu0 %6189
  %6191 = vrot.lane.b32.xlu0 %v6016, 116
  %v6192 = vpop.permute.xlu0 %6191
  %v6193 = vsel %vm461, %v6186, %v6188
  %v6194 = vsel %vm461, %v6188, %v6190
  %v6195 = vsel %vm461, %v6190, %v6192
  %6200 = vrot.lane.b32.xlu0 %v6013, 115
  %v6201 = vpop.permute.xlu0 %6200
  %6202 = vrot.lane.b32.xlu0 %v6007, 115
  %v6203 = vpop.permute.xlu0 %6202
  %6204 = vrot.lane.b32.xlu0 %v6008, 115
  %v6205 = vpop.permute.xlu0 %6204
  %6206 = vrot.lane.b32.xlu0 %v6016, 115
  %v6207 = vpop.permute.xlu0 %6206
  %v6208 = vsel %vm469, %v6201, %v6203
  %v6209 = vsel %vm469, %v6203, %v6205
  %v6210 = vsel %vm469, %v6205, %v6207
  %6215 = vrot.lane.b32.xlu0 %v6013, 114
  %v6216 = vpop.permute.xlu0 %6215
  %6217 = vrot.lane.b32.xlu0 %v6007, 114
  %v6218 = vpop.permute.xlu0 %6217
  %6219 = vrot.lane.b32.xlu0 %v6008, 114
  %v6220 = vpop.permute.xlu0 %6219
  %6221 = vrot.lane.b32.xlu0 %v6016, 114
  %v6222 = vpop.permute.xlu0 %6221
  %v6223 = vsel %vm477, %v6216, %v6218
  %v6224 = vsel %vm477, %v6218, %v6220
  %v6225 = vsel %vm477, %v6220, %v6222
  %6230 = vrot.lane.b32.xlu0 %v6013, 113
  %v6231 = vpop.permute.xlu0 %6230
  %6232 = vrot.lane.b32.xlu0 %v6007, 113
  %v6233 = vpop.permute.xlu0 %6232
  %6234 = vrot.lane.b32.xlu0 %v6008, 113
  %v6235 = vpop.permute.xlu0 %6234
  %6236 = vrot.lane.b32.xlu0 %v6016, 113
  %v6237 = vpop.permute.xlu0 %6236
  %v6238 = vsel %vm485, %v6231, %v6233
  %v6239 = vsel %vm485, %v6233, %v6235
  %v6240 = vsel %vm485, %v6235, %v6237
  %6245 = vrot.lane.b32.xlu0 %v6013, 112
  %v6246 = vpop.permute.xlu0 %6245
  %6247 = vrot.lane.b32.xlu0 %v6007, 112
  %v6248 = vpop.permute.xlu0 %6247
  %6249 = vrot.lane.b32.xlu0 %v6008, 112
  %v6250 = vpop.permute.xlu0 %6249
  %6251 = vrot.lane.b32.xlu0 %v6016, 112
  %v6252 = vpop.permute.xlu0 %6251
  %6253 = vrot.lane.b32.xlu0 %v6028, 112
  %v6254 = vpop.permute.xlu0 %6253
  %6255 = vrot.lane.b32.xlu0 %v6029, 112
  %v6256 = vpop.permute.xlu0 %6255
  %6257 = vrot.lane.b32.xlu0 %v6030, 112
  %v6258 = vpop.permute.xlu0 %6257
  %6259 = vrot.lane.b32.xlu0 %v6027, 112
  %v6260 = vpop.permute.xlu0 %6259
  %6261 = vrot.lane.b32.xlu0 %v6043, 112
  %v6262 = vpop.permute.xlu0 %6261
  %6263 = vrot.lane.b32.xlu0 %v6044, 112
  %v6264 = vpop.permute.xlu0 %6263
  %6265 = vrot.lane.b32.xlu0 %v6045, 112
  %v6266 = vpop.permute.xlu0 %6265
  %6267 = vrot.lane.b32.xlu0 %v6042, 112
  %v6268 = vpop.permute.xlu0 %6267
  %6269 = vrot.lane.b32.xlu0 %v6058, 112
  %v6270 = vpop.permute.xlu0 %6269
  %6271 = vrot.lane.b32.xlu0 %v6059, 112
  %v6272 = vpop.permute.xlu0 %6271
  %6273 = vrot.lane.b32.xlu0 %v6060, 112
  %v6274 = vpop.permute.xlu0 %6273
  %6275 = vrot.lane.b32.xlu0 %v6057, 112
  %v6276 = vpop.permute.xlu0 %6275
  %6277 = vrot.lane.b32.xlu0 %v6073, 112
  %v6278 = vpop.permute.xlu0 %6277
  %6279 = vrot.lane.b32.xlu0 %v6074, 112
  %v6280 = vpop.permute.xlu0 %6279
  %6281 = vrot.lane.b32.xlu0 %v6075, 112
  %v6282 = vpop.permute.xlu0 %6281
  %6283 = vrot.lane.b32.xlu0 %v6072, 112
  %v6284 = vpop.permute.xlu0 %6283
  %6285 = vrot.lane.b32.xlu0 %v6088, 112
  %v6286 = vpop.permute.xlu0 %6285
  %6287 = vrot.lane.b32.xlu0 %v6089, 112
  %v6288 = vpop.permute.xlu0 %6287
  %6289 = vrot.lane.b32.xlu0 %v6090, 112
  %v6290 = vpop.permute.xlu0 %6289
  %6291 = vrot.lane.b32.xlu0 %v6087, 112
  %v6292 = vpop.permute.xlu0 %6291
  %6293 = vrot.lane.b32.xlu0 %v6103, 112
  %v6294 = vpop.permute.xlu0 %6293
  %6295 = vrot.lane.b32.xlu0 %v6104, 112
  %v6296 = vpop.permute.xlu0 %6295
  %6297 = vrot.lane.b32.xlu0 %v6105, 112
  %v6298 = vpop.permute.xlu0 %6297
  %6299 = vrot.lane.b32.xlu0 %v6102, 112
  %v6300 = vpop.permute.xlu0 %6299
  %6301 = vrot.lane.b32.xlu0 %v6118, 112
  %v6302 = vpop.permute.xlu0 %6301
  %6303 = vrot.lane.b32.xlu0 %v6119, 112
  %v6304 = vpop.permute.xlu0 %6303
  %6305 = vrot.lane.b32.xlu0 %v6120, 112
  %v6306 = vpop.permute.xlu0 %6305
  %6307 = vrot.lane.b32.xlu0 %v6117, 112
  %v6308 = vpop.permute.xlu0 %6307
  %6309 = vrot.lane.b32.xlu0 %v6133, 112
  %v6310 = vpop.permute.xlu0 %6309
  %6311 = vrot.lane.b32.xlu0 %v6134, 112
  %v6312 = vpop.permute.xlu0 %6311
  %6313 = vrot.lane.b32.xlu0 %v6135, 112
  %v6314 = vpop.permute.xlu0 %6313
  %6315 = vrot.lane.b32.xlu0 %v6132, 112
  %v6316 = vpop.permute.xlu0 %6315
  %6317 = vrot.lane.b32.xlu0 %v6148, 112
  %v6318 = vpop.permute.xlu0 %6317
  %6319 = vrot.lane.b32.xlu0 %v6149, 112
  %v6320 = vpop.permute.xlu0 %6319
  %6321 = vrot.lane.b32.xlu0 %v6150, 112
  %v6322 = vpop.permute.xlu0 %6321
  %6323 = vrot.lane.b32.xlu0 %v6147, 112
  %v6324 = vpop.permute.xlu0 %6323
  %6325 = vrot.lane.b32.xlu0 %v6163, 112
  %v6326 = vpop.permute.xlu0 %6325
  %6327 = vrot.lane.b32.xlu0 %v6164, 112
  %v6328 = vpop.permute.xlu0 %6327
  %6329 = vrot.lane.b32.xlu0 %v6165, 112
  %v6330 = vpop.permute.xlu0 %6329
  %6331 = vrot.lane.b32.xlu0 %v6162, 112
  %v6332 = vpop.permute.xlu0 %6331
  %6333 = vrot.lane.b32.xlu0 %v6178, 112
  %v6334 = vpop.permute.xlu0 %6333
  %6335 = vrot.lane.b32.xlu0 %v6179, 112
  %v6336 = vpop.permute.xlu0 %6335
  %6337 = vrot.lane.b32.xlu0 %v6180, 112
  %v6338 = vpop.permute.xlu0 %6337
  %6339 = vrot.lane.b32.xlu0 %v6177, 112
  %v6340 = vpop.permute.xlu0 %6339
  %6341 = vrot.lane.b32.xlu0 %v6193, 112
  %v6342 = vpop.permute.xlu0 %6341
  %6343 = vrot.lane.b32.xlu0 %v6194, 112
  %v6344 = vpop.permute.xlu0 %6343
  %6345 = vrot.lane.b32.xlu0 %v6195, 112
  %v6346 = vpop.permute.xlu0 %6345
  %6347 = vrot.lane.b32.xlu0 %v6192, 112
  %v6348 = vpop.permute.xlu0 %6347
  %6349 = vrot.lane.b32.xlu0 %v6208, 112
  %v6350 = vpop.permute.xlu0 %6349
  %6351 = vrot.lane.b32.xlu0 %v6209, 112
  %v6352 = vpop.permute.xlu0 %6351
  %6353 = vrot.lane.b32.xlu0 %v6210, 112
  %v6354 = vpop.permute.xlu0 %6353
  %6355 = vrot.lane.b32.xlu0 %v6207, 112
  %v6356 = vpop.permute.xlu0 %6355
  %6357 = vrot.lane.b32.xlu0 %v6223, 112
  %v6358 = vpop.permute.xlu0 %6357
  %6359 = vrot.lane.b32.xlu0 %v6224, 112
  %v6360 = vpop.permute.xlu0 %6359
  %6361 = vrot.lane.b32.xlu0 %v6225, 112
  %v6362 = vpop.permute.xlu0 %6361
  %6363 = vrot.lane.b32.xlu0 %v6222, 112
  %v6364 = vpop.permute.xlu0 %6363
  %6365 = vrot.lane.b32.xlu0 %v6238, 112
  %v6366 = vpop.permute.xlu0 %6365
  %6367 = vrot.lane.b32.xlu0 %v6239, 112
  %v6368 = vpop.permute.xlu0 %6367
  %6369 = vrot.lane.b32.xlu0 %v6240, 112
  %v6370 = vpop.permute.xlu0 %6369
  %6371 = vrot.lane.b32.xlu0 %v6237, 112
  %v6372 = vpop.permute.xlu0 %6371
  %v6373 = vsel %vm505, %v6246, %v6248
  %v6374 = vsel %vm505, %v6248, %v6250
  %v6375 = vsel %vm505, %v6250, %v6252
  %v6376 = vsel %vm505, %v6254, %v6256
  %v6377 = vsel %vm505, %v6256, %v6258
  %v6378 = vsel %vm505, %v6258, %v6260
  %v6379 = vsel %vm505, %v6262, %v6264
  %v6380 = vsel %vm505, %v6264, %v6266
  %v6381 = vsel %vm505, %v6266, %v6268
  %v6382 = vsel %vm505, %v6270, %v6272
  %v6383 = vsel %vm505, %v6272, %v6274
  %v6384 = vsel %vm505, %v6274, %v6276
  %v6385 = vsel %vm505, %v6278, %v6280
  %v6386 = vsel %vm505, %v6280, %v6282
  %v6387 = vsel %vm505, %v6282, %v6284
  %v6388 = vsel %vm505, %v6286, %v6288
  %v6389 = vsel %vm505, %v6288, %v6290
  %v6390 = vsel %vm505, %v6290, %v6292
  %v6391 = vsel %vm505, %v6294, %v6296
  %v6392 = vsel %vm505, %v6296, %v6298
  %v6393 = vsel %vm505, %v6298, %v6300
  %v6394 = vsel %vm505, %v6302, %v6304
  %v6395 = vsel %vm505, %v6304, %v6306
  %v6396 = vsel %vm505, %v6306, %v6308
  %v6397 = vsel %vm505, %v6310, %v6312
  %v6398 = vsel %vm505, %v6312, %v6314
  %v6399 = vsel %vm505, %v6314, %v6316
  %v6400 = vsel %vm505, %v6318, %v6320
  %v6401 = vsel %vm505, %v6320, %v6322
  %v6402 = vsel %vm505, %v6322, %v6324
  %v6403 = vsel %vm505, %v6326, %v6328
  %v6404 = vsel %vm505, %v6328, %v6330
  %v6405 = vsel %vm505, %v6330, %v6332
  %v6406 = vsel %vm505, %v6334, %v6336
  %v6407 = vsel %vm505, %v6336, %v6338
  %v6408 = vsel %vm505, %v6338, %v6340
  %v6409 = vsel %vm505, %v6342, %v6344
  %v6410 = vsel %vm505, %v6344, %v6346
  %v6411 = vsel %vm505, %v6346, %v6348
  %v6412 = vsel %vm505, %v6350, %v6352
  %v6413 = vsel %vm505, %v6352, %v6354
  %v6414 = vsel %vm505, %v6354, %v6356
  %v6415 = vsel %vm505, %v6358, %v6360
  %v6416 = vsel %vm505, %v6360, %v6362
  %v6417 = vsel %vm505, %v6362, %v6364
  %v6418 = vsel %vm505, %v6366, %v6368
  %v6419 = vsel %vm505, %v6368, %v6370
  %v6420 = vsel %vm505, %v6370, %v6372
  %6485 = vrot.lane.b32.xlu0 %v6013, 96
  %v6486 = vpop.permute.xlu0 %6485
  %6487 = vrot.lane.b32.xlu0 %v6007, 96
  %v6488 = vpop.permute.xlu0 %6487
  %6489 = vrot.lane.b32.xlu0 %v6008, 96
  %v6490 = vpop.permute.xlu0 %6489
  %6491 = vrot.lane.b32.xlu0 %v6016, 96
  %v6492 = vpop.permute.xlu0 %6491
  %6493 = vrot.lane.b32.xlu0 %v6028, 96
  %v6494 = vpop.permute.xlu0 %6493
  %6495 = vrot.lane.b32.xlu0 %v6029, 96
  %v6496 = vpop.permute.xlu0 %6495
  %6497 = vrot.lane.b32.xlu0 %v6030, 96
  %v6498 = vpop.permute.xlu0 %6497
  %6499 = vrot.lane.b32.xlu0 %v6027, 96
  %v6500 = vpop.permute.xlu0 %6499
  %6501 = vrot.lane.b32.xlu0 %v6043, 96
  %v6502 = vpop.permute.xlu0 %6501
  %6503 = vrot.lane.b32.xlu0 %v6044, 96
  %v6504 = vpop.permute.xlu0 %6503
  %6505 = vrot.lane.b32.xlu0 %v6045, 96
  %v6506 = vpop.permute.xlu0 %6505
  %6507 = vrot.lane.b32.xlu0 %v6042, 96
  %v6508 = vpop.permute.xlu0 %6507
  %6509 = vrot.lane.b32.xlu0 %v6058, 96
  %v6510 = vpop.permute.xlu0 %6509
  %6511 = vrot.lane.b32.xlu0 %v6059, 96
  %v6512 = vpop.permute.xlu0 %6511
  %6513 = vrot.lane.b32.xlu0 %v6060, 96
  %v6514 = vpop.permute.xlu0 %6513
  %6515 = vrot.lane.b32.xlu0 %v6057, 96
  %v6516 = vpop.permute.xlu0 %6515
  %6517 = vrot.lane.b32.xlu0 %v6073, 96
  %v6518 = vpop.permute.xlu0 %6517
  %6519 = vrot.lane.b32.xlu0 %v6074, 96
  %v6520 = vpop.permute.xlu0 %6519
  %6521 = vrot.lane.b32.xlu0 %v6075, 96
  %v6522 = vpop.permute.xlu0 %6521
  %6523 = vrot.lane.b32.xlu0 %v6072, 96
  %v6524 = vpop.permute.xlu0 %6523
  %6525 = vrot.lane.b32.xlu0 %v6088, 96
  %v6526 = vpop.permute.xlu0 %6525
  %6527 = vrot.lane.b32.xlu0 %v6089, 96
  %v6528 = vpop.permute.xlu0 %6527
  %6529 = vrot.lane.b32.xlu0 %v6090, 96
  %v6530 = vpop.permute.xlu0 %6529
  %6531 = vrot.lane.b32.xlu0 %v6087, 96
  %v6532 = vpop.permute.xlu0 %6531
  %6533 = vrot.lane.b32.xlu0 %v6103, 96
  %v6534 = vpop.permute.xlu0 %6533
  %6535 = vrot.lane.b32.xlu0 %v6104, 96
  %v6536 = vpop.permute.xlu0 %6535
  %6537 = vrot.lane.b32.xlu0 %v6105, 96
  %v6538 = vpop.permute.xlu0 %6537
  %6539 = vrot.lane.b32.xlu0 %v6102, 96
  %v6540 = vpop.permute.xlu0 %6539
  %6541 = vrot.lane.b32.xlu0 %v6118, 96
  %v6542 = vpop.permute.xlu0 %6541
  %6543 = vrot.lane.b32.xlu0 %v6119, 96
  %v6544 = vpop.permute.xlu0 %6543
  %6545 = vrot.lane.b32.xlu0 %v6120, 96
  %v6546 = vpop.permute.xlu0 %6545
  %6547 = vrot.lane.b32.xlu0 %v6117, 96
  %v6548 = vpop.permute.xlu0 %6547
  %v6549 = vsel %vm2115, %v6486, %v6488
  %v6550 = vsel %vm2115, %v6488, %v6490
  %v6551 = vsel %vm2115, %v6490, %v6492
  %v6552 = vsel %vm2115, %v6494, %v6496
  %v6553 = vsel %vm2115, %v6496, %v6498
  %v6554 = vsel %vm2115, %v6498, %v6500
  %v6555 = vsel %vm2115, %v6502, %v6504
  %v6556 = vsel %vm2115, %v6504, %v6506
  %v6557 = vsel %vm2115, %v6506, %v6508
  %v6558 = vsel %vm2115, %v6510, %v6512
  %v6559 = vsel %vm2115, %v6512, %v6514
  %v6560 = vsel %vm2115, %v6514, %v6516
  %v6561 = vsel %vm2115, %v6518, %v6520
  %v6562 = vsel %vm2115, %v6520, %v6522
  %v6563 = vsel %vm2115, %v6522, %v6524
  %v6564 = vsel %vm2115, %v6526, %v6528
  %v6565 = vsel %vm2115, %v6528, %v6530
  %v6566 = vsel %vm2115, %v6530, %v6532
  %v6567 = vsel %vm2115, %v6534, %v6536
  %v6568 = vsel %vm2115, %v6536, %v6538
  %v6569 = vsel %vm2115, %v6538, %v6540
  %v6570 = vsel %vm2115, %v6542, %v6544
  %v6571 = vsel %vm2115, %v6544, %v6546
  %v6572 = vsel %vm2115, %v6546, %v6548
  %v6605 = vld [vmem:[%s9] sm:$0xff]
  %v6606 = vld [vmem:[%s9 + $0x8] sm:$0xff]
  %v6607 = vld [vmem:[%s9 + $0x10] sm:$0xf]
  %v6608 = vld [vmem:[%s9 + $0x14] sm:$0xff]
  %v6609 = vld [vmem:[%s9 + $0x1c] sm:$0xff]
  %v6610 = vld [vmem:[%s9 + $0x24] sm:$0xf]
  %v6611 = vld [vmem:[%s10] sm:$0xff]
  %v6612 = vld [vmem:[%s10 + $0x8] sm:$0xff]
  %6614 = vset.pattern.permute.xlu0 0
  %6615 = vperm.xlu0 %6614, %v6611
  %v6616 = vpop.permute.xlu0 %6615
  %6619 = vset.pattern.permute.xlu0 0
  %6620 = vperm.xlu0 %6619, %v6612
  %v6621 = vpop.permute.xlu0 %6620
  %v6629 = vunpack.c.l.b16 %v6605
  %v6630 = vunpack.c.h.b16 %v6605
  %v6631 = vunpack.c.l.b16 %v6606
  %v6632 = vunpack.c.h.b16 %v6606
  %v6633 = vunpack.c.l.b16 %v6607
  %v6634 = vunpack.c.l.b16 %v6608
  %v6635 = vunpack.c.h.b16 %v6608
  %v6636 = vunpack.c.l.b16 %v6609
  %v6637 = vunpack.c.h.b16 %v6609
  %v6638 = vunpack.c.l.b16 %v6610
  %v6639 = vpack.c.b16 %v6634, %v6629
  %v6640 = vpack.c.b16 %v6635, %v6630
  %v6641 = vpack.c.b16 %v6636, %v6631
  %v6642 = vpack.c.b16 %v6637, %v6632
  %v6643 = vpack.c.b16 %v6638, %v6633
  %6649 = vmatprep.subr.bf16.mxu0 %v6007
  %6650 = vmatpush1.bf16.msra.mxu0 %v6013
  %6651 = vmatprep.subr.bf16.mxu0 %v6029
  %6652 = vmatpush1.bf16.msra.mxu0 %v6028
  %6653 = vmatprep.subr.bf16.mxu0 %v6044
  %6654 = vmatpush1.bf16.msra.mxu0 %v6043
  %6655 = vmatprep.subr.bf16.mxu0 %v6059
  %6656 = vmatpush1.bf16.msra.mxu0 %v6058
  %6657 = vmatprep.subr.bf16.mxu0 %v6074
  %6658 = vmatpush1.bf16.msra.mxu0 %v6073
  %6659 = vmatprep.subr.bf16.mxu0 %v6089
  %6660 = vmatpush1.bf16.msra.mxu0 %v6088
  %6661 = vmatprep.subr.bf16.mxu0 %v6104
  %6662 = vmatpush1.bf16.msra.mxu0 %v6103
  %6663 = vmatprep.subr.bf16.mxu0 %v6119
  %6664 = vmatpush1.bf16.msra.mxu0 %v6118
  %6665 = vmatprep.subr.bf16.mxu0 %v6134
  %6666 = vmatpush1.bf16.msra.mxu0 %v6133
  %6667 = vmatprep.subr.bf16.mxu0 %v6149
  %6668 = vmatpush1.bf16.msra.mxu0 %v6148
  %6669 = vmatprep.subr.bf16.mxu0 %v6164
  %6670 = vmatpush1.bf16.msra.mxu0 %v6163
  %6671 = vmatprep.subr.bf16.mxu0 %v6179
  %6672 = vmatpush1.bf16.msra.mxu0 %v6178
  %6673 = vmatprep.subr.bf16.mxu0 %v6194
  %6674 = vmatpush1.bf16.msra.mxu0 %v6193
  %6675 = vmatprep.subr.bf16.mxu0 %v6209
  %6676 = vmatpush1.bf16.msra.mxu0 %v6208
  %6677 = vmatprep.subr.bf16.mxu0 %v6224
  %6678 = vmatpush1.bf16.msra.mxu0 %v6223
  %6679 = vmatprep.subr.bf16.mxu0 %v6239
  %6680 = vmatpush1.bf16.msra.mxu0 %v6238
  %6681 = vmatprep.mubr.bf16.mxu0 %v6640
  %6682 = vmatmul.mubr.bf16.gmra.mrb[0].mxu0 %v6639
  %v6683 = vpop.f32.mrb[0].mxu0
  %v6684 = vadd.f32 %v6616, %v6683
  %v6685 = vpop.f32.mrb[0].mxu0
  %v6686 = vadd.f32 %v6616, %v6685
  %v6687 = vpop.f32.mrb[0].mxu0
  %v6688 = vadd.f32 %v6621, %v6687
  %v6689 = vpop.f32.mrb[0].mxu0
  %v6690 = vadd.f32 %v6621, %v6689
  %6691 = vdwg.mxu0
  %6692 = vmatprep.subr.bf16.mxu0 %v6374
  %6693 = vmatpush1.bf16.msra.mxu0 %v6373
  %6694 = vmatprep.subr.bf16.mxu0 %v6377
  %6695 = vmatpush1.bf16.msra.mxu0 %v6376
  %6696 = vmatprep.subr.bf16.mxu0 %v6380
  %6697 = vmatpush1.bf16.msra.mxu0 %v6379
  %6698 = vmatprep.subr.bf16.mxu0 %v6383
  %6699 = vmatpush1.bf16.msra.mxu0 %v6382
  %6700 = vmatprep.subr.bf16.mxu0 %v6386
  %6701 = vmatpush1.bf16.msra.mxu0 %v6385
  %6702 = vmatprep.subr.bf16.mxu0 %v6389
  %6703 = vmatpush1.bf16.msra.mxu0 %v6388
  %6704 = vmatprep.subr.bf16.mxu0 %v6392
  %6705 = vmatpush1.bf16.msra.mxu0 %v6391
  %6706 = vmatprep.subr.bf16.mxu0 %v6395
  %6707 = vmatpush1.bf16.msra.mxu0 %v6394
  %6708 = vmatprep.subr.bf16.mxu0 %v6398
  %6709 = vmatpush1.bf16.msra.mxu0 %v6397
  %6710 = vmatprep.subr.bf16.mxu0 %v6401
  %6711 = vmatpush1.bf16.msra.mxu0 %v6400
  %6712 = vmatprep.subr.bf16.mxu0 %v6404
  %6713 = vmatpush1.bf16.msra.mxu0 %v6403
  %6714 = vmatprep.subr.bf16.mxu0 %v6407
  %6715 = vmatpush1.bf16.msra.mxu0 %v6406
  %6716 = vmatprep.subr.bf16.mxu0 %v6410
  %6717 = vmatpush1.bf16.msra.mxu0 %v6409
  %6718 = vmatprep.subr.bf16.mxu0 %v6413
  %6719 = vmatpush1.bf16.msra.mxu0 %v6412
  %6720 = vmatprep.subr.bf16.mxu0 %v6416
  %6721 = vmatpush1.bf16.msra.mxu0 %v6415
  %6722 = vmatprep.subr.bf16.mxu0 %v6419
  %6723 = vmatpush1.bf16.msra.mxu0 %v6418
  %6724 = vmatprep.mubr.bf16.mxu0 %v6642
  %6725 = vmatmul.mubr.bf16.gmra.mrb[0].mxu0 %v6641
  %v6726 = vpop.f32.mrb[0].mxu0
  %v6727 = vadd.f32 %v6684, %v6726
  %v6728 = vpop.f32.mrb[0].mxu0
  %v6729 = vadd.f32 %v6686, %v6728
  %v6730 = vpop.f32.mrb[0].mxu0
  %v6731 = vadd.f32 %v6688, %v6730
  %v6732 = vpop.f32.mrb[0].mxu0
  %v6733 = vadd.f32 %v6690, %v6732
  %6734 = vdwg.mxu0
  %6735 = vmatprep.subr.bf16.mxu0 %v6550
  %6736 = vmatpush1.bf16.msra.mxu0 %v6549
  %6737 = vmatprep.subr.bf16.mxu0 %v6553
  %6738 = vmatpush1.bf16.msra.mxu0 %v6552
  %6739 = vmatprep.subr.bf16.mxu0 %v6556
  %6740 = vmatpush1.bf16.msra.mxu0 %v6555
  %6741 = vmatprep.subr.bf16.mxu0 %v6559
  %6742 = vmatpush1.bf16.msra.mxu0 %v6558
  %6743 = vmatprep.subr.bf16.mxu0 %v6562
  %6744 = vmatpush1.bf16.msra.mxu0 %v6561
  %6745 = vmatprep.subr.bf16.mxu0 %v6565
  %6746 = vmatpush1.bf16.msra.mxu0 %v6564
  %6747 = vmatprep.subr.bf16.mxu0 %v6568
  %6748 = vmatpush1.bf16.msra.mxu0 %v6567
  %6749 = vmatprep.subr.bf16.mxu0 %v6571
  %6750 = vmatpush1.bf16.msra.mxu0 %v6570
  %6751 = vmatprep.subr.bf16.mxu0 0
  %6752 = vmatpush1.bf16.msra.mxu0 0
  %6753 = vmatprep.subr.bf16.mxu0 0
  %6754 = vmatpush1.bf16.msra.mxu0 0
  %6755 = vmatprep.subr.bf16.mxu0 0
  %6756 = vmatpush1.bf16.msra.mxu0 0
  %6757 = vmatprep.subr.bf16.mxu0 0
  %6758 = vmatpush1.bf16.msra.mxu0 0
  %6759 = vmatprep.subr.bf16.mxu0 0
  %6760 = vmatpush1.bf16.msra.mxu0 0
  %6761 = vmatprep.subr.bf16.mxu0 0
  %6762 = vmatpush1.bf16.msra.mxu0 0
  %6763 = vmatprep.subr.bf16.mxu0 0
  %6764 = vmatpush1.bf16.msra.mxu0 0
  %6765 = vmatprep.subr.bf16.mxu0 0
  %6766 = vmatpush1.bf16.msra.mxu0 0
  %6767 = vmatprep.mubr.bf16.mxu0 0
  %6768 = vmatmul.mubr.bf16.gmra.mrb[0].mxu0 %v6643
  %v6769 = vpop.f32.mrb[0].mxu0
  %v6770 = vadd.f32 %v6727, %v6769
  %v6771 = vpop.f32.mrb[0].mxu0
  %v6772 = vadd.f32 %v6729, %v6771
  %v6773 = vpop.f32.mrb[0].mxu0
  %v6774 = vadd.f32 %v6731, %v6773
  %v6775 = vpop.f32.mrb[0].mxu0
  %v6776 = vadd.f32 %v6733, %v6775
  %6777 = vdwg.mxu0
  %6778 = vmatprep.subr.bf16.mxu0 %v6016
  %6779 = vmatpush1.bf16.msra.mxu0 %v6008
  %6780 = vmatprep.subr.bf16.mxu0 %v6027
  %6781 = vmatpush1.bf16.msra.mxu0 %v6030
  %6782 = vmatprep.subr.bf16.mxu0 %v6042
  %6783 = vmatpush1.bf16.msra.mxu0 %v6045
  %6784 = vmatprep.subr.bf16.mxu0 %v6057
  %6785 = vmatpush1.bf16.msra.mxu0 %v6060
  %6786 = vmatprep.subr.bf16.mxu0 %v6072
  %6787 = vmatpush1.bf16.msra.mxu0 %v6075
  %6788 = vmatprep.subr.bf16.mxu0 %v6087
  %6789 = vmatpush1.bf16.msra.mxu0 %v6090
  %6790 = vmatprep.subr.bf16.mxu0 %v6102
  %6791 = vmatpush1.bf16.msra.mxu0 %v6105
  %6792 = vmatprep.subr.bf16.mxu0 %v6117
  %6793 = vmatpush1.bf16.msra.mxu0 %v6120
  %6794 = vmatprep.subr.bf16.mxu0 %v6132
  %6795 = vmatpush1.bf16.msra.mxu0 %v6135
  %6796 = vmatprep.subr.bf16.mxu0 %v6147
  %6797 = vmatpush1.bf16.msra.mxu0 %v6150
  %6798 = vmatprep.subr.bf16.mxu0 %v6162
  %6799 = vmatpush1.bf16.msra.mxu0 %v6165
  %6800 = vmatprep.subr.bf16.mxu0 %v6177
  %6801 = vmatpush1.bf16.msra.mxu0 %v6180
  %6802 = vmatprep.subr.bf16.mxu0 %v6192
  %6803 = vmatpush1.bf16.msra.mxu0 %v6195
  %6804 = vmatprep.subr.bf16.mxu0 %v6207
  %6805 = vmatpush1.bf16.msra.mxu0 %v6210
  %6806 = vmatprep.subr.bf16.mxu0 %v6222
  %6807 = vmatpush1.bf16.msra.mxu0 %v6225
  %6808 = vmatprep.subr.bf16.mxu0 %v6237
  %6809 = vmatpush1.bf16.msra.mxu0 %v6240
  %6810 = vmatprep.mubr.bf16.mxu0 %v6640
  %6811 = vmatmul.mubr.bf16.gmra.mrb[0].mxu0 %v6639
  %v6812 = vpop.f32.mrb[0].mxu0
  %v6813 = vadd.f32 %v6616, %v6812
  %v6814 = vpop.f32.mrb[0].mxu0
  %v6815 = vadd.f32 %v6616, %v6814
  %v6816 = vpop.f32.mrb[0].mxu0
  %v6817 = vadd.f32 %v6621, %v6816
  %v6818 = vpop.f32.mrb[0].mxu0
  %v6819 = vadd.f32 %v6621, %v6818
  %6820 = vdwg.mxu0
  %6821 = vmatprep.subr.bf16.mxu0 %v6252
  %6822 = vmatpush1.bf16.msra.mxu0 %v6375
  %6823 = vmatprep.subr.bf16.mxu0 %v6260
  %6824 = vmatpush1.bf16.msra.mxu0 %v6378
  %6825 = vmatprep.subr.bf16.mxu0 %v6268
  %6826 = vmatpush1.bf16.msra.mxu0 %v6381
  %6827 = vmatprep.subr.bf16.mxu0 %v6276
  %6828 = vmatpush1.bf16.msra.mxu0 %v6384
  %6829 = vmatprep.subr.bf16.mxu0 %v6284
  %6830 = vmatpush1.bf16.msra.mxu0 %v6387
  %6831 = vmatprep.subr.bf16.mxu0 %v6292
  %6832 = vmatpush1.bf16.msra.mxu0 %v6390
  %6833 = vmatprep.subr.bf16.mxu0 %v6300
  %6834 = vmatpush1.bf16.msra.mxu0 %v6393
  %6835 = vmatprep.subr.bf16.mxu0 %v6308
  %6836 = vmatpush1.bf16.msra.mxu0 %v6396
  %6837 = vmatprep.subr.bf16.mxu0 %v6316
  %6838 = vmatpush1.bf16.msra.mxu0 %v6399
  %6839 = vmatprep.subr.bf16.mxu0 %v6324
  %6840 = vmatpush1.bf16.msra.mxu0 %v6402
  %6841 = vmatprep.subr.bf16.mxu0 %v6332
  %6842 = vmatpush1.bf16.msra.mxu0 %v6405
  %6843 = vmatprep.subr.bf16.mxu0 %v6340
  %6844 = vmatpush1.bf16.msra.mxu0 %v6408
  %6845 = vmatprep.subr.bf16.mxu0 %v6348
  %6846 = vmatpush1.bf16.msra.mxu0 %v6411
  %6847 = vmatprep.subr.bf16.mxu0 %v6356
  %6848 = vmatpush1.bf16.msra.mxu0 %v6414
  %6849 = vmatprep.subr.bf16.mxu0 %v6364
  %6850 = vmatpush1.bf16.msra.mxu0 %v6417
  %6851 = vmatprep.subr.bf16.mxu0 %v6372
  %6852 = vmatpush1.bf16.msra.mxu0 %v6420
  %6853 = vmatprep.mubr.bf16.mxu0 %v6642
  %6854 = vmatmul.mubr.bf16.gmra.mrb[0].mxu0 %v6641
  %v6855 = vpop.f32.mrb[0].mxu0
  %v6856 = vadd.f32 %v6813, %v6855
  %v6857 = vpop.f32.mrb[0].mxu0
  %v6858 = vadd.f32 %v6815, %v6857
  %v6859 = vpop.f32.mrb[0].mxu0
  %v6860 = vadd.f32 %v6817, %v6859
  %v6861 = vpop.f32.mrb[0].mxu0
  %v6862 = vadd.f32 %v6819, %v6861
  %6863 = vdwg.mxu0
  %6864 = vmatprep.subr.bf16.mxu0 %v6492
  %6865 = vmatpush1.bf16.msra.mxu0 %v6551
  %6866 = vmatprep.subr.bf16.mxu0 %v6500
  %6867 = vmatpush1.bf16.msra.mxu0 %v6554
  %6868 = vmatprep.subr.bf16.mxu0 %v6508
  %6869 = vmatpush1.bf16.msra.mxu0 %v6557
  %6870 = vmatprep.subr.bf16.mxu0 %v6516
  %6871 = vmatpush1.bf16.msra.mxu0 %v6560
  %6872 = vmatprep.subr.bf16.mxu0 %v6524
  %6873 = vmatpush1.bf16.msra.mxu0 %v6563
  %6874 = vmatprep.subr.bf16.mxu0 %v6532
  %6875 = vmatpush1.bf16.msra.mxu0 %v6566
  %6876 = vmatprep.subr.bf16.mxu0 %v6540
  %6877 = vmatpush1.bf16.msra.mxu0 %v6569
  %6878 = vmatprep.subr.bf16.mxu0 %v6548
  %6879 = vmatpush1.bf16.msra.mxu0 %v6572
  %6880 = vmatprep.subr.bf16.mxu0 0
  %6881 = vmatpush1.bf16.msra.mxu0 0
  %6882 = vmatprep.subr.bf16.mxu0 0
  %6883 = vmatpush1.bf16.msra.mxu0 0
  %6884 = vmatprep.subr.bf16.mxu0 0
  %6885 = vmatpush1.bf16.msra.mxu0 0
  %6886 = vmatprep.subr.bf16.mxu0 0
  %6887 = vmatpush1.bf16.msra.mxu0 0
  %6888 = vmatprep.subr.bf16.mxu0 0
  %6889 = vmatpush1.bf16.msra.mxu0 0
  %6890 = vmatprep.subr.bf16.mxu0 0
  %6891 = vmatpush1.bf16.msra.mxu0 0
  %6892 = vmatprep.subr.bf16.mxu0 0
  %6893 = vmatpush1.bf16.msra.mxu0 0
  %6894 = vmatprep.subr.bf16.mxu0 0
  %6895 = vmatpush1.bf16.msra.mxu0 0
  %6896 = vmatprep.mubr.bf16.mxu0 0
  %6897 = vmatmul.mubr.bf16.gmra.mrb[0].mxu0 %v6643
  %v6898 = vpop.f32.mrb[0].mxu0
  %v6899 = vadd.f32 %v6856, %v6898
  %v6900 = vpop.f32.mrb[0].mxu0
  %v6901 = vadd.f32 %v6858, %v6900
  %v6902 = vpop.f32.mrb[0].mxu0
  %v6903 = vadd.f32 %v6860, %v6902
  %v6904 = vpop.f32.mrb[0].mxu0
  %v6905 = vadd.f32 %v6862, %v6904
  %6906 = vdwg.mxu0
  %v6907 = vpack.c.bf16 %v6774, %v6770
  %v6908 = vpack.c.bf16 %v6776, %v6772
  %v6909 = vpack.c.bf16 %v6903, %v6899
  %v6910 = vpack.c.bf16 %v6905, %v6901
  %v6911 = vld [vmem:[%s11] sm:$0xff]
  %v6912 = vld [vmem:[%s11 + $0x8] sm:$0xff]
  %v6913 = vld [vmem:[%s11 + $0x10] sm:$0xf]
  %v6914 = vld [vmem:[%s11 + $0x14] sm:$0xff]
  %v6915 = vld [vmem:[%s11 + $0x1c] sm:$0xff]
  %v6916 = vld [vmem:[%s11 + $0x24] sm:$0xf]
  %v6917 = vld [vmem:[%s11 + $0x28] sm:$0xff]
  %v6918 = vld [vmem:[%s11 + $0x30] sm:$0xff]
  %v6919 = vld [vmem:[%s11 + $0x38] sm:$0xf]
  %v6920 = vld [vmem:[%s11 + $0x3c] sm:$0xff]
  %v6921 = vld [vmem:[%s11 + $0x44] sm:$0xff]
  %v6922 = vld [vmem:[%s11 + $0x4c] sm:$0xf]
  %v6923 = vld [vmem:[%s11 + $0x50] sm:$0xff]
  %v6924 = vld [vmem:[%s11 + $0x58] sm:$0xff]
  %v6925 = vld [vmem:[%s11 + $0x60] sm:$0xf]
  %v6926 = vld [vmem:[%s11 + $0x64] sm:$0xff]
  %v6927 = vld [vmem:[%s11 + $0x6c] sm:$0xff]
  %v6928 = vld [vmem:[%s11 + $0x74] sm:$0xf]
  %v6929 = vld [vmem:[%s11 + $0x78] sm:$0xff]
  %v6930 = vld [vmem:[%s11 + $0x80] sm:$0xff]
  %v6931 = vld [vmem:[%s11 + $0x88] sm:$0xf]
  %v6932 = vld [vmem:[%s11 + $0x8c] sm:$0xff]
  %v6933 = vld [vmem:[%s11 + $0x94] sm:$0xff]
  %v6934 = vld [vmem:[%s11 + $0x9c] sm:$0xf]
  %v6935 = vld [vmem:[%s11 + $0xa0] sm:$0xff]
  %v6936 = vld [vmem:[%s11 + $0xa8] sm:$0xff]
  %v6937 = vld [vmem:[%s11 + $0xb0] sm:$0xf]
  %v6938 = vld [vmem:[%s11 + $0xb4] sm:$0xff]
  %v6939 = vld [vmem:[%s11 + $0xbc] sm:$0xff]
  %v6940 = vld [vmem:[%s11 + $0xc4] sm:$0xf]
  %v6941 = vld [vmem:[%s11 + $0xc8] sm:$0xff]
  %v6942 = vld [vmem:[%s11 + $0xd0] sm:$0xff]
  %v6943 = vld [vmem:[%s11 + $0xd8] sm:$0xf]
  %v6944 = vld [vmem:[%s11 + $0xdc] sm:$0xff]
  %v6945 = vld [vmem:[%s11 + $0xe4] sm:$0xff]
  %v6946 = vld [vmem:[%s11 + $0xec] sm:$0xf]
  %v6947 = vld [vmem:[%s11 + $0xf0] sm:$0xff]
  %v6948 = vld [vmem:[%s11 + $0xf8] sm:$0xff]
  %v6949 = vld [vmem:[%s11 + $0x100] sm:$0xf]
  %v6950 = vld [vmem:[%s11 + $0x104] sm:$0xff]
  %v6951 = vld [vmem:[%s11 + $0x10c] sm:$0xff]
  %v6952 = vld [vmem:[%s11 + $0x114] sm:$0xf]
  %v6953 = vld [vmem:[%s11 + $0x118] sm:$0xff]
  %v6954 = vld [vmem:[%s11 + $0x120] sm:$0xff]
  %v6955 = vld [vmem:[%s11 + $0x128] sm:$0xf]
  %v6956 = vld [vmem:[%s11 + $0x12c] sm:$0xff]
  %v6957 = vld [vmem:[%s11 + $0x134] sm:$0xff]
  %v6958 = vld [vmem:[%s11 + $0x13c] sm:$0xf]
  %v6959 = vld [vmem:[%s11 + $0x140] sm:$0xff]
  %v6960 = vld [vmem:[%s11 + $0x148] sm:$0xff]
  %v6961 = vld [vmem:[%s11 + $0x150] sm:$0xf]
  %v6962 = vld [vmem:[%s11 + $0x154] sm:$0xff]
  %v6963 = vld [vmem:[%s11 + $0x15c] sm:$0xff]
  %v6964 = vld [vmem:[%s11 + $0x164] sm:$0xf]
  %v6965 = vld [vmem:[%s11 + $0x168] sm:$0xff]
  %v6966 = vld [vmem:[%s11 + $0x170] sm:$0xff]
  %v6967 = vld [vmem:[%s11 + $0x178] sm:$0xf]
  %v6968 = vld [vmem:[%s11 + $0x17c] sm:$0xff]
  %v6969 = vld [vmem:[%s11 + $0x184] sm:$0xff]
  %v6970 = vld [vmem:[%s11 + $0x18c] sm:$0xf]
  %v6971 = vld [vmem:[%s11 + $0x190] sm:$0xff]
  %v6972 = vld [vmem:[%s11 + $0x198] sm:$0xff]
  %v6973 = vld [vmem:[%s11 + $0x1a0] sm:$0xf]
  %v6974 = vld [vmem:[%s11 + $0x1a4] sm:$0xff]
  %v6975 = vld [vmem:[%s11 + $0x1ac] sm:$0xff]
  %v6976 = vld [vmem:[%s11 + $0x1b4] sm:$0xf]
  %v6977 = vld [vmem:[%s11 + $0x1b8] sm:$0xff]
  %v6978 = vld [vmem:[%s11 + $0x1c0] sm:$0xff]
  %v6979 = vld [vmem:[%s11 + $0x1c8] sm:$0xf]
  %v6980 = vld [vmem:[%s11 + $0x1cc] sm:$0xff]
  %v6981 = vld [vmem:[%s11 + $0x1d4] sm:$0xff]
  %v6982 = vld [vmem:[%s11 + $0x1dc] sm:$0xf]
  %v6983 = vld [vmem:[%s11 + $0x1e0] sm:$0xff]
  %v6984 = vld [vmem:[%s11 + $0x1e8] sm:$0xff]
  %v6985 = vld [vmem:[%s11 + $0x1f0] sm:$0xf]
  %v6986 = vld [vmem:[%s11 + $0x1f4] sm:$0xff]
  %v6987 = vld [vmem:[%s11 + $0x1fc] sm:$0xff]
  %v6988 = vld [vmem:[%s11 + $0x204] sm:$0xf]
  %v6989 = vld [vmem:[%s11 + $0x208] sm:$0xff]
  %v6990 = vld [vmem:[%s11 + $0x210] sm:$0xff]
  %v6991 = vld [vmem:[%s11 + $0x218] sm:$0xf]
  %v6992 = vld [vmem:[%s11 + $0x21c] sm:$0xff]
  %v6993 = vld [vmem:[%s11 + $0x224] sm:$0xff]
  %v6994 = vld [vmem:[%s11 + $0x22c] sm:$0xf]
  %v6995 = vld [vmem:[%s11 + $0x230] sm:$0xff]
  %v6996 = vld [vmem:[%s11 + $0x238] sm:$0xff]
  %v6997 = vld [vmem:[%s11 + $0x240] sm:$0xf]
  %v6998 = vld [vmem:[%s11 + $0x244] sm:$0xff]
  %v6999 = vld [vmem:[%s11 + $0x24c] sm:$0xff]
  %v7000 = vld [vmem:[%s11 + $0x254] sm:$0xf]
  %v7001 = vld [vmem:[%s11 + $0x258] sm:$0xff]
  %v7002 = vld [vmem:[%s11 + $0x260] sm:$0xff]
  %v7003 = vld [vmem:[%s11 + $0x268] sm:$0xf]
  %v7004 = vld [vmem:[%s11 + $0x26c] sm:$0xff]
  %v7005 = vld [vmem:[%s11 + $0x274] sm:$0xff]
  %v7006 = vld [vmem:[%s11 + $0x27c] sm:$0xf]
  %v7007 = vld [vmem:[%s11 + $0x280] sm:$0xff]
  %v7008 = vld [vmem:[%s11 + $0x288] sm:$0xff]
  %v7009 = vld [vmem:[%s11 + $0x290] sm:$0xf]
  %v7010 = vld [vmem:[%s11 + $0x294] sm:$0xff]
  %v7011 = vld [vmem:[%s11 + $0x29c] sm:$0xff]
  %v7012 = vld [vmem:[%s11 + $0x2a4] sm:$0xf]
  %v7013 = vld [vmem:[%s11 + $0x2a8] sm:$0xff]
  %v7014 = vld [vmem:[%s11 + $0x2b0] sm:$0xff]
  %v7015 = vld [vmem:[%s11 + $0x2b8] sm:$0xf]
  %v7016 = vld [vmem:[%s11 + $0x2bc] sm:$0xff]
  %v7017 = vld [vmem:[%s11 + $0x2c4] sm:$0xff]
  %v7018 = vld [vmem:[%s11 + $0x2cc] sm:$0xf]
  %v7019 = vld [vmem:[%s11 + $0x2d0] sm:$0xff]
  %v7020 = vld [vmem:[%s11 + $0x2d8] sm:$0xff]
  %v7021 = vld [vmem:[%s11 + $0x2e0] sm:$0xf]
  %v7022 = vld [vmem:[%s11 + $0x2e4] sm:$0xff]
  %v7023 = vld [vmem:[%s11 + $0x2ec] sm:$0xff]
  %v7024 = vld [vmem:[%s11 + $0x2f4] sm:$0xf]
  %v7025 = vld [vmem:[%s11 + $0x2f8] sm:$0xff]
  %v7026 = vld [vmem:[%s11 + $0x300] sm:$0xff]
  %v7027 = vld [vmem:[%s11 + $0x308] sm:$0xf]
  %v7028 = vld [vmem:[%s11 + $0x30c] sm:$0xff]
  %v7029 = vld [vmem:[%s11 + $0x314] sm:$0xff]
  %v7030 = vld [vmem:[%s11 + $0x31c] sm:$0xf]
  %v7031 = vld [vmem:[%s11 + $0x320] sm:$0xff]
  %v7032 = vld [vmem:[%s11 + $0x328] sm:$0xff]
  %v7033 = vld [vmem:[%s11 + $0x330] sm:$0xf]
  %v7034 = vld [vmem:[%s11 + $0x334] sm:$0xff]
  %v7035 = vld [vmem:[%s11 + $0x33c] sm:$0xff]
  %v7036 = vld [vmem:[%s11 + $0x344] sm:$0xf]
  %v7037 = vld [vmem:[%s11 + $0x348] sm:$0xff]
  %v7038 = vld [vmem:[%s11 + $0x350] sm:$0xff]
  %v7039 = vld [vmem:[%s11 + $0x358] sm:$0xf]
  %v7040 = vld [vmem:[%s11 + $0x35c] sm:$0xff]
  %v7041 = vld [vmem:[%s11 + $0x364] sm:$0xff]
  %v7042 = vld [vmem:[%s11 + $0x36c] sm:$0xf]
  %v7043 = vld [vmem:[%s11 + $0x370] sm:$0xff]
  %v7044 = vld [vmem:[%s11 + $0x378] sm:$0xff]
  %v7045 = vld [vmem:[%s11 + $0x380] sm:$0xf]
  %v7046 = vld [vmem:[%s11 + $0x384] sm:$0xff]
  %v7047 = vld [vmem:[%s11 + $0x38c] sm:$0xff]
  %v7048 = vld [vmem:[%s11 + $0x394] sm:$0xf]
  %v7049 = vld [vmem:[%s11 + $0x398] sm:$0xff]
  %v7050 = vld [vmem:[%s11 + $0x3a0] sm:$0xff]
  %v7051 = vld [vmem:[%s11 + $0x3a8] sm:$0xf]
  %v7052 = vld [vmem:[%s11 + $0x3ac] sm:$0xff]
  %v7053 = vld [vmem:[%s11 + $0x3b4] sm:$0xff]
  %v7054 = vld [vmem:[%s11 + $0x3bc] sm:$0xf]
  %v7055 = vld [vmem:[%s11 + $0x3c0] sm:$0xff]
  %v7056 = vld [vmem:[%s11 + $0x3c8] sm:$0xff]
  %v7057 = vld [vmem:[%s11 + $0x3d0] sm:$0xf]
  %v7058 = vld [vmem:[%s11 + $0x3d4] sm:$0xff]
  %v7059 = vld [vmem:[%s11 + $0x3dc] sm:$0xff]
  %v7060 = vld [vmem:[%s11 + $0x3e4] sm:$0xf]
  %v7061 = vld [vmem:[%s11 + $0x3e8] sm:$0xff]
  %v7062 = vld [vmem:[%s11 + $0x3f0] sm:$0xff]
  %v7063 = vld [vmem:[%s11 + $0x3f8] sm:$0xf]
  %v7064 = vld [vmem:[%s11 + $0x3fc] sm:$0xff]
  %v7065 = vld [vmem:[%s11 + $0x404] sm:$0xff]
  %v7066 = vld [vmem:[%s11 + $0x40c] sm:$0xf]
  %v7067 = vld [vmem:[%s11 + $0x410] sm:$0xff]
  %v7068 = vld [vmem:[%s11 + $0x418] sm:$0xff]
  %v7069 = vld [vmem:[%s11 + $0x420] sm:$0xf]
  %v7070 = vld [vmem:[%s11 + $0x424] sm:$0x11]
  %v7071 = vld [vmem:[%s11 + $0x42c] sm:$0x11]
  %v7072 = vld [vmem:[%s11 + $0x434] sm:$0x1]
  %v7073 = vld [vmem:[%s12] sm:$0x1f]
  %v7075 = vlaneseq
  %v7076 = vshrl.u32 %v7075, 7
  %v7077 = vsub.s32 0, %v7076
  %v7078 = vrot.slane %v7073, %v7077
  %v7079 = vlaneseq
  %v7080 = vshrl.u32 %v7079, 7
  %v7081 = vsub.s32 1, %v7080
  %v7082 = vrot.slane %v7073, %v7081
  %v7083 = vlaneseq
  %v7084 = vshrl.u32 %v7083, 7
  %v7085 = vsub.s32 2, %v7084
  %v7086 = vrot.slane %v7073, %v7085
  %v7087 = vlaneseq
  %v7088 = vshrl.u32 %v7087, 7
  %v7089 = vsub.s32 3, %v7088
  %v7090 = vrot.slane %v7073, %v7089
  %v7091 = vlaneseq
  %v7092 = vshrl.u32 %v7091, 7
  %v7093 = vsub.s32 4, %v7092
  %v7094 = vrot.slane %v7073, %v7093
  %v7262 = vunpack.c.l.b16 %v6911
  %v7263 = vunpack.c.h.b16 %v6911
  %v7264 = vunpack.c.l.b16 %v6912
  %v7265 = vunpack.c.h.b16 %v6912
  %v7266 = vunpack.c.l.b16 %v6913
  %v7267 = vunpack.c.l.b16 %v6914
  %v7268 = vunpack.c.h.b16 %v6914
  %v7269 = vunpack.c.l.b16 %v6915
  %v7270 = vunpack.c.h.b16 %v6915
  %v7271 = vunpack.c.l.b16 %v6916
  %v7272 = vunpack.c.l.b16 %v6917
  %v7273 = vunpack.c.h.b16 %v6917
  %v7274 = vunpack.c.l.b16 %v6918
  %v7275 = vunpack.c.h.b16 %v6918
  %v7276 = vunpack.c.l.b16 %v6919
  %v7277 = vunpack.c.l.b16 %v6920
  %v7278 = vunpack.c.h.b16 %v6920
  %v7279 = vunpack.c.l.b16 %v6921
  %v7280 = vunpack.c.h.b16 %v6921
  %v7281 = vunpack.c.l.b16 %v6922
  %v7282 = vunpack.c.l.b16 %v6923
  %v7283 = vunpack.c.h.b16 %v6923
  %v7284 = vunpack.c.l.b16 %v6924
  %v7285 = vunpack.c.h.b16 %v6924
  %v7286 = vunpack.c.l.b16 %v6925
  %v7287 = vunpack.c.l.b16 %v6926
  %v7288 = vunpack.c.h.b16 %v6926
  %v7289 = vunpack.c.l.b16 %v6927
  %v7290 = vunpack.c.h.b16 %v6927
  %v7291 = vunpack.c.l.b16 %v6928
  %v7292 = vunpack.c.l.b16 %v6929
  %v7293 = vunpack.c.h.b16 %v6929
  %v7294 = vunpack.c.l.b16 %v6930
  %v7295 = vunpack.c.h.b16 %v6930
  %v7296 = vunpack.c.l.b16 %v6931
  %v7297 = vunpack.c.l.b16 %v6932
  %v7298 = vunpack.c.h.b16 %v6932
  %v7299 = vunpack.c.l.b16 %v6933
  %v7300 = vunpack.c.h.b16 %v6933
  %v7301 = vunpack.c.l.b16 %v6934
  %v7302 = vunpack.c.l.b16 %v6935
  %v7303 = vunpack.c.h.b16 %v6935
  %v7304 = vunpack.c.l.b16 %v6936
  %v7305 = vunpack.c.h.b16 %v6936
  %v7306 = vunpack.c.l.b16 %v6937
  %v7307 = vunpack.c.l.b16 %v6938
  %v7308 = vunpack.c.h.b16 %v6938
  %v7309 = vunpack.c.l.b16 %v6939
  %v7310 = vunpack.c.h.b16 %v6939
  %v7311 = vunpack.c.l.b16 %v6940
  %v7312 = vunpack.c.l.b16 %v6941
  %v7313 = vunpack.c.h.b16 %v6941
  %v7314 = vunpack.c.l.b16 %v6942
  %v7315 = vunpack.c.h.b16 %v6942
  %v7316 = vunpack.c.l.b16 %v6943
  %v7317 = vunpack.c.l.b16 %v6944
  %v7318 = vunpack.c.h.b16 %v6944
  %v7319 = vunpack.c.l.b16 %v6945
  %v7320 = vunpack.c.h.b16 %v6945
  %v7321 = vunpack.c.l.b16 %v6946
  %v7322 = vunpack.c.l.b16 %v6947
  %v7323 = vunpack.c.h.b16 %v6947
  %v7324 = vunpack.c.l.b16 %v6948
  %v7325 = vunpack.c.h.b16 %v6948
  %v7326 = vunpack.c.l.b16 %v6949
  %v7327 = vunpack.c.l.b16 %v6950
  %v7328 = vunpack.c.h.b16 %v6950
  %v7329 = vunpack.c.l.b16 %v6951
  %v7330 = vunpack.c.h.b16 %v6951
  %v7331 = vunpack.c.l.b16 %v6952
  %v7332 = vunpack.c.l.b16 %v6953
  %v7333 = vunpack.c.h.b16 %v6953
  %v7334 = vunpack.c.l.b16 %v6954
  %v7335 = vunpack.c.h.b16 %v6954
  %v7336 = vunpack.c.l.b16 %v6955
  %v7337 = vunpack.c.l.b16 %v6956
  %v7338 = vunpack.c.h.b16 %v6956
  %v7339 = vunpack.c.l.b16 %v6957
  %v7340 = vunpack.c.h.b16 %v6957
  %v7341 = vunpack.c.l.b16 %v6958
  %v7342 = vunpack.c.l.b16 %v6959
  %v7343 = vunpack.c.h.b16 %v6959
  %v7344 = vunpack.c.l.b16 %v6960
  %v7345 = vunpack.c.h.b16 %v6960
  %v7346 = vunpack.c.l.b16 %v6961
  %v7347 = vunpack.c.l.b16 %v6962
  %v7348 = vunpack.c.h.b16 %v6962
  %v7349 = vunpack.c.l.b16 %v6963
  %v7350 = vunpack.c.h.b16 %v6963
  %v7351 = vunpack.c.l.b16 %v6964
  %v7352 = vunpack.c.l.b16 %v6965
  %v7353 = vunpack.c.h.b16 %v6965
  %v7354 = vunpack.c.l.b16 %v6966
  %v7355 = vunpack.c.h.b16 %v6966
  %v7356 = vunpack.c.l.b16 %v6967
  %v7357 = vunpack.c.l.b16 %v6968
  %v7358 = vunpack.c.h.b16 %v6968
  %v7359 = vunpack.c.l.b16 %v6969
  %v7360 = vunpack.c.h.b16 %v6969
  %v7361 = vunpack.c.l.b16 %v6970
  %v7362 = vunpack.c.l.b16 %v6971
  %v7363 = vunpack.c.h.b16 %v6971
  %v7364 = vunpack.c.l.b16 %v6972
  %v7365 = vunpack.c.h.b16 %v6972
  %v7366 = vunpack.c.l.b16 %v6973
  %v7367 = vunpack.c.l.b16 %v6974
  %v7368 = vunpack.c.h.b16 %v6974
  %v7369 = vunpack.c.l.b16 %v6975
  %v7370 = vunpack.c.h.b16 %v6975
  %v7371 = vunpack.c.l.b16 %v6976
  %v7372 = vunpack.c.l.b16 %v6977
  %v7373 = vunpack.c.h.b16 %v6977
  %v7374 = vunpack.c.l.b16 %v6978
  %v7375 = vunpack.c.h.b16 %v6978
  %v7376 = vunpack.c.l.b16 %v6979
  %v7377 = vunpack.c.l.b16 %v6980
  %v7378 = vunpack.c.h.b16 %v6980
  %v7379 = vunpack.c.l.b16 %v6981
  %v7380 = vunpack.c.h.b16 %v6981
  %v7381 = vunpack.c.l.b16 %v6982
  %v7382 = vunpack.c.l.b16 %v6983
  %v7383 = vunpack.c.h.b16 %v6983
  %v7384 = vunpack.c.l.b16 %v6984
  %v7385 = vunpack.c.h.b16 %v6984
  %v7386 = vunpack.c.l.b16 %v6985
  %v7387 = vunpack.c.l.b16 %v6986
  %v7388 = vunpack.c.h.b16 %v6986
  %v7389 = vunpack.c.l.b16 %v6987
  %v7390 = vunpack.c.h.b16 %v6987
  %v7391 = vunpack.c.l.b16 %v6988
  %v7392 = vunpack.c.l.b16 %v6989
  %v7393 = vunpack.c.h.b16 %v6989
  %v7394 = vunpack.c.l.b16 %v6990
  %v7395 = vunpack.c.h.b16 %v6990
  %v7396 = vunpack.c.l.b16 %v6991
  %v7397 = vunpack.c.l.b16 %v6992
  %v7398 = vunpack.c.h.b16 %v6992
  %v7399 = vunpack.c.l.b16 %v6993
  %v7400 = vunpack.c.h.b16 %v6993
  %v7401 = vunpack.c.l.b16 %v6994
  %v7402 = vunpack.c.l.b16 %v6995
  %v7403 = vunpack.c.h.b16 %v6995
  %v7404 = vunpack.c.l.b16 %v6996
  %v7405 = vunpack.c.h.b16 %v6996
  %v7406 = vunpack.c.l.b16 %v6997
  %v7407 = vunpack.c.l.b16 %v6998
  %v7408 = vunpack.c.h.b16 %v6998
  %v7409 = vunpack.c.l.b16 %v6999
  %v7410 = vunpack.c.h.b16 %v6999
  %v7411 = vunpack.c.l.b16 %v7000
  %v7412 = vunpack.c.l.b16 %v7001
  %v7413 = vunpack.c.h.b16 %v7001
  %v7414 = vunpack.c.l.b16 %v7002
  %v7415 = vunpack.c.h.b16 %v7002
  %v7416 = vunpack.c.l.b16 %v7003
  %v7417 = vunpack.c.l.b16 %v7004
  %v7418 = vunpack.c.h.b16 %v7004
  %v7419 = vunpack.c.l.b16 %v7005
  %v7420 = vunpack.c.h.b16 %v7005
  %v7421 = vunpack.c.l.b16 %v7006
  %v7422 = vunpack.c.l.b16 %v7007
  %v7423 = vunpack.c.h.b16 %v7007
  %v7424 = vunpack.c.l.b16 %v7008
  %v7425 = vunpack.c.h.b16 %v7008
  %v7426 = vunpack.c.l.b16 %v7009
  %v7427 = vunpack.c.l.b16 %v7010
  %v7428 = vunpack.c.h.b16 %v7010
  %v7429 = vunpack.c.l.b16 %v7011
  %v7430 = vunpack.c.h.b16 %v7011
  %v7431 = vunpack.c.l.b16 %v7012
  %v7432 = vunpack.c.l.b16 %v7013
  %v7433 = vunpack.c.h.b16 %v7013
  %v7434 = vunpack.c.l.b16 %v7014
  %v7435 = vunpack.c.h.b16 %v7014
  %v7436 = vunpack.c.l.b16 %v7015
  %v7437 = vunpack.c.l.b16 %v7016
  %v7438 = vunpack.c.h.b16 %v7016
  %v7439 = vunpack.c.l.b16 %v7017
  %v7440 = vunpack.c.h.b16 %v7017
  %v7441 = vunpack.c.l.b16 %v7018
  %v7442 = vunpack.c.l.b16 %v7019
  %v7443 = vunpack.c.h.b16 %v7019
  %v7444 = vunpack.c.l.b16 %v7020
  %v7445 = vunpack.c.h.b16 %v7020
  %v7446 = vunpack.c.l.b16 %v7021
  %v7447 = vunpack.c.l.b16 %v7022
  %v7448 = vunpack.c.h.b16 %v7022
  %v7449 = vunpack.c.l.b16 %v7023
  %v7450 = vunpack.c.h.b16 %v7023
  %v7451 = vunpack.c.l.b16 %v7024
  %v7452 = vunpack.c.l.b16 %v7025
  %v7453 = vunpack.c.h.b16 %v7025
  %v7454 = vunpack.c.l.b16 %v7026
  %v7455 = vunpack.c.h.b16 %v7026
  %v7456 = vunpack.c.l.b16 %v7027
  %v7457 = vunpack.c.l.b16 %v7028
  %v7458 = vunpack.c.h.b16 %v7028
  %v7459 = vunpack.c.l.b16 %v7029
  %v7460 = vunpack.c.h.b16 %v7029
  %v7461 = vunpack.c.l.b16 %v7030
  %v7462 = vunpack.c.l.b16 %v7031
  %v7463 = vunpack.c.h.b16 %v7031
  %v7464 = vunpack.c.l.b16 %v7032
  %v7465 = vunpack.c.h.b16 %v7032
  %v7466 = vunpack.c.l.b16 %v7033
  %v7467 = vunpack.c.l.b16 %v7034
  %v7468 = vunpack.c.h.b16 %v7034
  %v7469 = vunpack.c.l.b16 %v7035
  %v7470 = vunpack.c.h.b16 %v7035
  %v7471 = vunpack.c.l.b16 %v7036
  %v7472 = vunpack.c.l.b16 %v7037
  %v7473 = vunpack.c.h.b16 %v7037
  %v7474 = vunpack.c.l.b16 %v7038
  %v7475 = vunpack.c.h.b16 %v7038
  %v7476 = vunpack.c.l.b16 %v7039
  %v7477 = vunpack.c.l.b16 %v7040
  %v7478 = vunpack.c.h.b16 %v7040
  %v7479 = vunpack.c.l.b16 %v7041
  %v7480 = vunpack.c.h.b16 %v7041
  %v7481 = vunpack.c.l.b16 %v7042
  %v7482 = vunpack.c.l.b16 %v7043
  %v7483 = vunpack.c.h.b16 %v7043
  %v7484 = vunpack.c.l.b16 %v7044
  %v7485 = vunpack.c.h.b16 %v7044
  %v7486 = vunpack.c.l.b16 %v7045
  %v7487 = vunpack.c.l.b16 %v7046
  %v7488 = vunpack.c.h.b16 %v7046
  %v7489 = vunpack.c.l.b16 %v7047
  %v7490 = vunpack.c.h.b16 %v7047
  %v7491 = vunpack.c.l.b16 %v7048
  %v7492 = vunpack.c.l.b16 %v7049
  %v7493 = vunpack.c.h.b16 %v7049
  %v7494 = vunpack.c.l.b16 %v7050
  %v7495 = vunpack.c.h.b16 %v7050
  %v7496 = vunpack.c.l.b16 %v7051
  %v7497 = vunpack.c.l.b16 %v7052
  %v7498 = vunpack.c.h.b16 %v7052
  %v7499 = vunpack.c.l.b16 %v7053
  %v7500 = vunpack.c.h.b16 %v7053
  %v7501 = vunpack.c.l.b16 %v7054
  %v7502 = vunpack.c.l.b16 %v7055
  %v7503 = vunpack.c.h.b16 %v7055
  %v7504 = vunpack.c.l.b16 %v7056
  %v7505 = vunpack.c.h.b16 %v7056
  %v7506 = vunpack.c.l.b16 %v7057
  %v7507 = vunpack.c.l.b16 %v7058
  %v7508 = vunpack.c.h.b16 %v7058
  %v7509 = vunpack.c.l.b16 %v7059
  %v7510 = vunpack.c.h.b16 %v7059
  %v7511 = vunpack.c.l.b16 %v7060
  %v7512 = vunpack.c.l.b16 %v7061
  %v7513 = vunpack.c.h.b16 %v7061
  %v7514 = vunpack.c.l.b16 %v7062
  %v7515 = vunpack.c.h.b16 %v7062
  %v7516 = vunpack.c.l.b16 %v7063
  %v7517 = vunpack.c.l.b16 %v7064
  %v7518 = vunpack.c.h.b16 %v7064
  %v7519 = vunpack.c.l.b16 %v7065
  %v7520 = vunpack.c.h.b16 %v7065
  %v7521 = vunpack.c.l.b16 %v7066
  %v7522 = vunpack.c.l.b16 %v7067
  %v7523 = vunpack.c.h.b16 %v7067
  %v7524 = vunpack.c.l.b16 %v7068
  %v7525 = vunpack.c.h.b16 %v7068
  %v7526 = vunpack.c.l.b16 %v7069
  %v7527 = vunpack.c.l.b16 %v7070
  %v7528 = vunpack.c.h.b16 %v7070
  %v7529 = vunpack.c.l.b16 %v7071
  %v7530 = vunpack.c.h.b16 %v7071
  %v7531 = vunpack.c.l.b16 %v7072
  %v7532 = vpack.c.b16 %v7267, %v7262
  %v7533 = vpack.c.b16 %v7268, %v7263
  %v7534 = vpack.c.b16 %v7269, %v7264
  %v7535 = vpack.c.b16 %v7270, %v7265
  %v7536 = vpack.c.b16 %v7271, %v7266
  %v7537 = vpack.c.b16 %v7277, %v7272
  %v7538 = vpack.c.b16 %v7278, %v7273
  %v7539 = vpack.c.b16 %v7279, %v7274
  %v7540 = vpack.c.b16 %v7280, %v7275
  %v7541 = vpack.c.b16 %v7281, %v7276
  %v7542 = vpack.c.b16 %v7287, %v7282
  %v7543 = vpack.c.b16 %v7288, %v7283
  %v7544 = vpack.c.b16 %v7289, %v7284
  %v7545 = vpack.c.b16 %v7290, %v7285
  %v7546 = vpack.c.b16 %v7291, %v7286
  %v7547 = vpack.c.b16 %v7297, %v7292
  %v7548 = vpack.c.b16 %v7298, %v7293
  %v7549 = vpack.c.b16 %v7299, %v7294
  %v7550 = vpack.c.b16 %v7300, %v7295
  %v7551 = vpack.c.b16 %v7301, %v7296
  %v7552 = vpack.c.b16 %v7307, %v7302
  %v7553 = vpack.c.b16 %v7308, %v7303
  %v7554 = vpack.c.b16 %v7309, %v7304
  %v7555 = vpack.c.b16 %v7310, %v7305
  %v7556 = vpack.c.b16 %v7311, %v7306
  %v7557 = vpack.c.b16 %v7317, %v7312
  %v7558 = vpack.c.b16 %v7318, %v7313
  %v7559 = vpack.c.b16 %v7319, %v7314
  %v7560 = vpack.c.b16 %v7320, %v7315
  %v7561 = vpack.c.b16 %v7321, %v7316
  %v7562 = vpack.c.b16 %v7327, %v7322
  %v7563 = vpack.c.b16 %v7328, %v7323
  %v7564 = vpack.c.b16 %v7329, %v7324
  %v7565 = vpack.c.b16 %v7330, %v7325
  %v7566 = vpack.c.b16 %v7331, %v7326
  %v7567 = vpack.c.b16 %v7337, %v7332
  %v7568 = vpack.c.b16 %v7338, %v7333
  %v7569 = vpack.c.b16 %v7339, %v7334
  %v7570 = vpack.c.b16 %v7340, %v7335
  %v7571 = vpack.c.b16 %v7341, %v7336
  %v7572 = vpack.c.b16 %v7347, %v7342
  %v7573 = vpack.c.b16 %v7348, %v7343
  %v7574 = vpack.c.b16 %v7349, %v7344
  %v7575 = vpack.c.b16 %v7350, %v7345
  %v7576 = vpack.c.b16 %v7351, %v7346
  %v7577 = vpack.c.b16 %v7357, %v7352
  %v7578 = vpack.c.b16 %v7358, %v7353
  %v7579 = vpack.c.b16 %v7359, %v7354
  %v7580 = vpack.c.b16 %v7360, %v7355
  %v7581 = vpack.c.b16 %v7361, %v7356
  %v7582 = vpack.c.b16 %v7367, %v7362
  %v7583 = vpack.c.b16 %v7368, %v7363
  %v7584 = vpack.c.b16 %v7369, %v7364
  %v7585 = vpack.c.b16 %v7370, %v7365
  %v7586 = vpack.c.b16 %v7371, %v7366
  %v7587 = vpack.c.b16 %v7377, %v7372
  %v7588 = vpack.c.b16 %v7378, %v7373
  %v7589 = vpack.c.b16 %v7379, %v7374
  %v7590 = vpack.c.b16 %v7380, %v7375
  %v7591 = vpack.c.b16 %v7381, %v7376
  %v7592 = vpack.c.b16 %v7387, %v7382
  %v7593 = vpack.c.b16 %v7388, %v7383
  %v7594 = vpack.c.b16 %v7389, %v7384
  %v7595 = vpack.c.b16 %v7390, %v7385
  %v7596 = vpack.c.b16 %v7391, %v7386
  %v7597 = vpack.c.b16 %v7397, %v7392
  %v7598 = vpack.c.b16 %v7398, %v7393
  %v7599 = vpack.c.b16 %v7399, %v7394
  %v7600 = vpack.c.b16 %v7400, %v7395
  %v7601 = vpack.c.b16 %v7401, %v7396
  %v7602 = vpack.c.b16 %v7407, %v7402
  %v7603 = vpack.c.b16 %v7408, %v7403
  %v7604 = vpack.c.b16 %v7409, %v7404
  %v7605 = vpack.c.b16 %v7410, %v7405
  %v7606 = vpack.c.b16 %v7411, %v7406
  %v7607 = vpack.c.b16 %v7417, %v7412
  %v7608 = vpack.c.b16 %v7418, %v7413
  %v7609 = vpack.c.b16 %v7419, %v7414
  %v7610 = vpack.c.b16 %v7420, %v7415
  %v7611 = vpack.c.b16 %v7421, %v7416
  %v7612 = vpack.c.b16 %v7427, %v7422
  %v7613 = vpack.c.b16 %v7428, %v7423
  %v7614 = vpack.c.b16 %v7429, %v7424
  %v7615 = vpack.c.b16 %v7430, %v7425
  %v7616 = vpack.c.b16 %v7431, %v7426
  %v7617 = vpack.c.b16 %v7437, %v7432
  %v7618 = vpack.c.b16 %v7438, %v7433
  %v7619 = vpack.c.b16 %v7439, %v7434
  %v7620 = vpack.c.b16 %v7440, %v7435
  %v7621 = vpack.c.b16 %v7441, %v7436
  %v7622 = vpack.c.b16 %v7447, %v7442
  %v7623 = vpack.c.b16 %v7448, %v7443
  %v7624 = vpack.c.b16 %v7449, %v7444
  %v7625 = vpack.c.b16 %v7450, %v7445
  %v7626 = vpack.c.b16 %v7451, %v7446
  %v7627 = vpack.c.b16 %v7457, %v7452
  %v7628 = vpack.c.b16 %v7458, %v7453
  %v7629 = vpack.c.b16 %v7459, %v7454
  %v7630 = vpack.c.b16 %v7460, %v7455
  %v7631 = vpack.c.b16 %v7461, %v7456
  %v7632 = vpack.c.b16 %v7467, %v7462
  %v7633 = vpack.c.b16 %v7468, %v7463
  %v7634 = vpack.c.b16 %v7469, %v7464
  %v7635 = vpack.c.b16 %v7470, %v7465
  %v7636 = vpack.c.b16 %v7471, %v7466
  %v7637 = vpack.c.b16 %v7477, %v7472
  %v7638 = vpack.c.b16 %v7478, %v7473
  %v7639 = vpack.c.b16 %v7479, %v7474
  %v7640 = vpack.c.b16 %v7480, %v7475
  %v7641 = vpack.c.b16 %v7481, %v7476
  %v7642 = vpack.c.b16 %v7487, %v7482
  %v7643 = vpack.c.b16 %v7488, %v7483
  %v7644 = vpack.c.b16 %v7489, %v7484
  %v7645 = vpack.c.b16 %v7490, %v7485
  %v7646 = vpack.c.b16 %v7491, %v7486
  %v7647 = vpack.c.b16 %v7497, %v7492
  %v7648 = vpack.c.b16 %v7498, %v7493
  %v7649 = vpack.c.b16 %v7499, %v7494
  %v7650 = vpack.c.b16 %v7500, %v7495
  %v7651 = vpack.c.b16 %v7501, %v7496
  %v7652 = vpack.c.b16 %v7507, %v7502
  %v7653 = vpack.c.b16 %v7508, %v7503
  %v7654 = vpack.c.b16 %v7509, %v7504
  %v7655 = vpack.c.b16 %v7510, %v7505
  %v7656 = vpack.c.b16 %v7511, %v7506
  %v7657 = vpack.c.b16 %v7517, %v7512
  %v7658 = vpack.c.b16 %v7518, %v7513
  %v7659 = vpack.c.b16 %v7519, %v7514
  %v7660 = vpack.c.b16 %v7520, %v7515
  %v7661 = vpack.c.b16 %v7521, %v7516
  %v7662 = vpack.c.b16 %v7527, %v7522
  %v7663 = vpack.c.b16 %v7528, %v7523
  %v7664 = vpack.c.b16 %v7529, %v7524
  %v7665 = vpack.c.b16 %v7530, %v7525
  %v7666 = vpack.c.b16 %v7531, %v7526
  %v7798 = vsel %vm1580, %v6910, 0
  %v7801 = vand.u32 %v7662, %v3369
  %v7804 = vand.u32 %v7663, %v3369
  %v7807 = vand.u32 %v7664, %v3369
  %v7810 = vand.u32 %v7665, %v3369
  %v7813 = vand.u32 %v7666, %v3369
  %7815 = vmatprep.subr.bf16.mxu0 %v7533
  %7816 = vmatpush1.bf16.msra.mxu0 %v7532
  %7817 = vmatprep.subr.bf16.mxu0 %v7538
  %7818 = vmatpush1.bf16.msra.mxu0 %v7537
  %7819 = vmatprep.subr.bf16.mxu0 %v7543
  %7820 = vmatpush1.bf16.msra.mxu0 %v7542
  %7821 = vmatprep.subr.bf16.mxu0 %v7548
  %7822 = vmatpush1.bf16.msra.mxu0 %v7547
  %7823 = vmatprep.subr.bf16.mxu0 %v7553
  %7824 = vmatpush1.bf16.msra.mxu0 %v7552
  %7825 = vmatprep.subr.bf16.mxu0 %v7558
  %7826 = vmatpush1.bf16.msra.mxu0 %v7557
  %7827 = vmatprep.subr.bf16.mxu0 %v7563
  %7828 = vmatpush1.bf16.msra.mxu0 %v7562
  %7829 = vmatprep.subr.bf16.mxu0 %v7568
  %7830 = vmatpush1.bf16.msra.mxu0 %v7567
  %7831 = vmatprep.subr.bf16.mxu0 %v7573
  %7832 = vmatpush1.bf16.msra.mxu0 %v7572
  %7833 = vmatprep.subr.bf16.mxu0 %v7578
  %7834 = vmatpush1.bf16.msra.mxu0 %v7577
  %7835 = vmatprep.subr.bf16.mxu0 %v7583
  %7836 = vmatpush1.bf16.msra.mxu0 %v7582
  %7837 = vmatprep.subr.bf16.mxu0 %v7588
  %7838 = vmatpush1.bf16.msra.mxu0 %v7587
  %7839 = vmatprep.subr.bf16.mxu0 %v7593
  %7840 = vmatpush1.bf16.msra.mxu0 %v7592
  %7841 = vmatprep.subr.bf16.mxu0 %v7598
  %7842 = vmatpush1.bf16.msra.mxu0 %v7597
  %7843 = vmatprep.subr.bf16.mxu0 %v7603
  %7844 = vmatpush1.bf16.msra.mxu0 %v7602
  %7845 = vmatprep.subr.bf16.mxu0 %v7608
  %7846 = vmatpush1.bf16.msra.mxu0 %v7607
  %7847 = vmatprep.mubr.bf16.mxu0 %v6908
  %7848 = vmatmul.mubr.bf16.gmra.mrb[0].mxu0 %v6907
  %v7849 = vpop.f32.mrb[0].mxu0
  %v7850 = vadd.f32 %v7078, %v7849
  %v7851 = vpop.f32.mrb[0].mxu0
  %v7852 = vadd.f32 %v7082, %v7851
  %v7853 = vpop.f32.mrb[0].mxu0
  %v7854 = vadd.f32 %v7078, %v7853
  %v7855 = vpop.f32.mrb[0].mxu0
  %v7856 = vadd.f32 %v7082, %v7855
  %7857 = vdwg.mxu0
  %7858 = vmatprep.subr.bf16.mxu0 %v7613
  %7859 = vmatpush1.bf16.msra.mxu0 %v7612
  %7860 = vmatprep.subr.bf16.mxu0 %v7618
  %7861 = vmatpush1.bf16.msra.mxu0 %v7617
  %7862 = vmatprep.subr.bf16.mxu0 %v7623
  %7863 = vmatpush1.bf16.msra.mxu0 %v7622
  %7864 = vmatprep.subr.bf16.mxu0 %v7628
  %7865 = vmatpush1.bf16.msra.mxu0 %v7627
  %7866 = vmatprep.subr.bf16.mxu0 %v7633
  %7867 = vmatpush1.bf16.msra.mxu0 %v7632
  %7868 = vmatprep.subr.bf16.mxu0 %v7638
  %7869 = vmatpush1.bf16.msra.mxu0 %v7637
  %7870 = vmatprep.subr.bf16.mxu0 %v7643
  %7871 = vmatpush1.bf16.msra.mxu0 %v7642
  %7872 = vmatprep.subr.bf16.mxu0 %v7648
  %7873 = vmatpush1.bf16.msra.mxu0 %v7647
  %7874 = vmatprep.subr.bf16.mxu0 %v7653
  %7875 = vmatpush1.bf16.msra.mxu0 %v7652
  %7876 = vmatprep.subr.bf16.mxu0 %v7658
  %7877 = vmatpush1.bf16.msra.mxu0 %v7657
  %7878 = vmatprep.subr.bf16.mxu0 %v7804
  %7879 = vmatpush1.bf16.msra.mxu0 %v7801
  %7880 = vmatprep.subr.bf16.mxu0 0
  %7881 = vmatpush1.bf16.msra.mxu0 0
  %7882 = vmatprep.subr.bf16.mxu0 0
  %7883 = vmatpush1.bf16.msra.mxu0 0
  %7884 = vmatprep.subr.bf16.mxu0 0
  %7885 = vmatpush1.bf16.msra.mxu0 0
  %7886 = vmatprep.subr.bf16.mxu0 0
  %7887 = vmatpush1.bf16.msra.mxu0 0
  %7888 = vmatprep.subr.bf16.mxu0 0
  %7889 = vmatpush1.bf16.msra.mxu0 0
  %7890 = vmatprep.mubr.bf16.mxu0 %v7798
  %7891 = vmatmul.mubr.bf16.gmra.mrb[0].mxu0 %v6909
  %v7892 = vpop.f32.mrb[0].mxu0
  %v7893 = vadd.f32 %v7850, %v7892
  %v7894 = vpop.f32.mrb[0].mxu0
  %v7895 = vadd.f32 %v7852, %v7894
  %v7896 = vpop.f32.mrb[0].mxu0
  %v7897 = vadd.f32 %v7854, %v7896
  %v7898 = vpop.f32.mrb[0].mxu0
  %v7899 = vadd.f32 %v7856, %v7898
  %7900 = vdwg.mxu0
  %7901 = vmatprep.subr.bf16.mxu0 %v7535
  %7902 = vmatpush1.bf16.msra.mxu0 %v7534
  %7903 = vmatprep.subr.bf16.mxu0 %v7540
  %7904 = vmatpush1.bf16.msra.mxu0 %v7539
  %7905 = vmatprep.subr.bf16.mxu0 %v7545
  %7906 = vmatpush1.bf16.msra.mxu0 %v7544
  %7907 = vmatprep.subr.bf16.mxu0 %v7550
  %7908 = vmatpush1.bf16.msra.mxu0 %v7549
  %7909 = vmatprep.subr.bf16.mxu0 %v7555
  %7910 = vmatpush1.bf16.msra.mxu0 %v7554
  %7911 = vmatprep.subr.bf16.mxu0 %v7560
  %7912 = vmatpush1.bf16.msra.mxu0 %v7559
  %7913 = vmatprep.subr.bf16.mxu0 %v7565
  %7914 = vmatpush1.bf16.msra.mxu0 %v7564
  %7915 = vmatprep.subr.bf16.mxu0 %v7570
  %7916 = vmatpush1.bf16.msra.mxu0 %v7569
  %7917 = vmatprep.subr.bf16.mxu0 %v7575
  %7918 = vmatpush1.bf16.msra.mxu0 %v7574
  %7919 = vmatprep.subr.bf16.mxu0 %v7580
  %7920 = vmatpush1.bf16.msra.mxu0 %v7579
  %7921 = vmatprep.subr.bf16.mxu0 %v7585
  %7922 = vmatpush1.bf16.msra.mxu0 %v7584
  %7923 = vmatprep.subr.bf16.mxu0 %v7590
  %7924 = vmatpush1.bf16.msra.mxu0 %v7589
  %7925 = vmatprep.subr.bf16.mxu0 %v7595
  %7926 = vmatpush1.bf16.msra.mxu0 %v7594
  %7927 = vmatprep.subr.bf16.mxu0 %v7600
  %7928 = vmatpush1.bf16.msra.mxu0 %v7599
  %7929 = vmatprep.subr.bf16.mxu0 %v7605
  %7930 = vmatpush1.bf16.msra.mxu0 %v7604
  %7931 = vmatprep.subr.bf16.mxu0 %v7610
  %7932 = vmatpush1.bf16.msra.mxu0 %v7609
  %7933 = vmatprep.mubr.bf16.mxu0 %v6908
  %7934 = vmatmul.mubr.bf16.gmra.mrb[0].mxu0 %v6907
  %v7935 = vpop.f32.mrb[0].mxu0
  %v7936 = vadd.f32 %v7086, %v7935
  %v7937 = vpop.f32.mrb[0].mxu0
  %v7938 = vadd.f32 %v7090, %v7937
  %v7939 = vpop.f32.mrb[0].mxu0
  %v7940 = vadd.f32 %v7086, %v7939
  %v7941 = vpop.f32.mrb[0].mxu0
  %v7942 = vadd.f32 %v7090, %v7941
  %7943 = vdwg.mxu0
  %7944 = vmatprep.subr.bf16.mxu0 %v7615
  %7945 = vmatpush1.bf16.msra.mxu0 %v7614
  %7946 = vmatprep.subr.bf16.mxu0 %v7620
  %7947 = vmatpush1.bf16.msra.mxu0 %v7619
  %7948 = vmatprep.subr.bf16.mxu0 %v7625
  %7949 = vmatpush1.bf16.msra.mxu0 %v7624
  %7950 = vmatprep.subr.bf16.mxu0 %v7630
  %7951 = vmatpush1.bf16.msra.mxu0 %v7629
  %7952 = vmatprep.subr.bf16.mxu0 %v7635
  %7953 = vmatpush1.bf16.msra.mxu0 %v7634
  %7954 = vmatprep.subr.bf16.mxu0 %v7640
  %7955 = vmatpush1.bf16.msra.mxu0 %v7639
  %7956 = vmatprep.subr.bf16.mxu0 %v7645
  %7957 = vmatpush1.bf16.msra.mxu0 %v7644
  %7958 = vmatprep.subr.bf16.mxu0 %v7650
  %7959 = vmatpush1.bf16.msra.mxu0 %v7649
  %7960 = vmatprep.subr.bf16.mxu0 %v7655
  %7961 = vmatpush1.bf16.msra.mxu0 %v7654
  %7962 = vmatprep.subr.bf16.mxu0 %v7660
  %7963 = vmatpush1.bf16.msra.mxu0 %v7659
  %7964 = vmatprep.subr.bf16.mxu0 %v7810
  %7965 = vmatpush1.bf16.msra.mxu0 %v7807
  %7966 = vmatprep.subr.bf16.mxu0 0
  %7967 = vmatpush1.bf16.msra.mxu0 0
  %7968 = vmatprep.subr.bf16.mxu0 0
  %7969 = vmatpush1.bf16.msra.mxu0 0
  %7970 = vmatprep.subr.bf16.mxu0 0
  %7971 = vmatpush1.bf16.msra.mxu0 0
  %7972 = vmatprep.subr.bf16.mxu0 0
  %7973 = vmatpush1.bf16.msra.mxu0 0
  %7974 = vmatprep.subr.bf16.mxu0 0
  %7975 = vmatpush1.bf16.msra.mxu0 0
  %7976 = vmatprep.mubr.bf16.mxu0 %v7798
  %7977 = vmatmul.mubr.bf16.gmra.mrb[0].mxu0 %v6909
  %v7978 = vpop.f32.mrb[0].mxu0
  %v7979 = vadd.f32 %v7936, %v7978
  %v7980 = vpop.f32.mrb[0].mxu0
  %v7981 = vadd.f32 %v7938, %v7980
  %v7982 = vpop.f32.mrb[0].mxu0
  %v7983 = vadd.f32 %v7940, %v7982
  %v7984 = vpop.f32.mrb[0].mxu0
  %v7985 = vadd.f32 %v7942, %v7984
  %7986 = vdwg.mxu0
  %7987 = vmatprep.subr.bf16.mxu0 0
  %7988 = vmatpush1.bf16.msra.mxu0 %v7536
  %7989 = vmatprep.subr.bf16.mxu0 0
  %7990 = vmatpush1.bf16.msra.mxu0 %v7541
  %7991 = vmatprep.subr.bf16.mxu0 0
  %7992 = vmatpush1.bf16.msra.mxu0 %v7546
  %7993 = vmatprep.subr.bf16.mxu0 0
  %7994 = vmatpush1.bf16.msra.mxu0 %v7551
  %7995 = vmatprep.subr.bf16.mxu0 0
  %7996 = vmatpush1.bf16.msra.mxu0 %v7556
  %7997 = vmatprep.subr.bf16.mxu0 0
  %7998 = vmatpush1.bf16.msra.mxu0 %v7561
  %7999 = vmatprep.subr.bf16.mxu0 0
  %8000 = vmatpush1.bf16.msra.mxu0 %v7566
  %8001 = vmatprep.subr.bf16.mxu0 0
  %8002 = vmatpush1.bf16.msra.mxu0 %v7571
  %8003 = vmatprep.subr.bf16.mxu0 0
  %8004 = vmatpush1.bf16.msra.mxu0 %v7576
  %8005 = vmatprep.subr.bf16.mxu0 0
  %8006 = vmatpush1.bf16.msra.mxu0 %v7581
  %8007 = vmatprep.subr.bf16.mxu0 0
  %8008 = vmatpush1.bf16.msra.mxu0 %v7586
  %8009 = vmatprep.subr.bf16.mxu0 0
  %8010 = vmatpush1.bf16.msra.mxu0 %v7591
  %8011 = vmatprep.subr.bf16.mxu0 0
  %8012 = vmatpush1.bf16.msra.mxu0 %v7596
  %8013 = vmatprep.subr.bf16.mxu0 0
  %8014 = vmatpush1.bf16.msra.mxu0 %v7601
  %8015 = vmatprep.subr.bf16.mxu0 0
  %8016 = vmatpush1.bf16.msra.mxu0 %v7606
  %8017 = vmatprep.subr.bf16.mxu0 0
  %8018 = vmatpush1.bf16.msra.mxu0 %v7611
  %8019 = vmatprep.mubr.bf16.mxu0 %v6908
  %8020 = vmatmul.mubr.bf16.gmra.mrb[0].mxu0 %v6907
  %v8021 = vpop.f32.mrb[0].mxu0
  %v8022 = vadd.f32 %v7094, %v8021
  %v8023 = vpop.f32.mrb[0].mxu0
  %v8024 = vpop.f32.mrb[0].mxu0
  %v8025 = vadd.f32 %v7094, %v8024
  %v8026 = vpop.f32.mrb[0].mxu0
  %8027 = vdwg.mxu0
  %8028 = vmatprep.subr.bf16.mxu0 0
  %8029 = vmatpush1.bf16.msra.mxu0 %v7616
  %8030 = vmatprep.subr.bf16.mxu0 0
  %8031 = vmatpush1.bf16.msra.mxu0 %v7621
  %8032 = vmatprep.subr.bf16.mxu0 0
  %8033 = vmatpush1.bf16.msra.mxu0 %v7626
  %8034 = vmatprep.subr.bf16.mxu0 0
  %8035 = vmatpush1.bf16.msra.mxu0 %v7631
  %8036 = vmatprep.subr.bf16.mxu0 0
  %8037 = vmatpush1.bf16.msra.mxu0 %v7636
  %8038 = vmatprep.subr.bf16.mxu0 0
  %8039 = vmatpush1.bf16.msra.mxu0 %v7641
  %8040 = vmatprep.subr.bf16.mxu0 0
  %8041 = vmatpush1.bf16.msra.mxu0 %v7646
  %8042 = vmatprep.subr.bf16.mxu0 0
  %8043 = vmatpush1.bf16.msra.mxu0 %v7651
  %8044 = vmatprep.subr.bf16.mxu0 0
  %8045 = vmatpush1.bf16.msra.mxu0 %v7656
  %8046 = vmatprep.subr.bf16.mxu0 0
  %8047 = vmatpush1.bf16.msra.mxu0 %v7661
  %8048 = vmatprep.subr.bf16.mxu0 0
  %8049 = vmatpush1.bf16.msra.mxu0 %v7813
  %8050 = vmatprep.subr.bf16.mxu0 0
  %8051 = vmatpush1.bf16.msra.mxu0 0
  %8052 = vmatprep.subr.bf16.mxu0 0
  %8053 = vmatpush1.bf16.msra.mxu0 0
  %8054 = vmatprep.subr.bf16.mxu0 0
  %8055 = vmatpush1.bf16.msra.mxu0 0
  %8056 = vmatprep.subr.bf16.mxu0 0
  %8057 = vmatpush1.bf16.msra.mxu0 0
  %8058 = vmatprep.subr.bf16.mxu0 0
  %8059 = vmatpush1.bf16.msra.mxu0 0
  %8060 = vmatprep.mubr.bf16.mxu0 %v7798
  %8061 = vmatmul.mubr.bf16.gmra.mrb[0].mxu0 %v6909
  %v8062 = vpop.f32.mrb[0].mxu0
  %v8063 = vadd.f32 %v8022, %v8062
  %v8064 = vpop.f32.mrb[0].mxu0
  %v8065 = vpop.f32.mrb[0].mxu0
  %v8066 = vadd.f32 %v8025, %v8065
  %v8067 = vpop.f32.mrb[0].mxu0
  %8068 = vdwg.mxu0
  %v8069 = vsub.f32 0.0, %v7893
  %v8070 = vsub.f32 0.0, %v7895
  %v8071 = vsub.f32 0.0, %v7979
  %v8072 = vsub.f32 0.0, %v7981
  %v8073 = vsub.f32 0.0, %v8063
  %v8074 = vsub.f32 0.0, %v7897
  %v8075 = vsub.f32 0.0, %v7899
  %v8076 = vsub.f32 0.0, %v7983
  %v8077 = vsub.f32 0.0, %v7985
  %v8078 = vsub.f32 0.0, %v8066
  %v8079 = vmul.f32 %v8069, 1.442695
  %v8080 = vpow.pop %v8079
  %v8081 = vmul.f32 %v8070, 1.442695
  %v8082 = vpow.pop %v8081
  %v8083 = vmul.f32 %v8071, 1.442695
  %v8084 = vpow.pop %v8083
  %v8085 = vmul.f32 %v8072, 1.442695
  %v8086 = vpow.pop %v8085
  %v8087 = vmul.f32 %v8073, 1.442695
  %v8088 = vpow.pop %v8087
  %v8089 = vmul.f32 %v8074, 1.442695
  %v8090 = vpow.pop %v8089
  %v8091 = vmul.f32 %v8075, 1.442695
  %v8092 = vpow.pop %v8091
  %v8093 = vmul.f32 %v8076, 1.442695
  %v8094 = vpow.pop %v8093
  %v8095 = vmul.f32 %v8077, 1.442695
  %v8096 = vpow.pop %v8095
  %v8097 = vmul.f32 %v8078, 1.442695
  %v8098 = vpow.pop %v8097
  %v8099 = vadd.f32 %v8080, 1.0
  %v8100 = vadd.f32 %v8082, 1.0
  %v8101 = vadd.f32 %v8084, 1.0
  %v8102 = vadd.f32 %v8086, 1.0
  %v8103 = vadd.f32 %v8088, 1.0
  %v8104 = vadd.f32 %v8090, 1.0
  %v8105 = vadd.f32 %v8092, 1.0
  %v8106 = vadd.f32 %v8094, 1.0
  %v8107 = vadd.f32 %v8096, 1.0
  %v8108 = vadd.f32 %v8098, 1.0
  %v8109 = vrcp.pop %v8099
  %v8110 = vmul.f32 1.0, %v8109
  %v8111 = vrcp.pop %v8100
  %v8112 = vmul.f32 1.0, %v8111
  %v8113 = vrcp.pop %v8101
  %v8114 = vmul.f32 1.0, %v8113
  %v8115 = vrcp.pop %v8102
  %v8116 = vmul.f32 1.0, %v8115
  %v8117 = vrcp.pop %v8103
  %v8118 = vmul.f32 1.0, %v8117
  %v8119 = vrcp.pop %v8104
  %v8120 = vmul.f32 1.0, %v8119
  %v8121 = vrcp.pop %v8105
  %v8122 = vmul.f32 1.0, %v8121
  %v8123 = vrcp.pop %v8106
  %v8124 = vmul.f32 1.0, %v8123
  %v8125 = vrcp.pop %v8107
  %v8126 = vmul.f32 1.0, %v8125
  %v8127 = vrcp.pop %v8108
  %v8128 = vmul.f32 1.0, %v8127
  %8137 = vrot.lane.b32.xlu0 %v8110, 127
  %v8138 = vpop.permute.xlu0 %8137
  %8139 = vrot.lane.b32.xlu0 %v8112, 127
  %v8140 = vpop.permute.xlu0 %8139
  %8141 = vrot.lane.b32.xlu0 %v8114, 127
  %v8142 = vpop.permute.xlu0 %8141
  %8143 = vrot.lane.b32.xlu0 %v8116, 127
  %v8144 = vpop.permute.xlu0 %8143
  %8145 = vrot.lane.b32.xlu0 %v8120, 127
  %v8146 = vpop.permute.xlu0 %8145
  %8147 = vrot.lane.b32.xlu0 %v8122, 127
  %v8148 = vpop.permute.xlu0 %8147
  %8149 = vrot.lane.b32.xlu0 %v8124, 127
  %v8150 = vpop.permute.xlu0 %8149
  %8151 = vrot.lane.b32.xlu0 %v8126, 127
  %v8152 = vpop.permute.xlu0 %8151
  %v8153 = vsel %vm3723, %v8138, %v8140
  %v8154 = vsel %vm3723, %v8140, %v8142
  %v8155 = vsel %vm3723, %v8142, %v8144
  %v8156 = vsel %vm3723, %v8146, %v8148
  %v8157 = vsel %vm3723, %v8148, %v8150
  %v8158 = vsel %vm3723, %v8150, %v8152
  %v8167 = vadd.f32 %v8110, %v8153
  %v8168 = vadd.f32 %v8112, %v8154
  %v8169 = vadd.f32 %v8114, %v8155
  %v8170 = vadd.f32 %v8116, %v8144
  %v8171 = vadd.f32 %v8120, %v8156
  %v8172 = vadd.f32 %v8122, %v8157
  %v8173 = vadd.f32 %v8124, %v8158
  %v8174 = vadd.f32 %v8126, %v8152
  %8175 = vrot.lane.b32.xlu0 %v8110, 126
  %v8176 = vpop.permute.xlu0 %8175
  %8177 = vrot.lane.b32.xlu0 %v8112, 126
  %v8178 = vpop.permute.xlu0 %8177
  %8179 = vrot.lane.b32.xlu0 %v8114, 126
  %v8180 = vpop.permute.xlu0 %8179
  %8181 = vrot.lane.b32.xlu0 %v8116, 126
  %v8182 = vpop.permute.xlu0 %8181
  %8183 = vrot.lane.b32.xlu0 %v8120, 126
  %v8184 = vpop.permute.xlu0 %8183
  %8185 = vrot.lane.b32.xlu0 %v8122, 126
  %v8186 = vpop.permute.xlu0 %8185
  %8187 = vrot.lane.b32.xlu0 %v8124, 126
  %v8188 = vpop.permute.xlu0 %8187
  %8189 = vrot.lane.b32.xlu0 %v8126, 126
  %v8190 = vpop.permute.xlu0 %8189
  %v8191 = vsel %vm3762, %v8176, %v8178
  %v8192 = vsel %vm3762, %v8178, %v8180
  %v8193 = vsel %vm3762, %v8180, %v8182
  %v8194 = vsel %vm3762, %v8184, %v8186
  %v8195 = vsel %vm3762, %v8186, %v8188
  %v8196 = vsel %vm3762, %v8188, %v8190
  %v8205 = vadd.f32 %v8167, %v8191
  %v8206 = vadd.f32 %v8168, %v8192
  %v8207 = vadd.f32 %v8169, %v8193
  %v8208 = vadd.f32 %v8170, %v8182
  %v8209 = vadd.f32 %v8171, %v8194
  %v8210 = vadd.f32 %v8172, %v8195
  %v8211 = vadd.f32 %v8173, %v8196
  %v8212 = vadd.f32 %v8174, %v8190
  %8213 = vrot.lane.b32.xlu0 %v8110, 125
  %v8214 = vpop.permute.xlu0 %8213
  %8215 = vrot.lane.b32.xlu0 %v8112, 125
  %v8216 = vpop.permute.xlu0 %8215
  %8217 = vrot.lane.b32.xlu0 %v8114, 125
  %v8218 = vpop.permute.xlu0 %8217
  %8219 = vrot.lane.b32.xlu0 %v8116, 125
  %v8220 = vpop.permute.xlu0 %8219
  %8221 = vrot.lane.b32.xlu0 %v8120, 125
  %v8222 = vpop.permute.xlu0 %8221
  %8223 = vrot.lane.b32.xlu0 %v8122, 125
  %v8224 = vpop.permute.xlu0 %8223
  %8225 = vrot.lane.b32.xlu0 %v8124, 125
  %v8226 = vpop.permute.xlu0 %8225
  %8227 = vrot.lane.b32.xlu0 %v8126, 125
  %v8228 = vpop.permute.xlu0 %8227
  %v8229 = vsel %vm3801, %v8214, %v8216
  %v8230 = vsel %vm3801, %v8216, %v8218
  %v8231 = vsel %vm3801, %v8218, %v8220
  %v8232 = vsel %vm3801, %v8222, %v8224
  %v8233 = vsel %vm3801, %v8224, %v8226
  %v8234 = vsel %vm3801, %v8226, %v8228
  %v8243 = vadd.f32 %v8205, %v8229
  %v8244 = vadd.f32 %v8206, %v8230
  %v8245 = vadd.f32 %v8207, %v8231
  %v8246 = vadd.f32 %v8208, %v8220
  %v8247 = vadd.f32 %v8209, %v8232
  %v8248 = vadd.f32 %v8210, %v8233
  %v8249 = vadd.f32 %v8211, %v8234
  %v8250 = vadd.f32 %v8212, %v8228
  %8251 = vrot.lane.b32.xlu0 %v8110, 124
  %v8252 = vpop.permute.xlu0 %8251
  %8253 = vrot.lane.b32.xlu0 %v8112, 124
  %v8254 = vpop.permute.xlu0 %8253
  %8255 = vrot.lane.b32.xlu0 %v8114, 124
  %v8256 = vpop.permute.xlu0 %8255
  %8257 = vrot.lane.b32.xlu0 %v8116, 124
  %v8258 = vpop.permute.xlu0 %8257
  %8259 = vrot.lane.b32.xlu0 %v8120, 124
  %v8260 = vpop.permute.xlu0 %8259
  %8261 = vrot.lane.b32.xlu0 %v8122, 124
  %v8262 = vpop.permute.xlu0 %8261
  %8263 = vrot.lane.b32.xlu0 %v8124, 124
  %v8264 = vpop.permute.xlu0 %8263
  %8265 = vrot.lane.b32.xlu0 %v8126, 124
  %v8266 = vpop.permute.xlu0 %8265
  %v8267 = vsel %vm3840, %v8252, %v8254
  %v8268 = vsel %vm3840, %v8254, %v8256
  %v8269 = vsel %vm3840, %v8256, %v8258
  %v8270 = vsel %vm3840, %v8260, %v8262
  %v8271 = vsel %vm3840, %v8262, %v8264
  %v8272 = vsel %vm3840, %v8264, %v8266
  %v8281 = vadd.f32 %v8243, %v8267
  %v8282 = vadd.f32 %v8244, %v8268
  %v8283 = vadd.f32 %v8245, %v8269
  %v8284 = vadd.f32 %v8246, %v8258
  %v8285 = vadd.f32 %v8247, %v8270
  %v8286 = vadd.f32 %v8248, %v8271
  %v8287 = vadd.f32 %v8249, %v8272
  %v8288 = vadd.f32 %v8250, %v8266
  %8289 = vrot.lane.b32.xlu0 %v8110, 123
  %v8290 = vpop.permute.xlu0 %8289
  %8291 = vrot.lane.b32.xlu0 %v8112, 123
  %v8292 = vpop.permute.xlu0 %8291
  %8293 = vrot.lane.b32.xlu0 %v8114, 123
  %v8294 = vpop.permute.xlu0 %8293
  %8295 = vrot.lane.b32.xlu0 %v8116, 123
  %v8296 = vpop.permute.xlu0 %8295
  %8297 = vrot.lane.b32.xlu0 %v8120, 123
  %v8298 = vpop.permute.xlu0 %8297
  %8299 = vrot.lane.b32.xlu0 %v8122, 123
  %v8300 = vpop.permute.xlu0 %8299
  %8301 = vrot.lane.b32.xlu0 %v8124, 123
  %v8302 = vpop.permute.xlu0 %8301
  %8303 = vrot.lane.b32.xlu0 %v8126, 123
  %v8304 = vpop.permute.xlu0 %8303
  %v8305 = vsel %vm3879, %v8290, %v8292
  %v8306 = vsel %vm3879, %v8292, %v8294
  %v8307 = vsel %vm3879, %v8294, %v8296
  %v8308 = vsel %vm3879, %v8298, %v8300
  %v8309 = vsel %vm3879, %v8300, %v8302
  %v8310 = vsel %vm3879, %v8302, %v8304
  %v8319 = vadd.f32 %v8281, %v8305
  %v8320 = vadd.f32 %v8282, %v8306
  %v8321 = vadd.f32 %v8283, %v8307
  %v8322 = vadd.f32 %v8284, %v8296
  %v8323 = vadd.f32 %v8285, %v8308
  %v8324 = vadd.f32 %v8286, %v8309
  %v8325 = vadd.f32 %v8287, %v8310
  %v8326 = vadd.f32 %v8288, %v8304
  %8327 = vrot.lane.b32.xlu0 %v8110, 122
  %v8328 = vpop.permute.xlu0 %8327
  %8329 = vrot.lane.b32.xlu0 %v8112, 122
  %v8330 = vpop.permute.xlu0 %8329
  %8331 = vrot.lane.b32.xlu0 %v8114, 122
  %v8332 = vpop.permute.xlu0 %8331
  %8333 = vrot.lane.b32.xlu0 %v8116, 122
  %v8334 = vpop.permute.xlu0 %8333
  %8335 = vrot.lane.b32.xlu0 %v8120, 122
  %v8336 = vpop.permute.xlu0 %8335
  %8337 = vrot.lane.b32.xlu0 %v8122, 122
  %v8338 = vpop.permute.xlu0 %8337
  %8339 = vrot.lane.b32.xlu0 %v8124, 122
  %v8340 = vpop.permute.xlu0 %8339
  %8341 = vrot.lane.b32.xlu0 %v8126, 122
  %v8342 = vpop.permute.xlu0 %8341
  %v8343 = vsel %vm3918, %v8328, %v8330
  %v8344 = vsel %vm3918, %v8330, %v8332
  %v8345 = vsel %vm3918, %v8332, %v8334
  %v8346 = vsel %vm3918, %v8336, %v8338
  %v8347 = vsel %vm3918, %v8338, %v8340
  %v8348 = vsel %vm3918, %v8340, %v8342
  %v8357 = vadd.f32 %v8319, %v8343
  %v8358 = vadd.f32 %v8320, %v8344
  %v8359 = vadd.f32 %v8321, %v8345
  %v8360 = vadd.f32 %v8322, %v8334
  %v8361 = vadd.f32 %v8323, %v8346
  %v8362 = vadd.f32 %v8324, %v8347
  %v8363 = vadd.f32 %v8325, %v8348
  %v8364 = vadd.f32 %v8326, %v8342
  %8365 = vrot.lane.b32.xlu0 %v8110, 121
  %v8366 = vpop.permute.xlu0 %8365
  %8367 = vrot.lane.b32.xlu0 %v8112, 121
  %v8368 = vpop.permute.xlu0 %8367
  %8369 = vrot.lane.b32.xlu0 %v8114, 121
  %v8370 = vpop.permute.xlu0 %8369
  %8371 = vrot.lane.b32.xlu0 %v8116, 121
  %v8372 = vpop.permute.xlu0 %8371
  %8373 = vrot.lane.b32.xlu0 %v8120, 121
  %v8374 = vpop.permute.xlu0 %8373
  %8375 = vrot.lane.b32.xlu0 %v8122, 121
  %v8376 = vpop.permute.xlu0 %8375
  %8377 = vrot.lane.b32.xlu0 %v8124, 121
  %v8378 = vpop.permute.xlu0 %8377
  %8379 = vrot.lane.b32.xlu0 %v8126, 121
  %v8380 = vpop.permute.xlu0 %8379
  %v8381 = vsel %vm3957, %v8366, %v8368
  %v8382 = vsel %vm3957, %v8368, %v8370
  %v8383 = vsel %vm3957, %v8370, %v8372
  %v8384 = vsel %vm3957, %v8374, %v8376
  %v8385 = vsel %vm3957, %v8376, %v8378
  %v8386 = vsel %vm3957, %v8378, %v8380
  %v8395 = vadd.f32 %v8357, %v8381
  %v8396 = vadd.f32 %v8358, %v8382
  %v8397 = vadd.f32 %v8359, %v8383
  %v8398 = vadd.f32 %v8360, %v8372
  %v8399 = vadd.f32 %v8361, %v8384
  %v8400 = vadd.f32 %v8362, %v8385
  %v8401 = vadd.f32 %v8363, %v8386
  %v8402 = vadd.f32 %v8364, %v8380
  %8403 = vrot.lane.b32.xlu0 %v8110, 120
  %v8404 = vpop.permute.xlu0 %8403
  %8405 = vrot.lane.b32.xlu0 %v8112, 120
  %v8406 = vpop.permute.xlu0 %8405
  %8407 = vrot.lane.b32.xlu0 %v8114, 120
  %v8408 = vpop.permute.xlu0 %8407
  %8409 = vrot.lane.b32.xlu0 %v8116, 120
  %v8410 = vpop.permute.xlu0 %8409
  %8411 = vrot.lane.b32.xlu0 %v8120, 120
  %v8412 = vpop.permute.xlu0 %8411
  %8413 = vrot.lane.b32.xlu0 %v8122, 120
  %v8414 = vpop.permute.xlu0 %8413
  %8415 = vrot.lane.b32.xlu0 %v8124, 120
  %v8416 = vpop.permute.xlu0 %8415
  %8417 = vrot.lane.b32.xlu0 %v8126, 120
  %v8418 = vpop.permute.xlu0 %8417
  %v8419 = vsel %vm3996, %v8404, %v8406
  %v8420 = vsel %vm3996, %v8406, %v8408
  %v8421 = vsel %vm3996, %v8408, %v8410
  %v8422 = vsel %vm3996, %v8412, %v8414
  %v8423 = vsel %vm3996, %v8414, %v8416
  %v8424 = vsel %vm3996, %v8416, %v8418
  %v8433 = vadd.f32 %v8395, %v8419
  %v8434 = vadd.f32 %v8396, %v8420
  %v8435 = vadd.f32 %v8397, %v8421
  %v8436 = vadd.f32 %v8398, %v8410
  %v8437 = vadd.f32 %v8399, %v8422
  %v8438 = vadd.f32 %v8400, %v8423
  %v8439 = vadd.f32 %v8401, %v8424
  %v8440 = vadd.f32 %v8402, %v8418
  %8441 = vrot.lane.b32.xlu0 %v8110, 119
  %v8442 = vpop.permute.xlu0 %8441
  %8443 = vrot.lane.b32.xlu0 %v8112, 119
  %v8444 = vpop.permute.xlu0 %8443
  %8445 = vrot.lane.b32.xlu0 %v8114, 119
  %v8446 = vpop.permute.xlu0 %8445
  %8447 = vrot.lane.b32.xlu0 %v8116, 119
  %v8448 = vpop.permute.xlu0 %8447
  %8449 = vrot.lane.b32.xlu0 %v8120, 119
  %v8450 = vpop.permute.xlu0 %8449
  %8451 = vrot.lane.b32.xlu0 %v8122, 119
  %v8452 = vpop.permute.xlu0 %8451
  %8453 = vrot.lane.b32.xlu0 %v8124, 119
  %v8454 = vpop.permute.xlu0 %8453
  %8455 = vrot.lane.b32.xlu0 %v8126, 119
  %v8456 = vpop.permute.xlu0 %8455
  %v8457 = vsel %vm4035, %v8442, %v8444
  %v8458 = vsel %vm4035, %v8444, %v8446
  %v8459 = vsel %vm4035, %v8446, %v8448
  %v8460 = vsel %vm4035, %v8450, %v8452
  %v8461 = vsel %vm4035, %v8452, %v8454
  %v8462 = vsel %vm4035, %v8454, %v8456
  %v8471 = vadd.f32 %v8433, %v8457
  %v8472 = vadd.f32 %v8434, %v8458
  %v8473 = vadd.f32 %v8435, %v8459
  %v8474 = vadd.f32 %v8436, %v8448
  %v8475 = vadd.f32 %v8437, %v8460
  %v8476 = vadd.f32 %v8438, %v8461
  %v8477 = vadd.f32 %v8439, %v8462
  %v8478 = vadd.f32 %v8440, %v8456
  %8479 = vrot.lane.b32.xlu0 %v8110, 118
  %v8480 = vpop.permute.xlu0 %8479
  %8481 = vrot.lane.b32.xlu0 %v8112, 118
  %v8482 = vpop.permute.xlu0 %8481
  %8483 = vrot.lane.b32.xlu0 %v8114, 118
  %v8484 = vpop.permute.xlu0 %8483
  %8485 = vrot.lane.b32.xlu0 %v8116, 118
  %v8486 = vpop.permute.xlu0 %8485
  %8487 = vrot.lane.b32.xlu0 %v8120, 118
  %v8488 = vpop.permute.xlu0 %8487
  %8489 = vrot.lane.b32.xlu0 %v8122, 118
  %v8490 = vpop.permute.xlu0 %8489
  %8491 = vrot.lane.b32.xlu0 %v8124, 118
  %v8492 = vpop.permute.xlu0 %8491
  %8493 = vrot.lane.b32.xlu0 %v8126, 118
  %v8494 = vpop.permute.xlu0 %8493
  %v8495 = vsel %vm4074, %v8480, %v8482
  %v8496 = vsel %vm4074, %v8482, %v8484
  %v8497 = vsel %vm4074, %v8484, %v8486
  %v8498 = vsel %vm4074, %v8488, %v8490
  %v8499 = vsel %vm4074, %v8490, %v8492
  %v8500 = vsel %vm4074, %v8492, %v8494
  %v8509 = vadd.f32 %v8471, %v8495
  %v8510 = vadd.f32 %v8472, %v8496
  %v8511 = vadd.f32 %v8473, %v8497
  %v8512 = vadd.f32 %v8474, %v8486
  %v8513 = vadd.f32 %v8475, %v8498
  %v8514 = vadd.f32 %v8476, %v8499
  %v8515 = vadd.f32 %v8477, %v8500
  %v8516 = vadd.f32 %v8478, %v8494
  %8517 = vrot.lane.b32.xlu0 %v8110, 117
  %v8518 = vpop.permute.xlu0 %8517
  %8519 = vrot.lane.b32.xlu0 %v8112, 117
  %v8520 = vpop.permute.xlu0 %8519
  %8521 = vrot.lane.b32.xlu0 %v8114, 117
  %v8522 = vpop.permute.xlu0 %8521
  %8523 = vrot.lane.b32.xlu0 %v8116, 117
  %v8524 = vpop.permute.xlu0 %8523
  %8525 = vrot.lane.b32.xlu0 %v8120, 117
  %v8526 = vpop.permute.xlu0 %8525
  %8527 = vrot.lane.b32.xlu0 %v8122, 117
  %v8528 = vpop.permute.xlu0 %8527
  %8529 = vrot.lane.b32.xlu0 %v8124, 117
  %v8530 = vpop.permute.xlu0 %8529
  %8531 = vrot.lane.b32.xlu0 %v8126, 117
  %v8532 = vpop.permute.xlu0 %8531
  %v8533 = vsel %vm4113, %v8518, %v8520
  %v8534 = vsel %vm4113, %v8520, %v8522
  %v8535 = vsel %vm4113, %v8522, %v8524
  %v8536 = vsel %vm4113, %v8526, %v8528
  %v8537 = vsel %vm4113, %v8528, %v8530
  %v8538 = vsel %vm4113, %v8530, %v8532
  %v8547 = vadd.f32 %v8509, %v8533
  %v8548 = vadd.f32 %v8510, %v8534
  %v8549 = vadd.f32 %v8511, %v8535
  %v8550 = vadd.f32 %v8512, %v8524
  %v8551 = vadd.f32 %v8513, %v8536
  %v8552 = vadd.f32 %v8514, %v8537
  %v8553 = vadd.f32 %v8515, %v8538
  %v8554 = vadd.f32 %v8516, %v8532
  %8555 = vrot.lane.b32.xlu0 %v8110, 116
  %v8556 = vpop.permute.xlu0 %8555
  %8557 = vrot.lane.b32.xlu0 %v8112, 116
  %v8558 = vpop.permute.xlu0 %8557
  %8559 = vrot.lane.b32.xlu0 %v8114, 116
  %v8560 = vpop.permute.xlu0 %8559
  %8561 = vrot.lane.b32.xlu0 %v8116, 116
  %v8562 = vpop.permute.xlu0 %8561
  %8563 = vrot.lane.b32.xlu0 %v8120, 116
  %v8564 = vpop.permute.xlu0 %8563
  %8565 = vrot.lane.b32.xlu0 %v8122, 116
  %v8566 = vpop.permute.xlu0 %8565
  %8567 = vrot.lane.b32.xlu0 %v8124, 116
  %v8568 = vpop.permute.xlu0 %8567
  %8569 = vrot.lane.b32.xlu0 %v8126, 116
  %v8570 = vpop.permute.xlu0 %8569
  %v8571 = vsel %vm4152, %v8556, %v8558
  %v8572 = vsel %vm4152, %v8558, %v8560
  %v8573 = vsel %vm4152, %v8560, %v8562
  %v8574 = vsel %vm4152, %v8564, %v8566
  %v8575 = vsel %vm4152, %v8566, %v8568
  %v8576 = vsel %vm4152, %v8568, %v8570
  %v8585 = vadd.f32 %v8547, %v8571
  %v8586 = vadd.f32 %v8548, %v8572
  %v8587 = vadd.f32 %v8549, %v8573
  %v8588 = vadd.f32 %v8550, %v8562
  %v8589 = vadd.f32 %v8551, %v8574
  %v8590 = vadd.f32 %v8552, %v8575
  %v8591 = vadd.f32 %v8553, %v8576
  %v8592 = vadd.f32 %v8554, %v8570
  %8595 = vrot.lane.b32.xlu0 %v8110, 115
  %v8596 = vpop.permute.xlu0 %8595
  %8597 = vrot.lane.b32.xlu0 %v8112, 115
  %v8598 = vpop.permute.xlu0 %8597
  %8599 = vrot.lane.b32.xlu0 %v8114, 115
  %v8600 = vpop.permute.xlu0 %8599
  %8601 = vrot.lane.b32.xlu0 %v8116, 115
  %v8602 = vpop.permute.xlu0 %8601
  %8603 = vrot.lane.b32.xlu0 %v8118, 115
  %v8604 = vpop.permute.xlu0 %8603
  %8605 = vrot.lane.b32.xlu0 %v8120, 115
  %v8606 = vpop.permute.xlu0 %8605
  %8607 = vrot.lane.b32.xlu0 %v8122, 115
  %v8608 = vpop.permute.xlu0 %8607
  %8609 = vrot.lane.b32.xlu0 %v8124, 115
  %v8610 = vpop.permute.xlu0 %8609
  %8611 = vrot.lane.b32.xlu0 %v8126, 115
  %v8612 = vpop.permute.xlu0 %8611
  %8613 = vrot.lane.b32.xlu0 %v8128, 115
  %v8614 = vpop.permute.xlu0 %8613
  %v8615 = vsel %vm4197, %v8596, %v8598
  %v8616 = vsel %vm4197, %v8598, %v8600
  %v8617 = vsel %vm4197, %v8600, %v8602
  %v8618 = vsel %vm4197, %v8602, %v8604
  %v8619 = vsel %vm4197, %v8606, %v8608
  %v8620 = vsel %vm4197, %v8608, %v8610
  %v8621 = vsel %vm4197, %v8610, %v8612
  %v8622 = vsel %vm4197, %v8612, %v8614
  %v8631 = vadd.f32 %v8585, %v8615
  %v8632 = vadd.f32 %v8586, %v8616
  %v8633 = vadd.f32 %v8587, %v8617
  %v8634 = vadd.f32 %v8588, %v8618
  %v8635 = vadd.f32 %v8589, %v8619
  %v8636 = vadd.f32 %v8590, %v8620
  %v8637 = vadd.f32 %v8591, %v8621
  %v8638 = vadd.f32 %v8592, %v8622
  %8639 = vrot.lane.b32.xlu0 %v8110, 114
  %v8640 = vpop.permute.xlu0 %8639
  %8641 = vrot.lane.b32.xlu0 %v8112, 114
  %v8642 = vpop.permute.xlu0 %8641
  %8643 = vrot.lane.b32.xlu0 %v8114, 114
  %v8644 = vpop.permute.xlu0 %8643
  %8645 = vrot.lane.b32.xlu0 %v8116, 114
  %v8646 = vpop.permute.xlu0 %8645
  %8647 = vrot.lane.b32.xlu0 %v8118, 114
  %v8648 = vpop.permute.xlu0 %8647
  %8649 = vrot.lane.b32.xlu0 %v8120, 114
  %v8650 = vpop.permute.xlu0 %8649
  %8651 = vrot.lane.b32.xlu0 %v8122, 114
  %v8652 = vpop.permute.xlu0 %8651
  %8653 = vrot.lane.b32.xlu0 %v8124, 114
  %v8654 = vpop.permute.xlu0 %8653
  %8655 = vrot.lane.b32.xlu0 %v8126, 114
  %v8656 = vpop.permute.xlu0 %8655
  %8657 = vrot.lane.b32.xlu0 %v8128, 114
  %v8658 = vpop.permute.xlu0 %8657
  %v8659 = vsel %vm4242, %v8640, %v8642
  %v8660 = vsel %vm4242, %v8642, %v8644
  %v8661 = vsel %vm4242, %v8644, %v8646
  %v8662 = vsel %vm4242, %v8646, %v8648
  %v8663 = vsel %vm4242, %v8650, %v8652
  %v8664 = vsel %vm4242, %v8652, %v8654
  %v8665 = vsel %vm4242, %v8654, %v8656
  %v8666 = vsel %vm4242, %v8656, %v8658
  %v8675 = vadd.f32 %v8631, %v8659
  %v8676 = vadd.f32 %v8632, %v8660
  %v8677 = vadd.f32 %v8633, %v8661
  %v8678 = vadd.f32 %v8634, %v8662
  %v8679 = vadd.f32 %v8635, %v8663
  %v8680 = vadd.f32 %v8636, %v8664
  %v8681 = vadd.f32 %v8637, %v8665
  %v8682 = vadd.f32 %v8638, %v8666
  %8683 = vrot.lane.b32.xlu0 %v8110, 113
  %v8684 = vpop.permute.xlu0 %8683
  %8685 = vrot.lane.b32.xlu0 %v8112, 113
  %v8686 = vpop.permute.xlu0 %8685
  %8687 = vrot.lane.b32.xlu0 %v8114, 113
  %v8688 = vpop.permute.xlu0 %8687
  %8689 = vrot.lane.b32.xlu0 %v8116, 113
  %v8690 = vpop.permute.xlu0 %8689
  %8691 = vrot.lane.b32.xlu0 %v8118, 113
  %v8692 = vpop.permute.xlu0 %8691
  %8693 = vrot.lane.b32.xlu0 %v8120, 113
  %v8694 = vpop.permute.xlu0 %8693
  %8695 = vrot.lane.b32.xlu0 %v8122, 113
  %v8696 = vpop.permute.xlu0 %8695
  %8697 = vrot.lane.b32.xlu0 %v8124, 113
  %v8698 = vpop.permute.xlu0 %8697
  %8699 = vrot.lane.b32.xlu0 %v8126, 113
  %v8700 = vpop.permute.xlu0 %8699
  %8701 = vrot.lane.b32.xlu0 %v8128, 113
  %v8702 = vpop.permute.xlu0 %8701
  %v8703 = vsel %vm4287, %v8684, %v8686
  %v8704 = vsel %vm4287, %v8686, %v8688
  %v8705 = vsel %vm4287, %v8688, %v8690
  %v8706 = vsel %vm4287, %v8690, %v8692
  %v8707 = vsel %vm4287, %v8694, %v8696
  %v8708 = vsel %vm4287, %v8696, %v8698
  %v8709 = vsel %vm4287, %v8698, %v8700
  %v8710 = vsel %vm4287, %v8700, %v8702
  %v8719 = vadd.f32 %v8675, %v8703
  %v8720 = vadd.f32 %v8676, %v8704
  %v8721 = vadd.f32 %v8677, %v8705
  %v8722 = vadd.f32 %v8678, %v8706
  %v8723 = vadd.f32 %v8679, %v8707
  %v8724 = vadd.f32 %v8680, %v8708
  %v8725 = vadd.f32 %v8681, %v8709
  %v8726 = vadd.f32 %v8682, %v8710
  %8727 = vrot.lane.b32.xlu0 %v8110, 112
  %v8728 = vpop.permute.xlu0 %8727
  %8729 = vrot.lane.b32.xlu0 %v8112, 112
  %v8730 = vpop.permute.xlu0 %8729
  %8731 = vrot.lane.b32.xlu0 %v8114, 112
  %v8732 = vpop.permute.xlu0 %8731
  %8733 = vrot.lane.b32.xlu0 %v8116, 112
  %v8734 = vpop.permute.xlu0 %8733
  %8735 = vrot.lane.b32.xlu0 %v8118, 112
  %v8736 = vpop.permute.xlu0 %8735
  %8737 = vrot.lane.b32.xlu0 %v8120, 112
  %v8738 = vpop.permute.xlu0 %8737
  %8739 = vrot.lane.b32.xlu0 %v8122, 112
  %v8740 = vpop.permute.xlu0 %8739
  %8741 = vrot.lane.b32.xlu0 %v8124, 112
  %v8742 = vpop.permute.xlu0 %8741
  %8743 = vrot.lane.b32.xlu0 %v8126, 112
  %v8744 = vpop.permute.xlu0 %8743
  %8745 = vrot.lane.b32.xlu0 %v8128, 112
  %v8746 = vpop.permute.xlu0 %8745
  %v8747 = vsel %vm4332, %v8728, %v8730
  %v8748 = vsel %vm4332, %v8730, %v8732
  %v8749 = vsel %vm4332, %v8732, %v8734
  %v8750 = vsel %vm4332, %v8734, %v8736
  %v8751 = vsel %vm4332, %v8738, %v8740
  %v8752 = vsel %vm4332, %v8740, %v8742
  %v8753 = vsel %vm4332, %v8742, %v8744
  %v8754 = vsel %vm4332, %v8744, %v8746
  %v8763 = vadd.f32 %v8719, %v8747
  %v8764 = vadd.f32 %v8720, %v8748
  %v8765 = vadd.f32 %v8721, %v8749
  %v8766 = vadd.f32 %v8722, %v8750
  %v8767 = vadd.f32 %v8723, %v8751
  %v8768 = vadd.f32 %v8724, %v8752
  %v8769 = vadd.f32 %v8725, %v8753
  %v8770 = vadd.f32 %v8726, %v8754
  %8771 = vrot.lane.b32.xlu0 %v8110, 111
  %v8772 = vpop.permute.xlu0 %8771
  %8773 = vrot.lane.b32.xlu0 %v8112, 111
  %v8774 = vpop.permute.xlu0 %8773
  %8775 = vrot.lane.b32.xlu0 %v8114, 111
  %v8776 = vpop.permute.xlu0 %8775
  %8777 = vrot.lane.b32.xlu0 %v8116, 111
  %v8778 = vpop.permute.xlu0 %8777
  %8779 = vrot.lane.b32.xlu0 %v8118, 111
  %v8780 = vpop.permute.xlu0 %8779
  %8781 = vrot.lane.b32.xlu0 %v8120, 111
  %v8782 = vpop.permute.xlu0 %8781
  %8783 = vrot.lane.b32.xlu0 %v8122, 111
  %v8784 = vpop.permute.xlu0 %8783
  %8785 = vrot.lane.b32.xlu0 %v8124, 111
  %v8786 = vpop.permute.xlu0 %8785
  %8787 = vrot.lane.b32.xlu0 %v8126, 111
  %v8788 = vpop.permute.xlu0 %8787
  %8789 = vrot.lane.b32.xlu0 %v8128, 111
  %v8790 = vpop.permute.xlu0 %8789
  %v8791 = vsel %vm4377, %v8772, %v8774
  %v8792 = vsel %vm4377, %v8774, %v8776
  %v8793 = vsel %vm4377, %v8776, %v8778
  %v8794 = vsel %vm4377, %v8778, %v8780
  %v8795 = vsel %vm4377, %v8782, %v8784
  %v8796 = vsel %vm4377, %v8784, %v8786
  %v8797 = vsel %vm4377, %v8786, %v8788
  %v8798 = vsel %vm4377, %v8788, %v8790
  %v8807 = vadd.f32 %v8763, %v8791
  %v8808 = vadd.f32 %v8764, %v8792
  %v8809 = vadd.f32 %v8765, %v8793
  %v8810 = vadd.f32 %v8766, %v8794
  %v8811 = vadd.f32 %v8767, %v8795
  %v8812 = vadd.f32 %v8768, %v8796
  %v8813 = vadd.f32 %v8769, %v8797
  %v8814 = vadd.f32 %v8770, %v8798
  %8815 = vrot.lane.b32.xlu0 %v8110, 110
  %v8816 = vpop.permute.xlu0 %8815
  %8817 = vrot.lane.b32.xlu0 %v8112, 110
  %v8818 = vpop.permute.xlu0 %8817
  %8819 = vrot.lane.b32.xlu0 %v8114, 110
  %v8820 = vpop.permute.xlu0 %8819
  %8821 = vrot.lane.b32.xlu0 %v8116, 110
  %v8822 = vpop.permute.xlu0 %8821
  %8823 = vrot.lane.b32.xlu0 %v8118, 110
  %v8824 = vpop.permute.xlu0 %8823
  %8825 = vrot.lane.b32.xlu0 %v8120, 110
  %v8826 = vpop.permute.xlu0 %8825
  %8827 = vrot.lane.b32.xlu0 %v8122, 110
  %v8828 = vpop.permute.xlu0 %8827
  %8829 = vrot.lane.b32.xlu0 %v8124, 110
  %v8830 = vpop.permute.xlu0 %8829
  %8831 = vrot.lane.b32.xlu0 %v8126, 110
  %v8832 = vpop.permute.xlu0 %8831
  %8833 = vrot.lane.b32.xlu0 %v8128, 110
  %v8834 = vpop.permute.xlu0 %8833
  %v8835 = vsel %vm4422, %v8816, %v8818
  %v8836 = vsel %vm4422, %v8818, %v8820
  %v8837 = vsel %vm4422, %v8820, %v8822
  %v8838 = vsel %vm4422, %v8822, %v8824
  %v8839 = vsel %vm4422, %v8826, %v8828
  %v8840 = vsel %vm4422, %v8828, %v8830
  %v8841 = vsel %vm4422, %v8830, %v8832
  %v8842 = vsel %vm4422, %v8832, %v8834
  %v8851 = vadd.f32 %v8807, %v8835
  %v8852 = vadd.f32 %v8808, %v8836
  %v8853 = vadd.f32 %v8809, %v8837
  %v8854 = vadd.f32 %v8810, %v8838
  %v8855 = vadd.f32 %v8811, %v8839
  %v8856 = vadd.f32 %v8812, %v8840
  %v8857 = vadd.f32 %v8813, %v8841
  %v8858 = vadd.f32 %v8814, %v8842
  %8859 = vrot.lane.b32.xlu0 %v8110, 109
  %v8860 = vpop.permute.xlu0 %8859
  %8861 = vrot.lane.b32.xlu0 %v8112, 109
  %v8862 = vpop.permute.xlu0 %8861
  %8863 = vrot.lane.b32.xlu0 %v8114, 109
  %v8864 = vpop.permute.xlu0 %8863
  %8865 = vrot.lane.b32.xlu0 %v8116, 109
  %v8866 = vpop.permute.xlu0 %8865
  %8867 = vrot.lane.b32.xlu0 %v8118, 109
  %v8868 = vpop.permute.xlu0 %8867
  %8869 = vrot.lane.b32.xlu0 %v8120, 109
  %v8870 = vpop.permute.xlu0 %8869
  %8871 = vrot.lane.b32.xlu0 %v8122, 109
  %v8872 = vpop.permute.xlu0 %8871
  %8873 = vrot.lane.b32.xlu0 %v8124, 109
  %v8874 = vpop.permute.xlu0 %8873
  %8875 = vrot.lane.b32.xlu0 %v8126, 109
  %v8876 = vpop.permute.xlu0 %8875
  %8877 = vrot.lane.b32.xlu0 %v8128, 109
  %v8878 = vpop.permute.xlu0 %8877
  %v8879 = vsel %vm4467, %v8860, %v8862
  %v8880 = vsel %vm4467, %v8862, %v8864
  %v8881 = vsel %vm4467, %v8864, %v8866
  %v8882 = vsel %vm4467, %v8866, %v8868
  %v8883 = vsel %vm4467, %v8870, %v8872
  %v8884 = vsel %vm4467, %v8872, %v8874
  %v8885 = vsel %vm4467, %v8874, %v8876
  %v8886 = vsel %vm4467, %v8876, %v8878
  %v8895 = vadd.f32 %v8851, %v8879
  %v8896 = vadd.f32 %v8852, %v8880
  %v8897 = vadd.f32 %v8853, %v8881
  %v8898 = vadd.f32 %v8854, %v8882
  %v8899 = vadd.f32 %v8855, %v8883
  %v8900 = vadd.f32 %v8856, %v8884
  %v8901 = vadd.f32 %v8857, %v8885
  %v8902 = vadd.f32 %v8858, %v8886
  %v8903 = vmul.f32 %v8895, 0.05
  %v8904 = vmul.f32 %v8896, 0.05
  %v8905 = vmul.f32 %v8897, 0.05
  %v8906 = vmul.f32 %v8898, 0.05
  %v8907 = vmul.f32 %v8899, 0.05
  %v8908 = vmul.f32 %v8900, 0.05
  %v8909 = vmul.f32 %v8901, 0.05
  %v8910 = vmul.f32 %v8902, 0.05
  %8911 = vst [vmem:[%s13 + $0x40] sm:$0xff] %v8903
  %8912 = vst [vmem:[%s13 + $0x48] sm:$0xff] %v8904
  %8913 = vst [vmem:[%s13 + $0x50] sm:$0xff] %v8905
  %8914 = vst.msk [vmem:[%s13 + $0x58] sm:$0xff] %vm4152, %v8906
  %8915 = vst [vmem:[%s13 + $0x60] sm:$0xff] %v8907
  %8916 = vst [vmem:[%s13 + $0x68] sm:$0xff] %v8908
  %8917 = vst [vmem:[%s13 + $0x70] sm:$0xff] %v8909
  %8918 = vst.msk [vmem:[%s13 + $0x78] sm:$0xff] %vm4152, %v8910
  // Predicated region
  $region54: #{seeg_cnn_vae_forward.3} parent=0 // pred_check
    _
  $region55: #{seeg_cnn_vae_forward.3} parent=0 // pred_check_branch
    %8920 = sbr.rel (0) target = $region57
  $region56: #{seeg_cnn_vae_forward.3} parent=0 // pred_region
    _
  $region57: #{seeg_cnn_vae_forward.3} parent=0 // pred_fallthru
    _
  // Predicated region
  $region58: #{seeg_cnn_vae_forward.3} parent=0 // pred_check
    _
  $region59: #{seeg_cnn_vae_forward.3} parent=0 // pred_check_branch
    %8922 = sbr.rel (0) target = $region61
  $region60: #{seeg_cnn_vae_forward.3} parent=0 // pred_region
    _
  $region61: #{seeg_cnn_vae_forward.3} parent=0 // pred_fallthru
    _

</llo_original>
